<compile_context>
chip_gen: v6e
topology: v6e:2x2x1
jax: 0.10.0
libtpu: 0.0.40
codegen_flags: <defaults>
</compile_context>

<pallas_src>
import jax
import jax.numpy as jnp
from jax.experimental import pallas as pl
from jax.experimental.pallas import tpu as pltpu
import numpy as np


def _round_up(n, m):
    return ((n + m - 1) // m) * m


def _choose_t_chunk(seq_len, max_chunk=64):
    """Largest divisor of seq_len that is <= max_chunk (keeps VMEM bounded)."""
    c = min(seq_len, max_chunk)
    while seq_len % c:
        c -= 1
    return c


def _vrnn_kernel(x_ref, wih_ref, whh_ref, b_ref, wout_ref, bout_ref,
                 y_ref, hlast_ref,
                 h_scratch, slab_ref):
    """One grid step processes T_CHUNK timesteps.

    x_ref    : (T, B, I)   chunk of inputs
    wih_ref  : (I, H)      W_ih^T
    whh_ref  : (H, H)      W_hh^T
    b_ref    : (1, H)      b_ih + b_hh (pre-combined)
    wout_ref : (H, O)      W_out^T
    bout_ref : (1, O)      b_out
    y_ref    : (T, B, O)   chunk of outputs
    hlast_ref: (1, B, H)   final hidden state (written on last chunk only)
    h_scratch: (B, H)      running hidden state, persists across grid steps
    slab_ref : (T, B, H)   holds pre-activations, then overwritten with h_t
    """
    c = pl.program_id(0)
    n_chunks = pl.num_programs(0)
    T, B, I = x_ref.shape
    H = whh_ref.shape[0]
    O = wout_ref.shape[1]

    @pl.when(c == 0)
    def _():
        # init_hidden_state: zeros
        h_scratch[...] = jnp.zeros_like(h_scratch)

    # ---- Hoisted input projection: one big MXU matmul for the whole chunk ----
    x2 = x_ref[...].reshape(T * B, I)                       # (T*B, I)
    pre = jnp.dot(x2, wih_ref[...], preferred_element_type=jnp.float32)
    slab_ref[...] = pre.reshape(T, B, H) + b_ref[...]       # + (b_ih + b_hh)

    whh = whh_ref[...]                                      # hoisted weight load

    # ---- Serial recurrence: only h_{t-1} @ W_hh^T + tanh on the critical path
    def step(t, carry):
        h_prev = h_scratch[...]
        h_new = jnp.tanh(slab_ref[t] +
                         jnp.dot(h_prev, whh,
                                 preferred_element_type=jnp.float32))
        slab_ref[t] = h_new          # slab now holds h_t (buffer reuse)
        h_scratch[...] = h_new
        return carry

    jax.lax.fori_loop(0, T, step, 0, unroll=True)

    # ---- Hoisted output projection: one big lane-dense MXU matmul per chunk --
    h_all = slab_ref[...].reshape(T * B, H)                 # (T*B, H)
    y = jnp.dot(h_all, wout_ref[...], preferred_element_type=jnp.float32)
    y_ref[...] = (y.reshape(T, B, O) + bout_ref[...]).astype(y_ref.dtype)

    @pl.when(c == n_chunks - 1)
    def _():
        hlast_ref[0] = h_scratch[...].astype(hlast_ref.dtype)


def vrnn_forward(x, params):
    """x: (S, B, I) float32. Returns (y:(S, B, O), h:(1, B, H))."""
    S, B, I = x.shape
    H = params["w_ih_t"].shape[1]
    O = params["w_out_t"].shape[1]

    # Pad to vreg tiles: sublane dim -> multiple of 8 (f32), lane dims -> 128.
    Bp = _round_up(B, 8)
    Ip = _round_up(I, 128)
    Hp = _round_up(H, 128)
    Op = _round_up(O, 128)

    Tc = _choose_t_chunk(S)
    n_chunks = S // Tc

    xp = jnp.pad(x, ((0, 0), (0, Bp - B), (0, Ip - I)))
    wih = jnp.pad(params["w_ih_t"], ((0, Ip - I), (0, Hp - H)))
    whh = jnp.pad(params["w_hh_t"], ((0, Hp - H), (0, Hp - H)))
    b = jnp.pad(params["b_ih"] + params["b_hh"], ((0, 0), (0, Hp - H)))
    wout = jnp.pad(params["w_out_t"], ((0, Hp - H), (0, Op - O)))
    bout = jnp.pad(params["b_out"], ((0, 0), (0, Op - O)))

    grid_spec = pltpu.PrefetchScalarGridSpec(
        num_scalar_prefetch=0,
        grid=(n_chunks,),
        in_specs=[
            pl.BlockSpec((Tc, Bp, Ip), lambda c: (c, 0, 0)),   # x chunk
            pl.BlockSpec((Ip, Hp), lambda c: (0, 0)),          # W_ih^T
            pl.BlockSpec((Hp, Hp), lambda c: (0, 0)),          # W_hh^T
            pl.BlockSpec((1, Hp), lambda c: (0, 0)),           # b_ih + b_hh
            pl.BlockSpec((Hp, Op), lambda c: (0, 0)),          # W_out^T
            pl.BlockSpec((1, Op), lambda c: (0, 0)),           # b_out
        ],
        out_specs=[
            pl.BlockSpec((Tc, Bp, Op), lambda c: (c, 0, 0)),   # y chunk
            pl.BlockSpec((1, Bp, Hp), lambda c: (0, 0, 0)),    # h_last (resident)
        ],
        scratch_shapes=[
            pltpu.VMEM((Bp, Hp), jnp.float32),        # running hidden state
            pltpu.VMEM((Tc, Bp, Hp), jnp.float32),    # pre-act / h_all slab
        ],
    )

    y_pad, h_pad = pl.pallas_call(
        _vrnn_kernel,
        out_shape=(
            jax.ShapeDtypeStruct((S, Bp, Op), jnp.float32),
            jax.ShapeDtypeStruct((1, Bp, Hp), jnp.float32),
        ),
        grid_spec=grid_spec,
        compiler_params=pltpu.CompilerParams(
            dimension_semantics=("arbitrary",)),   # time recurrence is serial
    )(xp, wih, whh, b, wout, bout)

    return y_pad[:, :B, :O], h_pad[:, :B, :H]


def make_params(key, input_size, hidden_size, output_size):
    """Deterministic init mimicking PyTorch's uniform(-1/sqrt(H), 1/sqrt(H))."""
    ks = jax.random.split(key, 6)
    kr = 1.0 / np.sqrt(hidden_size)
    u = lambda k, shp, bound: jax.random.uniform(
        k, shp, jnp.float32, minval=-bound, maxval=bound)
    return {
        "w_ih_t": u(ks[0], (input_size, hidden_size), kr),    # W_ih.T
        "w_hh_t": u(ks[1], (hidden_size, hidden_size), kr),   # W_hh.T
        "b_ih":   u(ks[2], (1, hidden_size), kr),
        "b_hh":   u(ks[3], (1, hidden_size), kr),
        "w_out_t": u(ks[4], (hidden_size, output_size), kr),  # Linear weight.T
        "b_out":   u(ks[5], (1, output_size), kr),
    }


def vrnn_reference(x, params):
    """Pure-JAX reference (lax.scan) for correctness check."""
    def step(h, x_t):
        h_new = jnp.tanh(x_t @ params["w_ih_t"] + h @ params["w_hh_t"]
                         + params["b_ih"] + params["b_hh"])
        return h_new, h_new
    B = x.shape[1]
    H = params["w_ih_t"].shape[1]
    h0 = jnp.zeros((B, H), jnp.float32)
    h_last, h_all = jax.lax.scan(step, h0, x)
    y = h_all @ params["w_out_t"] + params["b_out"]
    return y, h_last[None]


if __name__ == "__main__":
    # Use true f32 matmuls in the XLA reference so the comparison is tight.
    jax.config.update("jax_default_matmul_precision", "float32")

    SEQ, BATCH = 8, 4
    INPUT_SIZE, HIDDEN_SIZE, OUTPUT_SIZE = 16, 32, 8

    key = jax.random.PRNGKey(0)
    kx, kp = jax.random.split(key)
    x = jax.random.normal(kx, (SEQ, BATCH, INPUT_SIZE), jnp.float32)
    params = make_params(kp, INPUT_SIZE, HIDDEN_SIZE, OUTPUT_SIZE)

    y, h = jax.jit(vrnn_forward)(x, params)
    jax.block_until_ready((y, h))

    y_ref, h_ref = vrnn_reference(x, params)
    np.testing.assert_allclose(np.asarray(y), np.asarray(y_ref),
                               atol=2e-5, rtol=2e-5)
    np.testing.assert_allclose(np.asarray(h), np.asarray(h_ref),
                               atol=2e-5, rtol=2e-5)

    print("KERNEL_OK")
</pallas_src>

<mosaic_0001>
module attributes {stable_mosaic.version = 11 : i64} {
  func.func @_vrnn_kernel(%arg0: i32, %arg1: memref<8x8x128xf32, #tpu.memory_space<vmem>>, %arg2: memref<128x128xf32, #tpu.memory_space<vmem>>, %arg3: memref<128x128xf32, #tpu.memory_space<vmem>>, %arg4: memref<1x128xf32, #tpu.memory_space<vmem>>, %arg5: memref<128x128xf32, #tpu.memory_space<vmem>>, %arg6: memref<1x128xf32, #tpu.memory_space<vmem>>, %arg7: memref<8x8x128xf32, #tpu.memory_space<vmem>>, %arg8: memref<1x8x128xf32, #tpu.memory_space<vmem>>, %arg9: memref<8x128xf32, #tpu.memory_space<vmem>>, %arg10: memref<8x8x128xf32, #tpu.memory_space<vmem>>) attributes {dimension_semantics = [#tpu.dimension_semantics<arbitrary>], iteration_bounds = array<i64: 1>, scalar_prefetch = 0 : i64, scratch_operands = 2 : i64, tpu.core_type = #tpu.core_type<tc>, window_params = [{transform_indices = @transform_0, window_bounds = array<i64: 8, 8, 128>}, {pipeline_mode = #tpu.pipeline_mode<synchronous>, transform_indices = @transform_1, window_bounds = array<i64: 128, 128>}, {pipeline_mode = #tpu.pipeline_mode<synchronous>, transform_indices = @transform_2, window_bounds = array<i64: 128, 128>}, {pipeline_mode = #tpu.pipeline_mode<synchronous>, transform_indices = @transform_3, window_bounds = array<i64: 1, 128>}, {pipeline_mode = #tpu.pipeline_mode<synchronous>, transform_indices = @transform_4, window_bounds = array<i64: 128, 128>}, {pipeline_mode = #tpu.pipeline_mode<synchronous>, transform_indices = @transform_5, window_bounds = array<i64: 1, 128>}, {transform_indices = @transform_6, window_bounds = array<i64: 8, 8, 128>}, {pipeline_mode = #tpu.pipeline_mode<synchronous>, transform_indices = @transform_7, window_bounds = array<i64: 1, 8, 128>}]} {
    %c0_i32 = arith.constant 0 : i32
    %0 = arith.cmpi eq, %arg0, %c0_i32 : i32
    %1 = arith.extui %0 : i1 to i32
    %c0_i32_0 = arith.constant 0 : i32
    %2 = arith.cmpi ne, %1, %c0_i32_0 : i32
    scf.if %2 {
      %cst_98 = arith.constant 0.000000e+00 : f32
      %123 = vector.broadcast %cst_98 : f32 to vector<8x128xf32>
      %c0_99 = arith.constant 0 : index
      %c0_100 = arith.constant 0 : index
      %124 = vector.load %arg9[%c0_99, %c0_100] : memref<8x128xf32, #tpu.memory_space<vmem>>, vector<8x128xf32>
      tpu.vector_store %arg9[%c0_99, %c0_100], %123 {strides = array<i32>} : memref<8x128xf32, #tpu.memory_space<vmem>>, vector<8x128xf32>,
    } else {
    }
    %c0 = arith.constant 0 : index
    %c0_1 = arith.constant 0 : index
    %c0_2 = arith.constant 0 : index
    %3 = vector.load %arg1[%c0, %c0_1, %c0_2] : memref<8x8x128xf32, #tpu.memory_space<vmem>>, vector<8x8x128xf32>
    %4 = vector.shape_cast %3 : vector<8x8x128xf32> to vector<64x128xf32>
    %c0_3 = arith.constant 0 : index
    %c0_4 = arith.constant 0 : index
    %5 = vector.load %arg2[%c0_3, %c0_4] : memref<128x128xf32, #tpu.memory_space<vmem>>, vector<128x128xf32>
    %cst = arith.constant dense<0.000000e+00> : vector<64x128xf32>
    %6 = tpu.matmul %4, %5, %cst {dimension_numbers = #tpu.dot_dimension_numbers<[1], [0], [0], [1], [0, 0, 1, 1], [], []>, precision = #tpu.contract_precision<fp32>} : vector<64x128xf32>, vector<128x128xf32>, vector<64x128xf32> -> vector<64x128xf32>
    %7 = vector.shape_cast %6 : vector<64x128xf32> to vector<8x8x128xf32>
    %c0_5 = arith.constant 0 : index
    %c0_6 = arith.constant 0 : index
    %8 = vector.load %arg4[%c0_5, %c0_6] : memref<1x128xf32, #tpu.memory_space<vmem>>, vector<1x128xf32>
    %9 = vector.shape_cast %8 : vector<1x128xf32> to vector<1x1x128xf32>
    %10 = vector.broadcast %9 : vector<1x1x128xf32> to vector<8x8x128xf32>
    %11 = arith.addf %7, %10 : vector<8x8x128xf32>
    %c0_7 = arith.constant 0 : index
    %c0_8 = arith.constant 0 : index
    %c0_9 = arith.constant 0 : index
    %12 = vector.load %arg10[%c0_7, %c0_8, %c0_9] : memref<8x8x128xf32, #tpu.memory_space<vmem>>, vector<8x8x128xf32>
    tpu.vector_store %arg10[%c0_7, %c0_8, %c0_9], %11 {strides = array<i32>} : memref<8x8x128xf32, #tpu.memory_space<vmem>>, vector<8x8x128xf32>,
    %c0_10 = arith.constant 0 : index
    %c0_11 = arith.constant 0 : index
    %13 = vector.load %arg3[%c0_10, %c0_11] : memref<128x128xf32, #tpu.memory_space<vmem>>, vector<128x128xf32>
    %c0_i32_12 = arith.constant 0 : i32
    %c0_13 = arith.constant 0 : index
    %c0_14 = arith.constant 0 : index
    %14 = vector.load %arg9[%c0_13, %c0_14] : memref<8x128xf32, #tpu.memory_space<vmem>>, vector<8x128xf32>
    %15 = arith.index_cast %c0_i32_12 : i32 to index
    %c0_15 = arith.constant 0 : index
    %c0_16 = arith.constant 0 : index
    %16 = vector.load %arg10[%15, %c0_15, %c0_16] : memref<8x8x128xf32, #tpu.memory_space<vmem>>, vector<1x8x128xf32>
    %17 = vector.shape_cast %16 : vector<1x8x128xf32> to vector<8x128xf32>
    %cst_17 = arith.constant dense<0.000000e+00> : vector<8x128xf32>
    %18 = tpu.matmul %14, %13, %cst_17 {dimension_numbers = #tpu.dot_dimension_numbers<[1], [0], [0], [1], [0, 0, 1, 1], [], []>, precision = #tpu.contract_precision<fp32>} : vector<8x128xf32>, vector<128x128xf32>, vector<8x128xf32> -> vector<8x128xf32>
    %19 = arith.addf %17, %18 : vector<8x128xf32>
    %20 = math.tanh %19 : vector<8x128xf32>
    %21 = arith.index_cast %c0_i32_12 : i32 to index
    %c0_18 = arith.constant 0 : index
    %c0_19 = arith.constant 0 : index
    %22 = vector.load %arg10[%21, %c0_18, %c0_19] : memref<8x8x128xf32, #tpu.memory_space<vmem>>, vector<1x8x128xf32>
    %23 = vector.shape_cast %22 : vector<1x8x128xf32> to vector<8x128xf32>
    %24 = vector.shape_cast %20 : vector<8x128xf32> to vector<1x8x128xf32>
    tpu.vector_store %arg10[%21, %c0_18, %c0_19], %24 {strides = array<i32>} : memref<8x8x128xf32, #tpu.memory_space<vmem>>, vector<1x8x128xf32>,
    %c0_20 = arith.constant 0 : index
    %c0_21 = arith.constant 0 : index
    %25 = vector.load %arg9[%c0_20, %c0_21] : memref<8x128xf32, #tpu.memory_space<vmem>>, vector<8x128xf32>
    tpu.vector_store %arg9[%c0_20, %c0_21], %20 {strides = array<i32>} : memref<8x128xf32, #tpu.memory_space<vmem>>, vector<8x128xf32>,
    %c1_i32 = arith.constant 1 : i32
    %c0_22 = arith.constant 0 : index
    %c0_23 = arith.constant 0 : index
    %26 = vector.load %arg9[%c0_22, %c0_23] : memref<8x128xf32, #tpu.memory_space<vmem>>, vector<8x128xf32>
    %27 = arith.index_cast %c1_i32 : i32 to index
    %c0_24 = arith.constant 0 : index
    %c0_25 = arith.constant 0 : index
    %28 = vector.load %arg10[%27, %c0_24, %c0_25] : memref<8x8x128xf32, #tpu.memory_space<vmem>>, vector<1x8x128xf32>
    %29 = vector.shape_cast %28 : vector<1x8x128xf32> to vector<8x128xf32>
    %cst_26 = arith.constant dense<0.000000e+00> : vector<8x128xf32>
    %30 = tpu.matmul %26, %13, %cst_26 {dimension_numbers = #tpu.dot_dimension_numbers<[1], [0], [0], [1], [0, 0, 1, 1], [], []>, precision = #tpu.contract_precision<fp32>} : vector<8x128xf32>, vector<128x128xf32>, vector<8x128xf32> -> vector<8x128xf32>
    %31 = arith.addf %29, %30 : vector<8x128xf32>
    %32 = math.tanh %31 : vector<8x128xf32>
    %33 = arith.index_cast %c1_i32 : i32 to index
    %c0_27 = arith.constant 0 : index
    %c0_28 = arith.constant 0 : index
    %34 = vector.load %arg10[%33, %c0_27, %c0_28] : memref<8x8x128xf32, #tpu.memory_space<vmem>>, vector<1x8x128xf32>
    %35 = vector.shape_cast %34 : vector<1x8x128xf32> to vector<8x128xf32>
    %36 = vector.shape_cast %32 : vector<8x128xf32> to vector<1x8x128xf32>
    tpu.vector_store %arg10[%33, %c0_27, %c0_28], %36 {strides = array<i32>} : memref<8x8x128xf32, #tpu.memory_space<vmem>>, vector<1x8x128xf32>,
    %c0_29 = arith.constant 0 : index
    %c0_30 = arith.constant 0 : index
    %37 = vector.load %arg9[%c0_29, %c0_30] : memref<8x128xf32, #tpu.memory_space<vmem>>, vector<8x128xf32>
    tpu.vector_store %arg9[%c0_29, %c0_30], %32 {strides = array<i32>} : memref<8x128xf32, #tpu.memory_space<vmem>>, vector<8x128xf32>,
    %c2_i32 = arith.constant 2 : i32
    %c0_31 = arith.constant 0 : index
    %c0_32 = arith.constant 0 : index
    %38 = vector.load %arg9[%c0_31, %c0_32] : memref<8x128xf32, #tpu.memory_space<vmem>>, vector<8x128xf32>
    %39 = arith.index_cast %c2_i32 : i32 to index
    %c0_33 = arith.constant 0 : index
    %c0_34 = arith.constant 0 : index
    %40 = vector.load %arg10[%39, %c0_33, %c0_34] : memref<8x8x128xf32, #tpu.memory_space<vmem>>, vector<1x8x128xf32>
    %41 = vector.shape_cast %40 : vector<1x8x128xf32> to vector<8x128xf32>
    %cst_35 = arith.constant dense<0.000000e+00> : vector<8x128xf32>
    %42 = tpu.matmul %38, %13, %cst_35 {dimension_numbers = #tpu.dot_dimension_numbers<[1], [0], [0], [1], [0, 0, 1, 1], [], []>, precision = #tpu.contract_precision<fp32>} : vector<8x128xf32>, vector<128x128xf32>, vector<8x128xf32> -> vector<8x128xf32>
    %43 = arith.addf %41, %42 : vector<8x128xf32>
    %44 = math.tanh %43 : vector<8x128xf32>
    %45 = arith.index_cast %c2_i32 : i32 to index
    %c0_36 = arith.constant 0 : index
    %c0_37 = arith.constant 0 : index
    %46 = vector.load %arg10[%45, %c0_36, %c0_37] : memref<8x8x128xf32, #tpu.memory_space<vmem>>, vector<1x8x128xf32>
    %47 = vector.shape_cast %46 : vector<1x8x128xf32> to vector<8x128xf32>
    %48 = vector.shape_cast %44 : vector<8x128xf32> to vector<1x8x128xf32>
    tpu.vector_store %arg10[%45, %c0_36, %c0_37], %48 {strides = array<i32>} : memref<8x8x128xf32, #tpu.memory_space<vmem>>, vector<1x8x128xf32>,
    %c0_38 = arith.constant 0 : index
    %c0_39 = arith.constant 0 : index
    %49 = vector.load %arg9[%c0_38, %c0_39] : memref<8x128xf32, #tpu.memory_space<vmem>>, vector<8x128xf32>
    tpu.vector_store %arg9[%c0_38, %c0_39], %44 {strides = array<i32>} : memref<8x128xf32, #tpu.memory_space<vmem>>, vector<8x128xf32>,
    %c3_i32 = arith.constant 3 : i32
    %c0_40 = arith.constant 0 : index
    %c0_41 = arith.constant 0 : index
    %50 = vector.load %arg9[%c0_40, %c0_41] : memref<8x128xf32, #tpu.memory_space<vmem>>, vector<8x128xf32>
    %51 = arith.index_cast %c3_i32 : i32 to index
    %c0_42 = arith.constant 0 : index
    %c0_43 = arith.constant 0 : index
    %52 = vector.load %arg10[%51, %c0_42, %c0_43] : memref<8x8x128xf32, #tpu.memory_space<vmem>>, vector<1x8x128xf32>
    %53 = vector.shape_cast %52 : vector<1x8x128xf32> to vector<8x128xf32>
    %cst_44 = arith.constant dense<0.000000e+00> : vector<8x128xf32>
    %54 = tpu.matmul %50, %13, %cst_44 {dimension_numbers = #tpu.dot_dimension_numbers<[1], [0], [0], [1], [0, 0, 1, 1], [], []>, precision = #tpu.contract_precision<fp32>} : vector<8x128xf32>, vector<128x128xf32>, vector<8x128xf32> -> vector<8x128xf32>
    %55 = arith.addf %53, %54 : vector<8x128xf32>
    %56 = math.tanh %55 : vector<8x128xf32>
    %57 = arith.index_cast %c3_i32 : i32 to index
    %c0_45 = arith.constant 0 : index
    %c0_46 = arith.constant 0 : index
    %58 = vector.load %arg10[%57, %c0_45, %c0_46] : memref<8x8x128xf32, #tpu.memory_space<vmem>>, vector<1x8x128xf32>
    %59 = vector.shape_cast %58 : vector<1x8x128xf32> to vector<8x128xf32>
    %60 = vector.shape_cast %56 : vector<8x128xf32> to vector<1x8x128xf32>
    tpu.vector_store %arg10[%57, %c0_45, %c0_46], %60 {strides = array<i32>} : memref<8x8x128xf32, #tpu.memory_space<vmem>>, vector<1x8x128xf32>,
    %c0_47 = arith.constant 0 : index
    %c0_48 = arith.constant 0 : index
    %61 = vector.load %arg9[%c0_47, %c0_48] : memref<8x128xf32, #tpu.memory_space<vmem>>, vector<8x128xf32>
    tpu.vector_store %arg9[%c0_47, %c0_48], %56 {strides = array<i32>} : memref<8x128xf32, #tpu.memory_space<vmem>>, vector<8x128xf32>,
    %c4_i32 = arith.constant 4 : i32
    %c0_49 = arith.constant 0 : index
    %c0_50 = arith.constant 0 : index
    %62 = vector.load %arg9[%c0_49, %c0_50] : memref<8x128xf32, #tpu.memory_space<vmem>>, vector<8x128xf32>
    %63 = arith.index_cast %c4_i32 : i32 to index
    %c0_51 = arith.constant 0 : index
    %c0_52 = arith.constant 0 : index
    %64 = vector.load %arg10[%63, %c0_51, %c0_52] : memref<8x8x128xf32, #tpu.memory_space<vmem>>, vector<1x8x128xf32>
    %65 = vector.shape_cast %64 : vector<1x8x128xf32> to vector<8x128xf32>
    %cst_53 = arith.constant dense<0.000000e+00> : vector<8x128xf32>
    %66 = tpu.matmul %62, %13, %cst_53 {dimension_numbers = #tpu.dot_dimension_numbers<[1], [0], [0], [1], [0, 0, 1, 1], [], []>, precision = #tpu.contract_precision<fp32>} : vector<8x128xf32>, vector<128x128xf32>, vector<8x128xf32> -> vector<8x128xf32>
    %67 = arith.addf %65, %66 : vector<8x128xf32>
    %68 = math.tanh %67 : vector<8x128xf32>
    %69 = arith.index_cast %c4_i32 : i32 to index
    %c0_54 = arith.constant 0 : index
    %c0_55 = arith.constant 0 : index
    %70 = vector.load %arg10[%69, %c0_54, %c0_55] : memref<8x8x128xf32, #tpu.memory_space<vmem>>, vector<1x8x128xf32>
    %71 = vector.shape_cast %70 : vector<1x8x128xf32> to vector<8x128xf32>
    %72 = vector.shape_cast %68 : vector<8x128xf32> to vector<1x8x128xf32>
    tpu.vector_store %arg10[%69, %c0_54, %c0_55], %72 {strides = array<i32>} : memref<8x8x128xf32, #tpu.memory_space<vmem>>, vector<1x8x128xf32>,
    %c0_56 = arith.constant 0 : index
    %c0_57 = arith.constant 0 : index
    %73 = vector.load %arg9[%c0_56, %c0_57] : memref<8x128xf32, #tpu.memory_space<vmem>>, vector<8x128xf32>
    tpu.vector_store %arg9[%c0_56, %c0_57], %68 {strides = array<i32>} : memref<8x128xf32, #tpu.memory_space<vmem>>, vector<8x128xf32>,
    %c5_i32 = arith.constant 5 : i32
    %c0_58 = arith.constant 0 : index
    %c0_59 = arith.constant 0 : index
    %74 = vector.load %arg9[%c0_58, %c0_59] : memref<8x128xf32, #tpu.memory_space<vmem>>, vector<8x128xf32>
    %75 = arith.index_cast %c5_i32 : i32 to index
    %c0_60 = arith.constant 0 : index
    %c0_61 = arith.constant 0 : index
    %76 = vector.load %arg10[%75, %c0_60, %c0_61] : memref<8x8x128xf32, #tpu.memory_space<vmem>>, vector<1x8x128xf32>
    %77 = vector.shape_cast %76 : vector<1x8x128xf32> to vector<8x128xf32>
    %cst_62 = arith.constant dense<0.000000e+00> : vector<8x128xf32>
    %78 = tpu.matmul %74, %13, %cst_62 {dimension_numbers = #tpu.dot_dimension_numbers<[1], [0], [0], [1], [0, 0, 1, 1], [], []>, precision = #tpu.contract_precision<fp32>} : vector<8x128xf32>, vector<128x128xf32>, vector<8x128xf32> -> vector<8x128xf32>
    %79 = arith.addf %77, %78 : vector<8x128xf32>
    %80 = math.tanh %79 : vector<8x128xf32>
    %81 = arith.index_cast %c5_i32 : i32 to index
    %c0_63 = arith.constant 0 : index
    %c0_64 = arith.constant 0 : index
    %82 = vector.load %arg10[%81, %c0_63, %c0_64] : memref<8x8x128xf32, #tpu.memory_space<vmem>>, vector<1x8x128xf32>
    %83 = vector.shape_cast %82 : vector<1x8x128xf32> to vector<8x128xf32>
    %84 = vector.shape_cast %80 : vector<8x128xf32> to vector<1x8x128xf32>
    tpu.vector_store %arg10[%81, %c0_63, %c0_64], %84 {strides = array<i32>} : memref<8x8x128xf32, #tpu.memory_space<vmem>>, vector<1x8x128xf32>,
    %c0_65 = arith.constant 0 : index
    %c0_66 = arith.constant 0 : index
    %85 = vector.load %arg9[%c0_65, %c0_66] : memref<8x128xf32, #tpu.memory_space<vmem>>, vector<8x128xf32>
    tpu.vector_store %arg9[%c0_65, %c0_66], %80 {strides = array<i32>} : memref<8x128xf32, #tpu.memory_space<vmem>>, vector<8x128xf32>,
    %c6_i32 = arith.constant 6 : i32
    %c0_67 = arith.constant 0 : index
    %c0_68 = arith.constant 0 : index
    %86 = vector.load %arg9[%c0_67, %c0_68] : memref<8x128xf32, #tpu.memory_space<vmem>>, vector<8x128xf32>
    %87 = arith.index_cast %c6_i32 : i32 to index
    %c0_69 = arith.constant 0 : index
    %c0_70 = arith.constant 0 : index
    %88 = vector.load %arg10[%87, %c0_69, %c0_70] : memref<8x8x128xf32, #tpu.memory_space<vmem>>, vector<1x8x128xf32>
    %89 = vector.shape_cast %88 : vector<1x8x128xf32> to vector<8x128xf32>
    %cst_71 = arith.constant dense<0.000000e+00> : vector<8x128xf32>
    %90 = tpu.matmul %86, %13, %cst_71 {dimension_numbers = #tpu.dot_dimension_numbers<[1], [0], [0], [1], [0, 0, 1, 1], [], []>, precision = #tpu.contract_precision<fp32>} : vector<8x128xf32>, vector<128x128xf32>, vector<8x128xf32> -> vector<8x128xf32>
    %91 = arith.addf %89, %90 : vector<8x128xf32>
    %92 = math.tanh %91 : vector<8x128xf32>
    %93 = arith.index_cast %c6_i32 : i32 to index
    %c0_72 = arith.constant 0 : index
    %c0_73 = arith.constant 0 : index
    %94 = vector.load %arg10[%93, %c0_72, %c0_73] : memref<8x8x128xf32, #tpu.memory_space<vmem>>, vector<1x8x128xf32>
    %95 = vector.shape_cast %94 : vector<1x8x128xf32> to vector<8x128xf32>
    %96 = vector.shape_cast %92 : vector<8x128xf32> to vector<1x8x128xf32>
    tpu.vector_store %arg10[%93, %c0_72, %c0_73], %96 {strides = array<i32>} : memref<8x8x128xf32, #tpu.memory_space<vmem>>, vector<1x8x128xf32>,
    %c0_74 = arith.constant 0 : index
    %c0_75 = arith.constant 0 : index
    %97 = vector.load %arg9[%c0_74, %c0_75] : memref<8x128xf32, #tpu.memory_space<vmem>>, vector<8x128xf32>
    tpu.vector_store %arg9[%c0_74, %c0_75], %92 {strides = array<i32>} : memref<8x128xf32, #tpu.memory_space<vmem>>, vector<8x128xf32>,
    %c7_i32 = arith.constant 7 : i32
    %c0_76 = arith.constant 0 : index
    %c0_77 = arith.constant 0 : index
    %98 = vector.load %arg9[%c0_76, %c0_77] : memref<8x128xf32, #tpu.memory_space<vmem>>, vector<8x128xf32>
    %99 = arith.index_cast %c7_i32 : i32 to index
    %c0_78 = arith.constant 0 : index
    %c0_79 = arith.constant 0 : index
    %100 = vector.load %arg10[%99, %c0_78, %c0_79] : memref<8x8x128xf32, #tpu.memory_space<vmem>>, vector<1x8x128xf32>
    %101 = vector.shape_cast %100 : vector<1x8x128xf32> to vector<8x128xf32>
    %cst_80 = arith.constant dense<0.000000e+00> : vector<8x128xf32>
    %102 = tpu.matmul %98, %13, %cst_80 {dimension_numbers = #tpu.dot_dimension_numbers<[1], [0], [0], [1], [0, 0, 1, 1], [], []>, precision = #tpu.contract_precision<fp32>} : vector<8x128xf32>, vector<128x128xf32>, vector<8x128xf32> -> vector<8x128xf32>
    %103 = arith.addf %101, %102 : vector<8x128xf32>
    %104 = math.tanh %103 : vector<8x128xf32>
    %105 = arith.index_cast %c7_i32 : i32 to index
    %c0_81 = arith.constant 0 : index
    %c0_82 = arith.constant 0 : index
    %106 = vector.load %arg10[%105, %c0_81, %c0_82] : memref<8x8x128xf32, #tpu.memory_space<vmem>>, vector<1x8x128xf32>
    %107 = vector.shape_cast %106 : vector<1x8x128xf32> to vector<8x128xf32>
    %108 = vector.shape_cast %104 : vector<8x128xf32> to vector<1x8x128xf32>
    tpu.vector_store %arg10[%105, %c0_81, %c0_82], %108 {strides = array<i32>} : memref<8x8x128xf32, #tpu.memory_space<vmem>>, vector<1x8x128xf32>,
    %c0_83 = arith.constant 0 : index
    %c0_84 = arith.constant 0 : index
    %109 = vector.load %arg9[%c0_83, %c0_84] : memref<8x128xf32, #tpu.memory_space<vmem>>, vector<8x128xf32>
    tpu.vector_store %arg9[%c0_83, %c0_84], %104 {strides = array<i32>} : memref<8x128xf32, #tpu.memory_space<vmem>>, vector<8x128xf32>,
    %c8_i32 = arith.constant 8 : i32
    %c0_85 = arith.constant 0 : index
    %c0_86 = arith.constant 0 : index
    %c0_87 = arith.constant 0 : index
    %110 = vector.load %arg10[%c0_85, %c0_86, %c0_87] : memref<8x8x128xf32, #tpu.memory_space<vmem>>, vector<8x8x128xf32>
    %111 = vector.shape_cast %110 : vector<8x8x128xf32> to vector<64x128xf32>
    %c0_88 = arith.constant 0 : index
    %c0_89 = arith.constant 0 : index
    %112 = vector.load %arg5[%c0_88, %c0_89] : memref<128x128xf32, #tpu.memory_space<vmem>>, vector<128x128xf32>
    %cst_90 = arith.constant dense<0.000000e+00> : vector<64x128xf32>
    %113 = tpu.matmul %111, %112, %cst_90 {dimension_numbers = #tpu.dot_dimension_numbers<[1], [0], [0], [1], [0, 0, 1, 1], [], []>, precision = #tpu.contract_precision<fp32>} : vector<64x128xf32>, vector<128x128xf32>, vector<64x128xf32> -> vector<64x128xf32>
    %114 = vector.shape_cast %113 : vector<64x128xf32> to vector<8x8x128xf32>
    %c0_91 = arith.constant 0 : index
    %c0_92 = arith.constant 0 : index
    %115 = vector.load %arg6[%c0_91, %c0_92] : memref<1x128xf32, #tpu.memory_space<vmem>>, vector<1x128xf32>
    %116 = vector.shape_cast %115 : vector<1x128xf32> to vector<1x1x128xf32>
    %117 = vector.broadcast %116 : vector<1x1x128xf32> to vector<8x8x128xf32>
    %118 = arith.addf %114, %117 : vector<8x8x128xf32>
    %c0_93 = arith.constant 0 : index
    %c0_94 = arith.constant 0 : index
    %c0_95 = arith.constant 0 : index
    %119 = vector.load %arg7[%c0_93, %c0_94, %c0_95] : memref<8x8x128xf32, #tpu.memory_space<vmem>>, vector<8x8x128xf32>
    tpu.vector_store %arg7[%c0_93, %c0_94, %c0_95], %118 {strides = array<i32>} : memref<8x8x128xf32, #tpu.memory_space<vmem>>, vector<8x8x128xf32>,
    %c0_i32_96 = arith.constant 0 : i32
    %120 = arith.cmpi eq, %arg0, %c0_i32_96 : i32
    %121 = arith.extui %120 : i1 to i32
    %c0_i32_97 = arith.constant 0 : i32
    %122 = arith.cmpi ne, %121, %c0_i32_97 : i32
    scf.if %122 {
      %c0_98 = arith.constant 0 : index
      %c0_99 = arith.constant 0 : index
      %123 = vector.load %arg9[%c0_98, %c0_99] : memref<8x128xf32, #tpu.memory_space<vmem>>, vector<8x128xf32>
      %c0_100 = arith.constant 0 : index
      %c0_101 = arith.constant 0 : index
      %c0_102 = arith.constant 0 : index
      %124 = vector.load %arg8[%c0_100, %c0_101, %c0_102] : memref<1x8x128xf32, #tpu.memory_space<vmem>>, vector<1x8x128xf32>
      %125 = vector.shape_cast %124 : vector<1x8x128xf32> to vector<8x128xf32>
      %126 = vector.shape_cast %123 : vector<8x128xf32> to vector<1x8x128xf32>
      tpu.vector_store %arg8[%c0_100, %c0_101, %c0_102], %126 {strides = array<i32>} : memref<1x8x128xf32, #tpu.memory_space<vmem>>, vector<1x8x128xf32>,
    } else {
    }
    return
  }
  func.func @transform_0(%arg0: i32) -> (i32, i32, i32) {
    %c0_i32 = arith.constant 0 : i32
    %c0_i32_0 = arith.constant 0 : i32
    %c0_i32_1 = arith.constant 0 : i32
    return %arg0, %c0_i32, %c0_i32_0 : i32, i32, i32
  }
  func.func @transform_1(%arg0: i32) -> (i32, i32) {
    %c0_i32 = arith.constant 0 : i32
    %c0_i32_0 = arith.constant 0 : i32
    %c0_i32_1 = arith.constant 0 : i32
    return %c0_i32, %c0_i32_0 : i32, i32
  }
  func.func @transform_2(%arg0: i32) -> (i32, i32) {
    %c0_i32 = arith.constant 0 : i32
    %c0_i32_0 = arith.constant 0 : i32
    %c0_i32_1 = arith.constant 0 : i32
    return %c0_i32, %c0_i32_0 : i32, i32
  }
  func.func @transform_3(%arg0: i32) -> (i32, i32) {
    %c0_i32 = arith.constant 0 : i32
    %c0_i32_0 = arith.constant 0 : i32
    %c0_i32_1 = arith.constant 0 : i32
    return %c0_i32, %c0_i32_0 : i32, i32
  }
  func.func @transform_4(%arg0: i32) -> (i32, i32) {
    %c0_i32 = arith.constant 0 : i32
    %c0_i32_0 = arith.constant 0 : i32
    %c0_i32_1 = arith.constant 0 : i32
    return %c0_i32, %c0_i32_0 : i32, i32
  }
  func.func @transform_5(%arg0: i32) -> (i32, i32) {
    %c0_i32 = arith.constant 0 : i32
    %c0_i32_0 = arith.constant 0 : i32
    %c0_i32_1 = arith.constant 0 : i32
    return %c0_i32, %c0_i32_0 : i32, i32
  }
  func.func @transform_6(%arg0: i32) -> (i32, i32, i32) {
    %c0_i32 = arith.constant 0 : i32
    %c0_i32_0 = arith.constant 0 : i32
    %c0_i32_1 = arith.constant 0 : i32
    return %arg0, %c0_i32, %c0_i32_0 : i32, i32, i32
  }
  func.func @transform_7(%arg0: i32) -> (i32, i32, i32) {
    %c0_i32 = arith.constant 0 : i32
    %c0_i32_0 = arith.constant 0 : i32
    %c0_i32_1 = arith.constant 0 : i32
    %c0_i32_2 = arith.constant 0 : i32
    return %c0_i32, %c0_i32_0, %c0_i32_1 : i32, i32, i32
  }
}

</mosaic_0001>

<llo_original>
// kernel: vrnn_forward.1
$region0: #{vrnn_forward.1}
  #allocation0 [shape = 'u32[]', space=smem, size = 0x4, offset = 0x4, fixed_abs, tag = 'smem constant byte address 0x4 - core index']
  #allocation1 [shape = 'u32[144,128]{1,0:T(1,128)}', space=vmem, size = 0x12000, scoped, tag = 'internal scratch']
  #allocation2 [shape = 'f32[8,128]{1,0:T(8,128)}', space=vmem, size = 0x1000, scoped, tag = 'scratch operand']
  #allocation3 [shape = 'f32[8,8,128]{2,1,0:T(8,128)}', space=vmem, size = 0x8000, scoped, tag = 'scratch operand']
  %s0 = inlined_call_operand.vmem [shape: f32[8,8,128], index: 0, kind: input, shape index: {}]
  %s1 = inlined_call_operand.vmem [shape: f32[128,128], index: 1, kind: input, shape index: {}]
  %s2 = inlined_call_operand.vmem [shape: f32[128,128], index: 2, kind: input, shape index: {}]
  %s3 = inlined_call_operand.vmem [shape: f32[1,128], index: 3, kind: input, shape index: {}]
  %s4 = inlined_call_operand.vmem [shape: f32[128,128], index: 4, kind: input, shape index: {}]
  %s5 = inlined_call_operand.vmem [shape: f32[1,128], index: 5, kind: input, shape index: {}]
  %s6 = inlined_call_operand.vmem [shape: f32[8,8,128], index: 6, kind: output, shape index: {0}]
  %s7 = inlined_call_operand.vmem [shape: f32[1,8,128], index: 7, kind: output, shape index: {1}]
  %8 = xla_tuple %s6, %s7
  %s9 = sld [smem:[#allocation0]]
  $region50: #{vrnn_forward.1} parent=0
    _
  %s11 = ssub.s32 1, %s9
  %s12 = scalar_select 0, %s11, %s9
  // Predicated region
  $region2: #{vrnn_forward.1} parent=0 // pred_check
    _
  $region3: #{vrnn_forward.1} parent=0 // pred_check_branch
    %14 = sbr.rel (0) target = $region5
  $region4: #{vrnn_forward.1} parent=0 // pred_region
    _
  $region5: #{vrnn_forward.1} parent=0 // pred_fallthru
    _
  // Predicated region
  $region6: #{vrnn_forward.1} parent=0 // pred_check
    _
  $region7: #{vrnn_forward.1} parent=0 // pred_check_branch
    %16 = sbr.rel (0) target = $region9
  $region8: #{vrnn_forward.1} parent=0 // pred_region
    _
  $region9: #{vrnn_forward.1} parent=0 // pred_fallthru
    _
  // Predicated region
  $region10: #{vrnn_forward.1} parent=0 // pred_check
    _
  $region11: #{vrnn_forward.1} parent=0 // pred_check_branch
    %18 = sbr.rel (0) target = $region13
  $region12: #{vrnn_forward.1} parent=0 // pred_region
    _
  $region13: #{vrnn_forward.1} parent=0 // pred_fallthru
    _
  // Predicated region
  $region14: #{vrnn_forward.1} parent=0 // pred_check
    _
  $region15: #{vrnn_forward.1} parent=0 // pred_check_branch
    %20 = sbr.rel (0) target = $region17
  $region16: #{vrnn_forward.1} parent=0 // pred_region
    _
  $region17: #{vrnn_forward.1} parent=0 // pred_fallthru
    _
  // Predicated region
  $region18: #{vrnn_forward.1} parent=0 // pred_check
    _
  $region19: #{vrnn_forward.1} parent=0 // pred_check_branch
    %22 = sbr.rel (0) target = $region21
  $region20: #{vrnn_forward.1} parent=0 // pred_region
    _
  $region21: #{vrnn_forward.1} parent=0 // pred_fallthru
    _
  // Predicated region
  $region22: #{vrnn_forward.1} parent=0 // pred_check
    _
  $region23: #{vrnn_forward.1} parent=0 // pred_check_branch
    %24 = sbr.rel (0) target = $region25
  $region24: #{vrnn_forward.1} parent=0 // pred_region
    _
  $region25: #{vrnn_forward.1} parent=0 // pred_fallthru
    _
  %p25 = scmp.eq.s32.totalorder 0, 0
  // Predicated region
  $region26: #{vrnn_forward.1} parent=0 // pred_check
    %p26 = pneg %p25
  $region27: #{vrnn_forward.1} parent=0 // pred_check_branch
    %28 = sbr.rel (%p26) target = $region29
  $region28: #{vrnn_forward.1} parent=0 // pred_region
    %29 = vst [vmem:[#allocation2] sm:$0xff] 0.0
  $region29: #{vrnn_forward.1} parent=0 // pred_fallthru
    _
  %v30 = vld [vmem:[%s0] sm:$0xff]
  %v31 = vld [vmem:[%s0 + $0x8] sm:$0xff]
  %v32 = vld [vmem:[%s0 + $0x10] sm:$0xff]
  %v33 = vld [vmem:[%s0 + $0x18] sm:$0xff]
  %v34 = vld [vmem:[%s0 + $0x20] sm:$0xff]
  %v35 = vld [vmem:[%s0 + $0x28] sm:$0xff]
  %v36 = vld [vmem:[%s0 + $0x30] sm:$0xff]
  %v37 = vld [vmem:[%s0 + $0x38] sm:$0xff]
  %v38 = vld [vmem:[%s1] sm:$0xff]
  %v39 = vld [vmem:[%s1 + $0x8] sm:$0xff]
  %v40 = vld [vmem:[%s1 + $0x10] sm:$0xff]
  %v41 = vld [vmem:[%s1 + $0x18] sm:$0xff]
  %v42 = vld [vmem:[%s1 + $0x20] sm:$0xff]
  %v43 = vld [vmem:[%s1 + $0x28] sm:$0xff]
  %v44 = vld [vmem:[%s1 + $0x30] sm:$0xff]
  %v45 = vld [vmem:[%s1 + $0x38] sm:$0xff]
  %v46 = vld [vmem:[%s1 + $0x40] sm:$0xff]
  %v47 = vld [vmem:[%s1 + $0x48] sm:$0xff]
  %v48 = vld [vmem:[%s1 + $0x50] sm:$0xff]
  %v49 = vld [vmem:[%s1 + $0x58] sm:$0xff]
  %v50 = vld [vmem:[%s1 + $0x60] sm:$0xff]
  %v51 = vld [vmem:[%s1 + $0x68] sm:$0xff]
  %v52 = vld [vmem:[%s1 + $0x70] sm:$0xff]
  %v53 = vld [vmem:[%s1 + $0x78] sm:$0xff]
  %54 = vmatprep.subr.mxu0 0.0
  %v55 = vand.u32 %v53, 4294901760
  %56 = vmatpush1.msra.mxu0 %v55
  %57 = vmatprep.subr.mxu0 0.0
  %v58 = vand.u32 %v52, 4294901760
  %59 = vmatpush1.msra.mxu0 %v58
  %60 = vmatprep.subr.mxu0 0.0
  %v61 = vand.u32 %v51, 4294901760
  %62 = vmatpush1.msra.mxu0 %v61
  %63 = vmatprep.subr.mxu0 0.0
  %v64 = vand.u32 %v50, 4294901760
  %65 = vmatpush1.msra.mxu0 %v64
  %66 = vmatprep.subr.mxu0 0.0
  %v67 = vand.u32 %v49, 4294901760
  %68 = vmatpush1.msra.mxu0 %v67
  %69 = vmatprep.subr.mxu0 0.0
  %v70 = vand.u32 %v48, 4294901760
  %71 = vmatpush1.msra.mxu0 %v70
  %72 = vmatprep.subr.mxu0 0.0
  %v73 = vand.u32 %v47, 4294901760
  %74 = vmatpush1.msra.mxu0 %v73
  %75 = vmatprep.subr.mxu0 0.0
  %v76 = vand.u32 %v46, 4294901760
  %77 = vmatpush1.msra.mxu0 %v76
  %78 = vmatprep.subr.mxu0 0.0
  %v79 = vand.u32 %v45, 4294901760
  %80 = vmatpush1.msra.mxu0 %v79
  %81 = vmatprep.subr.mxu0 0.0
  %v82 = vand.u32 %v44, 4294901760
  %83 = vmatpush1.msra.mxu0 %v82
  %84 = vmatprep.subr.mxu0 0.0
  %v85 = vand.u32 %v43, 4294901760
  %86 = vmatpush1.msra.mxu0 %v85
  %87 = vmatprep.subr.mxu0 0.0
  %v88 = vand.u32 %v42, 4294901760
  %89 = vmatpush1.msra.mxu0 %v88
  %90 = vmatprep.subr.mxu0 0.0
  %v91 = vand.u32 %v41, 4294901760
  %92 = vmatpush1.msra.mxu0 %v91
  %93 = vmatprep.subr.mxu0 0.0
  %v94 = vand.u32 %v40, 4294901760
  %95 = vmatpush1.msra.mxu0 %v94
  %96 = vmatprep.subr.mxu0 0.0
  %v97 = vand.u32 %v39, 4294901760
  %98 = vmatpush1.msra.mxu0 %v97
  %99 = vmatprep.subr.mxu0 0.0
  %v100 = vand.u32 %v38, 4294901760
  %101 = vmatpush1.msra.mxu0 %v100
  %102 = vmatprep.subr.mxu0 0.0
  %103 = vmatpush2.msra.mxu0 0.0
  %104 = vmatprep.subr.mxu0 0.0
  %105 = vmatpush2.msra.mxu0 0.0
  %106 = vmatprep.subr.mxu0 0.0
  %107 = vmatpush2.msra.mxu0 0.0
  %108 = vmatprep.subr.mxu0 0.0
  %109 = vmatpush2.msra.mxu0 0.0
  %110 = vmatprep.subr.mxu0 0.0
  %111 = vmatpush2.msra.mxu0 0.0
  %112 = vmatprep.subr.mxu0 0.0
  %113 = vmatpush2.msra.mxu0 0.0
  %114 = vmatprep.subr.mxu0 0.0
  %115 = vmatpush2.msra.mxu0 0.0
  %116 = vmatprep.subr.mxu0 0.0
  %117 = vmatpush2.msra.mxu0 0.0
  %118 = vmatprep.subr.mxu0 0.0
  %119 = vmatpush2.msra.mxu0 0.0
  %120 = vmatprep.subr.mxu0 0.0
  %121 = vmatpush2.msra.mxu0 0.0
  %122 = vmatprep.subr.mxu0 0.0
  %123 = vmatpush2.msra.mxu0 0.0
  %124 = vmatprep.subr.mxu0 0.0
  %125 = vmatpush2.msra.mxu0 0.0
  %126 = vmatprep.subr.mxu0 0.0
  %127 = vmatpush2.msra.mxu0 0.0
  %128 = vmatprep.subr.mxu0 0.0
  %129 = vmatpush2.msra.mxu0 0.0
  %130 = vmatprep.subr.mxu0 0.0
  %131 = vmatpush2.msra.mxu0 0.0
  %132 = vmatprep.subr.mxu0 0.0
  %133 = vmatpush2.msra.mxu0 0.0
  %134 = vmatprep.mubr.f32.mxu0 0.0
  %v135 = vand.u32 %v30, 4294901760
  %v136 = vsub.f32 %v30, %v135
  %v137 = vand.u32 %v136, 4294901760
  %v138 = vsub.f32 %v136, %v137
  %v139 = vand.u32 %v138, 4294901760
  %140 = vmatmul.mubr.f32.gmra.mxu0 %v139
  %v141 = vpop.f32.mrf.mxu0
  %v142 = vadd.f32 0.0, %v141
  %v143 = vpop.f32.mrf.mxu0
  %144 = vmatprep.mubr.f32.mxu0 0.0
  %v145 = vand.u32 %v31, 4294901760
  %v146 = vsub.f32 %v31, %v145
  %v147 = vand.u32 %v146, 4294901760
  %v148 = vsub.f32 %v146, %v147
  %v149 = vand.u32 %v148, 4294901760
  %150 = vmatmul.mubr.f32.gmra.mxu0 %v149
  %v151 = vpop.f32.mrf.mxu0
  %v152 = vadd.f32 0.0, %v151
  %v153 = vpop.f32.mrf.mxu0
  %154 = vmatprep.mubr.f32.mxu0 0.0
  %v155 = vand.u32 %v32, 4294901760
  %v156 = vsub.f32 %v32, %v155
  %v157 = vand.u32 %v156, 4294901760
  %v158 = vsub.f32 %v156, %v157
  %v159 = vand.u32 %v158, 4294901760
  %160 = vmatmul.mubr.f32.gmra.mxu0 %v159
  %v161 = vpop.f32.mrf.mxu0
  %v162 = vadd.f32 0.0, %v161
  %v163 = vpop.f32.mrf.mxu0
  %164 = vmatprep.mubr.f32.mxu0 0.0
  %v165 = vand.u32 %v33, 4294901760
  %v166 = vsub.f32 %v33, %v165
  %v167 = vand.u32 %v166, 4294901760
  %v168 = vsub.f32 %v166, %v167
  %v169 = vand.u32 %v168, 4294901760
  %170 = vmatmul.mubr.f32.gmra.mxu0 %v169
  %v171 = vpop.f32.mrf.mxu0
  %v172 = vadd.f32 0.0, %v171
  %v173 = vpop.f32.mrf.mxu0
  %174 = vmatprep.mubr.f32.mxu0 0.0
  %v175 = vand.u32 %v34, 4294901760
  %v176 = vsub.f32 %v34, %v175
  %v177 = vand.u32 %v176, 4294901760
  %v178 = vsub.f32 %v176, %v177
  %v179 = vand.u32 %v178, 4294901760
  %180 = vmatmul.mubr.f32.gmra.mxu0 %v179
  %v181 = vpop.f32.mrf.mxu0
  %v182 = vadd.f32 0.0, %v181
  %v183 = vpop.f32.mrf.mxu0
  %184 = vmatprep.mubr.f32.mxu0 0.0
  %v185 = vand.u32 %v35, 4294901760
  %v186 = vsub.f32 %v35, %v185
  %v187 = vand.u32 %v186, 4294901760
  %v188 = vsub.f32 %v186, %v187
  %v189 = vand.u32 %v188, 4294901760
  %190 = vmatmul.mubr.f32.gmra.mxu0 %v189
  %v191 = vpop.f32.mrf.mxu0
  %v192 = vadd.f32 0.0, %v191
  %v193 = vpop.f32.mrf.mxu0
  %194 = vmatprep.mubr.f32.mxu0 0.0
  %v195 = vand.u32 %v36, 4294901760
  %v196 = vsub.f32 %v36, %v195
  %v197 = vand.u32 %v196, 4294901760
  %v198 = vsub.f32 %v196, %v197
  %v199 = vand.u32 %v198, 4294901760
  %200 = vmatmul.mubr.f32.gmra.mxu0 %v199
  %v201 = vpop.f32.mrf.mxu0
  %v202 = vadd.f32 0.0, %v201
  %v203 = vpop.f32.mrf.mxu0
  %204 = vmatprep.mubr.f32.mxu0 0.0
  %v205 = vand.u32 %v37, 4294901760
  %v206 = vsub.f32 %v37, %v205
  %v207 = vand.u32 %v206, 4294901760
  %v208 = vsub.f32 %v206, %v207
  %v209 = vand.u32 %v208, 4294901760
  %210 = vmatmul.mubr.f32.gmra.mxu0 %v209
  %v211 = vpop.f32.mrf.mxu0
  %v212 = vadd.f32 0.0, %v211
  %v213 = vpop.f32.mrf.mxu0
  %214 = vdwg.mxu0
  %215 = vmatprep.subr.mxu0 0.0
  %v216 = vand.u32 %v53, 4294901760
  %v217 = vsub.f32 %v53, %v216
  %v218 = vand.u32 %v217, 4294901760
  %v219 = vsub.f32 %v217, %v218
  %v220 = vand.u32 %v219, 4294901760
  %221 = vmatpush1.msra.mxu0 %v220
  %222 = vmatprep.subr.mxu0 0.0
  %v223 = vand.u32 %v52, 4294901760
  %v224 = vsub.f32 %v52, %v223
  %v225 = vand.u32 %v224, 4294901760
  %v226 = vsub.f32 %v224, %v225
  %v227 = vand.u32 %v226, 4294901760
  %228 = vmatpush1.msra.mxu0 %v227
  %229 = vmatprep.subr.mxu0 0.0
  %v230 = vand.u32 %v51, 4294901760
  %v231 = vsub.f32 %v51, %v230
  %v232 = vand.u32 %v231, 4294901760
  %v233 = vsub.f32 %v231, %v232
  %v234 = vand.u32 %v233, 4294901760
  %235 = vmatpush1.msra.mxu0 %v234
  %236 = vmatprep.subr.mxu0 0.0
  %v237 = vand.u32 %v50, 4294901760
  %v238 = vsub.f32 %v50, %v237
  %v239 = vand.u32 %v238, 4294901760
  %v240 = vsub.f32 %v238, %v239
  %v241 = vand.u32 %v240, 4294901760
  %242 = vmatpush1.msra.mxu0 %v241
  %243 = vmatprep.subr.mxu0 0.0
  %v244 = vand.u32 %v49, 4294901760
  %v245 = vsub.f32 %v49, %v244
  %v246 = vand.u32 %v245, 4294901760
  %v247 = vsub.f32 %v245, %v246
  %v248 = vand.u32 %v247, 4294901760
  %249 = vmatpush1.msra.mxu0 %v248
  %250 = vmatprep.subr.mxu0 0.0
  %v251 = vand.u32 %v48, 4294901760
  %v252 = vsub.f32 %v48, %v251
  %v253 = vand.u32 %v252, 4294901760
  %v254 = vsub.f32 %v252, %v253
  %v255 = vand.u32 %v254, 4294901760
  %256 = vmatpush1.msra.mxu0 %v255
  %257 = vmatprep.subr.mxu0 0.0
  %v258 = vand.u32 %v47, 4294901760
  %v259 = vsub.f32 %v47, %v258
  %v260 = vand.u32 %v259, 4294901760
  %v261 = vsub.f32 %v259, %v260
  %v262 = vand.u32 %v261, 4294901760
  %263 = vmatpush1.msra.mxu0 %v262
  %264 = vmatprep.subr.mxu0 0.0
  %v265 = vand.u32 %v46, 4294901760
  %v266 = vsub.f32 %v46, %v265
  %v267 = vand.u32 %v266, 4294901760
  %v268 = vsub.f32 %v266, %v267
  %v269 = vand.u32 %v268, 4294901760
  %270 = vmatpush1.msra.mxu0 %v269
  %271 = vmatprep.subr.mxu0 0.0
  %v272 = vand.u32 %v45, 4294901760
  %v273 = vsub.f32 %v45, %v272
  %v274 = vand.u32 %v273, 4294901760
  %v275 = vsub.f32 %v273, %v274
  %v276 = vand.u32 %v275, 4294901760
  %277 = vmatpush1.msra.mxu0 %v276
  %278 = vmatprep.subr.mxu0 0.0
  %v279 = vand.u32 %v44, 4294901760
  %v280 = vsub.f32 %v44, %v279
  %v281 = vand.u32 %v280, 4294901760
  %v282 = vsub.f32 %v280, %v281
  %v283 = vand.u32 %v282, 4294901760
  %284 = vmatpush1.msra.mxu0 %v283
  %285 = vmatprep.subr.mxu0 0.0
  %v286 = vand.u32 %v43, 4294901760
  %v287 = vsub.f32 %v43, %v286
  %v288 = vand.u32 %v287, 4294901760
  %v289 = vsub.f32 %v287, %v288
  %v290 = vand.u32 %v289, 4294901760
  %291 = vmatpush1.msra.mxu0 %v290
  %292 = vmatprep.subr.mxu0 0.0
  %v293 = vand.u32 %v42, 4294901760
  %v294 = vsub.f32 %v42, %v293
  %v295 = vand.u32 %v294, 4294901760
  %v296 = vsub.f32 %v294, %v295
  %v297 = vand.u32 %v296, 4294901760
  %298 = vmatpush1.msra.mxu0 %v297
  %299 = vmatprep.subr.mxu0 0.0
  %v300 = vand.u32 %v41, 4294901760
  %v301 = vsub.f32 %v41, %v300
  %v302 = vand.u32 %v301, 4294901760
  %v303 = vsub.f32 %v301, %v302
  %v304 = vand.u32 %v303, 4294901760
  %305 = vmatpush1.msra.mxu0 %v304
  %306 = vmatprep.subr.mxu0 0.0
  %v307 = vand.u32 %v40, 4294901760
  %v308 = vsub.f32 %v40, %v307
  %v309 = vand.u32 %v308, 4294901760
  %v310 = vsub.f32 %v308, %v309
  %v311 = vand.u32 %v310, 4294901760
  %312 = vmatpush1.msra.mxu0 %v311
  %313 = vmatprep.subr.mxu0 0.0
  %v314 = vand.u32 %v39, 4294901760
  %v315 = vsub.f32 %v39, %v314
  %v316 = vand.u32 %v315, 4294901760
  %v317 = vsub.f32 %v315, %v316
  %v318 = vand.u32 %v317, 4294901760
  %319 = vmatpush1.msra.mxu0 %v318
  %320 = vmatprep.subr.mxu0 0.0
  %v321 = vand.u32 %v38, 4294901760
  %v322 = vsub.f32 %v38, %v321
  %v323 = vand.u32 %v322, 4294901760
  %v324 = vsub.f32 %v322, %v323
  %v325 = vand.u32 %v324, 4294901760
  %326 = vmatpush1.msra.mxu0 %v325
  %327 = vmatprep.subr.mxu0 0.0
  %328 = vmatpush2.msra.mxu0 0.0
  %329 = vmatprep.subr.mxu0 0.0
  %330 = vmatpush2.msra.mxu0 0.0
  %331 = vmatprep.subr.mxu0 0.0
  %332 = vmatpush2.msra.mxu0 0.0
  %333 = vmatprep.subr.mxu0 0.0
  %334 = vmatpush2.msra.mxu0 0.0
  %335 = vmatprep.subr.mxu0 0.0
  %336 = vmatpush2.msra.mxu0 0.0
  %337 = vmatprep.subr.mxu0 0.0
  %338 = vmatpush2.msra.mxu0 0.0
  %339 = vmatprep.subr.mxu0 0.0
  %340 = vmatpush2.msra.mxu0 0.0
  %341 = vmatprep.subr.mxu0 0.0
  %342 = vmatpush2.msra.mxu0 0.0
  %343 = vmatprep.subr.mxu0 0.0
  %344 = vmatpush2.msra.mxu0 0.0
  %345 = vmatprep.subr.mxu0 0.0
  %346 = vmatpush2.msra.mxu0 0.0
  %347 = vmatprep.subr.mxu0 0.0
  %348 = vmatpush2.msra.mxu0 0.0
  %349 = vmatprep.subr.mxu0 0.0
  %350 = vmatpush2.msra.mxu0 0.0
  %351 = vmatprep.subr.mxu0 0.0
  %352 = vmatpush2.msra.mxu0 0.0
  %353 = vmatprep.subr.mxu0 0.0
  %354 = vmatpush2.msra.mxu0 0.0
  %355 = vmatprep.subr.mxu0 0.0
  %356 = vmatpush2.msra.mxu0 0.0
  %357 = vmatprep.subr.mxu0 0.0
  %358 = vmatpush2.msra.mxu0 0.0
  %359 = vmatprep.mubr.f32.mxu0 0.0
  %v360 = vand.u32 %v30, 4294901760
  %361 = vmatmul.mubr.f32.gmra.mxu0 %v360
  %v362 = vpop.f32.mrf.mxu0
  %v363 = vadd.f32 %v142, %v362
  %v364 = vpop.f32.mrf.mxu0
  %365 = vmatprep.mubr.f32.mxu0 0.0
  %v366 = vand.u32 %v31, 4294901760
  %367 = vmatmul.mubr.f32.gmra.mxu0 %v366
  %v368 = vpop.f32.mrf.mxu0
  %v369 = vadd.f32 %v152, %v368
  %v370 = vpop.f32.mrf.mxu0
  %371 = vmatprep.mubr.f32.mxu0 0.0
  %v372 = vand.u32 %v32, 4294901760
  %373 = vmatmul.mubr.f32.gmra.mxu0 %v372
  %v374 = vpop.f32.mrf.mxu0
  %v375 = vadd.f32 %v162, %v374
  %v376 = vpop.f32.mrf.mxu0
  %377 = vmatprep.mubr.f32.mxu0 0.0
  %v378 = vand.u32 %v33, 4294901760
  %379 = vmatmul.mubr.f32.gmra.mxu0 %v378
  %v380 = vpop.f32.mrf.mxu0
  %v381 = vadd.f32 %v172, %v380
  %v382 = vpop.f32.mrf.mxu0
  %383 = vmatprep.mubr.f32.mxu0 0.0
  %v384 = vand.u32 %v34, 4294901760
  %385 = vmatmul.mubr.f32.gmra.mxu0 %v384
  %v386 = vpop.f32.mrf.mxu0
  %v387 = vadd.f32 %v182, %v386
  %v388 = vpop.f32.mrf.mxu0
  %389 = vmatprep.mubr.f32.mxu0 0.0
  %v390 = vand.u32 %v35, 4294901760
  %391 = vmatmul.mubr.f32.gmra.mxu0 %v390
  %v392 = vpop.f32.mrf.mxu0
  %v393 = vadd.f32 %v192, %v392
  %v394 = vpop.f32.mrf.mxu0
  %395 = vmatprep.mubr.f32.mxu0 0.0
  %v396 = vand.u32 %v36, 4294901760
  %397 = vmatmul.mubr.f32.gmra.mxu0 %v396
  %v398 = vpop.f32.mrf.mxu0
  %v399 = vadd.f32 %v202, %v398
  %v400 = vpop.f32.mrf.mxu0
  %401 = vmatprep.mubr.f32.mxu0 0.0
  %v402 = vand.u32 %v37, 4294901760
  %403 = vmatmul.mubr.f32.gmra.mxu0 %v402
  %v404 = vpop.f32.mrf.mxu0
  %v405 = vadd.f32 %v212, %v404
  %v406 = vpop.f32.mrf.mxu0
  %407 = vdwg.mxu0
  %408 = vmatprep.subr.mxu0 0.0
  %v409 = vand.u32 %v53, 4294901760
  %v410 = vsub.f32 %v53, %v409
  %411 = vmatpush1.msra.mxu0 %v410
  %412 = vmatprep.subr.mxu0 0.0
  %v413 = vand.u32 %v52, 4294901760
  %v414 = vsub.f32 %v52, %v413
  %415 = vmatpush1.msra.mxu0 %v414
  %416 = vmatprep.subr.mxu0 0.0
  %v417 = vand.u32 %v51, 4294901760
  %v418 = vsub.f32 %v51, %v417
  %419 = vmatpush1.msra.mxu0 %v418
  %420 = vmatprep.subr.mxu0 0.0
  %v421 = vand.u32 %v50, 4294901760
  %v422 = vsub.f32 %v50, %v421
  %423 = vmatpush1.msra.mxu0 %v422
  %424 = vmatprep.subr.mxu0 0.0
  %v425 = vand.u32 %v49, 4294901760
  %v426 = vsub.f32 %v49, %v425
  %427 = vmatpush1.msra.mxu0 %v426
  %428 = vmatprep.subr.mxu0 0.0
  %v429 = vand.u32 %v48, 4294901760
  %v430 = vsub.f32 %v48, %v429
  %431 = vmatpush1.msra.mxu0 %v430
  %432 = vmatprep.subr.mxu0 0.0
  %v433 = vand.u32 %v47, 4294901760
  %v434 = vsub.f32 %v47, %v433
  %435 = vmatpush1.msra.mxu0 %v434
  %436 = vmatprep.subr.mxu0 0.0
  %v437 = vand.u32 %v46, 4294901760
  %v438 = vsub.f32 %v46, %v437
  %439 = vmatpush1.msra.mxu0 %v438
  %440 = vmatprep.subr.mxu0 0.0
  %v441 = vand.u32 %v45, 4294901760
  %v442 = vsub.f32 %v45, %v441
  %443 = vmatpush1.msra.mxu0 %v442
  %444 = vmatprep.subr.mxu0 0.0
  %v445 = vand.u32 %v44, 4294901760
  %v446 = vsub.f32 %v44, %v445
  %447 = vmatpush1.msra.mxu0 %v446
  %448 = vmatprep.subr.mxu0 0.0
  %v449 = vand.u32 %v43, 4294901760
  %v450 = vsub.f32 %v43, %v449
  %451 = vmatpush1.msra.mxu0 %v450
  %452 = vmatprep.subr.mxu0 0.0
  %v453 = vand.u32 %v42, 4294901760
  %v454 = vsub.f32 %v42, %v453
  %455 = vmatpush1.msra.mxu0 %v454
  %456 = vmatprep.subr.mxu0 0.0
  %v457 = vand.u32 %v41, 4294901760
  %v458 = vsub.f32 %v41, %v457
  %459 = vmatpush1.msra.mxu0 %v458
  %460 = vmatprep.subr.mxu0 0.0
  %v461 = vand.u32 %v40, 4294901760
  %v462 = vsub.f32 %v40, %v461
  %463 = vmatpush1.msra.mxu0 %v462
  %464 = vmatprep.subr.mxu0 0.0
  %v465 = vand.u32 %v39, 4294901760
  %v466 = vsub.f32 %v39, %v465
  %467 = vmatpush1.msra.mxu0 %v466
  %468 = vmatprep.subr.mxu0 0.0
  %v469 = vand.u32 %v38, 4294901760
  %v470 = vsub.f32 %v38, %v469
  %471 = vmatpush1.msra.mxu0 %v470
  %472 = vmatprep.subr.mxu0 0.0
  %473 = vmatpush2.msra.mxu0 0.0
  %474 = vmatprep.subr.mxu0 0.0
  %475 = vmatpush2.msra.mxu0 0.0
  %476 = vmatprep.subr.mxu0 0.0
  %477 = vmatpush2.msra.mxu0 0.0
  %478 = vmatprep.subr.mxu0 0.0
  %479 = vmatpush2.msra.mxu0 0.0
  %480 = vmatprep.subr.mxu0 0.0
  %481 = vmatpush2.msra.mxu0 0.0
  %482 = vmatprep.subr.mxu0 0.0
  %483 = vmatpush2.msra.mxu0 0.0
  %484 = vmatprep.subr.mxu0 0.0
  %485 = vmatpush2.msra.mxu0 0.0
  %486 = vmatprep.subr.mxu0 0.0
  %487 = vmatpush2.msra.mxu0 0.0
  %488 = vmatprep.subr.mxu0 0.0
  %489 = vmatpush2.msra.mxu0 0.0
  %490 = vmatprep.subr.mxu0 0.0
  %491 = vmatpush2.msra.mxu0 0.0
  %492 = vmatprep.subr.mxu0 0.0
  %493 = vmatpush2.msra.mxu0 0.0
  %494 = vmatprep.subr.mxu0 0.0
  %495 = vmatpush2.msra.mxu0 0.0
  %496 = vmatprep.subr.mxu0 0.0
  %497 = vmatpush2.msra.mxu0 0.0
  %498 = vmatprep.subr.mxu0 0.0
  %499 = vmatpush2.msra.mxu0 0.0
  %500 = vmatprep.subr.mxu0 0.0
  %501 = vmatpush2.msra.mxu0 0.0
  %502 = vmatprep.subr.mxu0 0.0
  %503 = vmatpush2.msra.mxu0 0.0
  %504 = vmatprep.mubr.f32.mxu0 0.0
  %v505 = vand.u32 %v30, 4294901760
  %v506 = vsub.f32 %v30, %v505
  %507 = vmatmul.mubr.f32.gmra.mxu0 %v506
  %v508 = vpop.f32.mrf.mxu0
  %v509 = vadd.f32 %v363, %v508
  %v510 = vpop.f32.mrf.mxu0
  %511 = vmatprep.mubr.f32.mxu0 0.0
  %v512 = vand.u32 %v31, 4294901760
  %v513 = vsub.f32 %v31, %v512
  %514 = vmatmul.mubr.f32.gmra.mxu0 %v513
  %v515 = vpop.f32.mrf.mxu0
  %v516 = vadd.f32 %v369, %v515
  %v517 = vpop.f32.mrf.mxu0
  %518 = vmatprep.mubr.f32.mxu0 0.0
  %v519 = vand.u32 %v32, 4294901760
  %v520 = vsub.f32 %v32, %v519
  %521 = vmatmul.mubr.f32.gmra.mxu0 %v520
  %v522 = vpop.f32.mrf.mxu0
  %v523 = vadd.f32 %v375, %v522
  %v524 = vpop.f32.mrf.mxu0
  %525 = vmatprep.mubr.f32.mxu0 0.0
  %v526 = vand.u32 %v33, 4294901760
  %v527 = vsub.f32 %v33, %v526
  %528 = vmatmul.mubr.f32.gmra.mxu0 %v527
  %v529 = vpop.f32.mrf.mxu0
  %v530 = vadd.f32 %v381, %v529
  %v531 = vpop.f32.mrf.mxu0
  %532 = vmatprep.mubr.f32.mxu0 0.0
  %v533 = vand.u32 %v34, 4294901760
  %v534 = vsub.f32 %v34, %v533
  %535 = vmatmul.mubr.f32.gmra.mxu0 %v534
  %v536 = vpop.f32.mrf.mxu0
  %v537 = vadd.f32 %v387, %v536
  %v538 = vpop.f32.mrf.mxu0
  %539 = vmatprep.mubr.f32.mxu0 0.0
  %v540 = vand.u32 %v35, 4294901760
  %v541 = vsub.f32 %v35, %v540
  %542 = vmatmul.mubr.f32.gmra.mxu0 %v541
  %v543 = vpop.f32.mrf.mxu0
  %v544 = vadd.f32 %v393, %v543
  %v545 = vpop.f32.mrf.mxu0
  %546 = vmatprep.mubr.f32.mxu0 0.0
  %v547 = vand.u32 %v36, 4294901760
  %v548 = vsub.f32 %v36, %v547
  %549 = vmatmul.mubr.f32.gmra.mxu0 %v548
  %v550 = vpop.f32.mrf.mxu0
  %v551 = vadd.f32 %v399, %v550
  %v552 = vpop.f32.mrf.mxu0
  %553 = vmatprep.mubr.f32.mxu0 0.0
  %v554 = vand.u32 %v37, 4294901760
  %v555 = vsub.f32 %v37, %v554
  %556 = vmatmul.mubr.f32.gmra.mxu0 %v555
  %v557 = vpop.f32.mrf.mxu0
  %v558 = vadd.f32 %v405, %v557
  %v559 = vpop.f32.mrf.mxu0
  %560 = vdwg.mxu0
  %561 = vmatprep.subr.mxu0 0.0
  %v562 = vand.u32 %v53, 4294901760
  %563 = vmatpush1.msra.mxu0 %v562
  %564 = vmatprep.subr.mxu0 0.0
  %v565 = vand.u32 %v52, 4294901760
  %566 = vmatpush1.msra.mxu0 %v565
  %567 = vmatprep.subr.mxu0 0.0
  %v568 = vand.u32 %v51, 4294901760
  %569 = vmatpush1.msra.mxu0 %v568
  %570 = vmatprep.subr.mxu0 0.0
  %v571 = vand.u32 %v50, 4294901760
  %572 = vmatpush1.msra.mxu0 %v571
  %573 = vmatprep.subr.mxu0 0.0
  %v574 = vand.u32 %v49, 4294901760
  %575 = vmatpush1.msra.mxu0 %v574
  %576 = vmatprep.subr.mxu0 0.0
  %v577 = vand.u32 %v48, 4294901760
  %578 = vmatpush1.msra.mxu0 %v577
  %579 = vmatprep.subr.mxu0 0.0
  %v580 = vand.u32 %v47, 4294901760
  %581 = vmatpush1.msra.mxu0 %v580
  %582 = vmatprep.subr.mxu0 0.0
  %v583 = vand.u32 %v46, 4294901760
  %584 = vmatpush1.msra.mxu0 %v583
  %585 = vmatprep.subr.mxu0 0.0
  %v586 = vand.u32 %v45, 4294901760
  %587 = vmatpush1.msra.mxu0 %v586
  %588 = vmatprep.subr.mxu0 0.0
  %v589 = vand.u32 %v44, 4294901760
  %590 = vmatpush1.msra.mxu0 %v589
  %591 = vmatprep.subr.mxu0 0.0
  %v592 = vand.u32 %v43, 4294901760
  %593 = vmatpush1.msra.mxu0 %v592
  %594 = vmatprep.subr.mxu0 0.0
  %v595 = vand.u32 %v42, 4294901760
  %596 = vmatpush1.msra.mxu0 %v595
  %597 = vmatprep.subr.mxu0 0.0
  %v598 = vand.u32 %v41, 4294901760
  %599 = vmatpush1.msra.mxu0 %v598
  %600 = vmatprep.subr.mxu0 0.0
  %v601 = vand.u32 %v40, 4294901760
  %602 = vmatpush1.msra.mxu0 %v601
  %603 = vmatprep.subr.mxu0 0.0
  %v604 = vand.u32 %v39, 4294901760
  %605 = vmatpush1.msra.mxu0 %v604
  %606 = vmatprep.subr.mxu0 0.0
  %v607 = vand.u32 %v38, 4294901760
  %608 = vmatpush1.msra.mxu0 %v607
  %609 = vmatprep.subr.mxu0 0.0
  %610 = vmatpush2.msra.mxu0 0.0
  %611 = vmatprep.subr.mxu0 0.0
  %612 = vmatpush2.msra.mxu0 0.0
  %613 = vmatprep.subr.mxu0 0.0
  %614 = vmatpush2.msra.mxu0 0.0
  %615 = vmatprep.subr.mxu0 0.0
  %616 = vmatpush2.msra.mxu0 0.0
  %617 = vmatprep.subr.mxu0 0.0
  %618 = vmatpush2.msra.mxu0 0.0
  %619 = vmatprep.subr.mxu0 0.0
  %620 = vmatpush2.msra.mxu0 0.0
  %621 = vmatprep.subr.mxu0 0.0
  %622 = vmatpush2.msra.mxu0 0.0
  %623 = vmatprep.subr.mxu0 0.0
  %624 = vmatpush2.msra.mxu0 0.0
  %625 = vmatprep.subr.mxu0 0.0
  %626 = vmatpush2.msra.mxu0 0.0
  %627 = vmatprep.subr.mxu0 0.0
  %628 = vmatpush2.msra.mxu0 0.0
  %629 = vmatprep.subr.mxu0 0.0
  %630 = vmatpush2.msra.mxu0 0.0
  %631 = vmatprep.subr.mxu0 0.0
  %632 = vmatpush2.msra.mxu0 0.0
  %633 = vmatprep.subr.mxu0 0.0
  %634 = vmatpush2.msra.mxu0 0.0
  %635 = vmatprep.subr.mxu0 0.0
  %636 = vmatpush2.msra.mxu0 0.0
  %637 = vmatprep.subr.mxu0 0.0
  %638 = vmatpush2.msra.mxu0 0.0
  %639 = vmatprep.subr.mxu0 0.0
  %640 = vmatpush2.msra.mxu0 0.0
  %641 = vmatprep.mubr.f32.mxu0 0.0
  %v642 = vand.u32 %v30, 4294901760
  %v643 = vsub.f32 %v30, %v642
  %v644 = vand.u32 %v643, 4294901760
  %645 = vmatmul.mubr.f32.gmra.mxu0 %v644
  %v646 = vpop.f32.mrf.mxu0
  %v647 = vadd.f32 %v509, %v646
  %v648 = vpop.f32.mrf.mxu0
  %649 = vmatprep.mubr.f32.mxu0 0.0
  %v650 = vand.u32 %v31, 4294901760
  %v651 = vsub.f32 %v31, %v650
  %v652 = vand.u32 %v651, 4294901760
  %653 = vmatmul.mubr.f32.gmra.mxu0 %v652
  %v654 = vpop.f32.mrf.mxu0
  %v655 = vadd.f32 %v516, %v654
  %v656 = vpop.f32.mrf.mxu0
  %657 = vmatprep.mubr.f32.mxu0 0.0
  %v658 = vand.u32 %v32, 4294901760
  %v659 = vsub.f32 %v32, %v658
  %v660 = vand.u32 %v659, 4294901760
  %661 = vmatmul.mubr.f32.gmra.mxu0 %v660
  %v662 = vpop.f32.mrf.mxu0
  %v663 = vadd.f32 %v523, %v662
  %v664 = vpop.f32.mrf.mxu0
  %665 = vmatprep.mubr.f32.mxu0 0.0
  %v666 = vand.u32 %v33, 4294901760
  %v667 = vsub.f32 %v33, %v666
  %v668 = vand.u32 %v667, 4294901760
  %669 = vmatmul.mubr.f32.gmra.mxu0 %v668
  %v670 = vpop.f32.mrf.mxu0
  %v671 = vadd.f32 %v530, %v670
  %v672 = vpop.f32.mrf.mxu0
  %673 = vmatprep.mubr.f32.mxu0 0.0
  %v674 = vand.u32 %v34, 4294901760
  %v675 = vsub.f32 %v34, %v674
  %v676 = vand.u32 %v675, 4294901760
  %677 = vmatmul.mubr.f32.gmra.mxu0 %v676
  %v678 = vpop.f32.mrf.mxu0
  %v679 = vadd.f32 %v537, %v678
  %v680 = vpop.f32.mrf.mxu0
  %681 = vmatprep.mubr.f32.mxu0 0.0
  %v682 = vand.u32 %v35, 4294901760
  %v683 = vsub.f32 %v35, %v682
  %v684 = vand.u32 %v683, 4294901760
  %685 = vmatmul.mubr.f32.gmra.mxu0 %v684
  %v686 = vpop.f32.mrf.mxu0
  %v687 = vadd.f32 %v544, %v686
  %v688 = vpop.f32.mrf.mxu0
  %689 = vmatprep.mubr.f32.mxu0 0.0
  %v690 = vand.u32 %v36, 4294901760
  %v691 = vsub.f32 %v36, %v690
  %v692 = vand.u32 %v691, 4294901760
  %693 = vmatmul.mubr.f32.gmra.mxu0 %v692
  %v694 = vpop.f32.mrf.mxu0
  %v695 = vadd.f32 %v551, %v694
  %v696 = vpop.f32.mrf.mxu0
  %697 = vmatprep.mubr.f32.mxu0 0.0
  %v698 = vand.u32 %v37, 4294901760
  %v699 = vsub.f32 %v37, %v698
  %v700 = vand.u32 %v699, 4294901760
  %701 = vmatmul.mubr.f32.gmra.mxu0 %v700
  %v702 = vpop.f32.mrf.mxu0
  %v703 = vadd.f32 %v558, %v702
  %v704 = vpop.f32.mrf.mxu0
  %705 = vdwg.mxu0
  %706 = vmatprep.subr.mxu0 0.0
  %v707 = vand.u32 %v53, 4294901760
  %v708 = vsub.f32 %v53, %v707
  %v709 = vand.u32 %v708, 4294901760
  %710 = vmatpush1.msra.mxu0 %v709
  %711 = vmatprep.subr.mxu0 0.0
  %v712 = vand.u32 %v52, 4294901760
  %v713 = vsub.f32 %v52, %v712
  %v714 = vand.u32 %v713, 4294901760
  %715 = vmatpush1.msra.mxu0 %v714
  %716 = vmatprep.subr.mxu0 0.0
  %v717 = vand.u32 %v51, 4294901760
  %v718 = vsub.f32 %v51, %v717
  %v719 = vand.u32 %v718, 4294901760
  %720 = vmatpush1.msra.mxu0 %v719
  %721 = vmatprep.subr.mxu0 0.0
  %v722 = vand.u32 %v50, 4294901760
  %v723 = vsub.f32 %v50, %v722
  %v724 = vand.u32 %v723, 4294901760
  %725 = vmatpush1.msra.mxu0 %v724
  %726 = vmatprep.subr.mxu0 0.0
  %v727 = vand.u32 %v49, 4294901760
  %v728 = vsub.f32 %v49, %v727
  %v729 = vand.u32 %v728, 4294901760
  %730 = vmatpush1.msra.mxu0 %v729
  %731 = vmatprep.subr.mxu0 0.0
  %v732 = vand.u32 %v48, 4294901760
  %v733 = vsub.f32 %v48, %v732
  %v734 = vand.u32 %v733, 4294901760
  %735 = vmatpush1.msra.mxu0 %v734
  %736 = vmatprep.subr.mxu0 0.0
  %v737 = vand.u32 %v47, 4294901760
  %v738 = vsub.f32 %v47, %v737
  %v739 = vand.u32 %v738, 4294901760
  %740 = vmatpush1.msra.mxu0 %v739
  %741 = vmatprep.subr.mxu0 0.0
  %v742 = vand.u32 %v46, 4294901760
  %v743 = vsub.f32 %v46, %v742
  %v744 = vand.u32 %v743, 4294901760
  %745 = vmatpush1.msra.mxu0 %v744
  %746 = vmatprep.subr.mxu0 0.0
  %v747 = vand.u32 %v45, 4294901760
  %v748 = vsub.f32 %v45, %v747
  %v749 = vand.u32 %v748, 4294901760
  %750 = vmatpush1.msra.mxu0 %v749
  %751 = vmatprep.subr.mxu0 0.0
  %v752 = vand.u32 %v44, 4294901760
  %v753 = vsub.f32 %v44, %v752
  %v754 = vand.u32 %v753, 4294901760
  %755 = vmatpush1.msra.mxu0 %v754
  %756 = vmatprep.subr.mxu0 0.0
  %v757 = vand.u32 %v43, 4294901760
  %v758 = vsub.f32 %v43, %v757
  %v759 = vand.u32 %v758, 4294901760
  %760 = vmatpush1.msra.mxu0 %v759
  %761 = vmatprep.subr.mxu0 0.0
  %v762 = vand.u32 %v42, 4294901760
  %v763 = vsub.f32 %v42, %v762
  %v764 = vand.u32 %v763, 4294901760
  %765 = vmatpush1.msra.mxu0 %v764
  %766 = vmatprep.subr.mxu0 0.0
  %v767 = vand.u32 %v41, 4294901760
  %v768 = vsub.f32 %v41, %v767
  %v769 = vand.u32 %v768, 4294901760
  %770 = vmatpush1.msra.mxu0 %v769
  %771 = vmatprep.subr.mxu0 0.0
  %v772 = vand.u32 %v40, 4294901760
  %v773 = vsub.f32 %v40, %v772
  %v774 = vand.u32 %v773, 4294901760
  %775 = vmatpush1.msra.mxu0 %v774
  %776 = vmatprep.subr.mxu0 0.0
  %v777 = vand.u32 %v39, 4294901760
  %v778 = vsub.f32 %v39, %v777
  %v779 = vand.u32 %v778, 4294901760
  %780 = vmatpush1.msra.mxu0 %v779
  %781 = vmatprep.subr.mxu0 0.0
  %v782 = vand.u32 %v38, 4294901760
  %v783 = vsub.f32 %v38, %v782
  %v784 = vand.u32 %v783, 4294901760
  %785 = vmatpush1.msra.mxu0 %v784
  %786 = vmatprep.subr.mxu0 0.0
  %787 = vmatpush2.msra.mxu0 0.0
  %788 = vmatprep.subr.mxu0 0.0
  %789 = vmatpush2.msra.mxu0 0.0
  %790 = vmatprep.subr.mxu0 0.0
  %791 = vmatpush2.msra.mxu0 0.0
  %792 = vmatprep.subr.mxu0 0.0
  %793 = vmatpush2.msra.mxu0 0.0
  %794 = vmatprep.subr.mxu0 0.0
  %795 = vmatpush2.msra.mxu0 0.0
  %796 = vmatprep.subr.mxu0 0.0
  %797 = vmatpush2.msra.mxu0 0.0
  %798 = vmatprep.subr.mxu0 0.0
  %799 = vmatpush2.msra.mxu0 0.0
  %800 = vmatprep.subr.mxu0 0.0
  %801 = vmatpush2.msra.mxu0 0.0
  %802 = vmatprep.subr.mxu0 0.0
  %803 = vmatpush2.msra.mxu0 0.0
  %804 = vmatprep.subr.mxu0 0.0
  %805 = vmatpush2.msra.mxu0 0.0
  %806 = vmatprep.subr.mxu0 0.0
  %807 = vmatpush2.msra.mxu0 0.0
  %808 = vmatprep.subr.mxu0 0.0
  %809 = vmatpush2.msra.mxu0 0.0
  %810 = vmatprep.subr.mxu0 0.0
  %811 = vmatpush2.msra.mxu0 0.0
  %812 = vmatprep.subr.mxu0 0.0
  %813 = vmatpush2.msra.mxu0 0.0
  %814 = vmatprep.subr.mxu0 0.0
  %815 = vmatpush2.msra.mxu0 0.0
  %816 = vmatprep.subr.mxu0 0.0
  %817 = vmatpush2.msra.mxu0 0.0
  %818 = vmatprep.mubr.f32.mxu0 0.0
  %v819 = vand.u32 %v30, 4294901760
  %820 = vmatmul.mubr.f32.gmra.mxu0 %v819
  %v821 = vpop.f32.mrf.mxu0
  %v822 = vadd.f32 %v647, %v821
  %v823 = vpop.f32.mrf.mxu0
  %824 = vmatprep.mubr.f32.mxu0 0.0
  %v825 = vand.u32 %v31, 4294901760
  %826 = vmatmul.mubr.f32.gmra.mxu0 %v825
  %v827 = vpop.f32.mrf.mxu0
  %v828 = vadd.f32 %v655, %v827
  %v829 = vpop.f32.mrf.mxu0
  %830 = vmatprep.mubr.f32.mxu0 0.0
  %v831 = vand.u32 %v32, 4294901760
  %832 = vmatmul.mubr.f32.gmra.mxu0 %v831
  %v833 = vpop.f32.mrf.mxu0
  %v834 = vadd.f32 %v663, %v833
  %v835 = vpop.f32.mrf.mxu0
  %836 = vmatprep.mubr.f32.mxu0 0.0
  %v837 = vand.u32 %v33, 4294901760
  %838 = vmatmul.mubr.f32.gmra.mxu0 %v837
  %v839 = vpop.f32.mrf.mxu0
  %v840 = vadd.f32 %v671, %v839
  %v841 = vpop.f32.mrf.mxu0
  %842 = vmatprep.mubr.f32.mxu0 0.0
  %v843 = vand.u32 %v34, 4294901760
  %844 = vmatmul.mubr.f32.gmra.mxu0 %v843
  %v845 = vpop.f32.mrf.mxu0
  %v846 = vadd.f32 %v679, %v845
  %v847 = vpop.f32.mrf.mxu0
  %848 = vmatprep.mubr.f32.mxu0 0.0
  %v849 = vand.u32 %v35, 4294901760
  %850 = vmatmul.mubr.f32.gmra.mxu0 %v849
  %v851 = vpop.f32.mrf.mxu0
  %v852 = vadd.f32 %v687, %v851
  %v853 = vpop.f32.mrf.mxu0
  %854 = vmatprep.mubr.f32.mxu0 0.0
  %v855 = vand.u32 %v36, 4294901760
  %856 = vmatmul.mubr.f32.gmra.mxu0 %v855
  %v857 = vpop.f32.mrf.mxu0
  %v858 = vadd.f32 %v695, %v857
  %v859 = vpop.f32.mrf.mxu0
  %860 = vmatprep.mubr.f32.mxu0 0.0
  %v861 = vand.u32 %v37, 4294901760
  %862 = vmatmul.mubr.f32.gmra.mxu0 %v861
  %v863 = vpop.f32.mrf.mxu0
  %v864 = vadd.f32 %v703, %v863
  %v865 = vpop.f32.mrf.mxu0
  %866 = vdwg.mxu0
  %867 = vmatprep.subr.mxu0 0.0
  %v868 = vand.u32 %v53, 4294901760
  %869 = vmatpush1.msra.mxu0 %v868
  %870 = vmatprep.subr.mxu0 0.0
  %v871 = vand.u32 %v52, 4294901760
  %872 = vmatpush1.msra.mxu0 %v871
  %873 = vmatprep.subr.mxu0 0.0
  %v874 = vand.u32 %v51, 4294901760
  %875 = vmatpush1.msra.mxu0 %v874
  %876 = vmatprep.subr.mxu0 0.0
  %v877 = vand.u32 %v50, 4294901760
  %878 = vmatpush1.msra.mxu0 %v877
  %879 = vmatprep.subr.mxu0 0.0
  %v880 = vand.u32 %v49, 4294901760
  %881 = vmatpush1.msra.mxu0 %v880
  %882 = vmatprep.subr.mxu0 0.0
  %v883 = vand.u32 %v48, 4294901760
  %884 = vmatpush1.msra.mxu0 %v883
  %885 = vmatprep.subr.mxu0 0.0
  %v886 = vand.u32 %v47, 4294901760
  %887 = vmatpush1.msra.mxu0 %v886
  %888 = vmatprep.subr.mxu0 0.0
  %v889 = vand.u32 %v46, 4294901760
  %890 = vmatpush1.msra.mxu0 %v889
  %891 = vmatprep.subr.mxu0 0.0
  %v892 = vand.u32 %v45, 4294901760
  %893 = vmatpush1.msra.mxu0 %v892
  %894 = vmatprep.subr.mxu0 0.0
  %v895 = vand.u32 %v44, 4294901760
  %896 = vmatpush1.msra.mxu0 %v895
  %897 = vmatprep.subr.mxu0 0.0
  %v898 = vand.u32 %v43, 4294901760
  %899 = vmatpush1.msra.mxu0 %v898
  %900 = vmatprep.subr.mxu0 0.0
  %v901 = vand.u32 %v42, 4294901760
  %902 = vmatpush1.msra.mxu0 %v901
  %903 = vmatprep.subr.mxu0 0.0
  %v904 = vand.u32 %v41, 4294901760
  %905 = vmatpush1.msra.mxu0 %v904
  %906 = vmatprep.subr.mxu0 0.0
  %v907 = vand.u32 %v40, 4294901760
  %908 = vmatpush1.msra.mxu0 %v907
  %909 = vmatprep.subr.mxu0 0.0
  %v910 = vand.u32 %v39, 4294901760
  %911 = vmatpush1.msra.mxu0 %v910
  %912 = vmatprep.subr.mxu0 0.0
  %v913 = vand.u32 %v38, 4294901760
  %914 = vmatpush1.msra.mxu0 %v913
  %915 = vmatprep.subr.mxu0 0.0
  %916 = vmatpush2.msra.mxu0 0.0
  %917 = vmatprep.subr.mxu0 0.0
  %918 = vmatpush2.msra.mxu0 0.0
  %919 = vmatprep.subr.mxu0 0.0
  %920 = vmatpush2.msra.mxu0 0.0
  %921 = vmatprep.subr.mxu0 0.0
  %922 = vmatpush2.msra.mxu0 0.0
  %923 = vmatprep.subr.mxu0 0.0
  %924 = vmatpush2.msra.mxu0 0.0
  %925 = vmatprep.subr.mxu0 0.0
  %926 = vmatpush2.msra.mxu0 0.0
  %927 = vmatprep.subr.mxu0 0.0
  %928 = vmatpush2.msra.mxu0 0.0
  %929 = vmatprep.subr.mxu0 0.0
  %930 = vmatpush2.msra.mxu0 0.0
  %931 = vmatprep.subr.mxu0 0.0
  %932 = vmatpush2.msra.mxu0 0.0
  %933 = vmatprep.subr.mxu0 0.0
  %934 = vmatpush2.msra.mxu0 0.0
  %935 = vmatprep.subr.mxu0 0.0
  %936 = vmatpush2.msra.mxu0 0.0
  %937 = vmatprep.subr.mxu0 0.0
  %938 = vmatpush2.msra.mxu0 0.0
  %939 = vmatprep.subr.mxu0 0.0
  %940 = vmatpush2.msra.mxu0 0.0
  %941 = vmatprep.subr.mxu0 0.0
  %942 = vmatpush2.msra.mxu0 0.0
  %943 = vmatprep.subr.mxu0 0.0
  %944 = vmatpush2.msra.mxu0 0.0
  %945 = vmatprep.subr.mxu0 0.0
  %946 = vmatpush2.msra.mxu0 0.0
  %947 = vmatprep.mubr.f32.mxu0 0.0
  %v948 = vand.u32 %v30, 4294901760
  %949 = vmatmul.mubr.f32.gmra.mxu0 %v948
  %v950 = vpop.f32.mrf.mxu0
  %v951 = vadd.f32 %v822, %v950
  %v952 = vpop.f32.mrf.mxu0
  %953 = vmatprep.mubr.f32.mxu0 0.0
  %v954 = vand.u32 %v31, 4294901760
  %955 = vmatmul.mubr.f32.gmra.mxu0 %v954
  %v956 = vpop.f32.mrf.mxu0
  %v957 = vadd.f32 %v828, %v956
  %v958 = vpop.f32.mrf.mxu0
  %959 = vmatprep.mubr.f32.mxu0 0.0
  %v960 = vand.u32 %v32, 4294901760
  %961 = vmatmul.mubr.f32.gmra.mxu0 %v960
  %v962 = vpop.f32.mrf.mxu0
  %v963 = vadd.f32 %v834, %v962
  %v964 = vpop.f32.mrf.mxu0
  %965 = vmatprep.mubr.f32.mxu0 0.0
  %v966 = vand.u32 %v33, 4294901760
  %967 = vmatmul.mubr.f32.gmra.mxu0 %v966
  %v968 = vpop.f32.mrf.mxu0
  %v969 = vadd.f32 %v840, %v968
  %v970 = vpop.f32.mrf.mxu0
  %971 = vmatprep.mubr.f32.mxu0 0.0
  %v972 = vand.u32 %v34, 4294901760
  %973 = vmatmul.mubr.f32.gmra.mxu0 %v972
  %v974 = vpop.f32.mrf.mxu0
  %v975 = vadd.f32 %v846, %v974
  %v976 = vpop.f32.mrf.mxu0
  %977 = vmatprep.mubr.f32.mxu0 0.0
  %v978 = vand.u32 %v35, 4294901760
  %979 = vmatmul.mubr.f32.gmra.mxu0 %v978
  %v980 = vpop.f32.mrf.mxu0
  %v981 = vadd.f32 %v852, %v980
  %v982 = vpop.f32.mrf.mxu0
  %983 = vmatprep.mubr.f32.mxu0 0.0
  %v984 = vand.u32 %v36, 4294901760
  %985 = vmatmul.mubr.f32.gmra.mxu0 %v984
  %v986 = vpop.f32.mrf.mxu0
  %v987 = vadd.f32 %v858, %v986
  %v988 = vpop.f32.mrf.mxu0
  %989 = vmatprep.mubr.f32.mxu0 0.0
  %v990 = vand.u32 %v37, 4294901760
  %991 = vmatmul.mubr.f32.gmra.mxu0 %v990
  %v992 = vpop.f32.mrf.mxu0
  %v993 = vadd.f32 %v864, %v992
  %v994 = vpop.f32.mrf.mxu0
  %995 = vdwg.mxu0
  %v996 = vld [vmem:[%s3] sm:$0x1]
  %v998 = vlaneseq
  %v999 = vshrl.u32 %v998, 7
  %v1000 = vsub.s32 0, %v999
  %v1001 = vrot.slane %v996, %v1000
  %v1003 = vadd.f32 %v951, %v1001
  %v1004 = vadd.f32 %v957, %v1001
  %v1005 = vadd.f32 %v963, %v1001
  %v1006 = vadd.f32 %v969, %v1001
  %v1007 = vadd.f32 %v975, %v1001
  %v1008 = vadd.f32 %v981, %v1001
  %v1009 = vadd.f32 %v987, %v1001
  %v1010 = vadd.f32 %v993, %v1001
  %1011 = vst [vmem:[#allocation3] sm:$0xff] %v1003
  %1012 = vst [vmem:[#allocation3 + $0x8] sm:$0xff] %v1004
  %1013 = vst [vmem:[#allocation3 + $0x10] sm:$0xff] %v1005
  %1014 = vst [vmem:[#allocation3 + $0x18] sm:$0xff] %v1006
  %1015 = vst [vmem:[#allocation3 + $0x20] sm:$0xff] %v1007
  %1016 = vst [vmem:[#allocation3 + $0x28] sm:$0xff] %v1008
  %1017 = vst [vmem:[#allocation3 + $0x30] sm:$0xff] %v1009
  %1018 = vst [vmem:[#allocation3 + $0x38] sm:$0xff] %v1010
  %v1019 = vld [vmem:[%s2] sm:$0xff]
  %v1020 = vld [vmem:[%s2 + $0x8] sm:$0xff]
  %v1021 = vld [vmem:[%s2 + $0x10] sm:$0xff]
  %v1022 = vld [vmem:[%s2 + $0x18] sm:$0xff]
  %v1023 = vld [vmem:[%s2 + $0x20] sm:$0xff]
  %v1024 = vld [vmem:[%s2 + $0x28] sm:$0xff]
  %v1025 = vld [vmem:[%s2 + $0x30] sm:$0xff]
  %v1026 = vld [vmem:[%s2 + $0x38] sm:$0xff]
  %v1027 = vld [vmem:[%s2 + $0x40] sm:$0xff]
  %v1028 = vld [vmem:[%s2 + $0x48] sm:$0xff]
  %v1029 = vld [vmem:[%s2 + $0x50] sm:$0xff]
  %v1030 = vld [vmem:[%s2 + $0x58] sm:$0xff]
  %v1031 = vld [vmem:[%s2 + $0x60] sm:$0xff]
  %v1032 = vld [vmem:[%s2 + $0x68] sm:$0xff]
  %v1033 = vld [vmem:[%s2 + $0x70] sm:$0xff]
  %v1034 = vld [vmem:[%s2 + $0x78] sm:$0xff]
  %v1035 = vld [vmem:[#allocation2] sm:$0xff]
  %v1036 = vld [vmem:[#allocation3] sm:$0xff]
  %1037 = vmatprep.subr.mxu0 0.0
  %v1038 = vand.u32 %v1034, 4294901760
  %1039 = vmatpush1.msra.mxu0 %v1038
  %1040 = vmatprep.subr.mxu0 0.0
  %v1041 = vand.u32 %v1033, 4294901760
  %1042 = vmatpush1.msra.mxu0 %v1041
  %1043 = vmatprep.subr.mxu0 0.0
  %v1044 = vand.u32 %v1032, 4294901760
  %1045 = vmatpush1.msra.mxu0 %v1044
  %1046 = vmatprep.subr.mxu0 0.0
  %v1047 = vand.u32 %v1031, 4294901760
  %1048 = vmatpush1.msra.mxu0 %v1047
  %1049 = vmatprep.subr.mxu0 0.0
  %v1050 = vand.u32 %v1030, 4294901760
  %1051 = vmatpush1.msra.mxu0 %v1050
  %1052 = vmatprep.subr.mxu0 0.0
  %v1053 = vand.u32 %v1029, 4294901760
  %1054 = vmatpush1.msra.mxu0 %v1053
  %1055 = vmatprep.subr.mxu0 0.0
  %v1056 = vand.u32 %v1028, 4294901760
  %1057 = vmatpush1.msra.mxu0 %v1056
  %1058 = vmatprep.subr.mxu0 0.0
  %v1059 = vand.u32 %v1027, 4294901760
  %1060 = vmatpush1.msra.mxu0 %v1059
  %1061 = vmatprep.subr.mxu0 0.0
  %v1062 = vand.u32 %v1026, 4294901760
  %1063 = vmatpush1.msra.mxu0 %v1062
  %1064 = vmatprep.subr.mxu0 0.0
  %v1065 = vand.u32 %v1025, 4294901760
  %1066 = vmatpush1.msra.mxu0 %v1065
  %1067 = vmatprep.subr.mxu0 0.0
  %v1068 = vand.u32 %v1024, 4294901760
  %1069 = vmatpush1.msra.mxu0 %v1068
  %1070 = vmatprep.subr.mxu0 0.0
  %v1071 = vand.u32 %v1023, 4294901760
  %1072 = vmatpush1.msra.mxu0 %v1071
  %1073 = vmatprep.subr.mxu0 0.0
  %v1074 = vand.u32 %v1022, 4294901760
  %1075 = vmatpush1.msra.mxu0 %v1074
  %1076 = vmatprep.subr.mxu0 0.0
  %v1077 = vand.u32 %v1021, 4294901760
  %1078 = vmatpush1.msra.mxu0 %v1077
  %1079 = vmatprep.subr.mxu0 0.0
  %v1080 = vand.u32 %v1020, 4294901760
  %1081 = vmatpush1.msra.mxu0 %v1080
  %1082 = vmatprep.subr.mxu0 0.0
  %v1083 = vand.u32 %v1019, 4294901760
  %1084 = vmatpush1.msra.mxu0 %v1083
  %1085 = vmatprep.subr.mxu0 0.0
  %1086 = vmatpush2.msra.mxu0 0.0
  %1087 = vmatprep.subr.mxu0 0.0
  %1088 = vmatpush2.msra.mxu0 0.0
  %1089 = vmatprep.subr.mxu0 0.0
  %1090 = vmatpush2.msra.mxu0 0.0
  %1091 = vmatprep.subr.mxu0 0.0
  %1092 = vmatpush2.msra.mxu0 0.0
  %1093 = vmatprep.subr.mxu0 0.0
  %1094 = vmatpush2.msra.mxu0 0.0
  %1095 = vmatprep.subr.mxu0 0.0
  %1096 = vmatpush2.msra.mxu0 0.0
  %1097 = vmatprep.subr.mxu0 0.0
  %1098 = vmatpush2.msra.mxu0 0.0
  %1099 = vmatprep.subr.mxu0 0.0
  %1100 = vmatpush2.msra.mxu0 0.0
  %1101 = vmatprep.subr.mxu0 0.0
  %1102 = vmatpush2.msra.mxu0 0.0
  %1103 = vmatprep.subr.mxu0 0.0
  %1104 = vmatpush2.msra.mxu0 0.0
  %1105 = vmatprep.subr.mxu0 0.0
  %1106 = vmatpush2.msra.mxu0 0.0
  %1107 = vmatprep.subr.mxu0 0.0
  %1108 = vmatpush2.msra.mxu0 0.0
  %1109 = vmatprep.subr.mxu0 0.0
  %1110 = vmatpush2.msra.mxu0 0.0
  %1111 = vmatprep.subr.mxu0 0.0
  %1112 = vmatpush2.msra.mxu0 0.0
  %1113 = vmatprep.subr.mxu0 0.0
  %1114 = vmatpush2.msra.mxu0 0.0
  %1115 = vmatprep.subr.mxu0 0.0
  %1116 = vmatpush2.msra.mxu0 0.0
  %1117 = vmatprep.mubr.f32.mxu0 0.0
  %v1118 = vand.u32 %v1035, 4294901760
  %v1119 = vsub.f32 %v1035, %v1118
  %v1120 = vand.u32 %v1119, 4294901760
  %v1121 = vsub.f32 %v1119, %v1120
  %v1122 = vand.u32 %v1121, 4294901760
  %1123 = vmatmul.mubr.f32.gmra.mxu0 %v1122
  %v1124 = vpop.f32.mrf.mxu0
  %v1125 = vadd.f32 0.0, %v1124
  %v1126 = vpop.f32.mrf.mxu0
  %1127 = vdwg.mxu0
  %1128 = vmatprep.subr.mxu0 0.0
  %v1129 = vand.u32 %v1034, 4294901760
  %v1130 = vsub.f32 %v1034, %v1129
  %v1131 = vand.u32 %v1130, 4294901760
  %v1132 = vsub.f32 %v1130, %v1131
  %v1133 = vand.u32 %v1132, 4294901760
  %1134 = vmatpush1.msra.mxu0 %v1133
  %1135 = vmatprep.subr.mxu0 0.0
  %v1136 = vand.u32 %v1033, 4294901760
  %v1137 = vsub.f32 %v1033, %v1136
  %v1138 = vand.u32 %v1137, 4294901760
  %v1139 = vsub.f32 %v1137, %v1138
  %v1140 = vand.u32 %v1139, 4294901760
  %1141 = vmatpush1.msra.mxu0 %v1140
  %1142 = vmatprep.subr.mxu0 0.0
  %v1143 = vand.u32 %v1032, 4294901760
  %v1144 = vsub.f32 %v1032, %v1143
  %v1145 = vand.u32 %v1144, 4294901760
  %v1146 = vsub.f32 %v1144, %v1145
  %v1147 = vand.u32 %v1146, 4294901760
  %1148 = vmatpush1.msra.mxu0 %v1147
  %1149 = vmatprep.subr.mxu0 0.0
  %v1150 = vand.u32 %v1031, 4294901760
  %v1151 = vsub.f32 %v1031, %v1150
  %v1152 = vand.u32 %v1151, 4294901760
  %v1153 = vsub.f32 %v1151, %v1152
  %v1154 = vand.u32 %v1153, 4294901760
  %1155 = vmatpush1.msra.mxu0 %v1154
  %1156 = vmatprep.subr.mxu0 0.0
  %v1157 = vand.u32 %v1030, 4294901760
  %v1158 = vsub.f32 %v1030, %v1157
  %v1159 = vand.u32 %v1158, 4294901760
  %v1160 = vsub.f32 %v1158, %v1159
  %v1161 = vand.u32 %v1160, 4294901760
  %1162 = vmatpush1.msra.mxu0 %v1161
  %1163 = vmatprep.subr.mxu0 0.0
  %v1164 = vand.u32 %v1029, 4294901760
  %v1165 = vsub.f32 %v1029, %v1164
  %v1166 = vand.u32 %v1165, 4294901760
  %v1167 = vsub.f32 %v1165, %v1166
  %v1168 = vand.u32 %v1167, 4294901760
  %1169 = vmatpush1.msra.mxu0 %v1168
  %1170 = vmatprep.subr.mxu0 0.0
  %v1171 = vand.u32 %v1028, 4294901760
  %v1172 = vsub.f32 %v1028, %v1171
  %v1173 = vand.u32 %v1172, 4294901760
  %v1174 = vsub.f32 %v1172, %v1173
  %v1175 = vand.u32 %v1174, 4294901760
  %1176 = vmatpush1.msra.mxu0 %v1175
  %1177 = vmatprep.subr.mxu0 0.0
  %v1178 = vand.u32 %v1027, 4294901760
  %v1179 = vsub.f32 %v1027, %v1178
  %v1180 = vand.u32 %v1179, 4294901760
  %v1181 = vsub.f32 %v1179, %v1180
  %v1182 = vand.u32 %v1181, 4294901760
  %1183 = vmatpush1.msra.mxu0 %v1182
  %1184 = vmatprep.subr.mxu0 0.0
  %v1185 = vand.u32 %v1026, 4294901760
  %v1186 = vsub.f32 %v1026, %v1185
  %v1187 = vand.u32 %v1186, 4294901760
  %v1188 = vsub.f32 %v1186, %v1187
  %v1189 = vand.u32 %v1188, 4294901760
  %1190 = vmatpush1.msra.mxu0 %v1189
  %1191 = vmatprep.subr.mxu0 0.0
  %v1192 = vand.u32 %v1025, 4294901760
  %v1193 = vsub.f32 %v1025, %v1192
  %v1194 = vand.u32 %v1193, 4294901760
  %v1195 = vsub.f32 %v1193, %v1194
  %v1196 = vand.u32 %v1195, 4294901760
  %1197 = vmatpush1.msra.mxu0 %v1196
  %1198 = vmatprep.subr.mxu0 0.0
  %v1199 = vand.u32 %v1024, 4294901760
  %v1200 = vsub.f32 %v1024, %v1199
  %v1201 = vand.u32 %v1200, 4294901760
  %v1202 = vsub.f32 %v1200, %v1201
  %v1203 = vand.u32 %v1202, 4294901760
  %1204 = vmatpush1.msra.mxu0 %v1203
  %1205 = vmatprep.subr.mxu0 0.0
  %v1206 = vand.u32 %v1023, 4294901760
  %v1207 = vsub.f32 %v1023, %v1206
  %v1208 = vand.u32 %v1207, 4294901760
  %v1209 = vsub.f32 %v1207, %v1208
  %v1210 = vand.u32 %v1209, 4294901760
  %1211 = vmatpush1.msra.mxu0 %v1210
  %1212 = vmatprep.subr.mxu0 0.0
  %v1213 = vand.u32 %v1022, 4294901760
  %v1214 = vsub.f32 %v1022, %v1213
  %v1215 = vand.u32 %v1214, 4294901760
  %v1216 = vsub.f32 %v1214, %v1215
  %v1217 = vand.u32 %v1216, 4294901760
  %1218 = vmatpush1.msra.mxu0 %v1217
  %1219 = vmatprep.subr.mxu0 0.0
  %v1220 = vand.u32 %v1021, 4294901760
  %v1221 = vsub.f32 %v1021, %v1220
  %v1222 = vand.u32 %v1221, 4294901760
  %v1223 = vsub.f32 %v1221, %v1222
  %v1224 = vand.u32 %v1223, 4294901760
  %1225 = vmatpush1.msra.mxu0 %v1224
  %1226 = vmatprep.subr.mxu0 0.0
  %v1227 = vand.u32 %v1020, 4294901760
  %v1228 = vsub.f32 %v1020, %v1227
  %v1229 = vand.u32 %v1228, 4294901760
  %v1230 = vsub.f32 %v1228, %v1229
  %v1231 = vand.u32 %v1230, 4294901760
  %1232 = vmatpush1.msra.mxu0 %v1231
  %1233 = vmatprep.subr.mxu0 0.0
  %v1234 = vand.u32 %v1019, 4294901760
  %v1235 = vsub.f32 %v1019, %v1234
  %v1236 = vand.u32 %v1235, 4294901760
  %v1237 = vsub.f32 %v1235, %v1236
  %v1238 = vand.u32 %v1237, 4294901760
  %1239 = vmatpush1.msra.mxu0 %v1238
  %1240 = vmatprep.subr.mxu0 0.0
  %1241 = vmatpush2.msra.mxu0 0.0
  %1242 = vmatprep.subr.mxu0 0.0
  %1243 = vmatpush2.msra.mxu0 0.0
  %1244 = vmatprep.subr.mxu0 0.0
  %1245 = vmatpush2.msra.mxu0 0.0
  %1246 = vmatprep.subr.mxu0 0.0
  %1247 = vmatpush2.msra.mxu0 0.0
  %1248 = vmatprep.subr.mxu0 0.0
  %1249 = vmatpush2.msra.mxu0 0.0
  %1250 = vmatprep.subr.mxu0 0.0
  %1251 = vmatpush2.msra.mxu0 0.0
  %1252 = vmatprep.subr.mxu0 0.0
  %1253 = vmatpush2.msra.mxu0 0.0
  %1254 = vmatprep.subr.mxu0 0.0
  %1255 = vmatpush2.msra.mxu0 0.0
  %1256 = vmatprep.subr.mxu0 0.0
  %1257 = vmatpush2.msra.mxu0 0.0
  %1258 = vmatprep.subr.mxu0 0.0
  %1259 = vmatpush2.msra.mxu0 0.0
  %1260 = vmatprep.subr.mxu0 0.0
  %1261 = vmatpush2.msra.mxu0 0.0
  %1262 = vmatprep.subr.mxu0 0.0
  %1263 = vmatpush2.msra.mxu0 0.0
  %1264 = vmatprep.subr.mxu0 0.0
  %1265 = vmatpush2.msra.mxu0 0.0
  %1266 = vmatprep.subr.mxu0 0.0
  %1267 = vmatpush2.msra.mxu0 0.0
  %1268 = vmatprep.subr.mxu0 0.0
  %1269 = vmatpush2.msra.mxu0 0.0
  %1270 = vmatprep.subr.mxu0 0.0
  %1271 = vmatpush2.msra.mxu0 0.0
  %1272 = vmatprep.mubr.f32.mxu0 0.0
  %v1273 = vand.u32 %v1035, 4294901760
  %1274 = vmatmul.mubr.f32.gmra.mxu0 %v1273
  %v1275 = vpop.f32.mrf.mxu0
  %v1276 = vadd.f32 %v1125, %v1275
  %v1277 = vpop.f32.mrf.mxu0
  %1278 = vdwg.mxu0
  %1279 = vmatprep.subr.mxu0 0.0
  %v1280 = vand.u32 %v1034, 4294901760
  %v1281 = vsub.f32 %v1034, %v1280
  %1282 = vmatpush1.msra.mxu0 %v1281
  %1283 = vmatprep.subr.mxu0 0.0
  %v1284 = vand.u32 %v1033, 4294901760
  %v1285 = vsub.f32 %v1033, %v1284
  %1286 = vmatpush1.msra.mxu0 %v1285
  %1287 = vmatprep.subr.mxu0 0.0
  %v1288 = vand.u32 %v1032, 4294901760
  %v1289 = vsub.f32 %v1032, %v1288
  %1290 = vmatpush1.msra.mxu0 %v1289
  %1291 = vmatprep.subr.mxu0 0.0
  %v1292 = vand.u32 %v1031, 4294901760
  %v1293 = vsub.f32 %v1031, %v1292
  %1294 = vmatpush1.msra.mxu0 %v1293
  %1295 = vmatprep.subr.mxu0 0.0
  %v1296 = vand.u32 %v1030, 4294901760
  %v1297 = vsub.f32 %v1030, %v1296
  %1298 = vmatpush1.msra.mxu0 %v1297
  %1299 = vmatprep.subr.mxu0 0.0
  %v1300 = vand.u32 %v1029, 4294901760
  %v1301 = vsub.f32 %v1029, %v1300
  %1302 = vmatpush1.msra.mxu0 %v1301
  %1303 = vmatprep.subr.mxu0 0.0
  %v1304 = vand.u32 %v1028, 4294901760
  %v1305 = vsub.f32 %v1028, %v1304
  %1306 = vmatpush1.msra.mxu0 %v1305
  %1307 = vmatprep.subr.mxu0 0.0
  %v1308 = vand.u32 %v1027, 4294901760
  %v1309 = vsub.f32 %v1027, %v1308
  %1310 = vmatpush1.msra.mxu0 %v1309
  %1311 = vmatprep.subr.mxu0 0.0
  %v1312 = vand.u32 %v1026, 4294901760
  %v1313 = vsub.f32 %v1026, %v1312
  %1314 = vmatpush1.msra.mxu0 %v1313
  %1315 = vmatprep.subr.mxu0 0.0
  %v1316 = vand.u32 %v1025, 4294901760
  %v1317 = vsub.f32 %v1025, %v1316
  %1318 = vmatpush1.msra.mxu0 %v1317
  %1319 = vmatprep.subr.mxu0 0.0
  %v1320 = vand.u32 %v1024, 4294901760
  %v1321 = vsub.f32 %v1024, %v1320
  %1322 = vmatpush1.msra.mxu0 %v1321
  %1323 = vmatprep.subr.mxu0 0.0
  %v1324 = vand.u32 %v1023, 4294901760
  %v1325 = vsub.f32 %v1023, %v1324
  %1326 = vmatpush1.msra.mxu0 %v1325
  %1327 = vmatprep.subr.mxu0 0.0
  %v1328 = vand.u32 %v1022, 4294901760
  %v1329 = vsub.f32 %v1022, %v1328
  %1330 = vmatpush1.msra.mxu0 %v1329
  %1331 = vmatprep.subr.mxu0 0.0
  %v1332 = vand.u32 %v1021, 4294901760
  %v1333 = vsub.f32 %v1021, %v1332
  %1334 = vmatpush1.msra.mxu0 %v1333
  %1335 = vmatprep.subr.mxu0 0.0
  %v1336 = vand.u32 %v1020, 4294901760
  %v1337 = vsub.f32 %v1020, %v1336
  %1338 = vmatpush1.msra.mxu0 %v1337
  %1339 = vmatprep.subr.mxu0 0.0
  %v1340 = vand.u32 %v1019, 4294901760
  %v1341 = vsub.f32 %v1019, %v1340
  %1342 = vmatpush1.msra.mxu0 %v1341
  %1343 = vmatprep.subr.mxu0 0.0
  %1344 = vmatpush2.msra.mxu0 0.0
  %1345 = vmatprep.subr.mxu0 0.0
  %1346 = vmatpush2.msra.mxu0 0.0
  %1347 = vmatprep.subr.mxu0 0.0
  %1348 = vmatpush2.msra.mxu0 0.0
  %1349 = vmatprep.subr.mxu0 0.0
  %1350 = vmatpush2.msra.mxu0 0.0
  %1351 = vmatprep.subr.mxu0 0.0
  %1352 = vmatpush2.msra.mxu0 0.0
  %1353 = vmatprep.subr.mxu0 0.0
  %1354 = vmatpush2.msra.mxu0 0.0
  %1355 = vmatprep.subr.mxu0 0.0
  %1356 = vmatpush2.msra.mxu0 0.0
  %1357 = vmatprep.subr.mxu0 0.0
  %1358 = vmatpush2.msra.mxu0 0.0
  %1359 = vmatprep.subr.mxu0 0.0
  %1360 = vmatpush2.msra.mxu0 0.0
  %1361 = vmatprep.subr.mxu0 0.0
  %1362 = vmatpush2.msra.mxu0 0.0
  %1363 = vmatprep.subr.mxu0 0.0
  %1364 = vmatpush2.msra.mxu0 0.0
  %1365 = vmatprep.subr.mxu0 0.0
  %1366 = vmatpush2.msra.mxu0 0.0
  %1367 = vmatprep.subr.mxu0 0.0
  %1368 = vmatpush2.msra.mxu0 0.0
  %1369 = vmatprep.subr.mxu0 0.0
  %1370 = vmatpush2.msra.mxu0 0.0
  %1371 = vmatprep.subr.mxu0 0.0
  %1372 = vmatpush2.msra.mxu0 0.0
  %1373 = vmatprep.subr.mxu0 0.0
  %1374 = vmatpush2.msra.mxu0 0.0
  %1375 = vmatprep.mubr.f32.mxu0 0.0
  %v1376 = vand.u32 %v1035, 4294901760
  %v1377 = vsub.f32 %v1035, %v1376
  %1378 = vmatmul.mubr.f32.gmra.mxu0 %v1377
  %v1379 = vpop.f32.mrf.mxu0
  %v1380 = vadd.f32 %v1276, %v1379
  %v1381 = vpop.f32.mrf.mxu0
  %1382 = vdwg.mxu0
  %1383 = vmatprep.subr.mxu0 0.0
  %v1384 = vand.u32 %v1034, 4294901760
  %1385 = vmatpush1.msra.mxu0 %v1384
  %1386 = vmatprep.subr.mxu0 0.0
  %v1387 = vand.u32 %v1033, 4294901760
  %1388 = vmatpush1.msra.mxu0 %v1387
  %1389 = vmatprep.subr.mxu0 0.0
  %v1390 = vand.u32 %v1032, 4294901760
  %1391 = vmatpush1.msra.mxu0 %v1390
  %1392 = vmatprep.subr.mxu0 0.0
  %v1393 = vand.u32 %v1031, 4294901760
  %1394 = vmatpush1.msra.mxu0 %v1393
  %1395 = vmatprep.subr.mxu0 0.0
  %v1396 = vand.u32 %v1030, 4294901760
  %1397 = vmatpush1.msra.mxu0 %v1396
  %1398 = vmatprep.subr.mxu0 0.0
  %v1399 = vand.u32 %v1029, 4294901760
  %1400 = vmatpush1.msra.mxu0 %v1399
  %1401 = vmatprep.subr.mxu0 0.0
  %v1402 = vand.u32 %v1028, 4294901760
  %1403 = vmatpush1.msra.mxu0 %v1402
  %1404 = vmatprep.subr.mxu0 0.0
  %v1405 = vand.u32 %v1027, 4294901760
  %1406 = vmatpush1.msra.mxu0 %v1405
  %1407 = vmatprep.subr.mxu0 0.0
  %v1408 = vand.u32 %v1026, 4294901760
  %1409 = vmatpush1.msra.mxu0 %v1408
  %1410 = vmatprep.subr.mxu0 0.0
  %v1411 = vand.u32 %v1025, 4294901760
  %1412 = vmatpush1.msra.mxu0 %v1411
  %1413 = vmatprep.subr.mxu0 0.0
  %v1414 = vand.u32 %v1024, 4294901760
  %1415 = vmatpush1.msra.mxu0 %v1414
  %1416 = vmatprep.subr.mxu0 0.0
  %v1417 = vand.u32 %v1023, 4294901760
  %1418 = vmatpush1.msra.mxu0 %v1417
  %1419 = vmatprep.subr.mxu0 0.0
  %v1420 = vand.u32 %v1022, 4294901760
  %1421 = vmatpush1.msra.mxu0 %v1420
  %1422 = vmatprep.subr.mxu0 0.0
  %v1423 = vand.u32 %v1021, 4294901760
  %1424 = vmatpush1.msra.mxu0 %v1423
  %1425 = vmatprep.subr.mxu0 0.0
  %v1426 = vand.u32 %v1020, 4294901760
  %1427 = vmatpush1.msra.mxu0 %v1426
  %1428 = vmatprep.subr.mxu0 0.0
  %v1429 = vand.u32 %v1019, 4294901760
  %1430 = vmatpush1.msra.mxu0 %v1429
  %1431 = vmatprep.subr.mxu0 0.0
  %1432 = vmatpush2.msra.mxu0 0.0
  %1433 = vmatprep.subr.mxu0 0.0
  %1434 = vmatpush2.msra.mxu0 0.0
  %1435 = vmatprep.subr.mxu0 0.0
  %1436 = vmatpush2.msra.mxu0 0.0
  %1437 = vmatprep.subr.mxu0 0.0
  %1438 = vmatpush2.msra.mxu0 0.0
  %1439 = vmatprep.subr.mxu0 0.0
  %1440 = vmatpush2.msra.mxu0 0.0
  %1441 = vmatprep.subr.mxu0 0.0
  %1442 = vmatpush2.msra.mxu0 0.0
  %1443 = vmatprep.subr.mxu0 0.0
  %1444 = vmatpush2.msra.mxu0 0.0
  %1445 = vmatprep.subr.mxu0 0.0
  %1446 = vmatpush2.msra.mxu0 0.0
  %1447 = vmatprep.subr.mxu0 0.0
  %1448 = vmatpush2.msra.mxu0 0.0
  %1449 = vmatprep.subr.mxu0 0.0
  %1450 = vmatpush2.msra.mxu0 0.0
  %1451 = vmatprep.subr.mxu0 0.0
  %1452 = vmatpush2.msra.mxu0 0.0
  %1453 = vmatprep.subr.mxu0 0.0
  %1454 = vmatpush2.msra.mxu0 0.0
  %1455 = vmatprep.subr.mxu0 0.0
  %1456 = vmatpush2.msra.mxu0 0.0
  %1457 = vmatprep.subr.mxu0 0.0
  %1458 = vmatpush2.msra.mxu0 0.0
  %1459 = vmatprep.subr.mxu0 0.0
  %1460 = vmatpush2.msra.mxu0 0.0
  %1461 = vmatprep.subr.mxu0 0.0
  %1462 = vmatpush2.msra.mxu0 0.0
  %1463 = vmatprep.mubr.f32.mxu0 0.0
  %v1464 = vand.u32 %v1035, 4294901760
  %v1465 = vsub.f32 %v1035, %v1464
  %v1466 = vand.u32 %v1465, 4294901760
  %1467 = vmatmul.mubr.f32.gmra.mxu0 %v1466
  %v1468 = vpop.f32.mrf.mxu0
  %v1469 = vadd.f32 %v1380, %v1468
  %v1470 = vpop.f32.mrf.mxu0
  %1471 = vdwg.mxu0
  %1472 = vmatprep.subr.mxu0 0.0
  %v1473 = vand.u32 %v1034, 4294901760
  %v1474 = vsub.f32 %v1034, %v1473
  %v1475 = vand.u32 %v1474, 4294901760
  %1476 = vmatpush1.msra.mxu0 %v1475
  %1477 = vmatprep.subr.mxu0 0.0
  %v1478 = vand.u32 %v1033, 4294901760
  %v1479 = vsub.f32 %v1033, %v1478
  %v1480 = vand.u32 %v1479, 4294901760
  %1481 = vmatpush1.msra.mxu0 %v1480
  %1482 = vmatprep.subr.mxu0 0.0
  %v1483 = vand.u32 %v1032, 4294901760
  %v1484 = vsub.f32 %v1032, %v1483
  %v1485 = vand.u32 %v1484, 4294901760
  %1486 = vmatpush1.msra.mxu0 %v1485
  %1487 = vmatprep.subr.mxu0 0.0
  %v1488 = vand.u32 %v1031, 4294901760
  %v1489 = vsub.f32 %v1031, %v1488
  %v1490 = vand.u32 %v1489, 4294901760
  %1491 = vmatpush1.msra.mxu0 %v1490
  %1492 = vmatprep.subr.mxu0 0.0
  %v1493 = vand.u32 %v1030, 4294901760
  %v1494 = vsub.f32 %v1030, %v1493
  %v1495 = vand.u32 %v1494, 4294901760
  %1496 = vmatpush1.msra.mxu0 %v1495
  %1497 = vmatprep.subr.mxu0 0.0
  %v1498 = vand.u32 %v1029, 4294901760
  %v1499 = vsub.f32 %v1029, %v1498
  %v1500 = vand.u32 %v1499, 4294901760
  %1501 = vmatpush1.msra.mxu0 %v1500
  %1502 = vmatprep.subr.mxu0 0.0
  %v1503 = vand.u32 %v1028, 4294901760
  %v1504 = vsub.f32 %v1028, %v1503
  %v1505 = vand.u32 %v1504, 4294901760
  %1506 = vmatpush1.msra.mxu0 %v1505
  %1507 = vmatprep.subr.mxu0 0.0
  %v1508 = vand.u32 %v1027, 4294901760
  %v1509 = vsub.f32 %v1027, %v1508
  %v1510 = vand.u32 %v1509, 4294901760
  %1511 = vmatpush1.msra.mxu0 %v1510
  %1512 = vmatprep.subr.mxu0 0.0
  %v1513 = vand.u32 %v1026, 4294901760
  %v1514 = vsub.f32 %v1026, %v1513
  %v1515 = vand.u32 %v1514, 4294901760
  %1516 = vmatpush1.msra.mxu0 %v1515
  %1517 = vmatprep.subr.mxu0 0.0
  %v1518 = vand.u32 %v1025, 4294901760
  %v1519 = vsub.f32 %v1025, %v1518
  %v1520 = vand.u32 %v1519, 4294901760
  %1521 = vmatpush1.msra.mxu0 %v1520
  %1522 = vmatprep.subr.mxu0 0.0
  %v1523 = vand.u32 %v1024, 4294901760
  %v1524 = vsub.f32 %v1024, %v1523
  %v1525 = vand.u32 %v1524, 4294901760
  %1526 = vmatpush1.msra.mxu0 %v1525
  %1527 = vmatprep.subr.mxu0 0.0
  %v1528 = vand.u32 %v1023, 4294901760
  %v1529 = vsub.f32 %v1023, %v1528
  %v1530 = vand.u32 %v1529, 4294901760
  %1531 = vmatpush1.msra.mxu0 %v1530
  %1532 = vmatprep.subr.mxu0 0.0
  %v1533 = vand.u32 %v1022, 4294901760
  %v1534 = vsub.f32 %v1022, %v1533
  %v1535 = vand.u32 %v1534, 4294901760
  %1536 = vmatpush1.msra.mxu0 %v1535
  %1537 = vmatprep.subr.mxu0 0.0
  %v1538 = vand.u32 %v1021, 4294901760
  %v1539 = vsub.f32 %v1021, %v1538
  %v1540 = vand.u32 %v1539, 4294901760
  %1541 = vmatpush1.msra.mxu0 %v1540
  %1542 = vmatprep.subr.mxu0 0.0
  %v1543 = vand.u32 %v1020, 4294901760
  %v1544 = vsub.f32 %v1020, %v1543
  %v1545 = vand.u32 %v1544, 4294901760
  %1546 = vmatpush1.msra.mxu0 %v1545
  %1547 = vmatprep.subr.mxu0 0.0
  %v1548 = vand.u32 %v1019, 4294901760
  %v1549 = vsub.f32 %v1019, %v1548
  %v1550 = vand.u32 %v1549, 4294901760
  %1551 = vmatpush1.msra.mxu0 %v1550
  %1552 = vmatprep.subr.mxu0 0.0
  %1553 = vmatpush2.msra.mxu0 0.0
  %1554 = vmatprep.subr.mxu0 0.0
  %1555 = vmatpush2.msra.mxu0 0.0
  %1556 = vmatprep.subr.mxu0 0.0
  %1557 = vmatpush2.msra.mxu0 0.0
  %1558 = vmatprep.subr.mxu0 0.0
  %1559 = vmatpush2.msra.mxu0 0.0
  %1560 = vmatprep.subr.mxu0 0.0
  %1561 = vmatpush2.msra.mxu0 0.0
  %1562 = vmatprep.subr.mxu0 0.0
  %1563 = vmatpush2.msra.mxu0 0.0
  %1564 = vmatprep.subr.mxu0 0.0
  %1565 = vmatpush2.msra.mxu0 0.0
  %1566 = vmatprep.subr.mxu0 0.0
  %1567 = vmatpush2.msra.mxu0 0.0
  %1568 = vmatprep.subr.mxu0 0.0
  %1569 = vmatpush2.msra.mxu0 0.0
  %1570 = vmatprep.subr.mxu0 0.0
  %1571 = vmatpush2.msra.mxu0 0.0
  %1572 = vmatprep.subr.mxu0 0.0
  %1573 = vmatpush2.msra.mxu0 0.0
  %1574 = vmatprep.subr.mxu0 0.0
  %1575 = vmatpush2.msra.mxu0 0.0
  %1576 = vmatprep.subr.mxu0 0.0
  %1577 = vmatpush2.msra.mxu0 0.0
  %1578 = vmatprep.subr.mxu0 0.0
  %1579 = vmatpush2.msra.mxu0 0.0
  %1580 = vmatprep.subr.mxu0 0.0
  %1581 = vmatpush2.msra.mxu0 0.0
  %1582 = vmatprep.subr.mxu0 0.0
  %1583 = vmatpush2.msra.mxu0 0.0
  %1584 = vmatprep.mubr.f32.mxu0 0.0
  %v1585 = vand.u32 %v1035, 4294901760
  %1586 = vmatmul.mubr.f32.gmra.mxu0 %v1585
  %v1587 = vpop.f32.mrf.mxu0
  %v1588 = vadd.f32 %v1469, %v1587
  %v1589 = vpop.f32.mrf.mxu0
  %1590 = vdwg.mxu0
  %1591 = vmatprep.subr.mxu0 0.0
  %v1592 = vand.u32 %v1034, 4294901760
  %1593 = vmatpush1.msra.mxu0 %v1592
  %1594 = vmatprep.subr.mxu0 0.0
  %v1595 = vand.u32 %v1033, 4294901760
  %1596 = vmatpush1.msra.mxu0 %v1595
  %1597 = vmatprep.subr.mxu0 0.0
  %v1598 = vand.u32 %v1032, 4294901760
  %1599 = vmatpush1.msra.mxu0 %v1598
  %1600 = vmatprep.subr.mxu0 0.0
  %v1601 = vand.u32 %v1031, 4294901760
  %1602 = vmatpush1.msra.mxu0 %v1601
  %1603 = vmatprep.subr.mxu0 0.0
  %v1604 = vand.u32 %v1030, 4294901760
  %1605 = vmatpush1.msra.mxu0 %v1604
  %1606 = vmatprep.subr.mxu0 0.0
  %v1607 = vand.u32 %v1029, 4294901760
  %1608 = vmatpush1.msra.mxu0 %v1607
  %1609 = vmatprep.subr.mxu0 0.0
  %v1610 = vand.u32 %v1028, 4294901760
  %1611 = vmatpush1.msra.mxu0 %v1610
  %1612 = vmatprep.subr.mxu0 0.0
  %v1613 = vand.u32 %v1027, 4294901760
  %1614 = vmatpush1.msra.mxu0 %v1613
  %1615 = vmatprep.subr.mxu0 0.0
  %v1616 = vand.u32 %v1026, 4294901760
  %1617 = vmatpush1.msra.mxu0 %v1616
  %1618 = vmatprep.subr.mxu0 0.0
  %v1619 = vand.u32 %v1025, 4294901760
  %1620 = vmatpush1.msra.mxu0 %v1619
  %1621 = vmatprep.subr.mxu0 0.0
  %v1622 = vand.u32 %v1024, 4294901760
  %1623 = vmatpush1.msra.mxu0 %v1622
  %1624 = vmatprep.subr.mxu0 0.0
  %v1625 = vand.u32 %v1023, 4294901760
  %1626 = vmatpush1.msra.mxu0 %v1625
  %1627 = vmatprep.subr.mxu0 0.0
  %v1628 = vand.u32 %v1022, 4294901760
  %1629 = vmatpush1.msra.mxu0 %v1628
  %1630 = vmatprep.subr.mxu0 0.0
  %v1631 = vand.u32 %v1021, 4294901760
  %1632 = vmatpush1.msra.mxu0 %v1631
  %1633 = vmatprep.subr.mxu0 0.0
  %v1634 = vand.u32 %v1020, 4294901760
  %1635 = vmatpush1.msra.mxu0 %v1634
  %1636 = vmatprep.subr.mxu0 0.0
  %v1637 = vand.u32 %v1019, 4294901760
  %1638 = vmatpush1.msra.mxu0 %v1637
  %1639 = vmatprep.subr.mxu0 0.0
  %1640 = vmatpush2.msra.mxu0 0.0
  %1641 = vmatprep.subr.mxu0 0.0
  %1642 = vmatpush2.msra.mxu0 0.0
  %1643 = vmatprep.subr.mxu0 0.0
  %1644 = vmatpush2.msra.mxu0 0.0
  %1645 = vmatprep.subr.mxu0 0.0
  %1646 = vmatpush2.msra.mxu0 0.0
  %1647 = vmatprep.subr.mxu0 0.0
  %1648 = vmatpush2.msra.mxu0 0.0
  %1649 = vmatprep.subr.mxu0 0.0
  %1650 = vmatpush2.msra.mxu0 0.0
  %1651 = vmatprep.subr.mxu0 0.0
  %1652 = vmatpush2.msra.mxu0 0.0
  %1653 = vmatprep.subr.mxu0 0.0
  %1654 = vmatpush2.msra.mxu0 0.0
  %1655 = vmatprep.subr.mxu0 0.0
  %1656 = vmatpush2.msra.mxu0 0.0
  %1657 = vmatprep.subr.mxu0 0.0
  %1658 = vmatpush2.msra.mxu0 0.0
  %1659 = vmatprep.subr.mxu0 0.0
  %1660 = vmatpush2.msra.mxu0 0.0
  %1661 = vmatprep.subr.mxu0 0.0
  %1662 = vmatpush2.msra.mxu0 0.0
  %1663 = vmatprep.subr.mxu0 0.0
  %1664 = vmatpush2.msra.mxu0 0.0
  %1665 = vmatprep.subr.mxu0 0.0
  %1666 = vmatpush2.msra.mxu0 0.0
  %1667 = vmatprep.subr.mxu0 0.0
  %1668 = vmatpush2.msra.mxu0 0.0
  %1669 = vmatprep.subr.mxu0 0.0
  %1670 = vmatpush2.msra.mxu0 0.0
  %1671 = vmatprep.mubr.f32.mxu0 0.0
  %v1672 = vand.u32 %v1035, 4294901760
  %1673 = vmatmul.mubr.f32.gmra.mxu0 %v1672
  %v1674 = vpop.f32.mrf.mxu0
  %v1675 = vadd.f32 %v1588, %v1674
  %v1676 = vpop.f32.mrf.mxu0
  %1677 = vdwg.mxu0
  %v1678 = vadd.f32 %v1036, %v1675
  %v1679 = vtanh.pop %v1678
  %1680 = vst [vmem:[#allocation3] sm:$0xff] %v1679
  %1681 = vst [vmem:[#allocation2] sm:$0xff] %v1679
  %v1682 = vld [vmem:[#allocation2] sm:$0xff]
  %s1683 = scalar_lea.vmem [#allocation3], 8
  %v1684 = vld [vmem:[%s1683] sm:$0xff]
  %1685 = vmatprep.subr.mxu0 0.0
  %v1686 = vand.u32 %v1034, 4294901760
  %1687 = vmatpush1.msra.mxu0 %v1686
  %1688 = vmatprep.subr.mxu0 0.0
  %v1689 = vand.u32 %v1033, 4294901760
  %1690 = vmatpush1.msra.mxu0 %v1689
  %1691 = vmatprep.subr.mxu0 0.0
  %v1692 = vand.u32 %v1032, 4294901760
  %1693 = vmatpush1.msra.mxu0 %v1692
  %1694 = vmatprep.subr.mxu0 0.0
  %v1695 = vand.u32 %v1031, 4294901760
  %1696 = vmatpush1.msra.mxu0 %v1695
  %1697 = vmatprep.subr.mxu0 0.0
  %v1698 = vand.u32 %v1030, 4294901760
  %1699 = vmatpush1.msra.mxu0 %v1698
  %1700 = vmatprep.subr.mxu0 0.0
  %v1701 = vand.u32 %v1029, 4294901760
  %1702 = vmatpush1.msra.mxu0 %v1701
  %1703 = vmatprep.subr.mxu0 0.0
  %v1704 = vand.u32 %v1028, 4294901760
  %1705 = vmatpush1.msra.mxu0 %v1704
  %1706 = vmatprep.subr.mxu0 0.0
  %v1707 = vand.u32 %v1027, 4294901760
  %1708 = vmatpush1.msra.mxu0 %v1707
  %1709 = vmatprep.subr.mxu0 0.0
  %v1710 = vand.u32 %v1026, 4294901760
  %1711 = vmatpush1.msra.mxu0 %v1710
  %1712 = vmatprep.subr.mxu0 0.0
  %v1713 = vand.u32 %v1025, 4294901760
  %1714 = vmatpush1.msra.mxu0 %v1713
  %1715 = vmatprep.subr.mxu0 0.0
  %v1716 = vand.u32 %v1024, 4294901760
  %1717 = vmatpush1.msra.mxu0 %v1716
  %1718 = vmatprep.subr.mxu0 0.0
  %v1719 = vand.u32 %v1023, 4294901760
  %1720 = vmatpush1.msra.mxu0 %v1719
  %1721 = vmatprep.subr.mxu0 0.0
  %v1722 = vand.u32 %v1022, 4294901760
  %1723 = vmatpush1.msra.mxu0 %v1722
  %1724 = vmatprep.subr.mxu0 0.0
  %v1725 = vand.u32 %v1021, 4294901760
  %1726 = vmatpush1.msra.mxu0 %v1725
  %1727 = vmatprep.subr.mxu0 0.0
  %v1728 = vand.u32 %v1020, 4294901760
  %1729 = vmatpush1.msra.mxu0 %v1728
  %1730 = vmatprep.subr.mxu0 0.0
  %v1731 = vand.u32 %v1019, 4294901760
  %1732 = vmatpush1.msra.mxu0 %v1731
  %1733 = vmatprep.subr.mxu0 0.0
  %1734 = vmatpush2.msra.mxu0 0.0
  %1735 = vmatprep.subr.mxu0 0.0
  %1736 = vmatpush2.msra.mxu0 0.0
  %1737 = vmatprep.subr.mxu0 0.0
  %1738 = vmatpush2.msra.mxu0 0.0
  %1739 = vmatprep.subr.mxu0 0.0
  %1740 = vmatpush2.msra.mxu0 0.0
  %1741 = vmatprep.subr.mxu0 0.0
  %1742 = vmatpush2.msra.mxu0 0.0
  %1743 = vmatprep.subr.mxu0 0.0
  %1744 = vmatpush2.msra.mxu0 0.0
  %1745 = vmatprep.subr.mxu0 0.0
  %1746 = vmatpush2.msra.mxu0 0.0
  %1747 = vmatprep.subr.mxu0 0.0
  %1748 = vmatpush2.msra.mxu0 0.0
  %1749 = vmatprep.subr.mxu0 0.0
  %1750 = vmatpush2.msra.mxu0 0.0
  %1751 = vmatprep.subr.mxu0 0.0
  %1752 = vmatpush2.msra.mxu0 0.0
  %1753 = vmatprep.subr.mxu0 0.0
  %1754 = vmatpush2.msra.mxu0 0.0
  %1755 = vmatprep.subr.mxu0 0.0
  %1756 = vmatpush2.msra.mxu0 0.0
  %1757 = vmatprep.subr.mxu0 0.0
  %1758 = vmatpush2.msra.mxu0 0.0
  %1759 = vmatprep.subr.mxu0 0.0
  %1760 = vmatpush2.msra.mxu0 0.0
  %1761 = vmatprep.subr.mxu0 0.0
  %1762 = vmatpush2.msra.mxu0 0.0
  %1763 = vmatprep.subr.mxu0 0.0
  %1764 = vmatpush2.msra.mxu0 0.0
  %1765 = vmatprep.mubr.f32.mxu0 0.0
  %v1766 = vand.u32 %v1682, 4294901760
  %v1767 = vsub.f32 %v1682, %v1766
  %v1768 = vand.u32 %v1767, 4294901760
  %v1769 = vsub.f32 %v1767, %v1768
  %v1770 = vand.u32 %v1769, 4294901760
  %1771 = vmatmul.mubr.f32.gmra.mxu0 %v1770
  %v1772 = vpop.f32.mrf.mxu0
  %v1773 = vadd.f32 0.0, %v1772
  %v1774 = vpop.f32.mrf.mxu0
  %1775 = vdwg.mxu0
  %1776 = vmatprep.subr.mxu0 0.0
  %v1777 = vand.u32 %v1034, 4294901760
  %v1778 = vsub.f32 %v1034, %v1777
  %v1779 = vand.u32 %v1778, 4294901760
  %v1780 = vsub.f32 %v1778, %v1779
  %v1781 = vand.u32 %v1780, 4294901760
  %1782 = vmatpush1.msra.mxu0 %v1781
  %1783 = vmatprep.subr.mxu0 0.0
  %v1784 = vand.u32 %v1033, 4294901760
  %v1785 = vsub.f32 %v1033, %v1784
  %v1786 = vand.u32 %v1785, 4294901760
  %v1787 = vsub.f32 %v1785, %v1786
  %v1788 = vand.u32 %v1787, 4294901760
  %1789 = vmatpush1.msra.mxu0 %v1788
  %1790 = vmatprep.subr.mxu0 0.0
  %v1791 = vand.u32 %v1032, 4294901760
  %v1792 = vsub.f32 %v1032, %v1791
  %v1793 = vand.u32 %v1792, 4294901760
  %v1794 = vsub.f32 %v1792, %v1793
  %v1795 = vand.u32 %v1794, 4294901760
  %1796 = vmatpush1.msra.mxu0 %v1795
  %1797 = vmatprep.subr.mxu0 0.0
  %v1798 = vand.u32 %v1031, 4294901760
  %v1799 = vsub.f32 %v1031, %v1798
  %v1800 = vand.u32 %v1799, 4294901760
  %v1801 = vsub.f32 %v1799, %v1800
  %v1802 = vand.u32 %v1801, 4294901760
  %1803 = vmatpush1.msra.mxu0 %v1802
  %1804 = vmatprep.subr.mxu0 0.0
  %v1805 = vand.u32 %v1030, 4294901760
  %v1806 = vsub.f32 %v1030, %v1805
  %v1807 = vand.u32 %v1806, 4294901760
  %v1808 = vsub.f32 %v1806, %v1807
  %v1809 = vand.u32 %v1808, 4294901760
  %1810 = vmatpush1.msra.mxu0 %v1809
  %1811 = vmatprep.subr.mxu0 0.0
  %v1812 = vand.u32 %v1029, 4294901760
  %v1813 = vsub.f32 %v1029, %v1812
  %v1814 = vand.u32 %v1813, 4294901760
  %v1815 = vsub.f32 %v1813, %v1814
  %v1816 = vand.u32 %v1815, 4294901760
  %1817 = vmatpush1.msra.mxu0 %v1816
  %1818 = vmatprep.subr.mxu0 0.0
  %v1819 = vand.u32 %v1028, 4294901760
  %v1820 = vsub.f32 %v1028, %v1819
  %v1821 = vand.u32 %v1820, 4294901760
  %v1822 = vsub.f32 %v1820, %v1821
  %v1823 = vand.u32 %v1822, 4294901760
  %1824 = vmatpush1.msra.mxu0 %v1823
  %1825 = vmatprep.subr.mxu0 0.0
  %v1826 = vand.u32 %v1027, 4294901760
  %v1827 = vsub.f32 %v1027, %v1826
  %v1828 = vand.u32 %v1827, 4294901760
  %v1829 = vsub.f32 %v1827, %v1828
  %v1830 = vand.u32 %v1829, 4294901760
  %1831 = vmatpush1.msra.mxu0 %v1830
  %1832 = vmatprep.subr.mxu0 0.0
  %v1833 = vand.u32 %v1026, 4294901760
  %v1834 = vsub.f32 %v1026, %v1833
  %v1835 = vand.u32 %v1834, 4294901760
  %v1836 = vsub.f32 %v1834, %v1835
  %v1837 = vand.u32 %v1836, 4294901760
  %1838 = vmatpush1.msra.mxu0 %v1837
  %1839 = vmatprep.subr.mxu0 0.0
  %v1840 = vand.u32 %v1025, 4294901760
  %v1841 = vsub.f32 %v1025, %v1840
  %v1842 = vand.u32 %v1841, 4294901760
  %v1843 = vsub.f32 %v1841, %v1842
  %v1844 = vand.u32 %v1843, 4294901760
  %1845 = vmatpush1.msra.mxu0 %v1844
  %1846 = vmatprep.subr.mxu0 0.0
  %v1847 = vand.u32 %v1024, 4294901760
  %v1848 = vsub.f32 %v1024, %v1847
  %v1849 = vand.u32 %v1848, 4294901760
  %v1850 = vsub.f32 %v1848, %v1849
  %v1851 = vand.u32 %v1850, 4294901760
  %1852 = vmatpush1.msra.mxu0 %v1851
  %1853 = vmatprep.subr.mxu0 0.0
  %v1854 = vand.u32 %v1023, 4294901760
  %v1855 = vsub.f32 %v1023, %v1854
  %v1856 = vand.u32 %v1855, 4294901760
  %v1857 = vsub.f32 %v1855, %v1856
  %v1858 = vand.u32 %v1857, 4294901760
  %1859 = vmatpush1.msra.mxu0 %v1858
  %1860 = vmatprep.subr.mxu0 0.0
  %v1861 = vand.u32 %v1022, 4294901760
  %v1862 = vsub.f32 %v1022, %v1861
  %v1863 = vand.u32 %v1862, 4294901760
  %v1864 = vsub.f32 %v1862, %v1863
  %v1865 = vand.u32 %v1864, 4294901760
  %1866 = vmatpush1.msra.mxu0 %v1865
  %1867 = vmatprep.subr.mxu0 0.0
  %v1868 = vand.u32 %v1021, 4294901760
  %v1869 = vsub.f32 %v1021, %v1868
  %v1870 = vand.u32 %v1869, 4294901760
  %v1871 = vsub.f32 %v1869, %v1870
  %v1872 = vand.u32 %v1871, 4294901760
  %1873 = vmatpush1.msra.mxu0 %v1872
  %1874 = vmatprep.subr.mxu0 0.0
  %v1875 = vand.u32 %v1020, 4294901760
  %v1876 = vsub.f32 %v1020, %v1875
  %v1877 = vand.u32 %v1876, 4294901760
  %v1878 = vsub.f32 %v1876, %v1877
  %v1879 = vand.u32 %v1878, 4294901760
  %1880 = vmatpush1.msra.mxu0 %v1879
  %1881 = vmatprep.subr.mxu0 0.0
  %v1882 = vand.u32 %v1019, 4294901760
  %v1883 = vsub.f32 %v1019, %v1882
  %v1884 = vand.u32 %v1883, 4294901760
  %v1885 = vsub.f32 %v1883, %v1884
  %v1886 = vand.u32 %v1885, 4294901760
  %1887 = vmatpush1.msra.mxu0 %v1886
  %1888 = vmatprep.subr.mxu0 0.0
  %1889 = vmatpush2.msra.mxu0 0.0
  %1890 = vmatprep.subr.mxu0 0.0
  %1891 = vmatpush2.msra.mxu0 0.0
  %1892 = vmatprep.subr.mxu0 0.0
  %1893 = vmatpush2.msra.mxu0 0.0
  %1894 = vmatprep.subr.mxu0 0.0
  %1895 = vmatpush2.msra.mxu0 0.0
  %1896 = vmatprep.subr.mxu0 0.0
  %1897 = vmatpush2.msra.mxu0 0.0
  %1898 = vmatprep.subr.mxu0 0.0
  %1899 = vmatpush2.msra.mxu0 0.0
  %1900 = vmatprep.subr.mxu0 0.0
  %1901 = vmatpush2.msra.mxu0 0.0
  %1902 = vmatprep.subr.mxu0 0.0
  %1903 = vmatpush2.msra.mxu0 0.0
  %1904 = vmatprep.subr.mxu0 0.0
  %1905 = vmatpush2.msra.mxu0 0.0
  %1906 = vmatprep.subr.mxu0 0.0
  %1907 = vmatpush2.msra.mxu0 0.0
  %1908 = vmatprep.subr.mxu0 0.0
  %1909 = vmatpush2.msra.mxu0 0.0
  %1910 = vmatprep.subr.mxu0 0.0
  %1911 = vmatpush2.msra.mxu0 0.0
  %1912 = vmatprep.subr.mxu0 0.0
  %1913 = vmatpush2.msra.mxu0 0.0
  %1914 = vmatprep.subr.mxu0 0.0
  %1915 = vmatpush2.msra.mxu0 0.0
  %1916 = vmatprep.subr.mxu0 0.0
  %1917 = vmatpush2.msra.mxu0 0.0
  %1918 = vmatprep.subr.mxu0 0.0
  %1919 = vmatpush2.msra.mxu0 0.0
  %1920 = vmatprep.mubr.f32.mxu0 0.0
  %v1921 = vand.u32 %v1682, 4294901760
  %1922 = vmatmul.mubr.f32.gmra.mxu0 %v1921
  %v1923 = vpop.f32.mrf.mxu0
  %v1924 = vadd.f32 %v1773, %v1923
  %v1925 = vpop.f32.mrf.mxu0
  %1926 = vdwg.mxu0
  %1927 = vmatprep.subr.mxu0 0.0
  %v1928 = vand.u32 %v1034, 4294901760
  %v1929 = vsub.f32 %v1034, %v1928
  %1930 = vmatpush1.msra.mxu0 %v1929
  %1931 = vmatprep.subr.mxu0 0.0
  %v1932 = vand.u32 %v1033, 4294901760
  %v1933 = vsub.f32 %v1033, %v1932
  %1934 = vmatpush1.msra.mxu0 %v1933
  %1935 = vmatprep.subr.mxu0 0.0
  %v1936 = vand.u32 %v1032, 4294901760
  %v1937 = vsub.f32 %v1032, %v1936
  %1938 = vmatpush1.msra.mxu0 %v1937
  %1939 = vmatprep.subr.mxu0 0.0
  %v1940 = vand.u32 %v1031, 4294901760
  %v1941 = vsub.f32 %v1031, %v1940
  %1942 = vmatpush1.msra.mxu0 %v1941
  %1943 = vmatprep.subr.mxu0 0.0
  %v1944 = vand.u32 %v1030, 4294901760
  %v1945 = vsub.f32 %v1030, %v1944
  %1946 = vmatpush1.msra.mxu0 %v1945
  %1947 = vmatprep.subr.mxu0 0.0
  %v1948 = vand.u32 %v1029, 4294901760
  %v1949 = vsub.f32 %v1029, %v1948
  %1950 = vmatpush1.msra.mxu0 %v1949
  %1951 = vmatprep.subr.mxu0 0.0
  %v1952 = vand.u32 %v1028, 4294901760
  %v1953 = vsub.f32 %v1028, %v1952
  %1954 = vmatpush1.msra.mxu0 %v1953
  %1955 = vmatprep.subr.mxu0 0.0
  %v1956 = vand.u32 %v1027, 4294901760
  %v1957 = vsub.f32 %v1027, %v1956
  %1958 = vmatpush1.msra.mxu0 %v1957
  %1959 = vmatprep.subr.mxu0 0.0
  %v1960 = vand.u32 %v1026, 4294901760
  %v1961 = vsub.f32 %v1026, %v1960
  %1962 = vmatpush1.msra.mxu0 %v1961
  %1963 = vmatprep.subr.mxu0 0.0
  %v1964 = vand.u32 %v1025, 4294901760
  %v1965 = vsub.f32 %v1025, %v1964
  %1966 = vmatpush1.msra.mxu0 %v1965
  %1967 = vmatprep.subr.mxu0 0.0
  %v1968 = vand.u32 %v1024, 4294901760
  %v1969 = vsub.f32 %v1024, %v1968
  %1970 = vmatpush1.msra.mxu0 %v1969
  %1971 = vmatprep.subr.mxu0 0.0
  %v1972 = vand.u32 %v1023, 4294901760
  %v1973 = vsub.f32 %v1023, %v1972
  %1974 = vmatpush1.msra.mxu0 %v1973
  %1975 = vmatprep.subr.mxu0 0.0
  %v1976 = vand.u32 %v1022, 4294901760
  %v1977 = vsub.f32 %v1022, %v1976
  %1978 = vmatpush1.msra.mxu0 %v1977
  %1979 = vmatprep.subr.mxu0 0.0
  %v1980 = vand.u32 %v1021, 4294901760
  %v1981 = vsub.f32 %v1021, %v1980
  %1982 = vmatpush1.msra.mxu0 %v1981
  %1983 = vmatprep.subr.mxu0 0.0
  %v1984 = vand.u32 %v1020, 4294901760
  %v1985 = vsub.f32 %v1020, %v1984
  %1986 = vmatpush1.msra.mxu0 %v1985
  %1987 = vmatprep.subr.mxu0 0.0
  %v1988 = vand.u32 %v1019, 4294901760
  %v1989 = vsub.f32 %v1019, %v1988
  %1990 = vmatpush1.msra.mxu0 %v1989
  %1991 = vmatprep.subr.mxu0 0.0
  %1992 = vmatpush2.msra.mxu0 0.0
  %1993 = vmatprep.subr.mxu0 0.0
  %1994 = vmatpush2.msra.mxu0 0.0
  %1995 = vmatprep.subr.mxu0 0.0
  %1996 = vmatpush2.msra.mxu0 0.0
  %1997 = vmatprep.subr.mxu0 0.0
  %1998 = vmatpush2.msra.mxu0 0.0
  %1999 = vmatprep.subr.mxu0 0.0
  %2000 = vmatpush2.msra.mxu0 0.0
  %2001 = vmatprep.subr.mxu0 0.0
  %2002 = vmatpush2.msra.mxu0 0.0
  %2003 = vmatprep.subr.mxu0 0.0
  %2004 = vmatpush2.msra.mxu0 0.0
  %2005 = vmatprep.subr.mxu0 0.0
  %2006 = vmatpush2.msra.mxu0 0.0
  %2007 = vmatprep.subr.mxu0 0.0
  %2008 = vmatpush2.msra.mxu0 0.0
  %2009 = vmatprep.subr.mxu0 0.0
  %2010 = vmatpush2.msra.mxu0 0.0
  %2011 = vmatprep.subr.mxu0 0.0
  %2012 = vmatpush2.msra.mxu0 0.0
  %2013 = vmatprep.subr.mxu0 0.0
  %2014 = vmatpush2.msra.mxu0 0.0
  %2015 = vmatprep.subr.mxu0 0.0
  %2016 = vmatpush2.msra.mxu0 0.0
  %2017 = vmatprep.subr.mxu0 0.0
  %2018 = vmatpush2.msra.mxu0 0.0
  %2019 = vmatprep.subr.mxu0 0.0
  %2020 = vmatpush2.msra.mxu0 0.0
  %2021 = vmatprep.subr.mxu0 0.0
  %2022 = vmatpush2.msra.mxu0 0.0
  %2023 = vmatprep.mubr.f32.mxu0 0.0
  %v2024 = vand.u32 %v1682, 4294901760
  %v2025 = vsub.f32 %v1682, %v2024
  %2026 = vmatmul.mubr.f32.gmra.mxu0 %v2025
  %v2027 = vpop.f32.mrf.mxu0
  %v2028 = vadd.f32 %v1924, %v2027
  %v2029 = vpop.f32.mrf.mxu0
  %2030 = vdwg.mxu0
  %2031 = vmatprep.subr.mxu0 0.0
  %v2032 = vand.u32 %v1034, 4294901760
  %2033 = vmatpush1.msra.mxu0 %v2032
  %2034 = vmatprep.subr.mxu0 0.0
  %v2035 = vand.u32 %v1033, 4294901760
  %2036 = vmatpush1.msra.mxu0 %v2035
  %2037 = vmatprep.subr.mxu0 0.0
  %v2038 = vand.u32 %v1032, 4294901760
  %2039 = vmatpush1.msra.mxu0 %v2038
  %2040 = vmatprep.subr.mxu0 0.0
  %v2041 = vand.u32 %v1031, 4294901760
  %2042 = vmatpush1.msra.mxu0 %v2041
  %2043 = vmatprep.subr.mxu0 0.0
  %v2044 = vand.u32 %v1030, 4294901760
  %2045 = vmatpush1.msra.mxu0 %v2044
  %2046 = vmatprep.subr.mxu0 0.0
  %v2047 = vand.u32 %v1029, 4294901760
  %2048 = vmatpush1.msra.mxu0 %v2047
  %2049 = vmatprep.subr.mxu0 0.0
  %v2050 = vand.u32 %v1028, 4294901760
  %2051 = vmatpush1.msra.mxu0 %v2050
  %2052 = vmatprep.subr.mxu0 0.0
  %v2053 = vand.u32 %v1027, 4294901760
  %2054 = vmatpush1.msra.mxu0 %v2053
  %2055 = vmatprep.subr.mxu0 0.0
  %v2056 = vand.u32 %v1026, 4294901760
  %2057 = vmatpush1.msra.mxu0 %v2056
  %2058 = vmatprep.subr.mxu0 0.0
  %v2059 = vand.u32 %v1025, 4294901760
  %2060 = vmatpush1.msra.mxu0 %v2059
  %2061 = vmatprep.subr.mxu0 0.0
  %v2062 = vand.u32 %v1024, 4294901760
  %2063 = vmatpush1.msra.mxu0 %v2062
  %2064 = vmatprep.subr.mxu0 0.0
  %v2065 = vand.u32 %v1023, 4294901760
  %2066 = vmatpush1.msra.mxu0 %v2065
  %2067 = vmatprep.subr.mxu0 0.0
  %v2068 = vand.u32 %v1022, 4294901760
  %2069 = vmatpush1.msra.mxu0 %v2068
  %2070 = vmatprep.subr.mxu0 0.0
  %v2071 = vand.u32 %v1021, 4294901760
  %2072 = vmatpush1.msra.mxu0 %v2071
  %2073 = vmatprep.subr.mxu0 0.0
  %v2074 = vand.u32 %v1020, 4294901760
  %2075 = vmatpush1.msra.mxu0 %v2074
  %2076 = vmatprep.subr.mxu0 0.0
  %v2077 = vand.u32 %v1019, 4294901760
  %2078 = vmatpush1.msra.mxu0 %v2077
  %2079 = vmatprep.subr.mxu0 0.0
  %2080 = vmatpush2.msra.mxu0 0.0
  %2081 = vmatprep.subr.mxu0 0.0
  %2082 = vmatpush2.msra.mxu0 0.0
  %2083 = vmatprep.subr.mxu0 0.0
  %2084 = vmatpush2.msra.mxu0 0.0
  %2085 = vmatprep.subr.mxu0 0.0
  %2086 = vmatpush2.msra.mxu0 0.0
  %2087 = vmatprep.subr.mxu0 0.0
  %2088 = vmatpush2.msra.mxu0 0.0
  %2089 = vmatprep.subr.mxu0 0.0
  %2090 = vmatpush2.msra.mxu0 0.0
  %2091 = vmatprep.subr.mxu0 0.0
  %2092 = vmatpush2.msra.mxu0 0.0
  %2093 = vmatprep.subr.mxu0 0.0
  %2094 = vmatpush2.msra.mxu0 0.0
  %2095 = vmatprep.subr.mxu0 0.0
  %2096 = vmatpush2.msra.mxu0 0.0
  %2097 = vmatprep.subr.mxu0 0.0
  %2098 = vmatpush2.msra.mxu0 0.0
  %2099 = vmatprep.subr.mxu0 0.0
  %2100 = vmatpush2.msra.mxu0 0.0
  %2101 = vmatprep.subr.mxu0 0.0
  %2102 = vmatpush2.msra.mxu0 0.0
  %2103 = vmatprep.subr.mxu0 0.0
  %2104 = vmatpush2.msra.mxu0 0.0
  %2105 = vmatprep.subr.mxu0 0.0
  %2106 = vmatpush2.msra.mxu0 0.0
  %2107 = vmatprep.subr.mxu0 0.0
  %2108 = vmatpush2.msra.mxu0 0.0
  %2109 = vmatprep.subr.mxu0 0.0
  %2110 = vmatpush2.msra.mxu0 0.0
  %2111 = vmatprep.mubr.f32.mxu0 0.0
  %v2112 = vand.u32 %v1682, 4294901760
  %v2113 = vsub.f32 %v1682, %v2112
  %v2114 = vand.u32 %v2113, 4294901760
  %2115 = vmatmul.mubr.f32.gmra.mxu0 %v2114
  %v2116 = vpop.f32.mrf.mxu0
  %v2117 = vadd.f32 %v2028, %v2116
  %v2118 = vpop.f32.mrf.mxu0
  %2119 = vdwg.mxu0
  %2120 = vmatprep.subr.mxu0 0.0
  %v2121 = vand.u32 %v1034, 4294901760
  %v2122 = vsub.f32 %v1034, %v2121
  %v2123 = vand.u32 %v2122, 4294901760
  %2124 = vmatpush1.msra.mxu0 %v2123
  %2125 = vmatprep.subr.mxu0 0.0
  %v2126 = vand.u32 %v1033, 4294901760
  %v2127 = vsub.f32 %v1033, %v2126
  %v2128 = vand.u32 %v2127, 4294901760
  %2129 = vmatpush1.msra.mxu0 %v2128
  %2130 = vmatprep.subr.mxu0 0.0
  %v2131 = vand.u32 %v1032, 4294901760
  %v2132 = vsub.f32 %v1032, %v2131
  %v2133 = vand.u32 %v2132, 4294901760
  %2134 = vmatpush1.msra.mxu0 %v2133
  %2135 = vmatprep.subr.mxu0 0.0
  %v2136 = vand.u32 %v1031, 4294901760
  %v2137 = vsub.f32 %v1031, %v2136
  %v2138 = vand.u32 %v2137, 4294901760
  %2139 = vmatpush1.msra.mxu0 %v2138
  %2140 = vmatprep.subr.mxu0 0.0
  %v2141 = vand.u32 %v1030, 4294901760
  %v2142 = vsub.f32 %v1030, %v2141
  %v2143 = vand.u32 %v2142, 4294901760
  %2144 = vmatpush1.msra.mxu0 %v2143
  %2145 = vmatprep.subr.mxu0 0.0
  %v2146 = vand.u32 %v1029, 4294901760
  %v2147 = vsub.f32 %v1029, %v2146
  %v2148 = vand.u32 %v2147, 4294901760
  %2149 = vmatpush1.msra.mxu0 %v2148
  %2150 = vmatprep.subr.mxu0 0.0
  %v2151 = vand.u32 %v1028, 4294901760
  %v2152 = vsub.f32 %v1028, %v2151
  %v2153 = vand.u32 %v2152, 4294901760
  %2154 = vmatpush1.msra.mxu0 %v2153
  %2155 = vmatprep.subr.mxu0 0.0
  %v2156 = vand.u32 %v1027, 4294901760
  %v2157 = vsub.f32 %v1027, %v2156
  %v2158 = vand.u32 %v2157, 4294901760
  %2159 = vmatpush1.msra.mxu0 %v2158
  %2160 = vmatprep.subr.mxu0 0.0
  %v2161 = vand.u32 %v1026, 4294901760
  %v2162 = vsub.f32 %v1026, %v2161
  %v2163 = vand.u32 %v2162, 4294901760
  %2164 = vmatpush1.msra.mxu0 %v2163
  %2165 = vmatprep.subr.mxu0 0.0
  %v2166 = vand.u32 %v1025, 4294901760
  %v2167 = vsub.f32 %v1025, %v2166
  %v2168 = vand.u32 %v2167, 4294901760
  %2169 = vmatpush1.msra.mxu0 %v2168
  %2170 = vmatprep.subr.mxu0 0.0
  %v2171 = vand.u32 %v1024, 4294901760
  %v2172 = vsub.f32 %v1024, %v2171
  %v2173 = vand.u32 %v2172, 4294901760
  %2174 = vmatpush1.msra.mxu0 %v2173
  %2175 = vmatprep.subr.mxu0 0.0
  %v2176 = vand.u32 %v1023, 4294901760
  %v2177 = vsub.f32 %v1023, %v2176
  %v2178 = vand.u32 %v2177, 4294901760
  %2179 = vmatpush1.msra.mxu0 %v2178
  %2180 = vmatprep.subr.mxu0 0.0
  %v2181 = vand.u32 %v1022, 4294901760
  %v2182 = vsub.f32 %v1022, %v2181
  %v2183 = vand.u32 %v2182, 4294901760
  %2184 = vmatpush1.msra.mxu0 %v2183
  %2185 = vmatprep.subr.mxu0 0.0
  %v2186 = vand.u32 %v1021, 4294901760
  %v2187 = vsub.f32 %v1021, %v2186
  %v2188 = vand.u32 %v2187, 4294901760
  %2189 = vmatpush1.msra.mxu0 %v2188
  %2190 = vmatprep.subr.mxu0 0.0
  %v2191 = vand.u32 %v1020, 4294901760
  %v2192 = vsub.f32 %v1020, %v2191
  %v2193 = vand.u32 %v2192, 4294901760
  %2194 = vmatpush1.msra.mxu0 %v2193
  %2195 = vmatprep.subr.mxu0 0.0
  %v2196 = vand.u32 %v1019, 4294901760
  %v2197 = vsub.f32 %v1019, %v2196
  %v2198 = vand.u32 %v2197, 4294901760
  %2199 = vmatpush1.msra.mxu0 %v2198
  %2200 = vmatprep.subr.mxu0 0.0
  %2201 = vmatpush2.msra.mxu0 0.0
  %2202 = vmatprep.subr.mxu0 0.0
  %2203 = vmatpush2.msra.mxu0 0.0
  %2204 = vmatprep.subr.mxu0 0.0
  %2205 = vmatpush2.msra.mxu0 0.0
  %2206 = vmatprep.subr.mxu0 0.0
  %2207 = vmatpush2.msra.mxu0 0.0
  %2208 = vmatprep.subr.mxu0 0.0
  %2209 = vmatpush2.msra.mxu0 0.0
  %2210 = vmatprep.subr.mxu0 0.0
  %2211 = vmatpush2.msra.mxu0 0.0
  %2212 = vmatprep.subr.mxu0 0.0
  %2213 = vmatpush2.msra.mxu0 0.0
  %2214 = vmatprep.subr.mxu0 0.0
  %2215 = vmatpush2.msra.mxu0 0.0
  %2216 = vmatprep.subr.mxu0 0.0
  %2217 = vmatpush2.msra.mxu0 0.0
  %2218 = vmatprep.subr.mxu0 0.0
  %2219 = vmatpush2.msra.mxu0 0.0
  %2220 = vmatprep.subr.mxu0 0.0
  %2221 = vmatpush2.msra.mxu0 0.0
  %2222 = vmatprep.subr.mxu0 0.0
  %2223 = vmatpush2.msra.mxu0 0.0
  %2224 = vmatprep.subr.mxu0 0.0
  %2225 = vmatpush2.msra.mxu0 0.0
  %2226 = vmatprep.subr.mxu0 0.0
  %2227 = vmatpush2.msra.mxu0 0.0
  %2228 = vmatprep.subr.mxu0 0.0
  %2229 = vmatpush2.msra.mxu0 0.0
  %2230 = vmatprep.subr.mxu0 0.0
  %2231 = vmatpush2.msra.mxu0 0.0
  %2232 = vmatprep.mubr.f32.mxu0 0.0
  %v2233 = vand.u32 %v1682, 4294901760
  %2234 = vmatmul.mubr.f32.gmra.mxu0 %v2233
  %v2235 = vpop.f32.mrf.mxu0
  %v2236 = vadd.f32 %v2117, %v2235
  %v2237 = vpop.f32.mrf.mxu0
  %2238 = vdwg.mxu0
  %2239 = vmatprep.subr.mxu0 0.0
  %v2240 = vand.u32 %v1034, 4294901760
  %2241 = vmatpush1.msra.mxu0 %v2240
  %2242 = vmatprep.subr.mxu0 0.0
  %v2243 = vand.u32 %v1033, 4294901760
  %2244 = vmatpush1.msra.mxu0 %v2243
  %2245 = vmatprep.subr.mxu0 0.0
  %v2246 = vand.u32 %v1032, 4294901760
  %2247 = vmatpush1.msra.mxu0 %v2246
  %2248 = vmatprep.subr.mxu0 0.0
  %v2249 = vand.u32 %v1031, 4294901760
  %2250 = vmatpush1.msra.mxu0 %v2249
  %2251 = vmatprep.subr.mxu0 0.0
  %v2252 = vand.u32 %v1030, 4294901760
  %2253 = vmatpush1.msra.mxu0 %v2252
  %2254 = vmatprep.subr.mxu0 0.0
  %v2255 = vand.u32 %v1029, 4294901760
  %2256 = vmatpush1.msra.mxu0 %v2255
  %2257 = vmatprep.subr.mxu0 0.0
  %v2258 = vand.u32 %v1028, 4294901760
  %2259 = vmatpush1.msra.mxu0 %v2258
  %2260 = vmatprep.subr.mxu0 0.0
  %v2261 = vand.u32 %v1027, 4294901760
  %2262 = vmatpush1.msra.mxu0 %v2261
  %2263 = vmatprep.subr.mxu0 0.0
  %v2264 = vand.u32 %v1026, 4294901760
  %2265 = vmatpush1.msra.mxu0 %v2264
  %2266 = vmatprep.subr.mxu0 0.0
  %v2267 = vand.u32 %v1025, 4294901760
  %2268 = vmatpush1.msra.mxu0 %v2267
  %2269 = vmatprep.subr.mxu0 0.0
  %v2270 = vand.u32 %v1024, 4294901760
  %2271 = vmatpush1.msra.mxu0 %v2270
  %2272 = vmatprep.subr.mxu0 0.0
  %v2273 = vand.u32 %v1023, 4294901760
  %2274 = vmatpush1.msra.mxu0 %v2273
  %2275 = vmatprep.subr.mxu0 0.0
  %v2276 = vand.u32 %v1022, 4294901760
  %2277 = vmatpush1.msra.mxu0 %v2276
  %2278 = vmatprep.subr.mxu0 0.0
  %v2279 = vand.u32 %v1021, 4294901760
  %2280 = vmatpush1.msra.mxu0 %v2279
  %2281 = vmatprep.subr.mxu0 0.0
  %v2282 = vand.u32 %v1020, 4294901760
  %2283 = vmatpush1.msra.mxu0 %v2282
  %2284 = vmatprep.subr.mxu0 0.0
  %v2285 = vand.u32 %v1019, 4294901760
  %2286 = vmatpush1.msra.mxu0 %v2285
  %2287 = vmatprep.subr.mxu0 0.0
  %2288 = vmatpush2.msra.mxu0 0.0
  %2289 = vmatprep.subr.mxu0 0.0
  %2290 = vmatpush2.msra.mxu0 0.0
  %2291 = vmatprep.subr.mxu0 0.0
  %2292 = vmatpush2.msra.mxu0 0.0
  %2293 = vmatprep.subr.mxu0 0.0
  %2294 = vmatpush2.msra.mxu0 0.0
  %2295 = vmatprep.subr.mxu0 0.0
  %2296 = vmatpush2.msra.mxu0 0.0
  %2297 = vmatprep.subr.mxu0 0.0
  %2298 = vmatpush2.msra.mxu0 0.0
  %2299 = vmatprep.subr.mxu0 0.0
  %2300 = vmatpush2.msra.mxu0 0.0
  %2301 = vmatprep.subr.mxu0 0.0
  %2302 = vmatpush2.msra.mxu0 0.0
  %2303 = vmatprep.subr.mxu0 0.0
  %2304 = vmatpush2.msra.mxu0 0.0
  %2305 = vmatprep.subr.mxu0 0.0
  %2306 = vmatpush2.msra.mxu0 0.0
  %2307 = vmatprep.subr.mxu0 0.0
  %2308 = vmatpush2.msra.mxu0 0.0
  %2309 = vmatprep.subr.mxu0 0.0
  %2310 = vmatpush2.msra.mxu0 0.0
  %2311 = vmatprep.subr.mxu0 0.0
  %2312 = vmatpush2.msra.mxu0 0.0
  %2313 = vmatprep.subr.mxu0 0.0
  %2314 = vmatpush2.msra.mxu0 0.0
  %2315 = vmatprep.subr.mxu0 0.0
  %2316 = vmatpush2.msra.mxu0 0.0
  %2317 = vmatprep.subr.mxu0 0.0
  %2318 = vmatpush2.msra.mxu0 0.0
  %2319 = vmatprep.mubr.f32.mxu0 0.0
  %v2320 = vand.u32 %v1682, 4294901760
  %2321 = vmatmul.mubr.f32.gmra.mxu0 %v2320
  %v2322 = vpop.f32.mrf.mxu0
  %v2323 = vadd.f32 %v2236, %v2322
  %v2324 = vpop.f32.mrf.mxu0
  %2325 = vdwg.mxu0
  %v2326 = vadd.f32 %v1684, %v2323
  %v2327 = vtanh.pop %v2326
  %2328 = vst [vmem:[%s1683] sm:$0xff] %v2327
  %2329 = vst [vmem:[#allocation2] sm:$0xff] %v2327
  %v2330 = vld [vmem:[#allocation2] sm:$0xff]
  %s2331 = scalar_lea.vmem [#allocation3], 16
  %v2332 = vld [vmem:[%s2331] sm:$0xff]
  %2333 = vmatprep.subr.mxu0 0.0
  %v2334 = vand.u32 %v1034, 4294901760
  %2335 = vmatpush1.msra.mxu0 %v2334
  %2336 = vmatprep.subr.mxu0 0.0
  %v2337 = vand.u32 %v1033, 4294901760
  %2338 = vmatpush1.msra.mxu0 %v2337
  %2339 = vmatprep.subr.mxu0 0.0
  %v2340 = vand.u32 %v1032, 4294901760
  %2341 = vmatpush1.msra.mxu0 %v2340
  %2342 = vmatprep.subr.mxu0 0.0
  %v2343 = vand.u32 %v1031, 4294901760
  %2344 = vmatpush1.msra.mxu0 %v2343
  %2345 = vmatprep.subr.mxu0 0.0
  %v2346 = vand.u32 %v1030, 4294901760
  %2347 = vmatpush1.msra.mxu0 %v2346
  %2348 = vmatprep.subr.mxu0 0.0
  %v2349 = vand.u32 %v1029, 4294901760
  %2350 = vmatpush1.msra.mxu0 %v2349
  %2351 = vmatprep.subr.mxu0 0.0
  %v2352 = vand.u32 %v1028, 4294901760
  %2353 = vmatpush1.msra.mxu0 %v2352
  %2354 = vmatprep.subr.mxu0 0.0
  %v2355 = vand.u32 %v1027, 4294901760
  %2356 = vmatpush1.msra.mxu0 %v2355
  %2357 = vmatprep.subr.mxu0 0.0
  %v2358 = vand.u32 %v1026, 4294901760
  %2359 = vmatpush1.msra.mxu0 %v2358
  %2360 = vmatprep.subr.mxu0 0.0
  %v2361 = vand.u32 %v1025, 4294901760
  %2362 = vmatpush1.msra.mxu0 %v2361
  %2363 = vmatprep.subr.mxu0 0.0
  %v2364 = vand.u32 %v1024, 4294901760
  %2365 = vmatpush1.msra.mxu0 %v2364
  %2366 = vmatprep.subr.mxu0 0.0
  %v2367 = vand.u32 %v1023, 4294901760
  %2368 = vmatpush1.msra.mxu0 %v2367
  %2369 = vmatprep.subr.mxu0 0.0
  %v2370 = vand.u32 %v1022, 4294901760
  %2371 = vmatpush1.msra.mxu0 %v2370
  %2372 = vmatprep.subr.mxu0 0.0
  %v2373 = vand.u32 %v1021, 4294901760
  %2374 = vmatpush1.msra.mxu0 %v2373
  %2375 = vmatprep.subr.mxu0 0.0
  %v2376 = vand.u32 %v1020, 4294901760
  %2377 = vmatpush1.msra.mxu0 %v2376
  %2378 = vmatprep.subr.mxu0 0.0
  %v2379 = vand.u32 %v1019, 4294901760
  %2380 = vmatpush1.msra.mxu0 %v2379
  %2381 = vmatprep.subr.mxu0 0.0
  %2382 = vmatpush2.msra.mxu0 0.0
  %2383 = vmatprep.subr.mxu0 0.0
  %2384 = vmatpush2.msra.mxu0 0.0
  %2385 = vmatprep.subr.mxu0 0.0
  %2386 = vmatpush2.msra.mxu0 0.0
  %2387 = vmatprep.subr.mxu0 0.0
  %2388 = vmatpush2.msra.mxu0 0.0
  %2389 = vmatprep.subr.mxu0 0.0
  %2390 = vmatpush2.msra.mxu0 0.0
  %2391 = vmatprep.subr.mxu0 0.0
  %2392 = vmatpush2.msra.mxu0 0.0
  %2393 = vmatprep.subr.mxu0 0.0
  %2394 = vmatpush2.msra.mxu0 0.0
  %2395 = vmatprep.subr.mxu0 0.0
  %2396 = vmatpush2.msra.mxu0 0.0
  %2397 = vmatprep.subr.mxu0 0.0
  %2398 = vmatpush2.msra.mxu0 0.0
  %2399 = vmatprep.subr.mxu0 0.0
  %2400 = vmatpush2.msra.mxu0 0.0
  %2401 = vmatprep.subr.mxu0 0.0
  %2402 = vmatpush2.msra.mxu0 0.0
  %2403 = vmatprep.subr.mxu0 0.0
  %2404 = vmatpush2.msra.mxu0 0.0
  %2405 = vmatprep.subr.mxu0 0.0
  %2406 = vmatpush2.msra.mxu0 0.0
  %2407 = vmatprep.subr.mxu0 0.0
  %2408 = vmatpush2.msra.mxu0 0.0
  %2409 = vmatprep.subr.mxu0 0.0
  %2410 = vmatpush2.msra.mxu0 0.0
  %2411 = vmatprep.subr.mxu0 0.0
  %2412 = vmatpush2.msra.mxu0 0.0
  %2413 = vmatprep.mubr.f32.mxu0 0.0
  %v2414 = vand.u32 %v2330, 4294901760
  %v2415 = vsub.f32 %v2330, %v2414
  %v2416 = vand.u32 %v2415, 4294901760
  %v2417 = vsub.f32 %v2415, %v2416
  %v2418 = vand.u32 %v2417, 4294901760
  %2419 = vmatmul.mubr.f32.gmra.mxu0 %v2418
  %v2420 = vpop.f32.mrf.mxu0
  %v2421 = vadd.f32 0.0, %v2420
  %v2422 = vpop.f32.mrf.mxu0
  %2423 = vdwg.mxu0
  %2424 = vmatprep.subr.mxu0 0.0
  %v2425 = vand.u32 %v1034, 4294901760
  %v2426 = vsub.f32 %v1034, %v2425
  %v2427 = vand.u32 %v2426, 4294901760
  %v2428 = vsub.f32 %v2426, %v2427
  %v2429 = vand.u32 %v2428, 4294901760
  %2430 = vmatpush1.msra.mxu0 %v2429
  %2431 = vmatprep.subr.mxu0 0.0
  %v2432 = vand.u32 %v1033, 4294901760
  %v2433 = vsub.f32 %v1033, %v2432
  %v2434 = vand.u32 %v2433, 4294901760
  %v2435 = vsub.f32 %v2433, %v2434
  %v2436 = vand.u32 %v2435, 4294901760
  %2437 = vmatpush1.msra.mxu0 %v2436
  %2438 = vmatprep.subr.mxu0 0.0
  %v2439 = vand.u32 %v1032, 4294901760
  %v2440 = vsub.f32 %v1032, %v2439
  %v2441 = vand.u32 %v2440, 4294901760
  %v2442 = vsub.f32 %v2440, %v2441
  %v2443 = vand.u32 %v2442, 4294901760
  %2444 = vmatpush1.msra.mxu0 %v2443
  %2445 = vmatprep.subr.mxu0 0.0
  %v2446 = vand.u32 %v1031, 4294901760
  %v2447 = vsub.f32 %v1031, %v2446
  %v2448 = vand.u32 %v2447, 4294901760
  %v2449 = vsub.f32 %v2447, %v2448
  %v2450 = vand.u32 %v2449, 4294901760
  %2451 = vmatpush1.msra.mxu0 %v2450
  %2452 = vmatprep.subr.mxu0 0.0
  %v2453 = vand.u32 %v1030, 4294901760
  %v2454 = vsub.f32 %v1030, %v2453
  %v2455 = vand.u32 %v2454, 4294901760
  %v2456 = vsub.f32 %v2454, %v2455
  %v2457 = vand.u32 %v2456, 4294901760
  %2458 = vmatpush1.msra.mxu0 %v2457
  %2459 = vmatprep.subr.mxu0 0.0
  %v2460 = vand.u32 %v1029, 4294901760
  %v2461 = vsub.f32 %v1029, %v2460
  %v2462 = vand.u32 %v2461, 4294901760
  %v2463 = vsub.f32 %v2461, %v2462
  %v2464 = vand.u32 %v2463, 4294901760
  %2465 = vmatpush1.msra.mxu0 %v2464
  %2466 = vmatprep.subr.mxu0 0.0
  %v2467 = vand.u32 %v1028, 4294901760
  %v2468 = vsub.f32 %v1028, %v2467
  %v2469 = vand.u32 %v2468, 4294901760
  %v2470 = vsub.f32 %v2468, %v2469
  %v2471 = vand.u32 %v2470, 4294901760
  %2472 = vmatpush1.msra.mxu0 %v2471
  %2473 = vmatprep.subr.mxu0 0.0
  %v2474 = vand.u32 %v1027, 4294901760
  %v2475 = vsub.f32 %v1027, %v2474
  %v2476 = vand.u32 %v2475, 4294901760
  %v2477 = vsub.f32 %v2475, %v2476
  %v2478 = vand.u32 %v2477, 4294901760
  %2479 = vmatpush1.msra.mxu0 %v2478
  %2480 = vmatprep.subr.mxu0 0.0
  %v2481 = vand.u32 %v1026, 4294901760
  %v2482 = vsub.f32 %v1026, %v2481
  %v2483 = vand.u32 %v2482, 4294901760
  %v2484 = vsub.f32 %v2482, %v2483
  %v2485 = vand.u32 %v2484, 4294901760
  %2486 = vmatpush1.msra.mxu0 %v2485
  %2487 = vmatprep.subr.mxu0 0.0
  %v2488 = vand.u32 %v1025, 4294901760
  %v2489 = vsub.f32 %v1025, %v2488
  %v2490 = vand.u32 %v2489, 4294901760
  %v2491 = vsub.f32 %v2489, %v2490
  %v2492 = vand.u32 %v2491, 4294901760
  %2493 = vmatpush1.msra.mxu0 %v2492
  %2494 = vmatprep.subr.mxu0 0.0
  %v2495 = vand.u32 %v1024, 4294901760
  %v2496 = vsub.f32 %v1024, %v2495
  %v2497 = vand.u32 %v2496, 4294901760
  %v2498 = vsub.f32 %v2496, %v2497
  %v2499 = vand.u32 %v2498, 4294901760
  %2500 = vmatpush1.msra.mxu0 %v2499
  %2501 = vmatprep.subr.mxu0 0.0
  %v2502 = vand.u32 %v1023, 4294901760
  %v2503 = vsub.f32 %v1023, %v2502
  %v2504 = vand.u32 %v2503, 4294901760
  %v2505 = vsub.f32 %v2503, %v2504
  %v2506 = vand.u32 %v2505, 4294901760
  %2507 = vmatpush1.msra.mxu0 %v2506
  %2508 = vmatprep.subr.mxu0 0.0
  %v2509 = vand.u32 %v1022, 4294901760
  %v2510 = vsub.f32 %v1022, %v2509
  %v2511 = vand.u32 %v2510, 4294901760
  %v2512 = vsub.f32 %v2510, %v2511
  %v2513 = vand.u32 %v2512, 4294901760
  %2514 = vmatpush1.msra.mxu0 %v2513
  %2515 = vmatprep.subr.mxu0 0.0
  %v2516 = vand.u32 %v1021, 4294901760
  %v2517 = vsub.f32 %v1021, %v2516
  %v2518 = vand.u32 %v2517, 4294901760
  %v2519 = vsub.f32 %v2517, %v2518
  %v2520 = vand.u32 %v2519, 4294901760
  %2521 = vmatpush1.msra.mxu0 %v2520
  %2522 = vmatprep.subr.mxu0 0.0
  %v2523 = vand.u32 %v1020, 4294901760
  %v2524 = vsub.f32 %v1020, %v2523
  %v2525 = vand.u32 %v2524, 4294901760
  %v2526 = vsub.f32 %v2524, %v2525
  %v2527 = vand.u32 %v2526, 4294901760
  %2528 = vmatpush1.msra.mxu0 %v2527
  %2529 = vmatprep.subr.mxu0 0.0
  %v2530 = vand.u32 %v1019, 4294901760
  %v2531 = vsub.f32 %v1019, %v2530
  %v2532 = vand.u32 %v2531, 4294901760
  %v2533 = vsub.f32 %v2531, %v2532
  %v2534 = vand.u32 %v2533, 4294901760
  %2535 = vmatpush1.msra.mxu0 %v2534
  %2536 = vmatprep.subr.mxu0 0.0
  %2537 = vmatpush2.msra.mxu0 0.0
  %2538 = vmatprep.subr.mxu0 0.0
  %2539 = vmatpush2.msra.mxu0 0.0
  %2540 = vmatprep.subr.mxu0 0.0
  %2541 = vmatpush2.msra.mxu0 0.0
  %2542 = vmatprep.subr.mxu0 0.0
  %2543 = vmatpush2.msra.mxu0 0.0
  %2544 = vmatprep.subr.mxu0 0.0
  %2545 = vmatpush2.msra.mxu0 0.0
  %2546 = vmatprep.subr.mxu0 0.0
  %2547 = vmatpush2.msra.mxu0 0.0
  %2548 = vmatprep.subr.mxu0 0.0
  %2549 = vmatpush2.msra.mxu0 0.0
  %2550 = vmatprep.subr.mxu0 0.0
  %2551 = vmatpush2.msra.mxu0 0.0
  %2552 = vmatprep.subr.mxu0 0.0
  %2553 = vmatpush2.msra.mxu0 0.0
  %2554 = vmatprep.subr.mxu0 0.0
  %2555 = vmatpush2.msra.mxu0 0.0
  %2556 = vmatprep.subr.mxu0 0.0
  %2557 = vmatpush2.msra.mxu0 0.0
  %2558 = vmatprep.subr.mxu0 0.0
  %2559 = vmatpush2.msra.mxu0 0.0
  %2560 = vmatprep.subr.mxu0 0.0
  %2561 = vmatpush2.msra.mxu0 0.0
  %2562 = vmatprep.subr.mxu0 0.0
  %2563 = vmatpush2.msra.mxu0 0.0
  %2564 = vmatprep.subr.mxu0 0.0
  %2565 = vmatpush2.msra.mxu0 0.0
  %2566 = vmatprep.subr.mxu0 0.0
  %2567 = vmatpush2.msra.mxu0 0.0
  %2568 = vmatprep.mubr.f32.mxu0 0.0
  %v2569 = vand.u32 %v2330, 4294901760
  %2570 = vmatmul.mubr.f32.gmra.mxu0 %v2569
  %v2571 = vpop.f32.mrf.mxu0
  %v2572 = vadd.f32 %v2421, %v2571
  %v2573 = vpop.f32.mrf.mxu0
  %2574 = vdwg.mxu0
  %2575 = vmatprep.subr.mxu0 0.0
  %v2576 = vand.u32 %v1034, 4294901760
  %v2577 = vsub.f32 %v1034, %v2576
  %2578 = vmatpush1.msra.mxu0 %v2577
  %2579 = vmatprep.subr.mxu0 0.0
  %v2580 = vand.u32 %v1033, 4294901760
  %v2581 = vsub.f32 %v1033, %v2580
  %2582 = vmatpush1.msra.mxu0 %v2581
  %2583 = vmatprep.subr.mxu0 0.0
  %v2584 = vand.u32 %v1032, 4294901760
  %v2585 = vsub.f32 %v1032, %v2584
  %2586 = vmatpush1.msra.mxu0 %v2585
  %2587 = vmatprep.subr.mxu0 0.0
  %v2588 = vand.u32 %v1031, 4294901760
  %v2589 = vsub.f32 %v1031, %v2588
  %2590 = vmatpush1.msra.mxu0 %v2589
  %2591 = vmatprep.subr.mxu0 0.0
  %v2592 = vand.u32 %v1030, 4294901760
  %v2593 = vsub.f32 %v1030, %v2592
  %2594 = vmatpush1.msra.mxu0 %v2593
  %2595 = vmatprep.subr.mxu0 0.0
  %v2596 = vand.u32 %v1029, 4294901760
  %v2597 = vsub.f32 %v1029, %v2596
  %2598 = vmatpush1.msra.mxu0 %v2597
  %2599 = vmatprep.subr.mxu0 0.0
  %v2600 = vand.u32 %v1028, 4294901760
  %v2601 = vsub.f32 %v1028, %v2600
  %2602 = vmatpush1.msra.mxu0 %v2601
  %2603 = vmatprep.subr.mxu0 0.0
  %v2604 = vand.u32 %v1027, 4294901760
  %v2605 = vsub.f32 %v1027, %v2604
  %2606 = vmatpush1.msra.mxu0 %v2605
  %2607 = vmatprep.subr.mxu0 0.0
  %v2608 = vand.u32 %v1026, 4294901760
  %v2609 = vsub.f32 %v1026, %v2608
  %2610 = vmatpush1.msra.mxu0 %v2609
  %2611 = vmatprep.subr.mxu0 0.0
  %v2612 = vand.u32 %v1025, 4294901760
  %v2613 = vsub.f32 %v1025, %v2612
  %2614 = vmatpush1.msra.mxu0 %v2613
  %2615 = vmatprep.subr.mxu0 0.0
  %v2616 = vand.u32 %v1024, 4294901760
  %v2617 = vsub.f32 %v1024, %v2616
  %2618 = vmatpush1.msra.mxu0 %v2617
  %2619 = vmatprep.subr.mxu0 0.0
  %v2620 = vand.u32 %v1023, 4294901760
  %v2621 = vsub.f32 %v1023, %v2620
  %2622 = vmatpush1.msra.mxu0 %v2621
  %2623 = vmatprep.subr.mxu0 0.0
  %v2624 = vand.u32 %v1022, 4294901760
  %v2625 = vsub.f32 %v1022, %v2624
  %2626 = vmatpush1.msra.mxu0 %v2625
  %2627 = vmatprep.subr.mxu0 0.0
  %v2628 = vand.u32 %v1021, 4294901760
  %v2629 = vsub.f32 %v1021, %v2628
  %2630 = vmatpush1.msra.mxu0 %v2629
  %2631 = vmatprep.subr.mxu0 0.0
  %v2632 = vand.u32 %v1020, 4294901760
  %v2633 = vsub.f32 %v1020, %v2632
  %2634 = vmatpush1.msra.mxu0 %v2633
  %2635 = vmatprep.subr.mxu0 0.0
  %v2636 = vand.u32 %v1019, 4294901760
  %v2637 = vsub.f32 %v1019, %v2636
  %2638 = vmatpush1.msra.mxu0 %v2637
  %2639 = vmatprep.subr.mxu0 0.0
  %2640 = vmatpush2.msra.mxu0 0.0
  %2641 = vmatprep.subr.mxu0 0.0
  %2642 = vmatpush2.msra.mxu0 0.0
  %2643 = vmatprep.subr.mxu0 0.0
  %2644 = vmatpush2.msra.mxu0 0.0
  %2645 = vmatprep.subr.mxu0 0.0
  %2646 = vmatpush2.msra.mxu0 0.0
  %2647 = vmatprep.subr.mxu0 0.0
  %2648 = vmatpush2.msra.mxu0 0.0
  %2649 = vmatprep.subr.mxu0 0.0
  %2650 = vmatpush2.msra.mxu0 0.0
  %2651 = vmatprep.subr.mxu0 0.0
  %2652 = vmatpush2.msra.mxu0 0.0
  %2653 = vmatprep.subr.mxu0 0.0
  %2654 = vmatpush2.msra.mxu0 0.0
  %2655 = vmatprep.subr.mxu0 0.0
  %2656 = vmatpush2.msra.mxu0 0.0
  %2657 = vmatprep.subr.mxu0 0.0
  %2658 = vmatpush2.msra.mxu0 0.0
  %2659 = vmatprep.subr.mxu0 0.0
  %2660 = vmatpush2.msra.mxu0 0.0
  %2661 = vmatprep.subr.mxu0 0.0
  %2662 = vmatpush2.msra.mxu0 0.0
  %2663 = vmatprep.subr.mxu0 0.0
  %2664 = vmatpush2.msra.mxu0 0.0
  %2665 = vmatprep.subr.mxu0 0.0
  %2666 = vmatpush2.msra.mxu0 0.0
  %2667 = vmatprep.subr.mxu0 0.0
  %2668 = vmatpush2.msra.mxu0 0.0
  %2669 = vmatprep.subr.mxu0 0.0
  %2670 = vmatpush2.msra.mxu0 0.0
  %2671 = vmatprep.mubr.f32.mxu0 0.0
  %v2672 = vand.u32 %v2330, 4294901760
  %v2673 = vsub.f32 %v2330, %v2672
  %2674 = vmatmul.mubr.f32.gmra.mxu0 %v2673
  %v2675 = vpop.f32.mrf.mxu0
  %v2676 = vadd.f32 %v2572, %v2675
  %v2677 = vpop.f32.mrf.mxu0
  %2678 = vdwg.mxu0
  %2679 = vmatprep.subr.mxu0 0.0
  %v2680 = vand.u32 %v1034, 4294901760
  %2681 = vmatpush1.msra.mxu0 %v2680
  %2682 = vmatprep.subr.mxu0 0.0
  %v2683 = vand.u32 %v1033, 4294901760
  %2684 = vmatpush1.msra.mxu0 %v2683
  %2685 = vmatprep.subr.mxu0 0.0
  %v2686 = vand.u32 %v1032, 4294901760
  %2687 = vmatpush1.msra.mxu0 %v2686
  %2688 = vmatprep.subr.mxu0 0.0
  %v2689 = vand.u32 %v1031, 4294901760
  %2690 = vmatpush1.msra.mxu0 %v2689
  %2691 = vmatprep.subr.mxu0 0.0
  %v2692 = vand.u32 %v1030, 4294901760
  %2693 = vmatpush1.msra.mxu0 %v2692
  %2694 = vmatprep.subr.mxu0 0.0
  %v2695 = vand.u32 %v1029, 4294901760
  %2696 = vmatpush1.msra.mxu0 %v2695
  %2697 = vmatprep.subr.mxu0 0.0
  %v2698 = vand.u32 %v1028, 4294901760
  %2699 = vmatpush1.msra.mxu0 %v2698
  %2700 = vmatprep.subr.mxu0 0.0
  %v2701 = vand.u32 %v1027, 4294901760
  %2702 = vmatpush1.msra.mxu0 %v2701
  %2703 = vmatprep.subr.mxu0 0.0
  %v2704 = vand.u32 %v1026, 4294901760
  %2705 = vmatpush1.msra.mxu0 %v2704
  %2706 = vmatprep.subr.mxu0 0.0
  %v2707 = vand.u32 %v1025, 4294901760
  %2708 = vmatpush1.msra.mxu0 %v2707
  %2709 = vmatprep.subr.mxu0 0.0
  %v2710 = vand.u32 %v1024, 4294901760
  %2711 = vmatpush1.msra.mxu0 %v2710
  %2712 = vmatprep.subr.mxu0 0.0
  %v2713 = vand.u32 %v1023, 4294901760
  %2714 = vmatpush1.msra.mxu0 %v2713
  %2715 = vmatprep.subr.mxu0 0.0
  %v2716 = vand.u32 %v1022, 4294901760
  %2717 = vmatpush1.msra.mxu0 %v2716
  %2718 = vmatprep.subr.mxu0 0.0
  %v2719 = vand.u32 %v1021, 4294901760
  %2720 = vmatpush1.msra.mxu0 %v2719
  %2721 = vmatprep.subr.mxu0 0.0
  %v2722 = vand.u32 %v1020, 4294901760
  %2723 = vmatpush1.msra.mxu0 %v2722
  %2724 = vmatprep.subr.mxu0 0.0
  %v2725 = vand.u32 %v1019, 4294901760
  %2726 = vmatpush1.msra.mxu0 %v2725
  %2727 = vmatprep.subr.mxu0 0.0
  %2728 = vmatpush2.msra.mxu0 0.0
  %2729 = vmatprep.subr.mxu0 0.0
  %2730 = vmatpush2.msra.mxu0 0.0
  %2731 = vmatprep.subr.mxu0 0.0
  %2732 = vmatpush2.msra.mxu0 0.0
  %2733 = vmatprep.subr.mxu0 0.0
  %2734 = vmatpush2.msra.mxu0 0.0
  %2735 = vmatprep.subr.mxu0 0.0
  %2736 = vmatpush2.msra.mxu0 0.0
  %2737 = vmatprep.subr.mxu0 0.0
  %2738 = vmatpush2.msra.mxu0 0.0
  %2739 = vmatprep.subr.mxu0 0.0
  %2740 = vmatpush2.msra.mxu0 0.0
  %2741 = vmatprep.subr.mxu0 0.0
  %2742 = vmatpush2.msra.mxu0 0.0
  %2743 = vmatprep.subr.mxu0 0.0
  %2744 = vmatpush2.msra.mxu0 0.0
  %2745 = vmatprep.subr.mxu0 0.0
  %2746 = vmatpush2.msra.mxu0 0.0
  %2747 = vmatprep.subr.mxu0 0.0
  %2748 = vmatpush2.msra.mxu0 0.0
  %2749 = vmatprep.subr.mxu0 0.0
  %2750 = vmatpush2.msra.mxu0 0.0
  %2751 = vmatprep.subr.mxu0 0.0
  %2752 = vmatpush2.msra.mxu0 0.0
  %2753 = vmatprep.subr.mxu0 0.0
  %2754 = vmatpush2.msra.mxu0 0.0
  %2755 = vmatprep.subr.mxu0 0.0
  %2756 = vmatpush2.msra.mxu0 0.0
  %2757 = vmatprep.subr.mxu0 0.0
  %2758 = vmatpush2.msra.mxu0 0.0
  %2759 = vmatprep.mubr.f32.mxu0 0.0
  %v2760 = vand.u32 %v2330, 4294901760
  %v2761 = vsub.f32 %v2330, %v2760
  %v2762 = vand.u32 %v2761, 4294901760
  %2763 = vmatmul.mubr.f32.gmra.mxu0 %v2762
  %v2764 = vpop.f32.mrf.mxu0
  %v2765 = vadd.f32 %v2676, %v2764
  %v2766 = vpop.f32.mrf.mxu0
  %2767 = vdwg.mxu0
  %2768 = vmatprep.subr.mxu0 0.0
  %v2769 = vand.u32 %v1034, 4294901760
  %v2770 = vsub.f32 %v1034, %v2769
  %v2771 = vand.u32 %v2770, 4294901760
  %2772 = vmatpush1.msra.mxu0 %v2771
  %2773 = vmatprep.subr.mxu0 0.0
  %v2774 = vand.u32 %v1033, 4294901760
  %v2775 = vsub.f32 %v1033, %v2774
  %v2776 = vand.u32 %v2775, 4294901760
  %2777 = vmatpush1.msra.mxu0 %v2776
  %2778 = vmatprep.subr.mxu0 0.0
  %v2779 = vand.u32 %v1032, 4294901760
  %v2780 = vsub.f32 %v1032, %v2779
  %v2781 = vand.u32 %v2780, 4294901760
  %2782 = vmatpush1.msra.mxu0 %v2781
  %2783 = vmatprep.subr.mxu0 0.0
  %v2784 = vand.u32 %v1031, 4294901760
  %v2785 = vsub.f32 %v1031, %v2784
  %v2786 = vand.u32 %v2785, 4294901760
  %2787 = vmatpush1.msra.mxu0 %v2786
  %2788 = vmatprep.subr.mxu0 0.0
  %v2789 = vand.u32 %v1030, 4294901760
  %v2790 = vsub.f32 %v1030, %v2789
  %v2791 = vand.u32 %v2790, 4294901760
  %2792 = vmatpush1.msra.mxu0 %v2791
  %2793 = vmatprep.subr.mxu0 0.0
  %v2794 = vand.u32 %v1029, 4294901760
  %v2795 = vsub.f32 %v1029, %v2794
  %v2796 = vand.u32 %v2795, 4294901760
  %2797 = vmatpush1.msra.mxu0 %v2796
  %2798 = vmatprep.subr.mxu0 0.0
  %v2799 = vand.u32 %v1028, 4294901760
  %v2800 = vsub.f32 %v1028, %v2799
  %v2801 = vand.u32 %v2800, 4294901760
  %2802 = vmatpush1.msra.mxu0 %v2801
  %2803 = vmatprep.subr.mxu0 0.0
  %v2804 = vand.u32 %v1027, 4294901760
  %v2805 = vsub.f32 %v1027, %v2804
  %v2806 = vand.u32 %v2805, 4294901760
  %2807 = vmatpush1.msra.mxu0 %v2806
  %2808 = vmatprep.subr.mxu0 0.0
  %v2809 = vand.u32 %v1026, 4294901760
  %v2810 = vsub.f32 %v1026, %v2809
  %v2811 = vand.u32 %v2810, 4294901760
  %2812 = vmatpush1.msra.mxu0 %v2811
  %2813 = vmatprep.subr.mxu0 0.0
  %v2814 = vand.u32 %v1025, 4294901760
  %v2815 = vsub.f32 %v1025, %v2814
  %v2816 = vand.u32 %v2815, 4294901760
  %2817 = vmatpush1.msra.mxu0 %v2816
  %2818 = vmatprep.subr.mxu0 0.0
  %v2819 = vand.u32 %v1024, 4294901760
  %v2820 = vsub.f32 %v1024, %v2819
  %v2821 = vand.u32 %v2820, 4294901760
  %2822 = vmatpush1.msra.mxu0 %v2821
  %2823 = vmatprep.subr.mxu0 0.0
  %v2824 = vand.u32 %v1023, 4294901760
  %v2825 = vsub.f32 %v1023, %v2824
  %v2826 = vand.u32 %v2825, 4294901760
  %2827 = vmatpush1.msra.mxu0 %v2826
  %2828 = vmatprep.subr.mxu0 0.0
  %v2829 = vand.u32 %v1022, 4294901760
  %v2830 = vsub.f32 %v1022, %v2829
  %v2831 = vand.u32 %v2830, 4294901760
  %2832 = vmatpush1.msra.mxu0 %v2831
  %2833 = vmatprep.subr.mxu0 0.0
  %v2834 = vand.u32 %v1021, 4294901760
  %v2835 = vsub.f32 %v1021, %v2834
  %v2836 = vand.u32 %v2835, 4294901760
  %2837 = vmatpush1.msra.mxu0 %v2836
  %2838 = vmatprep.subr.mxu0 0.0
  %v2839 = vand.u32 %v1020, 4294901760
  %v2840 = vsub.f32 %v1020, %v2839
  %v2841 = vand.u32 %v2840, 4294901760
  %2842 = vmatpush1.msra.mxu0 %v2841
  %2843 = vmatprep.subr.mxu0 0.0
  %v2844 = vand.u32 %v1019, 4294901760
  %v2845 = vsub.f32 %v1019, %v2844
  %v2846 = vand.u32 %v2845, 4294901760
  %2847 = vmatpush1.msra.mxu0 %v2846
  %2848 = vmatprep.subr.mxu0 0.0
  %2849 = vmatpush2.msra.mxu0 0.0
  %2850 = vmatprep.subr.mxu0 0.0
  %2851 = vmatpush2.msra.mxu0 0.0
  %2852 = vmatprep.subr.mxu0 0.0
  %2853 = vmatpush2.msra.mxu0 0.0
  %2854 = vmatprep.subr.mxu0 0.0
  %2855 = vmatpush2.msra.mxu0 0.0
  %2856 = vmatprep.subr.mxu0 0.0
  %2857 = vmatpush2.msra.mxu0 0.0
  %2858 = vmatprep.subr.mxu0 0.0
  %2859 = vmatpush2.msra.mxu0 0.0
  %2860 = vmatprep.subr.mxu0 0.0
  %2861 = vmatpush2.msra.mxu0 0.0
  %2862 = vmatprep.subr.mxu0 0.0
  %2863 = vmatpush2.msra.mxu0 0.0
  %2864 = vmatprep.subr.mxu0 0.0
  %2865 = vmatpush2.msra.mxu0 0.0
  %2866 = vmatprep.subr.mxu0 0.0
  %2867 = vmatpush2.msra.mxu0 0.0
  %2868 = vmatprep.subr.mxu0 0.0
  %2869 = vmatpush2.msra.mxu0 0.0
  %2870 = vmatprep.subr.mxu0 0.0
  %2871 = vmatpush2.msra.mxu0 0.0
  %2872 = vmatprep.subr.mxu0 0.0
  %2873 = vmatpush2.msra.mxu0 0.0
  %2874 = vmatprep.subr.mxu0 0.0
  %2875 = vmatpush2.msra.mxu0 0.0
  %2876 = vmatprep.subr.mxu0 0.0
  %2877 = vmatpush2.msra.mxu0 0.0
  %2878 = vmatprep.subr.mxu0 0.0
  %2879 = vmatpush2.msra.mxu0 0.0
  %2880 = vmatprep.mubr.f32.mxu0 0.0
  %v2881 = vand.u32 %v2330, 4294901760
  %2882 = vmatmul.mubr.f32.gmra.mxu0 %v2881
  %v2883 = vpop.f32.mrf.mxu0
  %v2884 = vadd.f32 %v2765, %v2883
  %v2885 = vpop.f32.mrf.mxu0
  %2886 = vdwg.mxu0
  %2887 = vmatprep.subr.mxu0 0.0
  %v2888 = vand.u32 %v1034, 4294901760
  %2889 = vmatpush1.msra.mxu0 %v2888
  %2890 = vmatprep.subr.mxu0 0.0
  %v2891 = vand.u32 %v1033, 4294901760
  %2892 = vmatpush1.msra.mxu0 %v2891
  %2893 = vmatprep.subr.mxu0 0.0
  %v2894 = vand.u32 %v1032, 4294901760
  %2895 = vmatpush1.msra.mxu0 %v2894
  %2896 = vmatprep.subr.mxu0 0.0
  %v2897 = vand.u32 %v1031, 4294901760
  %2898 = vmatpush1.msra.mxu0 %v2897
  %2899 = vmatprep.subr.mxu0 0.0
  %v2900 = vand.u32 %v1030, 4294901760
  %2901 = vmatpush1.msra.mxu0 %v2900
  %2902 = vmatprep.subr.mxu0 0.0
  %v2903 = vand.u32 %v1029, 4294901760
  %2904 = vmatpush1.msra.mxu0 %v2903
  %2905 = vmatprep.subr.mxu0 0.0
  %v2906 = vand.u32 %v1028, 4294901760
  %2907 = vmatpush1.msra.mxu0 %v2906
  %2908 = vmatprep.subr.mxu0 0.0
  %v2909 = vand.u32 %v1027, 4294901760
  %2910 = vmatpush1.msra.mxu0 %v2909
  %2911 = vmatprep.subr.mxu0 0.0
  %v2912 = vand.u32 %v1026, 4294901760
  %2913 = vmatpush1.msra.mxu0 %v2912
  %2914 = vmatprep.subr.mxu0 0.0
  %v2915 = vand.u32 %v1025, 4294901760
  %2916 = vmatpush1.msra.mxu0 %v2915
  %2917 = vmatprep.subr.mxu0 0.0
  %v2918 = vand.u32 %v1024, 4294901760
  %2919 = vmatpush1.msra.mxu0 %v2918
  %2920 = vmatprep.subr.mxu0 0.0
  %v2921 = vand.u32 %v1023, 4294901760
  %2922 = vmatpush1.msra.mxu0 %v2921
  %2923 = vmatprep.subr.mxu0 0.0
  %v2924 = vand.u32 %v1022, 4294901760
  %2925 = vmatpush1.msra.mxu0 %v2924
  %2926 = vmatprep.subr.mxu0 0.0
  %v2927 = vand.u32 %v1021, 4294901760
  %2928 = vmatpush1.msra.mxu0 %v2927
  %2929 = vmatprep.subr.mxu0 0.0
  %v2930 = vand.u32 %v1020, 4294901760
  %2931 = vmatpush1.msra.mxu0 %v2930
  %2932 = vmatprep.subr.mxu0 0.0
  %v2933 = vand.u32 %v1019, 4294901760
  %2934 = vmatpush1.msra.mxu0 %v2933
  %2935 = vmatprep.subr.mxu0 0.0
  %2936 = vmatpush2.msra.mxu0 0.0
  %2937 = vmatprep.subr.mxu0 0.0
  %2938 = vmatpush2.msra.mxu0 0.0
  %2939 = vmatprep.subr.mxu0 0.0
  %2940 = vmatpush2.msra.mxu0 0.0
  %2941 = vmatprep.subr.mxu0 0.0
  %2942 = vmatpush2.msra.mxu0 0.0
  %2943 = vmatprep.subr.mxu0 0.0
  %2944 = vmatpush2.msra.mxu0 0.0
  %2945 = vmatprep.subr.mxu0 0.0
  %2946 = vmatpush2.msra.mxu0 0.0
  %2947 = vmatprep.subr.mxu0 0.0
  %2948 = vmatpush2.msra.mxu0 0.0
  %2949 = vmatprep.subr.mxu0 0.0
  %2950 = vmatpush2.msra.mxu0 0.0
  %2951 = vmatprep.subr.mxu0 0.0
  %2952 = vmatpush2.msra.mxu0 0.0
  %2953 = vmatprep.subr.mxu0 0.0
  %2954 = vmatpush2.msra.mxu0 0.0
  %2955 = vmatprep.subr.mxu0 0.0
  %2956 = vmatpush2.msra.mxu0 0.0
  %2957 = vmatprep.subr.mxu0 0.0
  %2958 = vmatpush2.msra.mxu0 0.0
  %2959 = vmatprep.subr.mxu0 0.0
  %2960 = vmatpush2.msra.mxu0 0.0
  %2961 = vmatprep.subr.mxu0 0.0
  %2962 = vmatpush2.msra.mxu0 0.0
  %2963 = vmatprep.subr.mxu0 0.0
  %2964 = vmatpush2.msra.mxu0 0.0
  %2965 = vmatprep.subr.mxu0 0.0
  %2966 = vmatpush2.msra.mxu0 0.0
  %2967 = vmatprep.mubr.f32.mxu0 0.0
  %v2968 = vand.u32 %v2330, 4294901760
  %2969 = vmatmul.mubr.f32.gmra.mxu0 %v2968
  %v2970 = vpop.f32.mrf.mxu0
  %v2971 = vadd.f32 %v2884, %v2970
  %v2972 = vpop.f32.mrf.mxu0
  %2973 = vdwg.mxu0
  %v2974 = vadd.f32 %v2332, %v2971
  %v2975 = vtanh.pop %v2974
  %2976 = vst [vmem:[%s2331] sm:$0xff] %v2975
  %2977 = vst [vmem:[#allocation2] sm:$0xff] %v2975
  %v2978 = vld [vmem:[#allocation2] sm:$0xff]
  %s2979 = scalar_lea.vmem [#allocation3], 24
  %v2980 = vld [vmem:[%s2979] sm:$0xff]
  %2981 = vmatprep.subr.mxu0 0.0
  %v2982 = vand.u32 %v1034, 4294901760
  %2983 = vmatpush1.msra.mxu0 %v2982
  %2984 = vmatprep.subr.mxu0 0.0
  %v2985 = vand.u32 %v1033, 4294901760
  %2986 = vmatpush1.msra.mxu0 %v2985
  %2987 = vmatprep.subr.mxu0 0.0
  %v2988 = vand.u32 %v1032, 4294901760
  %2989 = vmatpush1.msra.mxu0 %v2988
  %2990 = vmatprep.subr.mxu0 0.0
  %v2991 = vand.u32 %v1031, 4294901760
  %2992 = vmatpush1.msra.mxu0 %v2991
  %2993 = vmatprep.subr.mxu0 0.0
  %v2994 = vand.u32 %v1030, 4294901760
  %2995 = vmatpush1.msra.mxu0 %v2994
  %2996 = vmatprep.subr.mxu0 0.0
  %v2997 = vand.u32 %v1029, 4294901760
  %2998 = vmatpush1.msra.mxu0 %v2997
  %2999 = vmatprep.subr.mxu0 0.0
  %v3000 = vand.u32 %v1028, 4294901760
  %3001 = vmatpush1.msra.mxu0 %v3000
  %3002 = vmatprep.subr.mxu0 0.0
  %v3003 = vand.u32 %v1027, 4294901760
  %3004 = vmatpush1.msra.mxu0 %v3003
  %3005 = vmatprep.subr.mxu0 0.0
  %v3006 = vand.u32 %v1026, 4294901760
  %3007 = vmatpush1.msra.mxu0 %v3006
  %3008 = vmatprep.subr.mxu0 0.0
  %v3009 = vand.u32 %v1025, 4294901760
  %3010 = vmatpush1.msra.mxu0 %v3009
  %3011 = vmatprep.subr.mxu0 0.0
  %v3012 = vand.u32 %v1024, 4294901760
  %3013 = vmatpush1.msra.mxu0 %v3012
  %3014 = vmatprep.subr.mxu0 0.0
  %v3015 = vand.u32 %v1023, 4294901760
  %3016 = vmatpush1.msra.mxu0 %v3015
  %3017 = vmatprep.subr.mxu0 0.0
  %v3018 = vand.u32 %v1022, 4294901760
  %3019 = vmatpush1.msra.mxu0 %v3018
  %3020 = vmatprep.subr.mxu0 0.0
  %v3021 = vand.u32 %v1021, 4294901760
  %3022 = vmatpush1.msra.mxu0 %v3021
  %3023 = vmatprep.subr.mxu0 0.0
  %v3024 = vand.u32 %v1020, 4294901760
  %3025 = vmatpush1.msra.mxu0 %v3024
  %3026 = vmatprep.subr.mxu0 0.0
  %v3027 = vand.u32 %v1019, 4294901760
  %3028 = vmatpush1.msra.mxu0 %v3027
  %3029 = vmatprep.subr.mxu0 0.0
  %3030 = vmatpush2.msra.mxu0 0.0
  %3031 = vmatprep.subr.mxu0 0.0
  %3032 = vmatpush2.msra.mxu0 0.0
  %3033 = vmatprep.subr.mxu0 0.0
  %3034 = vmatpush2.msra.mxu0 0.0
  %3035 = vmatprep.subr.mxu0 0.0
  %3036 = vmatpush2.msra.mxu0 0.0
  %3037 = vmatprep.subr.mxu0 0.0
  %3038 = vmatpush2.msra.mxu0 0.0
  %3039 = vmatprep.subr.mxu0 0.0
  %3040 = vmatpush2.msra.mxu0 0.0
  %3041 = vmatprep.subr.mxu0 0.0
  %3042 = vmatpush2.msra.mxu0 0.0
  %3043 = vmatprep.subr.mxu0 0.0
  %3044 = vmatpush2.msra.mxu0 0.0
  %3045 = vmatprep.subr.mxu0 0.0
  %3046 = vmatpush2.msra.mxu0 0.0
  %3047 = vmatprep.subr.mxu0 0.0
  %3048 = vmatpush2.msra.mxu0 0.0
  %3049 = vmatprep.subr.mxu0 0.0
  %3050 = vmatpush2.msra.mxu0 0.0
  %3051 = vmatprep.subr.mxu0 0.0
  %3052 = vmatpush2.msra.mxu0 0.0
  %3053 = vmatprep.subr.mxu0 0.0
  %3054 = vmatpush2.msra.mxu0 0.0
  %3055 = vmatprep.subr.mxu0 0.0
  %3056 = vmatpush2.msra.mxu0 0.0
  %3057 = vmatprep.subr.mxu0 0.0
  %3058 = vmatpush2.msra.mxu0 0.0
  %3059 = vmatprep.subr.mxu0 0.0
  %3060 = vmatpush2.msra.mxu0 0.0
  %3061 = vmatprep.mubr.f32.mxu0 0.0
  %v3062 = vand.u32 %v2978, 4294901760
  %v3063 = vsub.f32 %v2978, %v3062
  %v3064 = vand.u32 %v3063, 4294901760
  %v3065 = vsub.f32 %v3063, %v3064
  %v3066 = vand.u32 %v3065, 4294901760
  %3067 = vmatmul.mubr.f32.gmra.mxu0 %v3066
  %v3068 = vpop.f32.mrf.mxu0
  %v3069 = vadd.f32 0.0, %v3068
  %v3070 = vpop.f32.mrf.mxu0
  %3071 = vdwg.mxu0
  %3072 = vmatprep.subr.mxu0 0.0
  %v3073 = vand.u32 %v1034, 4294901760
  %v3074 = vsub.f32 %v1034, %v3073
  %v3075 = vand.u32 %v3074, 4294901760
  %v3076 = vsub.f32 %v3074, %v3075
  %v3077 = vand.u32 %v3076, 4294901760
  %3078 = vmatpush1.msra.mxu0 %v3077
  %3079 = vmatprep.subr.mxu0 0.0
  %v3080 = vand.u32 %v1033, 4294901760
  %v3081 = vsub.f32 %v1033, %v3080
  %v3082 = vand.u32 %v3081, 4294901760
  %v3083 = vsub.f32 %v3081, %v3082
  %v3084 = vand.u32 %v3083, 4294901760
  %3085 = vmatpush1.msra.mxu0 %v3084
  %3086 = vmatprep.subr.mxu0 0.0
  %v3087 = vand.u32 %v1032, 4294901760
  %v3088 = vsub.f32 %v1032, %v3087
  %v3089 = vand.u32 %v3088, 4294901760
  %v3090 = vsub.f32 %v3088, %v3089
  %v3091 = vand.u32 %v3090, 4294901760
  %3092 = vmatpush1.msra.mxu0 %v3091
  %3093 = vmatprep.subr.mxu0 0.0
  %v3094 = vand.u32 %v1031, 4294901760
  %v3095 = vsub.f32 %v1031, %v3094
  %v3096 = vand.u32 %v3095, 4294901760
  %v3097 = vsub.f32 %v3095, %v3096
  %v3098 = vand.u32 %v3097, 4294901760
  %3099 = vmatpush1.msra.mxu0 %v3098
  %3100 = vmatprep.subr.mxu0 0.0
  %v3101 = vand.u32 %v1030, 4294901760
  %v3102 = vsub.f32 %v1030, %v3101
  %v3103 = vand.u32 %v3102, 4294901760
  %v3104 = vsub.f32 %v3102, %v3103
  %v3105 = vand.u32 %v3104, 4294901760
  %3106 = vmatpush1.msra.mxu0 %v3105
  %3107 = vmatprep.subr.mxu0 0.0
  %v3108 = vand.u32 %v1029, 4294901760
  %v3109 = vsub.f32 %v1029, %v3108
  %v3110 = vand.u32 %v3109, 4294901760
  %v3111 = vsub.f32 %v3109, %v3110
  %v3112 = vand.u32 %v3111, 4294901760
  %3113 = vmatpush1.msra.mxu0 %v3112
  %3114 = vmatprep.subr.mxu0 0.0
  %v3115 = vand.u32 %v1028, 4294901760
  %v3116 = vsub.f32 %v1028, %v3115
  %v3117 = vand.u32 %v3116, 4294901760
  %v3118 = vsub.f32 %v3116, %v3117
  %v3119 = vand.u32 %v3118, 4294901760
  %3120 = vmatpush1.msra.mxu0 %v3119
  %3121 = vmatprep.subr.mxu0 0.0
  %v3122 = vand.u32 %v1027, 4294901760
  %v3123 = vsub.f32 %v1027, %v3122
  %v3124 = vand.u32 %v3123, 4294901760
  %v3125 = vsub.f32 %v3123, %v3124
  %v3126 = vand.u32 %v3125, 4294901760
  %3127 = vmatpush1.msra.mxu0 %v3126
  %3128 = vmatprep.subr.mxu0 0.0
  %v3129 = vand.u32 %v1026, 4294901760
  %v3130 = vsub.f32 %v1026, %v3129
  %v3131 = vand.u32 %v3130, 4294901760
  %v3132 = vsub.f32 %v3130, %v3131
  %v3133 = vand.u32 %v3132, 4294901760
  %3134 = vmatpush1.msra.mxu0 %v3133
  %3135 = vmatprep.subr.mxu0 0.0
  %v3136 = vand.u32 %v1025, 4294901760
  %v3137 = vsub.f32 %v1025, %v3136
  %v3138 = vand.u32 %v3137, 4294901760
  %v3139 = vsub.f32 %v3137, %v3138
  %v3140 = vand.u32 %v3139, 4294901760
  %3141 = vmatpush1.msra.mxu0 %v3140
  %3142 = vmatprep.subr.mxu0 0.0
  %v3143 = vand.u32 %v1024, 4294901760
  %v3144 = vsub.f32 %v1024, %v3143
  %v3145 = vand.u32 %v3144, 4294901760
  %v3146 = vsub.f32 %v3144, %v3145
  %v3147 = vand.u32 %v3146, 4294901760
  %3148 = vmatpush1.msra.mxu0 %v3147
  %3149 = vmatprep.subr.mxu0 0.0
  %v3150 = vand.u32 %v1023, 4294901760
  %v3151 = vsub.f32 %v1023, %v3150
  %v3152 = vand.u32 %v3151, 4294901760
  %v3153 = vsub.f32 %v3151, %v3152
  %v3154 = vand.u32 %v3153, 4294901760
  %3155 = vmatpush1.msra.mxu0 %v3154
  %3156 = vmatprep.subr.mxu0 0.0
  %v3157 = vand.u32 %v1022, 4294901760
  %v3158 = vsub.f32 %v1022, %v3157
  %v3159 = vand.u32 %v3158, 4294901760
  %v3160 = vsub.f32 %v3158, %v3159
  %v3161 = vand.u32 %v3160, 4294901760
  %3162 = vmatpush1.msra.mxu0 %v3161
  %3163 = vmatprep.subr.mxu0 0.0
  %v3164 = vand.u32 %v1021, 4294901760
  %v3165 = vsub.f32 %v1021, %v3164
  %v3166 = vand.u32 %v3165, 4294901760
  %v3167 = vsub.f32 %v3165, %v3166
  %v3168 = vand.u32 %v3167, 4294901760
  %3169 = vmatpush1.msra.mxu0 %v3168
  %3170 = vmatprep.subr.mxu0 0.0
  %v3171 = vand.u32 %v1020, 4294901760
  %v3172 = vsub.f32 %v1020, %v3171
  %v3173 = vand.u32 %v3172, 4294901760
  %v3174 = vsub.f32 %v3172, %v3173
  %v3175 = vand.u32 %v3174, 4294901760
  %3176 = vmatpush1.msra.mxu0 %v3175
  %3177 = vmatprep.subr.mxu0 0.0
  %v3178 = vand.u32 %v1019, 4294901760
  %v3179 = vsub.f32 %v1019, %v3178
  %v3180 = vand.u32 %v3179, 4294901760
  %v3181 = vsub.f32 %v3179, %v3180
  %v3182 = vand.u32 %v3181, 4294901760
  %3183 = vmatpush1.msra.mxu0 %v3182
  %3184 = vmatprep.subr.mxu0 0.0
  %3185 = vmatpush2.msra.mxu0 0.0
  %3186 = vmatprep.subr.mxu0 0.0
  %3187 = vmatpush2.msra.mxu0 0.0
  %3188 = vmatprep.subr.mxu0 0.0
  %3189 = vmatpush2.msra.mxu0 0.0
  %3190 = vmatprep.subr.mxu0 0.0
  %3191 = vmatpush2.msra.mxu0 0.0
  %3192 = vmatprep.subr.mxu0 0.0
  %3193 = vmatpush2.msra.mxu0 0.0
  %3194 = vmatprep.subr.mxu0 0.0
  %3195 = vmatpush2.msra.mxu0 0.0
  %3196 = vmatprep.subr.mxu0 0.0
  %3197 = vmatpush2.msra.mxu0 0.0
  %3198 = vmatprep.subr.mxu0 0.0
  %3199 = vmatpush2.msra.mxu0 0.0
  %3200 = vmatprep.subr.mxu0 0.0
  %3201 = vmatpush2.msra.mxu0 0.0
  %3202 = vmatprep.subr.mxu0 0.0
  %3203 = vmatpush2.msra.mxu0 0.0
  %3204 = vmatprep.subr.mxu0 0.0
  %3205 = vmatpush2.msra.mxu0 0.0
  %3206 = vmatprep.subr.mxu0 0.0
  %3207 = vmatpush2.msra.mxu0 0.0
  %3208 = vmatprep.subr.mxu0 0.0
  %3209 = vmatpush2.msra.mxu0 0.0
  %3210 = vmatprep.subr.mxu0 0.0
  %3211 = vmatpush2.msra.mxu0 0.0
  %3212 = vmatprep.subr.mxu0 0.0
  %3213 = vmatpush2.msra.mxu0 0.0
  %3214 = vmatprep.subr.mxu0 0.0
  %3215 = vmatpush2.msra.mxu0 0.0
  %3216 = vmatprep.mubr.f32.mxu0 0.0
  %v3217 = vand.u32 %v2978, 4294901760
  %3218 = vmatmul.mubr.f32.gmra.mxu0 %v3217
  %v3219 = vpop.f32.mrf.mxu0
  %v3220 = vadd.f32 %v3069, %v3219
  %v3221 = vpop.f32.mrf.mxu0
  %3222 = vdwg.mxu0
  %3223 = vmatprep.subr.mxu0 0.0
  %v3224 = vand.u32 %v1034, 4294901760
  %v3225 = vsub.f32 %v1034, %v3224
  %3226 = vmatpush1.msra.mxu0 %v3225
  %3227 = vmatprep.subr.mxu0 0.0
  %v3228 = vand.u32 %v1033, 4294901760
  %v3229 = vsub.f32 %v1033, %v3228
  %3230 = vmatpush1.msra.mxu0 %v3229
  %3231 = vmatprep.subr.mxu0 0.0
  %v3232 = vand.u32 %v1032, 4294901760
  %v3233 = vsub.f32 %v1032, %v3232
  %3234 = vmatpush1.msra.mxu0 %v3233
  %3235 = vmatprep.subr.mxu0 0.0
  %v3236 = vand.u32 %v1031, 4294901760
  %v3237 = vsub.f32 %v1031, %v3236
  %3238 = vmatpush1.msra.mxu0 %v3237
  %3239 = vmatprep.subr.mxu0 0.0
  %v3240 = vand.u32 %v1030, 4294901760
  %v3241 = vsub.f32 %v1030, %v3240
  %3242 = vmatpush1.msra.mxu0 %v3241
  %3243 = vmatprep.subr.mxu0 0.0
  %v3244 = vand.u32 %v1029, 4294901760
  %v3245 = vsub.f32 %v1029, %v3244
  %3246 = vmatpush1.msra.mxu0 %v3245
  %3247 = vmatprep.subr.mxu0 0.0
  %v3248 = vand.u32 %v1028, 4294901760
  %v3249 = vsub.f32 %v1028, %v3248
  %3250 = vmatpush1.msra.mxu0 %v3249
  %3251 = vmatprep.subr.mxu0 0.0
  %v3252 = vand.u32 %v1027, 4294901760
  %v3253 = vsub.f32 %v1027, %v3252
  %3254 = vmatpush1.msra.mxu0 %v3253
  %3255 = vmatprep.subr.mxu0 0.0
  %v3256 = vand.u32 %v1026, 4294901760
  %v3257 = vsub.f32 %v1026, %v3256
  %3258 = vmatpush1.msra.mxu0 %v3257
  %3259 = vmatprep.subr.mxu0 0.0
  %v3260 = vand.u32 %v1025, 4294901760
  %v3261 = vsub.f32 %v1025, %v3260
  %3262 = vmatpush1.msra.mxu0 %v3261
  %3263 = vmatprep.subr.mxu0 0.0
  %v3264 = vand.u32 %v1024, 4294901760
  %v3265 = vsub.f32 %v1024, %v3264
  %3266 = vmatpush1.msra.mxu0 %v3265
  %3267 = vmatprep.subr.mxu0 0.0
  %v3268 = vand.u32 %v1023, 4294901760
  %v3269 = vsub.f32 %v1023, %v3268
  %3270 = vmatpush1.msra.mxu0 %v3269
  %3271 = vmatprep.subr.mxu0 0.0
  %v3272 = vand.u32 %v1022, 4294901760
  %v3273 = vsub.f32 %v1022, %v3272
  %3274 = vmatpush1.msra.mxu0 %v3273
  %3275 = vmatprep.subr.mxu0 0.0
  %v3276 = vand.u32 %v1021, 4294901760
  %v3277 = vsub.f32 %v1021, %v3276
  %3278 = vmatpush1.msra.mxu0 %v3277
  %3279 = vmatprep.subr.mxu0 0.0
  %v3280 = vand.u32 %v1020, 4294901760
  %v3281 = vsub.f32 %v1020, %v3280
  %3282 = vmatpush1.msra.mxu0 %v3281
  %3283 = vmatprep.subr.mxu0 0.0
  %v3284 = vand.u32 %v1019, 4294901760
  %v3285 = vsub.f32 %v1019, %v3284
  %3286 = vmatpush1.msra.mxu0 %v3285
  %3287 = vmatprep.subr.mxu0 0.0
  %3288 = vmatpush2.msra.mxu0 0.0
  %3289 = vmatprep.subr.mxu0 0.0
  %3290 = vmatpush2.msra.mxu0 0.0
  %3291 = vmatprep.subr.mxu0 0.0
  %3292 = vmatpush2.msra.mxu0 0.0
  %3293 = vmatprep.subr.mxu0 0.0
  %3294 = vmatpush2.msra.mxu0 0.0
  %3295 = vmatprep.subr.mxu0 0.0
  %3296 = vmatpush2.msra.mxu0 0.0
  %3297 = vmatprep.subr.mxu0 0.0
  %3298 = vmatpush2.msra.mxu0 0.0
  %3299 = vmatprep.subr.mxu0 0.0
  %3300 = vmatpush2.msra.mxu0 0.0
  %3301 = vmatprep.subr.mxu0 0.0
  %3302 = vmatpush2.msra.mxu0 0.0
  %3303 = vmatprep.subr.mxu0 0.0
  %3304 = vmatpush2.msra.mxu0 0.0
  %3305 = vmatprep.subr.mxu0 0.0
  %3306 = vmatpush2.msra.mxu0 0.0
  %3307 = vmatprep.subr.mxu0 0.0
  %3308 = vmatpush2.msra.mxu0 0.0
  %3309 = vmatprep.subr.mxu0 0.0
  %3310 = vmatpush2.msra.mxu0 0.0
  %3311 = vmatprep.subr.mxu0 0.0
  %3312 = vmatpush2.msra.mxu0 0.0
  %3313 = vmatprep.subr.mxu0 0.0
  %3314 = vmatpush2.msra.mxu0 0.0
  %3315 = vmatprep.subr.mxu0 0.0
  %3316 = vmatpush2.msra.mxu0 0.0
  %3317 = vmatprep.subr.mxu0 0.0
  %3318 = vmatpush2.msra.mxu0 0.0
  %3319 = vmatprep.mubr.f32.mxu0 0.0
  %v3320 = vand.u32 %v2978, 4294901760
  %v3321 = vsub.f32 %v2978, %v3320
  %3322 = vmatmul.mubr.f32.gmra.mxu0 %v3321
  %v3323 = vpop.f32.mrf.mxu0
  %v3324 = vadd.f32 %v3220, %v3323
  %v3325 = vpop.f32.mrf.mxu0
  %3326 = vdwg.mxu0
  %3327 = vmatprep.subr.mxu0 0.0
  %v3328 = vand.u32 %v1034, 4294901760
  %3329 = vmatpush1.msra.mxu0 %v3328
  %3330 = vmatprep.subr.mxu0 0.0
  %v3331 = vand.u32 %v1033, 4294901760
  %3332 = vmatpush1.msra.mxu0 %v3331
  %3333 = vmatprep.subr.mxu0 0.0
  %v3334 = vand.u32 %v1032, 4294901760
  %3335 = vmatpush1.msra.mxu0 %v3334
  %3336 = vmatprep.subr.mxu0 0.0
  %v3337 = vand.u32 %v1031, 4294901760
  %3338 = vmatpush1.msra.mxu0 %v3337
  %3339 = vmatprep.subr.mxu0 0.0
  %v3340 = vand.u32 %v1030, 4294901760
  %3341 = vmatpush1.msra.mxu0 %v3340
  %3342 = vmatprep.subr.mxu0 0.0
  %v3343 = vand.u32 %v1029, 4294901760
  %3344 = vmatpush1.msra.mxu0 %v3343
  %3345 = vmatprep.subr.mxu0 0.0
  %v3346 = vand.u32 %v1028, 4294901760
  %3347 = vmatpush1.msra.mxu0 %v3346
  %3348 = vmatprep.subr.mxu0 0.0
  %v3349 = vand.u32 %v1027, 4294901760
  %3350 = vmatpush1.msra.mxu0 %v3349
  %3351 = vmatprep.subr.mxu0 0.0
  %v3352 = vand.u32 %v1026, 4294901760
  %3353 = vmatpush1.msra.mxu0 %v3352
  %3354 = vmatprep.subr.mxu0 0.0
  %v3355 = vand.u32 %v1025, 4294901760
  %3356 = vmatpush1.msra.mxu0 %v3355
  %3357 = vmatprep.subr.mxu0 0.0
  %v3358 = vand.u32 %v1024, 4294901760
  %3359 = vmatpush1.msra.mxu0 %v3358
  %3360 = vmatprep.subr.mxu0 0.0
  %v3361 = vand.u32 %v1023, 4294901760
  %3362 = vmatpush1.msra.mxu0 %v3361
  %3363 = vmatprep.subr.mxu0 0.0
  %v3364 = vand.u32 %v1022, 4294901760
  %3365 = vmatpush1.msra.mxu0 %v3364
  %3366 = vmatprep.subr.mxu0 0.0
  %v3367 = vand.u32 %v1021, 4294901760
  %3368 = vmatpush1.msra.mxu0 %v3367
  %3369 = vmatprep.subr.mxu0 0.0
  %v3370 = vand.u32 %v1020, 4294901760
  %3371 = vmatpush1.msra.mxu0 %v3370
  %3372 = vmatprep.subr.mxu0 0.0
  %v3373 = vand.u32 %v1019, 4294901760
  %3374 = vmatpush1.msra.mxu0 %v3373
  %3375 = vmatprep.subr.mxu0 0.0
  %3376 = vmatpush2.msra.mxu0 0.0
  %3377 = vmatprep.subr.mxu0 0.0
  %3378 = vmatpush2.msra.mxu0 0.0
  %3379 = vmatprep.subr.mxu0 0.0
  %3380 = vmatpush2.msra.mxu0 0.0
  %3381 = vmatprep.subr.mxu0 0.0
  %3382 = vmatpush2.msra.mxu0 0.0
  %3383 = vmatprep.subr.mxu0 0.0
  %3384 = vmatpush2.msra.mxu0 0.0
  %3385 = vmatprep.subr.mxu0 0.0
  %3386 = vmatpush2.msra.mxu0 0.0
  %3387 = vmatprep.subr.mxu0 0.0
  %3388 = vmatpush2.msra.mxu0 0.0
  %3389 = vmatprep.subr.mxu0 0.0
  %3390 = vmatpush2.msra.mxu0 0.0
  %3391 = vmatprep.subr.mxu0 0.0
  %3392 = vmatpush2.msra.mxu0 0.0
  %3393 = vmatprep.subr.mxu0 0.0
  %3394 = vmatpush2.msra.mxu0 0.0
  %3395 = vmatprep.subr.mxu0 0.0
  %3396 = vmatpush2.msra.mxu0 0.0
  %3397 = vmatprep.subr.mxu0 0.0
  %3398 = vmatpush2.msra.mxu0 0.0
  %3399 = vmatprep.subr.mxu0 0.0
  %3400 = vmatpush2.msra.mxu0 0.0
  %3401 = vmatprep.subr.mxu0 0.0
  %3402 = vmatpush2.msra.mxu0 0.0
  %3403 = vmatprep.subr.mxu0 0.0
  %3404 = vmatpush2.msra.mxu0 0.0
  %3405 = vmatprep.subr.mxu0 0.0
  %3406 = vmatpush2.msra.mxu0 0.0
  %3407 = vmatprep.mubr.f32.mxu0 0.0
  %v3408 = vand.u32 %v2978, 4294901760
  %v3409 = vsub.f32 %v2978, %v3408
  %v3410 = vand.u32 %v3409, 4294901760
  %3411 = vmatmul.mubr.f32.gmra.mxu0 %v3410
  %v3412 = vpop.f32.mrf.mxu0
  %v3413 = vadd.f32 %v3324, %v3412
  %v3414 = vpop.f32.mrf.mxu0
  %3415 = vdwg.mxu0
  %3416 = vmatprep.subr.mxu0 0.0
  %v3417 = vand.u32 %v1034, 4294901760
  %v3418 = vsub.f32 %v1034, %v3417
  %v3419 = vand.u32 %v3418, 4294901760
  %3420 = vmatpush1.msra.mxu0 %v3419
  %3421 = vmatprep.subr.mxu0 0.0
  %v3422 = vand.u32 %v1033, 4294901760
  %v3423 = vsub.f32 %v1033, %v3422
  %v3424 = vand.u32 %v3423, 4294901760
  %3425 = vmatpush1.msra.mxu0 %v3424
  %3426 = vmatprep.subr.mxu0 0.0
  %v3427 = vand.u32 %v1032, 4294901760
  %v3428 = vsub.f32 %v1032, %v3427
  %v3429 = vand.u32 %v3428, 4294901760
  %3430 = vmatpush1.msra.mxu0 %v3429
  %3431 = vmatprep.subr.mxu0 0.0
  %v3432 = vand.u32 %v1031, 4294901760
  %v3433 = vsub.f32 %v1031, %v3432
  %v3434 = vand.u32 %v3433, 4294901760
  %3435 = vmatpush1.msra.mxu0 %v3434
  %3436 = vmatprep.subr.mxu0 0.0
  %v3437 = vand.u32 %v1030, 4294901760
  %v3438 = vsub.f32 %v1030, %v3437
  %v3439 = vand.u32 %v3438, 4294901760
  %3440 = vmatpush1.msra.mxu0 %v3439
  %3441 = vmatprep.subr.mxu0 0.0
  %v3442 = vand.u32 %v1029, 4294901760
  %v3443 = vsub.f32 %v1029, %v3442
  %v3444 = vand.u32 %v3443, 4294901760
  %3445 = vmatpush1.msra.mxu0 %v3444
  %3446 = vmatprep.subr.mxu0 0.0
  %v3447 = vand.u32 %v1028, 4294901760
  %v3448 = vsub.f32 %v1028, %v3447
  %v3449 = vand.u32 %v3448, 4294901760
  %3450 = vmatpush1.msra.mxu0 %v3449
  %3451 = vmatprep.subr.mxu0 0.0
  %v3452 = vand.u32 %v1027, 4294901760
  %v3453 = vsub.f32 %v1027, %v3452
  %v3454 = vand.u32 %v3453, 4294901760
  %3455 = vmatpush1.msra.mxu0 %v3454
  %3456 = vmatprep.subr.mxu0 0.0
  %v3457 = vand.u32 %v1026, 4294901760
  %v3458 = vsub.f32 %v1026, %v3457
  %v3459 = vand.u32 %v3458, 4294901760
  %3460 = vmatpush1.msra.mxu0 %v3459
  %3461 = vmatprep.subr.mxu0 0.0
  %v3462 = vand.u32 %v1025, 4294901760
  %v3463 = vsub.f32 %v1025, %v3462
  %v3464 = vand.u32 %v3463, 4294901760
  %3465 = vmatpush1.msra.mxu0 %v3464
  %3466 = vmatprep.subr.mxu0 0.0
  %v3467 = vand.u32 %v1024, 4294901760
  %v3468 = vsub.f32 %v1024, %v3467
  %v3469 = vand.u32 %v3468, 4294901760
  %3470 = vmatpush1.msra.mxu0 %v3469
  %3471 = vmatprep.subr.mxu0 0.0
  %v3472 = vand.u32 %v1023, 4294901760
  %v3473 = vsub.f32 %v1023, %v3472
  %v3474 = vand.u32 %v3473, 4294901760
  %3475 = vmatpush1.msra.mxu0 %v3474
  %3476 = vmatprep.subr.mxu0 0.0
  %v3477 = vand.u32 %v1022, 4294901760
  %v3478 = vsub.f32 %v1022, %v3477
  %v3479 = vand.u32 %v3478, 4294901760
  %3480 = vmatpush1.msra.mxu0 %v3479
  %3481 = vmatprep.subr.mxu0 0.0
  %v3482 = vand.u32 %v1021, 4294901760
  %v3483 = vsub.f32 %v1021, %v3482
  %v3484 = vand.u32 %v3483, 4294901760
  %3485 = vmatpush1.msra.mxu0 %v3484
  %3486 = vmatprep.subr.mxu0 0.0
  %v3487 = vand.u32 %v1020, 4294901760
  %v3488 = vsub.f32 %v1020, %v3487
  %v3489 = vand.u32 %v3488, 4294901760
  %3490 = vmatpush1.msra.mxu0 %v3489
  %3491 = vmatprep.subr.mxu0 0.0
  %v3492 = vand.u32 %v1019, 4294901760
  %v3493 = vsub.f32 %v1019, %v3492
  %v3494 = vand.u32 %v3493, 4294901760
  %3495 = vmatpush1.msra.mxu0 %v3494
  %3496 = vmatprep.subr.mxu0 0.0
  %3497 = vmatpush2.msra.mxu0 0.0
  %3498 = vmatprep.subr.mxu0 0.0
  %3499 = vmatpush2.msra.mxu0 0.0
  %3500 = vmatprep.subr.mxu0 0.0
  %3501 = vmatpush2.msra.mxu0 0.0
  %3502 = vmatprep.subr.mxu0 0.0
  %3503 = vmatpush2.msra.mxu0 0.0
  %3504 = vmatprep.subr.mxu0 0.0
  %3505 = vmatpush2.msra.mxu0 0.0
  %3506 = vmatprep.subr.mxu0 0.0
  %3507 = vmatpush2.msra.mxu0 0.0
  %3508 = vmatprep.subr.mxu0 0.0
  %3509 = vmatpush2.msra.mxu0 0.0
  %3510 = vmatprep.subr.mxu0 0.0
  %3511 = vmatpush2.msra.mxu0 0.0
  %3512 = vmatprep.subr.mxu0 0.0
  %3513 = vmatpush2.msra.mxu0 0.0
  %3514 = vmatprep.subr.mxu0 0.0
  %3515 = vmatpush2.msra.mxu0 0.0
  %3516 = vmatprep.subr.mxu0 0.0
  %3517 = vmatpush2.msra.mxu0 0.0
  %3518 = vmatprep.subr.mxu0 0.0
  %3519 = vmatpush2.msra.mxu0 0.0
  %3520 = vmatprep.subr.mxu0 0.0
  %3521 = vmatpush2.msra.mxu0 0.0
  %3522 = vmatprep.subr.mxu0 0.0
  %3523 = vmatpush2.msra.mxu0 0.0
  %3524 = vmatprep.subr.mxu0 0.0
  %3525 = vmatpush2.msra.mxu0 0.0
  %3526 = vmatprep.subr.mxu0 0.0
  %3527 = vmatpush2.msra.mxu0 0.0
  %3528 = vmatprep.mubr.f32.mxu0 0.0
  %v3529 = vand.u32 %v2978, 4294901760
  %3530 = vmatmul.mubr.f32.gmra.mxu0 %v3529
  %v3531 = vpop.f32.mrf.mxu0
  %v3532 = vadd.f32 %v3413, %v3531
  %v3533 = vpop.f32.mrf.mxu0
  %3534 = vdwg.mxu0
  %3535 = vmatprep.subr.mxu0 0.0
  %v3536 = vand.u32 %v1034, 4294901760
  %3537 = vmatpush1.msra.mxu0 %v3536
  %3538 = vmatprep.subr.mxu0 0.0
  %v3539 = vand.u32 %v1033, 4294901760
  %3540 = vmatpush1.msra.mxu0 %v3539
  %3541 = vmatprep.subr.mxu0 0.0
  %v3542 = vand.u32 %v1032, 4294901760
  %3543 = vmatpush1.msra.mxu0 %v3542
  %3544 = vmatprep.subr.mxu0 0.0
  %v3545 = vand.u32 %v1031, 4294901760
  %3546 = vmatpush1.msra.mxu0 %v3545
  %3547 = vmatprep.subr.mxu0 0.0
  %v3548 = vand.u32 %v1030, 4294901760
  %3549 = vmatpush1.msra.mxu0 %v3548
  %3550 = vmatprep.subr.mxu0 0.0
  %v3551 = vand.u32 %v1029, 4294901760
  %3552 = vmatpush1.msra.mxu0 %v3551
  %3553 = vmatprep.subr.mxu0 0.0
  %v3554 = vand.u32 %v1028, 4294901760
  %3555 = vmatpush1.msra.mxu0 %v3554
  %3556 = vmatprep.subr.mxu0 0.0
  %v3557 = vand.u32 %v1027, 4294901760
  %3558 = vmatpush1.msra.mxu0 %v3557
  %3559 = vmatprep.subr.mxu0 0.0
  %v3560 = vand.u32 %v1026, 4294901760
  %3561 = vmatpush1.msra.mxu0 %v3560
  %3562 = vmatprep.subr.mxu0 0.0
  %v3563 = vand.u32 %v1025, 4294901760
  %3564 = vmatpush1.msra.mxu0 %v3563
  %3565 = vmatprep.subr.mxu0 0.0
  %v3566 = vand.u32 %v1024, 4294901760
  %3567 = vmatpush1.msra.mxu0 %v3566
  %3568 = vmatprep.subr.mxu0 0.0
  %v3569 = vand.u32 %v1023, 4294901760
  %3570 = vmatpush1.msra.mxu0 %v3569
  %3571 = vmatprep.subr.mxu0 0.0
  %v3572 = vand.u32 %v1022, 4294901760
  %3573 = vmatpush1.msra.mxu0 %v3572
  %3574 = vmatprep.subr.mxu0 0.0
  %v3575 = vand.u32 %v1021, 4294901760
  %3576 = vmatpush1.msra.mxu0 %v3575
  %3577 = vmatprep.subr.mxu0 0.0
  %v3578 = vand.u32 %v1020, 4294901760
  %3579 = vmatpush1.msra.mxu0 %v3578
  %3580 = vmatprep.subr.mxu0 0.0
  %v3581 = vand.u32 %v1019, 4294901760
  %3582 = vmatpush1.msra.mxu0 %v3581
  %3583 = vmatprep.subr.mxu0 0.0
  %3584 = vmatpush2.msra.mxu0 0.0
  %3585 = vmatprep.subr.mxu0 0.0
  %3586 = vmatpush2.msra.mxu0 0.0
  %3587 = vmatprep.subr.mxu0 0.0
  %3588 = vmatpush2.msra.mxu0 0.0
  %3589 = vmatprep.subr.mxu0 0.0
  %3590 = vmatpush2.msra.mxu0 0.0
  %3591 = vmatprep.subr.mxu0 0.0
  %3592 = vmatpush2.msra.mxu0 0.0
  %3593 = vmatprep.subr.mxu0 0.0
  %3594 = vmatpush2.msra.mxu0 0.0
  %3595 = vmatprep.subr.mxu0 0.0
  %3596 = vmatpush2.msra.mxu0 0.0
  %3597 = vmatprep.subr.mxu0 0.0
  %3598 = vmatpush2.msra.mxu0 0.0
  %3599 = vmatprep.subr.mxu0 0.0
  %3600 = vmatpush2.msra.mxu0 0.0
  %3601 = vmatprep.subr.mxu0 0.0
  %3602 = vmatpush2.msra.mxu0 0.0
  %3603 = vmatprep.subr.mxu0 0.0
  %3604 = vmatpush2.msra.mxu0 0.0
  %3605 = vmatprep.subr.mxu0 0.0
  %3606 = vmatpush2.msra.mxu0 0.0
  %3607 = vmatprep.subr.mxu0 0.0
  %3608 = vmatpush2.msra.mxu0 0.0
  %3609 = vmatprep.subr.mxu0 0.0
  %3610 = vmatpush2.msra.mxu0 0.0
  %3611 = vmatprep.subr.mxu0 0.0
  %3612 = vmatpush2.msra.mxu0 0.0
  %3613 = vmatprep.subr.mxu0 0.0
  %3614 = vmatpush2.msra.mxu0 0.0
  %3615 = vmatprep.mubr.f32.mxu0 0.0
  %v3616 = vand.u32 %v2978, 4294901760
  %3617 = vmatmul.mubr.f32.gmra.mxu0 %v3616
  %v3618 = vpop.f32.mrf.mxu0
  %v3619 = vadd.f32 %v3532, %v3618
  %v3620 = vpop.f32.mrf.mxu0
  %3621 = vdwg.mxu0
  %v3622 = vadd.f32 %v2980, %v3619
  %v3623 = vtanh.pop %v3622
  %3624 = vst [vmem:[%s2979] sm:$0xff] %v3623
  %3625 = vst [vmem:[#allocation2] sm:$0xff] %v3623
  %v3626 = vld [vmem:[#allocation2] sm:$0xff]
  %s3627 = scalar_lea.vmem [#allocation3], 32
  %v3628 = vld [vmem:[%s3627] sm:$0xff]
  %3629 = vmatprep.subr.mxu0 0.0
  %v3630 = vand.u32 %v1034, 4294901760
  %3631 = vmatpush1.msra.mxu0 %v3630
  %3632 = vmatprep.subr.mxu0 0.0
  %v3633 = vand.u32 %v1033, 4294901760
  %3634 = vmatpush1.msra.mxu0 %v3633
  %3635 = vmatprep.subr.mxu0 0.0
  %v3636 = vand.u32 %v1032, 4294901760
  %3637 = vmatpush1.msra.mxu0 %v3636
  %3638 = vmatprep.subr.mxu0 0.0
  %v3639 = vand.u32 %v1031, 4294901760
  %3640 = vmatpush1.msra.mxu0 %v3639
  %3641 = vmatprep.subr.mxu0 0.0
  %v3642 = vand.u32 %v1030, 4294901760
  %3643 = vmatpush1.msra.mxu0 %v3642
  %3644 = vmatprep.subr.mxu0 0.0
  %v3645 = vand.u32 %v1029, 4294901760
  %3646 = vmatpush1.msra.mxu0 %v3645
  %3647 = vmatprep.subr.mxu0 0.0
  %v3648 = vand.u32 %v1028, 4294901760
  %3649 = vmatpush1.msra.mxu0 %v3648
  %3650 = vmatprep.subr.mxu0 0.0
  %v3651 = vand.u32 %v1027, 4294901760
  %3652 = vmatpush1.msra.mxu0 %v3651
  %3653 = vmatprep.subr.mxu0 0.0
  %v3654 = vand.u32 %v1026, 4294901760
  %3655 = vmatpush1.msra.mxu0 %v3654
  %3656 = vmatprep.subr.mxu0 0.0
  %v3657 = vand.u32 %v1025, 4294901760
  %3658 = vmatpush1.msra.mxu0 %v3657
  %3659 = vmatprep.subr.mxu0 0.0
  %v3660 = vand.u32 %v1024, 4294901760
  %3661 = vmatpush1.msra.mxu0 %v3660
  %3662 = vmatprep.subr.mxu0 0.0
  %v3663 = vand.u32 %v1023, 4294901760
  %3664 = vmatpush1.msra.mxu0 %v3663
  %3665 = vmatprep.subr.mxu0 0.0
  %v3666 = vand.u32 %v1022, 4294901760
  %3667 = vmatpush1.msra.mxu0 %v3666
  %3668 = vmatprep.subr.mxu0 0.0
  %v3669 = vand.u32 %v1021, 4294901760
  %3670 = vmatpush1.msra.mxu0 %v3669
  %3671 = vmatprep.subr.mxu0 0.0
  %v3672 = vand.u32 %v1020, 4294901760
  %3673 = vmatpush1.msra.mxu0 %v3672
  %3674 = vmatprep.subr.mxu0 0.0
  %v3675 = vand.u32 %v1019, 4294901760
  %3676 = vmatpush1.msra.mxu0 %v3675
  %3677 = vmatprep.subr.mxu0 0.0
  %3678 = vmatpush2.msra.mxu0 0.0
  %3679 = vmatprep.subr.mxu0 0.0
  %3680 = vmatpush2.msra.mxu0 0.0
  %3681 = vmatprep.subr.mxu0 0.0
  %3682 = vmatpush2.msra.mxu0 0.0
  %3683 = vmatprep.subr.mxu0 0.0
  %3684 = vmatpush2.msra.mxu0 0.0
  %3685 = vmatprep.subr.mxu0 0.0
  %3686 = vmatpush2.msra.mxu0 0.0
  %3687 = vmatprep.subr.mxu0 0.0
  %3688 = vmatpush2.msra.mxu0 0.0
  %3689 = vmatprep.subr.mxu0 0.0
  %3690 = vmatpush2.msra.mxu0 0.0
  %3691 = vmatprep.subr.mxu0 0.0
  %3692 = vmatpush2.msra.mxu0 0.0
  %3693 = vmatprep.subr.mxu0 0.0
  %3694 = vmatpush2.msra.mxu0 0.0
  %3695 = vmatprep.subr.mxu0 0.0
  %3696 = vmatpush2.msra.mxu0 0.0
  %3697 = vmatprep.subr.mxu0 0.0
  %3698 = vmatpush2.msra.mxu0 0.0
  %3699 = vmatprep.subr.mxu0 0.0
  %3700 = vmatpush2.msra.mxu0 0.0
  %3701 = vmatprep.subr.mxu0 0.0
  %3702 = vmatpush2.msra.mxu0 0.0
  %3703 = vmatprep.subr.mxu0 0.0
  %3704 = vmatpush2.msra.mxu0 0.0
  %3705 = vmatprep.subr.mxu0 0.0
  %3706 = vmatpush2.msra.mxu0 0.0
  %3707 = vmatprep.subr.mxu0 0.0
  %3708 = vmatpush2.msra.mxu0 0.0
  %3709 = vmatprep.mubr.f32.mxu0 0.0
  %v3710 = vand.u32 %v3626, 4294901760
  %v3711 = vsub.f32 %v3626, %v3710
  %v3712 = vand.u32 %v3711, 4294901760
  %v3713 = vsub.f32 %v3711, %v3712
  %v3714 = vand.u32 %v3713, 4294901760
  %3715 = vmatmul.mubr.f32.gmra.mxu0 %v3714
  %v3716 = vpop.f32.mrf.mxu0
  %v3717 = vadd.f32 0.0, %v3716
  %v3718 = vpop.f32.mrf.mxu0
  %3719 = vdwg.mxu0
  %3720 = vmatprep.subr.mxu0 0.0
  %v3721 = vand.u32 %v1034, 4294901760
  %v3722 = vsub.f32 %v1034, %v3721
  %v3723 = vand.u32 %v3722, 4294901760
  %v3724 = vsub.f32 %v3722, %v3723
  %v3725 = vand.u32 %v3724, 4294901760
  %3726 = vmatpush1.msra.mxu0 %v3725
  %3727 = vmatprep.subr.mxu0 0.0
  %v3728 = vand.u32 %v1033, 4294901760
  %v3729 = vsub.f32 %v1033, %v3728
  %v3730 = vand.u32 %v3729, 4294901760
  %v3731 = vsub.f32 %v3729, %v3730
  %v3732 = vand.u32 %v3731, 4294901760
  %3733 = vmatpush1.msra.mxu0 %v3732
  %3734 = vmatprep.subr.mxu0 0.0
  %v3735 = vand.u32 %v1032, 4294901760
  %v3736 = vsub.f32 %v1032, %v3735
  %v3737 = vand.u32 %v3736, 4294901760
  %v3738 = vsub.f32 %v3736, %v3737
  %v3739 = vand.u32 %v3738, 4294901760
  %3740 = vmatpush1.msra.mxu0 %v3739
  %3741 = vmatprep.subr.mxu0 0.0
  %v3742 = vand.u32 %v1031, 4294901760
  %v3743 = vsub.f32 %v1031, %v3742
  %v3744 = vand.u32 %v3743, 4294901760
  %v3745 = vsub.f32 %v3743, %v3744
  %v3746 = vand.u32 %v3745, 4294901760
  %3747 = vmatpush1.msra.mxu0 %v3746
  %3748 = vmatprep.subr.mxu0 0.0
  %v3749 = vand.u32 %v1030, 4294901760
  %v3750 = vsub.f32 %v1030, %v3749
  %v3751 = vand.u32 %v3750, 4294901760
  %v3752 = vsub.f32 %v3750, %v3751
  %v3753 = vand.u32 %v3752, 4294901760
  %3754 = vmatpush1.msra.mxu0 %v3753
  %3755 = vmatprep.subr.mxu0 0.0
  %v3756 = vand.u32 %v1029, 4294901760
  %v3757 = vsub.f32 %v1029, %v3756
  %v3758 = vand.u32 %v3757, 4294901760
  %v3759 = vsub.f32 %v3757, %v3758
  %v3760 = vand.u32 %v3759, 4294901760
  %3761 = vmatpush1.msra.mxu0 %v3760
  %3762 = vmatprep.subr.mxu0 0.0
  %v3763 = vand.u32 %v1028, 4294901760
  %v3764 = vsub.f32 %v1028, %v3763
  %v3765 = vand.u32 %v3764, 4294901760
  %v3766 = vsub.f32 %v3764, %v3765
  %v3767 = vand.u32 %v3766, 4294901760
  %3768 = vmatpush1.msra.mxu0 %v3767
  %3769 = vmatprep.subr.mxu0 0.0
  %v3770 = vand.u32 %v1027, 4294901760
  %v3771 = vsub.f32 %v1027, %v3770
  %v3772 = vand.u32 %v3771, 4294901760
  %v3773 = vsub.f32 %v3771, %v3772
  %v3774 = vand.u32 %v3773, 4294901760
  %3775 = vmatpush1.msra.mxu0 %v3774
  %3776 = vmatprep.subr.mxu0 0.0
  %v3777 = vand.u32 %v1026, 4294901760
  %v3778 = vsub.f32 %v1026, %v3777
  %v3779 = vand.u32 %v3778, 4294901760
  %v3780 = vsub.f32 %v3778, %v3779
  %v3781 = vand.u32 %v3780, 4294901760
  %3782 = vmatpush1.msra.mxu0 %v3781
  %3783 = vmatprep.subr.mxu0 0.0
  %v3784 = vand.u32 %v1025, 4294901760
  %v3785 = vsub.f32 %v1025, %v3784
  %v3786 = vand.u32 %v3785, 4294901760
  %v3787 = vsub.f32 %v3785, %v3786
  %v3788 = vand.u32 %v3787, 4294901760
  %3789 = vmatpush1.msra.mxu0 %v3788
  %3790 = vmatprep.subr.mxu0 0.0
  %v3791 = vand.u32 %v1024, 4294901760
  %v3792 = vsub.f32 %v1024, %v3791
  %v3793 = vand.u32 %v3792, 4294901760
  %v3794 = vsub.f32 %v3792, %v3793
  %v3795 = vand.u32 %v3794, 4294901760
  %3796 = vmatpush1.msra.mxu0 %v3795
  %3797 = vmatprep.subr.mxu0 0.0
  %v3798 = vand.u32 %v1023, 4294901760
  %v3799 = vsub.f32 %v1023, %v3798
  %v3800 = vand.u32 %v3799, 4294901760
  %v3801 = vsub.f32 %v3799, %v3800
  %v3802 = vand.u32 %v3801, 4294901760
  %3803 = vmatpush1.msra.mxu0 %v3802
  %3804 = vmatprep.subr.mxu0 0.0
  %v3805 = vand.u32 %v1022, 4294901760
  %v3806 = vsub.f32 %v1022, %v3805
  %v3807 = vand.u32 %v3806, 4294901760
  %v3808 = vsub.f32 %v3806, %v3807
  %v3809 = vand.u32 %v3808, 4294901760
  %3810 = vmatpush1.msra.mxu0 %v3809
  %3811 = vmatprep.subr.mxu0 0.0
  %v3812 = vand.u32 %v1021, 4294901760
  %v3813 = vsub.f32 %v1021, %v3812
  %v3814 = vand.u32 %v3813, 4294901760
  %v3815 = vsub.f32 %v3813, %v3814
  %v3816 = vand.u32 %v3815, 4294901760
  %3817 = vmatpush1.msra.mxu0 %v3816
  %3818 = vmatprep.subr.mxu0 0.0
  %v3819 = vand.u32 %v1020, 4294901760
  %v3820 = vsub.f32 %v1020, %v3819
  %v3821 = vand.u32 %v3820, 4294901760
  %v3822 = vsub.f32 %v3820, %v3821
  %v3823 = vand.u32 %v3822, 4294901760
  %3824 = vmatpush1.msra.mxu0 %v3823
  %3825 = vmatprep.subr.mxu0 0.0
  %v3826 = vand.u32 %v1019, 4294901760
  %v3827 = vsub.f32 %v1019, %v3826
  %v3828 = vand.u32 %v3827, 4294901760
  %v3829 = vsub.f32 %v3827, %v3828
  %v3830 = vand.u32 %v3829, 4294901760
  %3831 = vmatpush1.msra.mxu0 %v3830
  %3832 = vmatprep.subr.mxu0 0.0
  %3833 = vmatpush2.msra.mxu0 0.0
  %3834 = vmatprep.subr.mxu0 0.0
  %3835 = vmatpush2.msra.mxu0 0.0
  %3836 = vmatprep.subr.mxu0 0.0
  %3837 = vmatpush2.msra.mxu0 0.0
  %3838 = vmatprep.subr.mxu0 0.0
  %3839 = vmatpush2.msra.mxu0 0.0
  %3840 = vmatprep.subr.mxu0 0.0
  %3841 = vmatpush2.msra.mxu0 0.0
  %3842 = vmatprep.subr.mxu0 0.0
  %3843 = vmatpush2.msra.mxu0 0.0
  %3844 = vmatprep.subr.mxu0 0.0
  %3845 = vmatpush2.msra.mxu0 0.0
  %3846 = vmatprep.subr.mxu0 0.0
  %3847 = vmatpush2.msra.mxu0 0.0
  %3848 = vmatprep.subr.mxu0 0.0
  %3849 = vmatpush2.msra.mxu0 0.0
  %3850 = vmatprep.subr.mxu0 0.0
  %3851 = vmatpush2.msra.mxu0 0.0
  %3852 = vmatprep.subr.mxu0 0.0
  %3853 = vmatpush2.msra.mxu0 0.0
  %3854 = vmatprep.subr.mxu0 0.0
  %3855 = vmatpush2.msra.mxu0 0.0
  %3856 = vmatprep.subr.mxu0 0.0
  %3857 = vmatpush2.msra.mxu0 0.0
  %3858 = vmatprep.subr.mxu0 0.0
  %3859 = vmatpush2.msra.mxu0 0.0
  %3860 = vmatprep.subr.mxu0 0.0
  %3861 = vmatpush2.msra.mxu0 0.0
  %3862 = vmatprep.subr.mxu0 0.0
  %3863 = vmatpush2.msra.mxu0 0.0
  %3864 = vmatprep.mubr.f32.mxu0 0.0
  %v3865 = vand.u32 %v3626, 4294901760
  %3866 = vmatmul.mubr.f32.gmra.mxu0 %v3865
  %v3867 = vpop.f32.mrf.mxu0
  %v3868 = vadd.f32 %v3717, %v3867
  %v3869 = vpop.f32.mrf.mxu0
  %3870 = vdwg.mxu0
  %3871 = vmatprep.subr.mxu0 0.0
  %v3872 = vand.u32 %v1034, 4294901760
  %v3873 = vsub.f32 %v1034, %v3872
  %3874 = vmatpush1.msra.mxu0 %v3873
  %3875 = vmatprep.subr.mxu0 0.0
  %v3876 = vand.u32 %v1033, 4294901760
  %v3877 = vsub.f32 %v1033, %v3876
  %3878 = vmatpush1.msra.mxu0 %v3877
  %3879 = vmatprep.subr.mxu0 0.0
  %v3880 = vand.u32 %v1032, 4294901760
  %v3881 = vsub.f32 %v1032, %v3880
  %3882 = vmatpush1.msra.mxu0 %v3881
  %3883 = vmatprep.subr.mxu0 0.0
  %v3884 = vand.u32 %v1031, 4294901760
  %v3885 = vsub.f32 %v1031, %v3884
  %3886 = vmatpush1.msra.mxu0 %v3885
  %3887 = vmatprep.subr.mxu0 0.0
  %v3888 = vand.u32 %v1030, 4294901760
  %v3889 = vsub.f32 %v1030, %v3888
  %3890 = vmatpush1.msra.mxu0 %v3889
  %3891 = vmatprep.subr.mxu0 0.0
  %v3892 = vand.u32 %v1029, 4294901760
  %v3893 = vsub.f32 %v1029, %v3892
  %3894 = vmatpush1.msra.mxu0 %v3893
  %3895 = vmatprep.subr.mxu0 0.0
  %v3896 = vand.u32 %v1028, 4294901760
  %v3897 = vsub.f32 %v1028, %v3896
  %3898 = vmatpush1.msra.mxu0 %v3897
  %3899 = vmatprep.subr.mxu0 0.0
  %v3900 = vand.u32 %v1027, 4294901760
  %v3901 = vsub.f32 %v1027, %v3900
  %3902 = vmatpush1.msra.mxu0 %v3901
  %3903 = vmatprep.subr.mxu0 0.0
  %v3904 = vand.u32 %v1026, 4294901760
  %v3905 = vsub.f32 %v1026, %v3904
  %3906 = vmatpush1.msra.mxu0 %v3905
  %3907 = vmatprep.subr.mxu0 0.0
  %v3908 = vand.u32 %v1025, 4294901760
  %v3909 = vsub.f32 %v1025, %v3908
  %3910 = vmatpush1.msra.mxu0 %v3909
  %3911 = vmatprep.subr.mxu0 0.0
  %v3912 = vand.u32 %v1024, 4294901760
  %v3913 = vsub.f32 %v1024, %v3912
  %3914 = vmatpush1.msra.mxu0 %v3913
  %3915 = vmatprep.subr.mxu0 0.0
  %v3916 = vand.u32 %v1023, 4294901760
  %v3917 = vsub.f32 %v1023, %v3916
  %3918 = vmatpush1.msra.mxu0 %v3917
  %3919 = vmatprep.subr.mxu0 0.0
  %v3920 = vand.u32 %v1022, 4294901760
  %v3921 = vsub.f32 %v1022, %v3920
  %3922 = vmatpush1.msra.mxu0 %v3921
  %3923 = vmatprep.subr.mxu0 0.0
  %v3924 = vand.u32 %v1021, 4294901760
  %v3925 = vsub.f32 %v1021, %v3924
  %3926 = vmatpush1.msra.mxu0 %v3925
  %3927 = vmatprep.subr.mxu0 0.0
  %v3928 = vand.u32 %v1020, 4294901760
  %v3929 = vsub.f32 %v1020, %v3928
  %3930 = vmatpush1.msra.mxu0 %v3929
  %3931 = vmatprep.subr.mxu0 0.0
  %v3932 = vand.u32 %v1019, 4294901760
  %v3933 = vsub.f32 %v1019, %v3932
  %3934 = vmatpush1.msra.mxu0 %v3933
  %3935 = vmatprep.subr.mxu0 0.0
  %3936 = vmatpush2.msra.mxu0 0.0
  %3937 = vmatprep.subr.mxu0 0.0
  %3938 = vmatpush2.msra.mxu0 0.0
  %3939 = vmatprep.subr.mxu0 0.0
  %3940 = vmatpush2.msra.mxu0 0.0
  %3941 = vmatprep.subr.mxu0 0.0
  %3942 = vmatpush2.msra.mxu0 0.0
  %3943 = vmatprep.subr.mxu0 0.0
  %3944 = vmatpush2.msra.mxu0 0.0
  %3945 = vmatprep.subr.mxu0 0.0
  %3946 = vmatpush2.msra.mxu0 0.0
  %3947 = vmatprep.subr.mxu0 0.0
  %3948 = vmatpush2.msra.mxu0 0.0
  %3949 = vmatprep.subr.mxu0 0.0
  %3950 = vmatpush2.msra.mxu0 0.0
  %3951 = vmatprep.subr.mxu0 0.0
  %3952 = vmatpush2.msra.mxu0 0.0
  %3953 = vmatprep.subr.mxu0 0.0
  %3954 = vmatpush2.msra.mxu0 0.0
  %3955 = vmatprep.subr.mxu0 0.0
  %3956 = vmatpush2.msra.mxu0 0.0
  %3957 = vmatprep.subr.mxu0 0.0
  %3958 = vmatpush2.msra.mxu0 0.0
  %3959 = vmatprep.subr.mxu0 0.0
  %3960 = vmatpush2.msra.mxu0 0.0
  %3961 = vmatprep.subr.mxu0 0.0
  %3962 = vmatpush2.msra.mxu0 0.0
  %3963 = vmatprep.subr.mxu0 0.0
  %3964 = vmatpush2.msra.mxu0 0.0
  %3965 = vmatprep.subr.mxu0 0.0
  %3966 = vmatpush2.msra.mxu0 0.0
  %3967 = vmatprep.mubr.f32.mxu0 0.0
  %v3968 = vand.u32 %v3626, 4294901760
  %v3969 = vsub.f32 %v3626, %v3968
  %3970 = vmatmul.mubr.f32.gmra.mxu0 %v3969
  %v3971 = vpop.f32.mrf.mxu0
  %v3972 = vadd.f32 %v3868, %v3971
  %v3973 = vpop.f32.mrf.mxu0
  %3974 = vdwg.mxu0
  %3975 = vmatprep.subr.mxu0 0.0
  %v3976 = vand.u32 %v1034, 4294901760
  %3977 = vmatpush1.msra.mxu0 %v3976
  %3978 = vmatprep.subr.mxu0 0.0
  %v3979 = vand.u32 %v1033, 4294901760
  %3980 = vmatpush1.msra.mxu0 %v3979
  %3981 = vmatprep.subr.mxu0 0.0
  %v3982 = vand.u32 %v1032, 4294901760
  %3983 = vmatpush1.msra.mxu0 %v3982
  %3984 = vmatprep.subr.mxu0 0.0
  %v3985 = vand.u32 %v1031, 4294901760
  %3986 = vmatpush1.msra.mxu0 %v3985
  %3987 = vmatprep.subr.mxu0 0.0
  %v3988 = vand.u32 %v1030, 4294901760
  %3989 = vmatpush1.msra.mxu0 %v3988
  %3990 = vmatprep.subr.mxu0 0.0
  %v3991 = vand.u32 %v1029, 4294901760
  %3992 = vmatpush1.msra.mxu0 %v3991
  %3993 = vmatprep.subr.mxu0 0.0
  %v3994 = vand.u32 %v1028, 4294901760
  %3995 = vmatpush1.msra.mxu0 %v3994
  %3996 = vmatprep.subr.mxu0 0.0
  %v3997 = vand.u32 %v1027, 4294901760
  %3998 = vmatpush1.msra.mxu0 %v3997
  %3999 = vmatprep.subr.mxu0 0.0
  %v4000 = vand.u32 %v1026, 4294901760
  %4001 = vmatpush1.msra.mxu0 %v4000
  %4002 = vmatprep.subr.mxu0 0.0
  %v4003 = vand.u32 %v1025, 4294901760
  %4004 = vmatpush1.msra.mxu0 %v4003
  %4005 = vmatprep.subr.mxu0 0.0
  %v4006 = vand.u32 %v1024, 4294901760
  %4007 = vmatpush1.msra.mxu0 %v4006
  %4008 = vmatprep.subr.mxu0 0.0
  %v4009 = vand.u32 %v1023, 4294901760
  %4010 = vmatpush1.msra.mxu0 %v4009
  %4011 = vmatprep.subr.mxu0 0.0
  %v4012 = vand.u32 %v1022, 4294901760
  %4013 = vmatpush1.msra.mxu0 %v4012
  %4014 = vmatprep.subr.mxu0 0.0
  %v4015 = vand.u32 %v1021, 4294901760
  %4016 = vmatpush1.msra.mxu0 %v4015
  %4017 = vmatprep.subr.mxu0 0.0
  %v4018 = vand.u32 %v1020, 4294901760
  %4019 = vmatpush1.msra.mxu0 %v4018
  %4020 = vmatprep.subr.mxu0 0.0
  %v4021 = vand.u32 %v1019, 4294901760
  %4022 = vmatpush1.msra.mxu0 %v4021
  %4023 = vmatprep.subr.mxu0 0.0
  %4024 = vmatpush2.msra.mxu0 0.0
  %4025 = vmatprep.subr.mxu0 0.0
  %4026 = vmatpush2.msra.mxu0 0.0
  %4027 = vmatprep.subr.mxu0 0.0
  %4028 = vmatpush2.msra.mxu0 0.0
  %4029 = vmatprep.subr.mxu0 0.0
  %4030 = vmatpush2.msra.mxu0 0.0
  %4031 = vmatprep.subr.mxu0 0.0
  %4032 = vmatpush2.msra.mxu0 0.0
  %4033 = vmatprep.subr.mxu0 0.0
  %4034 = vmatpush2.msra.mxu0 0.0
  %4035 = vmatprep.subr.mxu0 0.0
  %4036 = vmatpush2.msra.mxu0 0.0
  %4037 = vmatprep.subr.mxu0 0.0
  %4038 = vmatpush2.msra.mxu0 0.0
  %4039 = vmatprep.subr.mxu0 0.0
  %4040 = vmatpush2.msra.mxu0 0.0
  %4041 = vmatprep.subr.mxu0 0.0
  %4042 = vmatpush2.msra.mxu0 0.0
  %4043 = vmatprep.subr.mxu0 0.0
  %4044 = vmatpush2.msra.mxu0 0.0
  %4045 = vmatprep.subr.mxu0 0.0
  %4046 = vmatpush2.msra.mxu0 0.0
  %4047 = vmatprep.subr.mxu0 0.0
  %4048 = vmatpush2.msra.mxu0 0.0
  %4049 = vmatprep.subr.mxu0 0.0
  %4050 = vmatpush2.msra.mxu0 0.0
  %4051 = vmatprep.subr.mxu0 0.0
  %4052 = vmatpush2.msra.mxu0 0.0
  %4053 = vmatprep.subr.mxu0 0.0
  %4054 = vmatpush2.msra.mxu0 0.0
  %4055 = vmatprep.mubr.f32.mxu0 0.0
  %v4056 = vand.u32 %v3626, 4294901760
  %v4057 = vsub.f32 %v3626, %v4056
  %v4058 = vand.u32 %v4057, 4294901760
  %4059 = vmatmul.mubr.f32.gmra.mxu0 %v4058
  %v4060 = vpop.f32.mrf.mxu0
  %v4061 = vadd.f32 %v3972, %v4060
  %v4062 = vpop.f32.mrf.mxu0
  %4063 = vdwg.mxu0
  %4064 = vmatprep.subr.mxu0 0.0
  %v4065 = vand.u32 %v1034, 4294901760
  %v4066 = vsub.f32 %v1034, %v4065
  %v4067 = vand.u32 %v4066, 4294901760
  %4068 = vmatpush1.msra.mxu0 %v4067
  %4069 = vmatprep.subr.mxu0 0.0
  %v4070 = vand.u32 %v1033, 4294901760
  %v4071 = vsub.f32 %v1033, %v4070
  %v4072 = vand.u32 %v4071, 4294901760
  %4073 = vmatpush1.msra.mxu0 %v4072
  %4074 = vmatprep.subr.mxu0 0.0
  %v4075 = vand.u32 %v1032, 4294901760
  %v4076 = vsub.f32 %v1032, %v4075
  %v4077 = vand.u32 %v4076, 4294901760
  %4078 = vmatpush1.msra.mxu0 %v4077
  %4079 = vmatprep.subr.mxu0 0.0
  %v4080 = vand.u32 %v1031, 4294901760
  %v4081 = vsub.f32 %v1031, %v4080
  %v4082 = vand.u32 %v4081, 4294901760
  %4083 = vmatpush1.msra.mxu0 %v4082
  %4084 = vmatprep.subr.mxu0 0.0
  %v4085 = vand.u32 %v1030, 4294901760
  %v4086 = vsub.f32 %v1030, %v4085
  %v4087 = vand.u32 %v4086, 4294901760
  %4088 = vmatpush1.msra.mxu0 %v4087
  %4089 = vmatprep.subr.mxu0 0.0
  %v4090 = vand.u32 %v1029, 4294901760
  %v4091 = vsub.f32 %v1029, %v4090
  %v4092 = vand.u32 %v4091, 4294901760
  %4093 = vmatpush1.msra.mxu0 %v4092
  %4094 = vmatprep.subr.mxu0 0.0
  %v4095 = vand.u32 %v1028, 4294901760
  %v4096 = vsub.f32 %v1028, %v4095
  %v4097 = vand.u32 %v4096, 4294901760
  %4098 = vmatpush1.msra.mxu0 %v4097
  %4099 = vmatprep.subr.mxu0 0.0
  %v4100 = vand.u32 %v1027, 4294901760
  %v4101 = vsub.f32 %v1027, %v4100
  %v4102 = vand.u32 %v4101, 4294901760
  %4103 = vmatpush1.msra.mxu0 %v4102
  %4104 = vmatprep.subr.mxu0 0.0
  %v4105 = vand.u32 %v1026, 4294901760
  %v4106 = vsub.f32 %v1026, %v4105
  %v4107 = vand.u32 %v4106, 4294901760
  %4108 = vmatpush1.msra.mxu0 %v4107
  %4109 = vmatprep.subr.mxu0 0.0
  %v4110 = vand.u32 %v1025, 4294901760
  %v4111 = vsub.f32 %v1025, %v4110
  %v4112 = vand.u32 %v4111, 4294901760
  %4113 = vmatpush1.msra.mxu0 %v4112
  %4114 = vmatprep.subr.mxu0 0.0
  %v4115 = vand.u32 %v1024, 4294901760
  %v4116 = vsub.f32 %v1024, %v4115
  %v4117 = vand.u32 %v4116, 4294901760
  %4118 = vmatpush1.msra.mxu0 %v4117
  %4119 = vmatprep.subr.mxu0 0.0
  %v4120 = vand.u32 %v1023, 4294901760
  %v4121 = vsub.f32 %v1023, %v4120
  %v4122 = vand.u32 %v4121, 4294901760
  %4123 = vmatpush1.msra.mxu0 %v4122
  %4124 = vmatprep.subr.mxu0 0.0
  %v4125 = vand.u32 %v1022, 4294901760
  %v4126 = vsub.f32 %v1022, %v4125
  %v4127 = vand.u32 %v4126, 4294901760
  %4128 = vmatpush1.msra.mxu0 %v4127
  %4129 = vmatprep.subr.mxu0 0.0
  %v4130 = vand.u32 %v1021, 4294901760
  %v4131 = vsub.f32 %v1021, %v4130
  %v4132 = vand.u32 %v4131, 4294901760
  %4133 = vmatpush1.msra.mxu0 %v4132
  %4134 = vmatprep.subr.mxu0 0.0
  %v4135 = vand.u32 %v1020, 4294901760
  %v4136 = vsub.f32 %v1020, %v4135
  %v4137 = vand.u32 %v4136, 4294901760
  %4138 = vmatpush1.msra.mxu0 %v4137
  %4139 = vmatprep.subr.mxu0 0.0
  %v4140 = vand.u32 %v1019, 4294901760
  %v4141 = vsub.f32 %v1019, %v4140
  %v4142 = vand.u32 %v4141, 4294901760
  %4143 = vmatpush1.msra.mxu0 %v4142
  %4144 = vmatprep.subr.mxu0 0.0
  %4145 = vmatpush2.msra.mxu0 0.0
  %4146 = vmatprep.subr.mxu0 0.0
  %4147 = vmatpush2.msra.mxu0 0.0
  %4148 = vmatprep.subr.mxu0 0.0
  %4149 = vmatpush2.msra.mxu0 0.0
  %4150 = vmatprep.subr.mxu0 0.0
  %4151 = vmatpush2.msra.mxu0 0.0
  %4152 = vmatprep.subr.mxu0 0.0
  %4153 = vmatpush2.msra.mxu0 0.0
  %4154 = vmatprep.subr.mxu0 0.0
  %4155 = vmatpush2.msra.mxu0 0.0
  %4156 = vmatprep.subr.mxu0 0.0
  %4157 = vmatpush2.msra.mxu0 0.0
  %4158 = vmatprep.subr.mxu0 0.0
  %4159 = vmatpush2.msra.mxu0 0.0
  %4160 = vmatprep.subr.mxu0 0.0
  %4161 = vmatpush2.msra.mxu0 0.0
  %4162 = vmatprep.subr.mxu0 0.0
  %4163 = vmatpush2.msra.mxu0 0.0
  %4164 = vmatprep.subr.mxu0 0.0
  %4165 = vmatpush2.msra.mxu0 0.0
  %4166 = vmatprep.subr.mxu0 0.0
  %4167 = vmatpush2.msra.mxu0 0.0
  %4168 = vmatprep.subr.mxu0 0.0
  %4169 = vmatpush2.msra.mxu0 0.0
  %4170 = vmatprep.subr.mxu0 0.0
  %4171 = vmatpush2.msra.mxu0 0.0
  %4172 = vmatprep.subr.mxu0 0.0
  %4173 = vmatpush2.msra.mxu0 0.0
  %4174 = vmatprep.subr.mxu0 0.0
  %4175 = vmatpush2.msra.mxu0 0.0
  %4176 = vmatprep.mubr.f32.mxu0 0.0
  %v4177 = vand.u32 %v3626, 4294901760
  %4178 = vmatmul.mubr.f32.gmra.mxu0 %v4177
  %v4179 = vpop.f32.mrf.mxu0
  %v4180 = vadd.f32 %v4061, %v4179
  %v4181 = vpop.f32.mrf.mxu0
  %4182 = vdwg.mxu0
  %4183 = vmatprep.subr.mxu0 0.0
  %v4184 = vand.u32 %v1034, 4294901760
  %4185 = vmatpush1.msra.mxu0 %v4184
  %4186 = vmatprep.subr.mxu0 0.0
  %v4187 = vand.u32 %v1033, 4294901760
  %4188 = vmatpush1.msra.mxu0 %v4187
  %4189 = vmatprep.subr.mxu0 0.0
  %v4190 = vand.u32 %v1032, 4294901760
  %4191 = vmatpush1.msra.mxu0 %v4190
  %4192 = vmatprep.subr.mxu0 0.0
  %v4193 = vand.u32 %v1031, 4294901760
  %4194 = vmatpush1.msra.mxu0 %v4193
  %4195 = vmatprep.subr.mxu0 0.0
  %v4196 = vand.u32 %v1030, 4294901760
  %4197 = vmatpush1.msra.mxu0 %v4196
  %4198 = vmatprep.subr.mxu0 0.0
  %v4199 = vand.u32 %v1029, 4294901760
  %4200 = vmatpush1.msra.mxu0 %v4199
  %4201 = vmatprep.subr.mxu0 0.0
  %v4202 = vand.u32 %v1028, 4294901760
  %4203 = vmatpush1.msra.mxu0 %v4202
  %4204 = vmatprep.subr.mxu0 0.0
  %v4205 = vand.u32 %v1027, 4294901760
  %4206 = vmatpush1.msra.mxu0 %v4205
  %4207 = vmatprep.subr.mxu0 0.0
  %v4208 = vand.u32 %v1026, 4294901760
  %4209 = vmatpush1.msra.mxu0 %v4208
  %4210 = vmatprep.subr.mxu0 0.0
  %v4211 = vand.u32 %v1025, 4294901760
  %4212 = vmatpush1.msra.mxu0 %v4211
  %4213 = vmatprep.subr.mxu0 0.0
  %v4214 = vand.u32 %v1024, 4294901760
  %4215 = vmatpush1.msra.mxu0 %v4214
  %4216 = vmatprep.subr.mxu0 0.0
  %v4217 = vand.u32 %v1023, 4294901760
  %4218 = vmatpush1.msra.mxu0 %v4217
  %4219 = vmatprep.subr.mxu0 0.0
  %v4220 = vand.u32 %v1022, 4294901760
  %4221 = vmatpush1.msra.mxu0 %v4220
  %4222 = vmatprep.subr.mxu0 0.0
  %v4223 = vand.u32 %v1021, 4294901760
  %4224 = vmatpush1.msra.mxu0 %v4223
  %4225 = vmatprep.subr.mxu0 0.0
  %v4226 = vand.u32 %v1020, 4294901760
  %4227 = vmatpush1.msra.mxu0 %v4226
  %4228 = vmatprep.subr.mxu0 0.0
  %v4229 = vand.u32 %v1019, 4294901760
  %4230 = vmatpush1.msra.mxu0 %v4229
  %4231 = vmatprep.subr.mxu0 0.0
  %4232 = vmatpush2.msra.mxu0 0.0
  %4233 = vmatprep.subr.mxu0 0.0
  %4234 = vmatpush2.msra.mxu0 0.0
  %4235 = vmatprep.subr.mxu0 0.0
  %4236 = vmatpush2.msra.mxu0 0.0
  %4237 = vmatprep.subr.mxu0 0.0
  %4238 = vmatpush2.msra.mxu0 0.0
  %4239 = vmatprep.subr.mxu0 0.0
  %4240 = vmatpush2.msra.mxu0 0.0
  %4241 = vmatprep.subr.mxu0 0.0
  %4242 = vmatpush2.msra.mxu0 0.0
  %4243 = vmatprep.subr.mxu0 0.0
  %4244 = vmatpush2.msra.mxu0 0.0
  %4245 = vmatprep.subr.mxu0 0.0
  %4246 = vmatpush2.msra.mxu0 0.0
  %4247 = vmatprep.subr.mxu0 0.0
  %4248 = vmatpush2.msra.mxu0 0.0
  %4249 = vmatprep.subr.mxu0 0.0
  %4250 = vmatpush2.msra.mxu0 0.0
  %4251 = vmatprep.subr.mxu0 0.0
  %4252 = vmatpush2.msra.mxu0 0.0
  %4253 = vmatprep.subr.mxu0 0.0
  %4254 = vmatpush2.msra.mxu0 0.0
  %4255 = vmatprep.subr.mxu0 0.0
  %4256 = vmatpush2.msra.mxu0 0.0
  %4257 = vmatprep.subr.mxu0 0.0
  %4258 = vmatpush2.msra.mxu0 0.0
  %4259 = vmatprep.subr.mxu0 0.0
  %4260 = vmatpush2.msra.mxu0 0.0
  %4261 = vmatprep.subr.mxu0 0.0
  %4262 = vmatpush2.msra.mxu0 0.0
  %4263 = vmatprep.mubr.f32.mxu0 0.0
  %v4264 = vand.u32 %v3626, 4294901760
  %4265 = vmatmul.mubr.f32.gmra.mxu0 %v4264
  %v4266 = vpop.f32.mrf.mxu0
  %v4267 = vadd.f32 %v4180, %v4266
  %v4268 = vpop.f32.mrf.mxu0
  %4269 = vdwg.mxu0
  %v4270 = vadd.f32 %v3628, %v4267
  %v4271 = vtanh.pop %v4270
  %4272 = vst [vmem:[%s3627] sm:$0xff] %v4271
  %4273 = vst [vmem:[#allocation2] sm:$0xff] %v4271
  %v4274 = vld [vmem:[#allocation2] sm:$0xff]
  %s4275 = scalar_lea.vmem [#allocation3], 40
  %v4276 = vld [vmem:[%s4275] sm:$0xff]
  %4277 = vmatprep.subr.mxu0 0.0
  %v4278 = vand.u32 %v1034, 4294901760
  %4279 = vmatpush1.msra.mxu0 %v4278
  %4280 = vmatprep.subr.mxu0 0.0
  %v4281 = vand.u32 %v1033, 4294901760
  %4282 = vmatpush1.msra.mxu0 %v4281
  %4283 = vmatprep.subr.mxu0 0.0
  %v4284 = vand.u32 %v1032, 4294901760
  %4285 = vmatpush1.msra.mxu0 %v4284
  %4286 = vmatprep.subr.mxu0 0.0
  %v4287 = vand.u32 %v1031, 4294901760
  %4288 = vmatpush1.msra.mxu0 %v4287
  %4289 = vmatprep.subr.mxu0 0.0
  %v4290 = vand.u32 %v1030, 4294901760
  %4291 = vmatpush1.msra.mxu0 %v4290
  %4292 = vmatprep.subr.mxu0 0.0
  %v4293 = vand.u32 %v1029, 4294901760
  %4294 = vmatpush1.msra.mxu0 %v4293
  %4295 = vmatprep.subr.mxu0 0.0
  %v4296 = vand.u32 %v1028, 4294901760
  %4297 = vmatpush1.msra.mxu0 %v4296
  %4298 = vmatprep.subr.mxu0 0.0
  %v4299 = vand.u32 %v1027, 4294901760
  %4300 = vmatpush1.msra.mxu0 %v4299
  %4301 = vmatprep.subr.mxu0 0.0
  %v4302 = vand.u32 %v1026, 4294901760
  %4303 = vmatpush1.msra.mxu0 %v4302
  %4304 = vmatprep.subr.mxu0 0.0
  %v4305 = vand.u32 %v1025, 4294901760
  %4306 = vmatpush1.msra.mxu0 %v4305
  %4307 = vmatprep.subr.mxu0 0.0
  %v4308 = vand.u32 %v1024, 4294901760
  %4309 = vmatpush1.msra.mxu0 %v4308
  %4310 = vmatprep.subr.mxu0 0.0
  %v4311 = vand.u32 %v1023, 4294901760
  %4312 = vmatpush1.msra.mxu0 %v4311
  %4313 = vmatprep.subr.mxu0 0.0
  %v4314 = vand.u32 %v1022, 4294901760
  %4315 = vmatpush1.msra.mxu0 %v4314
  %4316 = vmatprep.subr.mxu0 0.0
  %v4317 = vand.u32 %v1021, 4294901760
  %4318 = vmatpush1.msra.mxu0 %v4317
  %4319 = vmatprep.subr.mxu0 0.0
  %v4320 = vand.u32 %v1020, 4294901760
  %4321 = vmatpush1.msra.mxu0 %v4320
  %4322 = vmatprep.subr.mxu0 0.0
  %v4323 = vand.u32 %v1019, 4294901760
  %4324 = vmatpush1.msra.mxu0 %v4323
  %4325 = vmatprep.subr.mxu0 0.0
  %4326 = vmatpush2.msra.mxu0 0.0
  %4327 = vmatprep.subr.mxu0 0.0
  %4328 = vmatpush2.msra.mxu0 0.0
  %4329 = vmatprep.subr.mxu0 0.0
  %4330 = vmatpush2.msra.mxu0 0.0
  %4331 = vmatprep.subr.mxu0 0.0
  %4332 = vmatpush2.msra.mxu0 0.0
  %4333 = vmatprep.subr.mxu0 0.0
  %4334 = vmatpush2.msra.mxu0 0.0
  %4335 = vmatprep.subr.mxu0 0.0
  %4336 = vmatpush2.msra.mxu0 0.0
  %4337 = vmatprep.subr.mxu0 0.0
  %4338 = vmatpush2.msra.mxu0 0.0
  %4339 = vmatprep.subr.mxu0 0.0
  %4340 = vmatpush2.msra.mxu0 0.0
  %4341 = vmatprep.subr.mxu0 0.0
  %4342 = vmatpush2.msra.mxu0 0.0
  %4343 = vmatprep.subr.mxu0 0.0
  %4344 = vmatpush2.msra.mxu0 0.0
  %4345 = vmatprep.subr.mxu0 0.0
  %4346 = vmatpush2.msra.mxu0 0.0
  %4347 = vmatprep.subr.mxu0 0.0
  %4348 = vmatpush2.msra.mxu0 0.0
  %4349 = vmatprep.subr.mxu0 0.0
  %4350 = vmatpush2.msra.mxu0 0.0
  %4351 = vmatprep.subr.mxu0 0.0
  %4352 = vmatpush2.msra.mxu0 0.0
  %4353 = vmatprep.subr.mxu0 0.0
  %4354 = vmatpush2.msra.mxu0 0.0
  %4355 = vmatprep.subr.mxu0 0.0
  %4356 = vmatpush2.msra.mxu0 0.0
  %4357 = vmatprep.mubr.f32.mxu0 0.0
  %v4358 = vand.u32 %v4274, 4294901760
  %v4359 = vsub.f32 %v4274, %v4358
  %v4360 = vand.u32 %v4359, 4294901760
  %v4361 = vsub.f32 %v4359, %v4360
  %v4362 = vand.u32 %v4361, 4294901760
  %4363 = vmatmul.mubr.f32.gmra.mxu0 %v4362
  %v4364 = vpop.f32.mrf.mxu0
  %v4365 = vadd.f32 0.0, %v4364
  %v4366 = vpop.f32.mrf.mxu0
  %4367 = vdwg.mxu0
  %4368 = vmatprep.subr.mxu0 0.0
  %v4369 = vand.u32 %v1034, 4294901760
  %v4370 = vsub.f32 %v1034, %v4369
  %v4371 = vand.u32 %v4370, 4294901760
  %v4372 = vsub.f32 %v4370, %v4371
  %v4373 = vand.u32 %v4372, 4294901760
  %4374 = vmatpush1.msra.mxu0 %v4373
  %4375 = vmatprep.subr.mxu0 0.0
  %v4376 = vand.u32 %v1033, 4294901760
  %v4377 = vsub.f32 %v1033, %v4376
  %v4378 = vand.u32 %v4377, 4294901760
  %v4379 = vsub.f32 %v4377, %v4378
  %v4380 = vand.u32 %v4379, 4294901760
  %4381 = vmatpush1.msra.mxu0 %v4380
  %4382 = vmatprep.subr.mxu0 0.0
  %v4383 = vand.u32 %v1032, 4294901760
  %v4384 = vsub.f32 %v1032, %v4383
  %v4385 = vand.u32 %v4384, 4294901760
  %v4386 = vsub.f32 %v4384, %v4385
  %v4387 = vand.u32 %v4386, 4294901760
  %4388 = vmatpush1.msra.mxu0 %v4387
  %4389 = vmatprep.subr.mxu0 0.0
  %v4390 = vand.u32 %v1031, 4294901760
  %v4391 = vsub.f32 %v1031, %v4390
  %v4392 = vand.u32 %v4391, 4294901760
  %v4393 = vsub.f32 %v4391, %v4392
  %v4394 = vand.u32 %v4393, 4294901760
  %4395 = vmatpush1.msra.mxu0 %v4394
  %4396 = vmatprep.subr.mxu0 0.0
  %v4397 = vand.u32 %v1030, 4294901760
  %v4398 = vsub.f32 %v1030, %v4397
  %v4399 = vand.u32 %v4398, 4294901760
  %v4400 = vsub.f32 %v4398, %v4399
  %v4401 = vand.u32 %v4400, 4294901760
  %4402 = vmatpush1.msra.mxu0 %v4401
  %4403 = vmatprep.subr.mxu0 0.0
  %v4404 = vand.u32 %v1029, 4294901760
  %v4405 = vsub.f32 %v1029, %v4404
  %v4406 = vand.u32 %v4405, 4294901760
  %v4407 = vsub.f32 %v4405, %v4406
  %v4408 = vand.u32 %v4407, 4294901760
  %4409 = vmatpush1.msra.mxu0 %v4408
  %4410 = vmatprep.subr.mxu0 0.0
  %v4411 = vand.u32 %v1028, 4294901760
  %v4412 = vsub.f32 %v1028, %v4411
  %v4413 = vand.u32 %v4412, 4294901760
  %v4414 = vsub.f32 %v4412, %v4413
  %v4415 = vand.u32 %v4414, 4294901760
  %4416 = vmatpush1.msra.mxu0 %v4415
  %4417 = vmatprep.subr.mxu0 0.0
  %v4418 = vand.u32 %v1027, 4294901760
  %v4419 = vsub.f32 %v1027, %v4418
  %v4420 = vand.u32 %v4419, 4294901760
  %v4421 = vsub.f32 %v4419, %v4420
  %v4422 = vand.u32 %v4421, 4294901760
  %4423 = vmatpush1.msra.mxu0 %v4422
  %4424 = vmatprep.subr.mxu0 0.0
  %v4425 = vand.u32 %v1026, 4294901760
  %v4426 = vsub.f32 %v1026, %v4425
  %v4427 = vand.u32 %v4426, 4294901760
  %v4428 = vsub.f32 %v4426, %v4427
  %v4429 = vand.u32 %v4428, 4294901760
  %4430 = vmatpush1.msra.mxu0 %v4429
  %4431 = vmatprep.subr.mxu0 0.0
  %v4432 = vand.u32 %v1025, 4294901760
  %v4433 = vsub.f32 %v1025, %v4432
  %v4434 = vand.u32 %v4433, 4294901760
  %v4435 = vsub.f32 %v4433, %v4434
  %v4436 = vand.u32 %v4435, 4294901760
  %4437 = vmatpush1.msra.mxu0 %v4436
  %4438 = vmatprep.subr.mxu0 0.0
  %v4439 = vand.u32 %v1024, 4294901760
  %v4440 = vsub.f32 %v1024, %v4439
  %v4441 = vand.u32 %v4440, 4294901760
  %v4442 = vsub.f32 %v4440, %v4441
  %v4443 = vand.u32 %v4442, 4294901760
  %4444 = vmatpush1.msra.mxu0 %v4443
  %4445 = vmatprep.subr.mxu0 0.0
  %v4446 = vand.u32 %v1023, 4294901760
  %v4447 = vsub.f32 %v1023, %v4446
  %v4448 = vand.u32 %v4447, 4294901760
  %v4449 = vsub.f32 %v4447, %v4448
  %v4450 = vand.u32 %v4449, 4294901760
  %4451 = vmatpush1.msra.mxu0 %v4450
  %4452 = vmatprep.subr.mxu0 0.0
  %v4453 = vand.u32 %v1022, 4294901760
  %v4454 = vsub.f32 %v1022, %v4453
  %v4455 = vand.u32 %v4454, 4294901760
  %v4456 = vsub.f32 %v4454, %v4455
  %v4457 = vand.u32 %v4456, 4294901760
  %4458 = vmatpush1.msra.mxu0 %v4457
  %4459 = vmatprep.subr.mxu0 0.0
  %v4460 = vand.u32 %v1021, 4294901760
  %v4461 = vsub.f32 %v1021, %v4460
  %v4462 = vand.u32 %v4461, 4294901760
  %v4463 = vsub.f32 %v4461, %v4462
  %v4464 = vand.u32 %v4463, 4294901760
  %4465 = vmatpush1.msra.mxu0 %v4464
  %4466 = vmatprep.subr.mxu0 0.0
  %v4467 = vand.u32 %v1020, 4294901760
  %v4468 = vsub.f32 %v1020, %v4467
  %v4469 = vand.u32 %v4468, 4294901760
  %v4470 = vsub.f32 %v4468, %v4469
  %v4471 = vand.u32 %v4470, 4294901760
  %4472 = vmatpush1.msra.mxu0 %v4471
  %4473 = vmatprep.subr.mxu0 0.0
  %v4474 = vand.u32 %v1019, 4294901760
  %v4475 = vsub.f32 %v1019, %v4474
  %v4476 = vand.u32 %v4475, 4294901760
  %v4477 = vsub.f32 %v4475, %v4476
  %v4478 = vand.u32 %v4477, 4294901760
  %4479 = vmatpush1.msra.mxu0 %v4478
  %4480 = vmatprep.subr.mxu0 0.0
  %4481 = vmatpush2.msra.mxu0 0.0
  %4482 = vmatprep.subr.mxu0 0.0
  %4483 = vmatpush2.msra.mxu0 0.0
  %4484 = vmatprep.subr.mxu0 0.0
  %4485 = vmatpush2.msra.mxu0 0.0
  %4486 = vmatprep.subr.mxu0 0.0
  %4487 = vmatpush2.msra.mxu0 0.0
  %4488 = vmatprep.subr.mxu0 0.0
  %4489 = vmatpush2.msra.mxu0 0.0
  %4490 = vmatprep.subr.mxu0 0.0
  %4491 = vmatpush2.msra.mxu0 0.0
  %4492 = vmatprep.subr.mxu0 0.0
  %4493 = vmatpush2.msra.mxu0 0.0
  %4494 = vmatprep.subr.mxu0 0.0
  %4495 = vmatpush2.msra.mxu0 0.0
  %4496 = vmatprep.subr.mxu0 0.0
  %4497 = vmatpush2.msra.mxu0 0.0
  %4498 = vmatprep.subr.mxu0 0.0
  %4499 = vmatpush2.msra.mxu0 0.0
  %4500 = vmatprep.subr.mxu0 0.0
  %4501 = vmatpush2.msra.mxu0 0.0
  %4502 = vmatprep.subr.mxu0 0.0
  %4503 = vmatpush2.msra.mxu0 0.0
  %4504 = vmatprep.subr.mxu0 0.0
  %4505 = vmatpush2.msra.mxu0 0.0
  %4506 = vmatprep.subr.mxu0 0.0
  %4507 = vmatpush2.msra.mxu0 0.0
  %4508 = vmatprep.subr.mxu0 0.0
  %4509 = vmatpush2.msra.mxu0 0.0
  %4510 = vmatprep.subr.mxu0 0.0
  %4511 = vmatpush2.msra.mxu0 0.0
  %4512 = vmatprep.mubr.f32.mxu0 0.0
  %v4513 = vand.u32 %v4274, 4294901760
  %4514 = vmatmul.mubr.f32.gmra.mxu0 %v4513
  %v4515 = vpop.f32.mrf.mxu0
  %v4516 = vadd.f32 %v4365, %v4515
  %v4517 = vpop.f32.mrf.mxu0
  %4518 = vdwg.mxu0
  %4519 = vmatprep.subr.mxu0 0.0
  %v4520 = vand.u32 %v1034, 4294901760
  %v4521 = vsub.f32 %v1034, %v4520
  %4522 = vmatpush1.msra.mxu0 %v4521
  %4523 = vmatprep.subr.mxu0 0.0
  %v4524 = vand.u32 %v1033, 4294901760
  %v4525 = vsub.f32 %v1033, %v4524
  %4526 = vmatpush1.msra.mxu0 %v4525
  %4527 = vmatprep.subr.mxu0 0.0
  %v4528 = vand.u32 %v1032, 4294901760
  %v4529 = vsub.f32 %v1032, %v4528
  %4530 = vmatpush1.msra.mxu0 %v4529
  %4531 = vmatprep.subr.mxu0 0.0
  %v4532 = vand.u32 %v1031, 4294901760
  %v4533 = vsub.f32 %v1031, %v4532
  %4534 = vmatpush1.msra.mxu0 %v4533
  %4535 = vmatprep.subr.mxu0 0.0
  %v4536 = vand.u32 %v1030, 4294901760
  %v4537 = vsub.f32 %v1030, %v4536
  %4538 = vmatpush1.msra.mxu0 %v4537
  %4539 = vmatprep.subr.mxu0 0.0
  %v4540 = vand.u32 %v1029, 4294901760
  %v4541 = vsub.f32 %v1029, %v4540
  %4542 = vmatpush1.msra.mxu0 %v4541
  %4543 = vmatprep.subr.mxu0 0.0
  %v4544 = vand.u32 %v1028, 4294901760
  %v4545 = vsub.f32 %v1028, %v4544
  %4546 = vmatpush1.msra.mxu0 %v4545
  %4547 = vmatprep.subr.mxu0 0.0
  %v4548 = vand.u32 %v1027, 4294901760
  %v4549 = vsub.f32 %v1027, %v4548
  %4550 = vmatpush1.msra.mxu0 %v4549
  %4551 = vmatprep.subr.mxu0 0.0
  %v4552 = vand.u32 %v1026, 4294901760
  %v4553 = vsub.f32 %v1026, %v4552
  %4554 = vmatpush1.msra.mxu0 %v4553
  %4555 = vmatprep.subr.mxu0 0.0
  %v4556 = vand.u32 %v1025, 4294901760
  %v4557 = vsub.f32 %v1025, %v4556
  %4558 = vmatpush1.msra.mxu0 %v4557
  %4559 = vmatprep.subr.mxu0 0.0
  %v4560 = vand.u32 %v1024, 4294901760
  %v4561 = vsub.f32 %v1024, %v4560
  %4562 = vmatpush1.msra.mxu0 %v4561
  %4563 = vmatprep.subr.mxu0 0.0
  %v4564 = vand.u32 %v1023, 4294901760
  %v4565 = vsub.f32 %v1023, %v4564
  %4566 = vmatpush1.msra.mxu0 %v4565
  %4567 = vmatprep.subr.mxu0 0.0
  %v4568 = vand.u32 %v1022, 4294901760
  %v4569 = vsub.f32 %v1022, %v4568
  %4570 = vmatpush1.msra.mxu0 %v4569
  %4571 = vmatprep.subr.mxu0 0.0
  %v4572 = vand.u32 %v1021, 4294901760
  %v4573 = vsub.f32 %v1021, %v4572
  %4574 = vmatpush1.msra.mxu0 %v4573
  %4575 = vmatprep.subr.mxu0 0.0
  %v4576 = vand.u32 %v1020, 4294901760
  %v4577 = vsub.f32 %v1020, %v4576
  %4578 = vmatpush1.msra.mxu0 %v4577
  %4579 = vmatprep.subr.mxu0 0.0
  %v4580 = vand.u32 %v1019, 4294901760
  %v4581 = vsub.f32 %v1019, %v4580
  %4582 = vmatpush1.msra.mxu0 %v4581
  %4583 = vmatprep.subr.mxu0 0.0
  %4584 = vmatpush2.msra.mxu0 0.0
  %4585 = vmatprep.subr.mxu0 0.0
  %4586 = vmatpush2.msra.mxu0 0.0
  %4587 = vmatprep.subr.mxu0 0.0
  %4588 = vmatpush2.msra.mxu0 0.0
  %4589 = vmatprep.subr.mxu0 0.0
  %4590 = vmatpush2.msra.mxu0 0.0
  %4591 = vmatprep.subr.mxu0 0.0
  %4592 = vmatpush2.msra.mxu0 0.0
  %4593 = vmatprep.subr.mxu0 0.0
  %4594 = vmatpush2.msra.mxu0 0.0
  %4595 = vmatprep.subr.mxu0 0.0
  %4596 = vmatpush2.msra.mxu0 0.0
  %4597 = vmatprep.subr.mxu0 0.0
  %4598 = vmatpush2.msra.mxu0 0.0
  %4599 = vmatprep.subr.mxu0 0.0
  %4600 = vmatpush2.msra.mxu0 0.0
  %4601 = vmatprep.subr.mxu0 0.0
  %4602 = vmatpush2.msra.mxu0 0.0
  %4603 = vmatprep.subr.mxu0 0.0
  %4604 = vmatpush2.msra.mxu0 0.0
  %4605 = vmatprep.subr.mxu0 0.0
  %4606 = vmatpush2.msra.mxu0 0.0
  %4607 = vmatprep.subr.mxu0 0.0
  %4608 = vmatpush2.msra.mxu0 0.0
  %4609 = vmatprep.subr.mxu0 0.0
  %4610 = vmatpush2.msra.mxu0 0.0
  %4611 = vmatprep.subr.mxu0 0.0
  %4612 = vmatpush2.msra.mxu0 0.0
  %4613 = vmatprep.subr.mxu0 0.0
  %4614 = vmatpush2.msra.mxu0 0.0
  %4615 = vmatprep.mubr.f32.mxu0 0.0
  %v4616 = vand.u32 %v4274, 4294901760
  %v4617 = vsub.f32 %v4274, %v4616
  %4618 = vmatmul.mubr.f32.gmra.mxu0 %v4617
  %v4619 = vpop.f32.mrf.mxu0
  %v4620 = vadd.f32 %v4516, %v4619
  %v4621 = vpop.f32.mrf.mxu0
  %4622 = vdwg.mxu0
  %4623 = vmatprep.subr.mxu0 0.0
  %v4624 = vand.u32 %v1034, 4294901760
  %4625 = vmatpush1.msra.mxu0 %v4624
  %4626 = vmatprep.subr.mxu0 0.0
  %v4627 = vand.u32 %v1033, 4294901760
  %4628 = vmatpush1.msra.mxu0 %v4627
  %4629 = vmatprep.subr.mxu0 0.0
  %v4630 = vand.u32 %v1032, 4294901760
  %4631 = vmatpush1.msra.mxu0 %v4630
  %4632 = vmatprep.subr.mxu0 0.0
  %v4633 = vand.u32 %v1031, 4294901760
  %4634 = vmatpush1.msra.mxu0 %v4633
  %4635 = vmatprep.subr.mxu0 0.0
  %v4636 = vand.u32 %v1030, 4294901760
  %4637 = vmatpush1.msra.mxu0 %v4636
  %4638 = vmatprep.subr.mxu0 0.0
  %v4639 = vand.u32 %v1029, 4294901760
  %4640 = vmatpush1.msra.mxu0 %v4639
  %4641 = vmatprep.subr.mxu0 0.0
  %v4642 = vand.u32 %v1028, 4294901760
  %4643 = vmatpush1.msra.mxu0 %v4642
  %4644 = vmatprep.subr.mxu0 0.0
  %v4645 = vand.u32 %v1027, 4294901760
  %4646 = vmatpush1.msra.mxu0 %v4645
  %4647 = vmatprep.subr.mxu0 0.0
  %v4648 = vand.u32 %v1026, 4294901760
  %4649 = vmatpush1.msra.mxu0 %v4648
  %4650 = vmatprep.subr.mxu0 0.0
  %v4651 = vand.u32 %v1025, 4294901760
  %4652 = vmatpush1.msra.mxu0 %v4651
  %4653 = vmatprep.subr.mxu0 0.0
  %v4654 = vand.u32 %v1024, 4294901760
  %4655 = vmatpush1.msra.mxu0 %v4654
  %4656 = vmatprep.subr.mxu0 0.0
  %v4657 = vand.u32 %v1023, 4294901760
  %4658 = vmatpush1.msra.mxu0 %v4657
  %4659 = vmatprep.subr.mxu0 0.0
  %v4660 = vand.u32 %v1022, 4294901760
  %4661 = vmatpush1.msra.mxu0 %v4660
  %4662 = vmatprep.subr.mxu0 0.0
  %v4663 = vand.u32 %v1021, 4294901760
  %4664 = vmatpush1.msra.mxu0 %v4663
  %4665 = vmatprep.subr.mxu0 0.0
  %v4666 = vand.u32 %v1020, 4294901760
  %4667 = vmatpush1.msra.mxu0 %v4666
  %4668 = vmatprep.subr.mxu0 0.0
  %v4669 = vand.u32 %v1019, 4294901760
  %4670 = vmatpush1.msra.mxu0 %v4669
  %4671 = vmatprep.subr.mxu0 0.0
  %4672 = vmatpush2.msra.mxu0 0.0
  %4673 = vmatprep.subr.mxu0 0.0
  %4674 = vmatpush2.msra.mxu0 0.0
  %4675 = vmatprep.subr.mxu0 0.0
  %4676 = vmatpush2.msra.mxu0 0.0
  %4677 = vmatprep.subr.mxu0 0.0
  %4678 = vmatpush2.msra.mxu0 0.0
  %4679 = vmatprep.subr.mxu0 0.0
  %4680 = vmatpush2.msra.mxu0 0.0
  %4681 = vmatprep.subr.mxu0 0.0
  %4682 = vmatpush2.msra.mxu0 0.0
  %4683 = vmatprep.subr.mxu0 0.0
  %4684 = vmatpush2.msra.mxu0 0.0
  %4685 = vmatprep.subr.mxu0 0.0
  %4686 = vmatpush2.msra.mxu0 0.0
  %4687 = vmatprep.subr.mxu0 0.0
  %4688 = vmatpush2.msra.mxu0 0.0
  %4689 = vmatprep.subr.mxu0 0.0
  %4690 = vmatpush2.msra.mxu0 0.0
  %4691 = vmatprep.subr.mxu0 0.0
  %4692 = vmatpush2.msra.mxu0 0.0
  %4693 = vmatprep.subr.mxu0 0.0
  %4694 = vmatpush2.msra.mxu0 0.0
  %4695 = vmatprep.subr.mxu0 0.0
  %4696 = vmatpush2.msra.mxu0 0.0
  %4697 = vmatprep.subr.mxu0 0.0
  %4698 = vmatpush2.msra.mxu0 0.0
  %4699 = vmatprep.subr.mxu0 0.0
  %4700 = vmatpush2.msra.mxu0 0.0
  %4701 = vmatprep.subr.mxu0 0.0
  %4702 = vmatpush2.msra.mxu0 0.0
  %4703 = vmatprep.mubr.f32.mxu0 0.0
  %v4704 = vand.u32 %v4274, 4294901760
  %v4705 = vsub.f32 %v4274, %v4704
  %v4706 = vand.u32 %v4705, 4294901760
  %4707 = vmatmul.mubr.f32.gmra.mxu0 %v4706
  %v4708 = vpop.f32.mrf.mxu0
  %v4709 = vadd.f32 %v4620, %v4708
  %v4710 = vpop.f32.mrf.mxu0
  %4711 = vdwg.mxu0
  %4712 = vmatprep.subr.mxu0 0.0
  %v4713 = vand.u32 %v1034, 4294901760
  %v4714 = vsub.f32 %v1034, %v4713
  %v4715 = vand.u32 %v4714, 4294901760
  %4716 = vmatpush1.msra.mxu0 %v4715
  %4717 = vmatprep.subr.mxu0 0.0
  %v4718 = vand.u32 %v1033, 4294901760
  %v4719 = vsub.f32 %v1033, %v4718
  %v4720 = vand.u32 %v4719, 4294901760
  %4721 = vmatpush1.msra.mxu0 %v4720
  %4722 = vmatprep.subr.mxu0 0.0
  %v4723 = vand.u32 %v1032, 4294901760
  %v4724 = vsub.f32 %v1032, %v4723
  %v4725 = vand.u32 %v4724, 4294901760
  %4726 = vmatpush1.msra.mxu0 %v4725
  %4727 = vmatprep.subr.mxu0 0.0
  %v4728 = vand.u32 %v1031, 4294901760
  %v4729 = vsub.f32 %v1031, %v4728
  %v4730 = vand.u32 %v4729, 4294901760
  %4731 = vmatpush1.msra.mxu0 %v4730
  %4732 = vmatprep.subr.mxu0 0.0
  %v4733 = vand.u32 %v1030, 4294901760
  %v4734 = vsub.f32 %v1030, %v4733
  %v4735 = vand.u32 %v4734, 4294901760
  %4736 = vmatpush1.msra.mxu0 %v4735
  %4737 = vmatprep.subr.mxu0 0.0
  %v4738 = vand.u32 %v1029, 4294901760
  %v4739 = vsub.f32 %v1029, %v4738
  %v4740 = vand.u32 %v4739, 4294901760
  %4741 = vmatpush1.msra.mxu0 %v4740
  %4742 = vmatprep.subr.mxu0 0.0
  %v4743 = vand.u32 %v1028, 4294901760
  %v4744 = vsub.f32 %v1028, %v4743
  %v4745 = vand.u32 %v4744, 4294901760
  %4746 = vmatpush1.msra.mxu0 %v4745
  %4747 = vmatprep.subr.mxu0 0.0
  %v4748 = vand.u32 %v1027, 4294901760
  %v4749 = vsub.f32 %v1027, %v4748
  %v4750 = vand.u32 %v4749, 4294901760
  %4751 = vmatpush1.msra.mxu0 %v4750
  %4752 = vmatprep.subr.mxu0 0.0
  %v4753 = vand.u32 %v1026, 4294901760
  %v4754 = vsub.f32 %v1026, %v4753
  %v4755 = vand.u32 %v4754, 4294901760
  %4756 = vmatpush1.msra.mxu0 %v4755
  %4757 = vmatprep.subr.mxu0 0.0
  %v4758 = vand.u32 %v1025, 4294901760
  %v4759 = vsub.f32 %v1025, %v4758
  %v4760 = vand.u32 %v4759, 4294901760
  %4761 = vmatpush1.msra.mxu0 %v4760
  %4762 = vmatprep.subr.mxu0 0.0
  %v4763 = vand.u32 %v1024, 4294901760
  %v4764 = vsub.f32 %v1024, %v4763
  %v4765 = vand.u32 %v4764, 4294901760
  %4766 = vmatpush1.msra.mxu0 %v4765
  %4767 = vmatprep.subr.mxu0 0.0
  %v4768 = vand.u32 %v1023, 4294901760
  %v4769 = vsub.f32 %v1023, %v4768
  %v4770 = vand.u32 %v4769, 4294901760
  %4771 = vmatpush1.msra.mxu0 %v4770
  %4772 = vmatprep.subr.mxu0 0.0
  %v4773 = vand.u32 %v1022, 4294901760
  %v4774 = vsub.f32 %v1022, %v4773
  %v4775 = vand.u32 %v4774, 4294901760
  %4776 = vmatpush1.msra.mxu0 %v4775
  %4777 = vmatprep.subr.mxu0 0.0
  %v4778 = vand.u32 %v1021, 4294901760
  %v4779 = vsub.f32 %v1021, %v4778
  %v4780 = vand.u32 %v4779, 4294901760
  %4781 = vmatpush1.msra.mxu0 %v4780
  %4782 = vmatprep.subr.mxu0 0.0
  %v4783 = vand.u32 %v1020, 4294901760
  %v4784 = vsub.f32 %v1020, %v4783
  %v4785 = vand.u32 %v4784, 4294901760
  %4786 = vmatpush1.msra.mxu0 %v4785
  %4787 = vmatprep.subr.mxu0 0.0
  %v4788 = vand.u32 %v1019, 4294901760
  %v4789 = vsub.f32 %v1019, %v4788
  %v4790 = vand.u32 %v4789, 4294901760
  %4791 = vmatpush1.msra.mxu0 %v4790
  %4792 = vmatprep.subr.mxu0 0.0
  %4793 = vmatpush2.msra.mxu0 0.0
  %4794 = vmatprep.subr.mxu0 0.0
  %4795 = vmatpush2.msra.mxu0 0.0
  %4796 = vmatprep.subr.mxu0 0.0
  %4797 = vmatpush2.msra.mxu0 0.0
  %4798 = vmatprep.subr.mxu0 0.0
  %4799 = vmatpush2.msra.mxu0 0.0
  %4800 = vmatprep.subr.mxu0 0.0
  %4801 = vmatpush2.msra.mxu0 0.0
  %4802 = vmatprep.subr.mxu0 0.0
  %4803 = vmatpush2.msra.mxu0 0.0
  %4804 = vmatprep.subr.mxu0 0.0
  %4805 = vmatpush2.msra.mxu0 0.0
  %4806 = vmatprep.subr.mxu0 0.0
  %4807 = vmatpush2.msra.mxu0 0.0
  %4808 = vmatprep.subr.mxu0 0.0
  %4809 = vmatpush2.msra.mxu0 0.0
  %4810 = vmatprep.subr.mxu0 0.0
  %4811 = vmatpush2.msra.mxu0 0.0
  %4812 = vmatprep.subr.mxu0 0.0
  %4813 = vmatpush2.msra.mxu0 0.0
  %4814 = vmatprep.subr.mxu0 0.0
  %4815 = vmatpush2.msra.mxu0 0.0
  %4816 = vmatprep.subr.mxu0 0.0
  %4817 = vmatpush2.msra.mxu0 0.0
  %4818 = vmatprep.subr.mxu0 0.0
  %4819 = vmatpush2.msra.mxu0 0.0
  %4820 = vmatprep.subr.mxu0 0.0
  %4821 = vmatpush2.msra.mxu0 0.0
  %4822 = vmatprep.subr.mxu0 0.0
  %4823 = vmatpush2.msra.mxu0 0.0
  %4824 = vmatprep.mubr.f32.mxu0 0.0
  %v4825 = vand.u32 %v4274, 4294901760
  %4826 = vmatmul.mubr.f32.gmra.mxu0 %v4825
  %v4827 = vpop.f32.mrf.mxu0
  %v4828 = vadd.f32 %v4709, %v4827
  %v4829 = vpop.f32.mrf.mxu0
  %4830 = vdwg.mxu0
  %4831 = vmatprep.subr.mxu0 0.0
  %v4832 = vand.u32 %v1034, 4294901760
  %4833 = vmatpush1.msra.mxu0 %v4832
  %4834 = vmatprep.subr.mxu0 0.0
  %v4835 = vand.u32 %v1033, 4294901760
  %4836 = vmatpush1.msra.mxu0 %v4835
  %4837 = vmatprep.subr.mxu0 0.0
  %v4838 = vand.u32 %v1032, 4294901760
  %4839 = vmatpush1.msra.mxu0 %v4838
  %4840 = vmatprep.subr.mxu0 0.0
  %v4841 = vand.u32 %v1031, 4294901760
  %4842 = vmatpush1.msra.mxu0 %v4841
  %4843 = vmatprep.subr.mxu0 0.0
  %v4844 = vand.u32 %v1030, 4294901760
  %4845 = vmatpush1.msra.mxu0 %v4844
  %4846 = vmatprep.subr.mxu0 0.0
  %v4847 = vand.u32 %v1029, 4294901760
  %4848 = vmatpush1.msra.mxu0 %v4847
  %4849 = vmatprep.subr.mxu0 0.0
  %v4850 = vand.u32 %v1028, 4294901760
  %4851 = vmatpush1.msra.mxu0 %v4850
  %4852 = vmatprep.subr.mxu0 0.0
  %v4853 = vand.u32 %v1027, 4294901760
  %4854 = vmatpush1.msra.mxu0 %v4853
  %4855 = vmatprep.subr.mxu0 0.0
  %v4856 = vand.u32 %v1026, 4294901760
  %4857 = vmatpush1.msra.mxu0 %v4856
  %4858 = vmatprep.subr.mxu0 0.0
  %v4859 = vand.u32 %v1025, 4294901760
  %4860 = vmatpush1.msra.mxu0 %v4859
  %4861 = vmatprep.subr.mxu0 0.0
  %v4862 = vand.u32 %v1024, 4294901760
  %4863 = vmatpush1.msra.mxu0 %v4862
  %4864 = vmatprep.subr.mxu0 0.0
  %v4865 = vand.u32 %v1023, 4294901760
  %4866 = vmatpush1.msra.mxu0 %v4865
  %4867 = vmatprep.subr.mxu0 0.0
  %v4868 = vand.u32 %v1022, 4294901760
  %4869 = vmatpush1.msra.mxu0 %v4868
  %4870 = vmatprep.subr.mxu0 0.0
  %v4871 = vand.u32 %v1021, 4294901760
  %4872 = vmatpush1.msra.mxu0 %v4871
  %4873 = vmatprep.subr.mxu0 0.0
  %v4874 = vand.u32 %v1020, 4294901760
  %4875 = vmatpush1.msra.mxu0 %v4874
  %4876 = vmatprep.subr.mxu0 0.0
  %v4877 = vand.u32 %v1019, 4294901760
  %4878 = vmatpush1.msra.mxu0 %v4877
  %4879 = vmatprep.subr.mxu0 0.0
  %4880 = vmatpush2.msra.mxu0 0.0
  %4881 = vmatprep.subr.mxu0 0.0
  %4882 = vmatpush2.msra.mxu0 0.0
  %4883 = vmatprep.subr.mxu0 0.0
  %4884 = vmatpush2.msra.mxu0 0.0
  %4885 = vmatprep.subr.mxu0 0.0
  %4886 = vmatpush2.msra.mxu0 0.0
  %4887 = vmatprep.subr.mxu0 0.0
  %4888 = vmatpush2.msra.mxu0 0.0
  %4889 = vmatprep.subr.mxu0 0.0
  %4890 = vmatpush2.msra.mxu0 0.0
  %4891 = vmatprep.subr.mxu0 0.0
  %4892 = vmatpush2.msra.mxu0 0.0
  %4893 = vmatprep.subr.mxu0 0.0
  %4894 = vmatpush2.msra.mxu0 0.0
  %4895 = vmatprep.subr.mxu0 0.0
  %4896 = vmatpush2.msra.mxu0 0.0
  %4897 = vmatprep.subr.mxu0 0.0
  %4898 = vmatpush2.msra.mxu0 0.0
  %4899 = vmatprep.subr.mxu0 0.0
  %4900 = vmatpush2.msra.mxu0 0.0
  %4901 = vmatprep.subr.mxu0 0.0
  %4902 = vmatpush2.msra.mxu0 0.0
  %4903 = vmatprep.subr.mxu0 0.0
  %4904 = vmatpush2.msra.mxu0 0.0
  %4905 = vmatprep.subr.mxu0 0.0
  %4906 = vmatpush2.msra.mxu0 0.0
  %4907 = vmatprep.subr.mxu0 0.0
  %4908 = vmatpush2.msra.mxu0 0.0
  %4909 = vmatprep.subr.mxu0 0.0
  %4910 = vmatpush2.msra.mxu0 0.0
  %4911 = vmatprep.mubr.f32.mxu0 0.0
  %v4912 = vand.u32 %v4274, 4294901760
  %4913 = vmatmul.mubr.f32.gmra.mxu0 %v4912
  %v4914 = vpop.f32.mrf.mxu0
  %v4915 = vadd.f32 %v4828, %v4914
  %v4916 = vpop.f32.mrf.mxu0
  %4917 = vdwg.mxu0
  %v4918 = vadd.f32 %v4276, %v4915
  %v4919 = vtanh.pop %v4918
  %4920 = vst [vmem:[%s4275] sm:$0xff] %v4919
  %4921 = vst [vmem:[#allocation2] sm:$0xff] %v4919
  %v4922 = vld [vmem:[#allocation2] sm:$0xff]
  %s4923 = scalar_lea.vmem [#allocation3], 48
  %v4924 = vld [vmem:[%s4923] sm:$0xff]
  %4925 = vmatprep.subr.mxu0 0.0
  %v4926 = vand.u32 %v1034, 4294901760
  %4927 = vmatpush1.msra.mxu0 %v4926
  %4928 = vmatprep.subr.mxu0 0.0
  %v4929 = vand.u32 %v1033, 4294901760
  %4930 = vmatpush1.msra.mxu0 %v4929
  %4931 = vmatprep.subr.mxu0 0.0
  %v4932 = vand.u32 %v1032, 4294901760
  %4933 = vmatpush1.msra.mxu0 %v4932
  %4934 = vmatprep.subr.mxu0 0.0
  %v4935 = vand.u32 %v1031, 4294901760
  %4936 = vmatpush1.msra.mxu0 %v4935
  %4937 = vmatprep.subr.mxu0 0.0
  %v4938 = vand.u32 %v1030, 4294901760
  %4939 = vmatpush1.msra.mxu0 %v4938
  %4940 = vmatprep.subr.mxu0 0.0
  %v4941 = vand.u32 %v1029, 4294901760
  %4942 = vmatpush1.msra.mxu0 %v4941
  %4943 = vmatprep.subr.mxu0 0.0
  %v4944 = vand.u32 %v1028, 4294901760
  %4945 = vmatpush1.msra.mxu0 %v4944
  %4946 = vmatprep.subr.mxu0 0.0
  %v4947 = vand.u32 %v1027, 4294901760
  %4948 = vmatpush1.msra.mxu0 %v4947
  %4949 = vmatprep.subr.mxu0 0.0
  %v4950 = vand.u32 %v1026, 4294901760
  %4951 = vmatpush1.msra.mxu0 %v4950
  %4952 = vmatprep.subr.mxu0 0.0
  %v4953 = vand.u32 %v1025, 4294901760
  %4954 = vmatpush1.msra.mxu0 %v4953
  %4955 = vmatprep.subr.mxu0 0.0
  %v4956 = vand.u32 %v1024, 4294901760
  %4957 = vmatpush1.msra.mxu0 %v4956
  %4958 = vmatprep.subr.mxu0 0.0
  %v4959 = vand.u32 %v1023, 4294901760
  %4960 = vmatpush1.msra.mxu0 %v4959
  %4961 = vmatprep.subr.mxu0 0.0
  %v4962 = vand.u32 %v1022, 4294901760
  %4963 = vmatpush1.msra.mxu0 %v4962
  %4964 = vmatprep.subr.mxu0 0.0
  %v4965 = vand.u32 %v1021, 4294901760
  %4966 = vmatpush1.msra.mxu0 %v4965
  %4967 = vmatprep.subr.mxu0 0.0
  %v4968 = vand.u32 %v1020, 4294901760
  %4969 = vmatpush1.msra.mxu0 %v4968
  %4970 = vmatprep.subr.mxu0 0.0
  %v4971 = vand.u32 %v1019, 4294901760
  %4972 = vmatpush1.msra.mxu0 %v4971
  %4973 = vmatprep.subr.mxu0 0.0
  %4974 = vmatpush2.msra.mxu0 0.0
  %4975 = vmatprep.subr.mxu0 0.0
  %4976 = vmatpush2.msra.mxu0 0.0
  %4977 = vmatprep.subr.mxu0 0.0
  %4978 = vmatpush2.msra.mxu0 0.0
  %4979 = vmatprep.subr.mxu0 0.0
  %4980 = vmatpush2.msra.mxu0 0.0
  %4981 = vmatprep.subr.mxu0 0.0
  %4982 = vmatpush2.msra.mxu0 0.0
  %4983 = vmatprep.subr.mxu0 0.0
  %4984 = vmatpush2.msra.mxu0 0.0
  %4985 = vmatprep.subr.mxu0 0.0
  %4986 = vmatpush2.msra.mxu0 0.0
  %4987 = vmatprep.subr.mxu0 0.0
  %4988 = vmatpush2.msra.mxu0 0.0
  %4989 = vmatprep.subr.mxu0 0.0
  %4990 = vmatpush2.msra.mxu0 0.0
  %4991 = vmatprep.subr.mxu0 0.0
  %4992 = vmatpush2.msra.mxu0 0.0
  %4993 = vmatprep.subr.mxu0 0.0
  %4994 = vmatpush2.msra.mxu0 0.0
  %4995 = vmatprep.subr.mxu0 0.0
  %4996 = vmatpush2.msra.mxu0 0.0
  %4997 = vmatprep.subr.mxu0 0.0
  %4998 = vmatpush2.msra.mxu0 0.0
  %4999 = vmatprep.subr.mxu0 0.0
  %5000 = vmatpush2.msra.mxu0 0.0
  %5001 = vmatprep.subr.mxu0 0.0
  %5002 = vmatpush2.msra.mxu0 0.0
  %5003 = vmatprep.subr.mxu0 0.0
  %5004 = vmatpush2.msra.mxu0 0.0
  %5005 = vmatprep.mubr.f32.mxu0 0.0
  %v5006 = vand.u32 %v4922, 4294901760
  %v5007 = vsub.f32 %v4922, %v5006
  %v5008 = vand.u32 %v5007, 4294901760
  %v5009 = vsub.f32 %v5007, %v5008
  %v5010 = vand.u32 %v5009, 4294901760
  %5011 = vmatmul.mubr.f32.gmra.mxu0 %v5010
  %v5012 = vpop.f32.mrf.mxu0
  %v5013 = vadd.f32 0.0, %v5012
  %v5014 = vpop.f32.mrf.mxu0
  %5015 = vdwg.mxu0
  %5016 = vmatprep.subr.mxu0 0.0
  %v5017 = vand.u32 %v1034, 4294901760
  %v5018 = vsub.f32 %v1034, %v5017
  %v5019 = vand.u32 %v5018, 4294901760
  %v5020 = vsub.f32 %v5018, %v5019
  %v5021 = vand.u32 %v5020, 4294901760
  %5022 = vmatpush1.msra.mxu0 %v5021
  %5023 = vmatprep.subr.mxu0 0.0
  %v5024 = vand.u32 %v1033, 4294901760
  %v5025 = vsub.f32 %v1033, %v5024
  %v5026 = vand.u32 %v5025, 4294901760
  %v5027 = vsub.f32 %v5025, %v5026
  %v5028 = vand.u32 %v5027, 4294901760
  %5029 = vmatpush1.msra.mxu0 %v5028
  %5030 = vmatprep.subr.mxu0 0.0
  %v5031 = vand.u32 %v1032, 4294901760
  %v5032 = vsub.f32 %v1032, %v5031
  %v5033 = vand.u32 %v5032, 4294901760
  %v5034 = vsub.f32 %v5032, %v5033
  %v5035 = vand.u32 %v5034, 4294901760
  %5036 = vmatpush1.msra.mxu0 %v5035
  %5037 = vmatprep.subr.mxu0 0.0
  %v5038 = vand.u32 %v1031, 4294901760
  %v5039 = vsub.f32 %v1031, %v5038
  %v5040 = vand.u32 %v5039, 4294901760
  %v5041 = vsub.f32 %v5039, %v5040
  %v5042 = vand.u32 %v5041, 4294901760
  %5043 = vmatpush1.msra.mxu0 %v5042
  %5044 = vmatprep.subr.mxu0 0.0
  %v5045 = vand.u32 %v1030, 4294901760
  %v5046 = vsub.f32 %v1030, %v5045
  %v5047 = vand.u32 %v5046, 4294901760
  %v5048 = vsub.f32 %v5046, %v5047
  %v5049 = vand.u32 %v5048, 4294901760
  %5050 = vmatpush1.msra.mxu0 %v5049
  %5051 = vmatprep.subr.mxu0 0.0
  %v5052 = vand.u32 %v1029, 4294901760
  %v5053 = vsub.f32 %v1029, %v5052
  %v5054 = vand.u32 %v5053, 4294901760
  %v5055 = vsub.f32 %v5053, %v5054
  %v5056 = vand.u32 %v5055, 4294901760
  %5057 = vmatpush1.msra.mxu0 %v5056
  %5058 = vmatprep.subr.mxu0 0.0
  %v5059 = vand.u32 %v1028, 4294901760
  %v5060 = vsub.f32 %v1028, %v5059
  %v5061 = vand.u32 %v5060, 4294901760
  %v5062 = vsub.f32 %v5060, %v5061
  %v5063 = vand.u32 %v5062, 4294901760
  %5064 = vmatpush1.msra.mxu0 %v5063
  %5065 = vmatprep.subr.mxu0 0.0
  %v5066 = vand.u32 %v1027, 4294901760
  %v5067 = vsub.f32 %v1027, %v5066
  %v5068 = vand.u32 %v5067, 4294901760
  %v5069 = vsub.f32 %v5067, %v5068
  %v5070 = vand.u32 %v5069, 4294901760
  %5071 = vmatpush1.msra.mxu0 %v5070
  %5072 = vmatprep.subr.mxu0 0.0
  %v5073 = vand.u32 %v1026, 4294901760
  %v5074 = vsub.f32 %v1026, %v5073
  %v5075 = vand.u32 %v5074, 4294901760
  %v5076 = vsub.f32 %v5074, %v5075
  %v5077 = vand.u32 %v5076, 4294901760
  %5078 = vmatpush1.msra.mxu0 %v5077
  %5079 = vmatprep.subr.mxu0 0.0
  %v5080 = vand.u32 %v1025, 4294901760
  %v5081 = vsub.f32 %v1025, %v5080
  %v5082 = vand.u32 %v5081, 4294901760
  %v5083 = vsub.f32 %v5081, %v5082
  %v5084 = vand.u32 %v5083, 4294901760
  %5085 = vmatpush1.msra.mxu0 %v5084
  %5086 = vmatprep.subr.mxu0 0.0
  %v5087 = vand.u32 %v1024, 4294901760
  %v5088 = vsub.f32 %v1024, %v5087
  %v5089 = vand.u32 %v5088, 4294901760
  %v5090 = vsub.f32 %v5088, %v5089
  %v5091 = vand.u32 %v5090, 4294901760
  %5092 = vmatpush1.msra.mxu0 %v5091
  %5093 = vmatprep.subr.mxu0 0.0
  %v5094 = vand.u32 %v1023, 4294901760
  %v5095 = vsub.f32 %v1023, %v5094
  %v5096 = vand.u32 %v5095, 4294901760
  %v5097 = vsub.f32 %v5095, %v5096
  %v5098 = vand.u32 %v5097, 4294901760
  %5099 = vmatpush1.msra.mxu0 %v5098
  %5100 = vmatprep.subr.mxu0 0.0
  %v5101 = vand.u32 %v1022, 4294901760
  %v5102 = vsub.f32 %v1022, %v5101
  %v5103 = vand.u32 %v5102, 4294901760
  %v5104 = vsub.f32 %v5102, %v5103
  %v5105 = vand.u32 %v5104, 4294901760
  %5106 = vmatpush1.msra.mxu0 %v5105
  %5107 = vmatprep.subr.mxu0 0.0
  %v5108 = vand.u32 %v1021, 4294901760
  %v5109 = vsub.f32 %v1021, %v5108
  %v5110 = vand.u32 %v5109, 4294901760
  %v5111 = vsub.f32 %v5109, %v5110
  %v5112 = vand.u32 %v5111, 4294901760
  %5113 = vmatpush1.msra.mxu0 %v5112
  %5114 = vmatprep.subr.mxu0 0.0
  %v5115 = vand.u32 %v1020, 4294901760
  %v5116 = vsub.f32 %v1020, %v5115
  %v5117 = vand.u32 %v5116, 4294901760
  %v5118 = vsub.f32 %v5116, %v5117
  %v5119 = vand.u32 %v5118, 4294901760
  %5120 = vmatpush1.msra.mxu0 %v5119
  %5121 = vmatprep.subr.mxu0 0.0
  %v5122 = vand.u32 %v1019, 4294901760
  %v5123 = vsub.f32 %v1019, %v5122
  %v5124 = vand.u32 %v5123, 4294901760
  %v5125 = vsub.f32 %v5123, %v5124
  %v5126 = vand.u32 %v5125, 4294901760
  %5127 = vmatpush1.msra.mxu0 %v5126
  %5128 = vmatprep.subr.mxu0 0.0
  %5129 = vmatpush2.msra.mxu0 0.0
  %5130 = vmatprep.subr.mxu0 0.0
  %5131 = vmatpush2.msra.mxu0 0.0
  %5132 = vmatprep.subr.mxu0 0.0
  %5133 = vmatpush2.msra.mxu0 0.0
  %5134 = vmatprep.subr.mxu0 0.0
  %5135 = vmatpush2.msra.mxu0 0.0
  %5136 = vmatprep.subr.mxu0 0.0
  %5137 = vmatpush2.msra.mxu0 0.0
  %5138 = vmatprep.subr.mxu0 0.0
  %5139 = vmatpush2.msra.mxu0 0.0
  %5140 = vmatprep.subr.mxu0 0.0
  %5141 = vmatpush2.msra.mxu0 0.0
  %5142 = vmatprep.subr.mxu0 0.0
  %5143 = vmatpush2.msra.mxu0 0.0
  %5144 = vmatprep.subr.mxu0 0.0
  %5145 = vmatpush2.msra.mxu0 0.0
  %5146 = vmatprep.subr.mxu0 0.0
  %5147 = vmatpush2.msra.mxu0 0.0
  %5148 = vmatprep.subr.mxu0 0.0
  %5149 = vmatpush2.msra.mxu0 0.0
  %5150 = vmatprep.subr.mxu0 0.0
  %5151 = vmatpush2.msra.mxu0 0.0
  %5152 = vmatprep.subr.mxu0 0.0
  %5153 = vmatpush2.msra.mxu0 0.0
  %5154 = vmatprep.subr.mxu0 0.0
  %5155 = vmatpush2.msra.mxu0 0.0
  %5156 = vmatprep.subr.mxu0 0.0
  %5157 = vmatpush2.msra.mxu0 0.0
  %5158 = vmatprep.subr.mxu0 0.0
  %5159 = vmatpush2.msra.mxu0 0.0
  %5160 = vmatprep.mubr.f32.mxu0 0.0
  %v5161 = vand.u32 %v4922, 4294901760
  %5162 = vmatmul.mubr.f32.gmra.mxu0 %v5161
  %v5163 = vpop.f32.mrf.mxu0
  %v5164 = vadd.f32 %v5013, %v5163
  %v5165 = vpop.f32.mrf.mxu0
  %5166 = vdwg.mxu0
  %5167 = vmatprep.subr.mxu0 0.0
  %v5168 = vand.u32 %v1034, 4294901760
  %v5169 = vsub.f32 %v1034, %v5168
  %5170 = vmatpush1.msra.mxu0 %v5169
  %5171 = vmatprep.subr.mxu0 0.0
  %v5172 = vand.u32 %v1033, 4294901760
  %v5173 = vsub.f32 %v1033, %v5172
  %5174 = vmatpush1.msra.mxu0 %v5173
  %5175 = vmatprep.subr.mxu0 0.0
  %v5176 = vand.u32 %v1032, 4294901760
  %v5177 = vsub.f32 %v1032, %v5176
  %5178 = vmatpush1.msra.mxu0 %v5177
  %5179 = vmatprep.subr.mxu0 0.0
  %v5180 = vand.u32 %v1031, 4294901760
  %v5181 = vsub.f32 %v1031, %v5180
  %5182 = vmatpush1.msra.mxu0 %v5181
  %5183 = vmatprep.subr.mxu0 0.0
  %v5184 = vand.u32 %v1030, 4294901760
  %v5185 = vsub.f32 %v1030, %v5184
  %5186 = vmatpush1.msra.mxu0 %v5185
  %5187 = vmatprep.subr.mxu0 0.0
  %v5188 = vand.u32 %v1029, 4294901760
  %v5189 = vsub.f32 %v1029, %v5188
  %5190 = vmatpush1.msra.mxu0 %v5189
  %5191 = vmatprep.subr.mxu0 0.0
  %v5192 = vand.u32 %v1028, 4294901760
  %v5193 = vsub.f32 %v1028, %v5192
  %5194 = vmatpush1.msra.mxu0 %v5193
  %5195 = vmatprep.subr.mxu0 0.0
  %v5196 = vand.u32 %v1027, 4294901760
  %v5197 = vsub.f32 %v1027, %v5196
  %5198 = vmatpush1.msra.mxu0 %v5197
  %5199 = vmatprep.subr.mxu0 0.0
  %v5200 = vand.u32 %v1026, 4294901760
  %v5201 = vsub.f32 %v1026, %v5200
  %5202 = vmatpush1.msra.mxu0 %v5201
  %5203 = vmatprep.subr.mxu0 0.0
  %v5204 = vand.u32 %v1025, 4294901760
  %v5205 = vsub.f32 %v1025, %v5204
  %5206 = vmatpush1.msra.mxu0 %v5205
  %5207 = vmatprep.subr.mxu0 0.0
  %v5208 = vand.u32 %v1024, 4294901760
  %v5209 = vsub.f32 %v1024, %v5208
  %5210 = vmatpush1.msra.mxu0 %v5209
  %5211 = vmatprep.subr.mxu0 0.0
  %v5212 = vand.u32 %v1023, 4294901760
  %v5213 = vsub.f32 %v1023, %v5212
  %5214 = vmatpush1.msra.mxu0 %v5213
  %5215 = vmatprep.subr.mxu0 0.0
  %v5216 = vand.u32 %v1022, 4294901760
  %v5217 = vsub.f32 %v1022, %v5216
  %5218 = vmatpush1.msra.mxu0 %v5217
  %5219 = vmatprep.subr.mxu0 0.0
  %v5220 = vand.u32 %v1021, 4294901760
  %v5221 = vsub.f32 %v1021, %v5220
  %5222 = vmatpush1.msra.mxu0 %v5221
  %5223 = vmatprep.subr.mxu0 0.0
  %v5224 = vand.u32 %v1020, 4294901760
  %v5225 = vsub.f32 %v1020, %v5224
  %5226 = vmatpush1.msra.mxu0 %v5225
  %5227 = vmatprep.subr.mxu0 0.0
  %v5228 = vand.u32 %v1019, 4294901760
  %v5229 = vsub.f32 %v1019, %v5228
  %5230 = vmatpush1.msra.mxu0 %v5229
  %5231 = vmatprep.subr.mxu0 0.0
  %5232 = vmatpush2.msra.mxu0 0.0
  %5233 = vmatprep.subr.mxu0 0.0
  %5234 = vmatpush2.msra.mxu0 0.0
  %5235 = vmatprep.subr.mxu0 0.0
  %5236 = vmatpush2.msra.mxu0 0.0
  %5237 = vmatprep.subr.mxu0 0.0
  %5238 = vmatpush2.msra.mxu0 0.0
  %5239 = vmatprep.subr.mxu0 0.0
  %5240 = vmatpush2.msra.mxu0 0.0
  %5241 = vmatprep.subr.mxu0 0.0
  %5242 = vmatpush2.msra.mxu0 0.0
  %5243 = vmatprep.subr.mxu0 0.0
  %5244 = vmatpush2.msra.mxu0 0.0
  %5245 = vmatprep.subr.mxu0 0.0
  %5246 = vmatpush2.msra.mxu0 0.0
  %5247 = vmatprep.subr.mxu0 0.0
  %5248 = vmatpush2.msra.mxu0 0.0
  %5249 = vmatprep.subr.mxu0 0.0
  %5250 = vmatpush2.msra.mxu0 0.0
  %5251 = vmatprep.subr.mxu0 0.0
  %5252 = vmatpush2.msra.mxu0 0.0
  %5253 = vmatprep.subr.mxu0 0.0
  %5254 = vmatpush2.msra.mxu0 0.0
  %5255 = vmatprep.subr.mxu0 0.0
  %5256 = vmatpush2.msra.mxu0 0.0
  %5257 = vmatprep.subr.mxu0 0.0
  %5258 = vmatpush2.msra.mxu0 0.0
  %5259 = vmatprep.subr.mxu0 0.0
  %5260 = vmatpush2.msra.mxu0 0.0
  %5261 = vmatprep.subr.mxu0 0.0
  %5262 = vmatpush2.msra.mxu0 0.0
  %5263 = vmatprep.mubr.f32.mxu0 0.0
  %v5264 = vand.u32 %v4922, 4294901760
  %v5265 = vsub.f32 %v4922, %v5264
  %5266 = vmatmul.mubr.f32.gmra.mxu0 %v5265
  %v5267 = vpop.f32.mrf.mxu0
  %v5268 = vadd.f32 %v5164, %v5267
  %v5269 = vpop.f32.mrf.mxu0
  %5270 = vdwg.mxu0
  %5271 = vmatprep.subr.mxu0 0.0
  %v5272 = vand.u32 %v1034, 4294901760
  %5273 = vmatpush1.msra.mxu0 %v5272
  %5274 = vmatprep.subr.mxu0 0.0
  %v5275 = vand.u32 %v1033, 4294901760
  %5276 = vmatpush1.msra.mxu0 %v5275
  %5277 = vmatprep.subr.mxu0 0.0
  %v5278 = vand.u32 %v1032, 4294901760
  %5279 = vmatpush1.msra.mxu0 %v5278
  %5280 = vmatprep.subr.mxu0 0.0
  %v5281 = vand.u32 %v1031, 4294901760
  %5282 = vmatpush1.msra.mxu0 %v5281
  %5283 = vmatprep.subr.mxu0 0.0
  %v5284 = vand.u32 %v1030, 4294901760
  %5285 = vmatpush1.msra.mxu0 %v5284
  %5286 = vmatprep.subr.mxu0 0.0
  %v5287 = vand.u32 %v1029, 4294901760
  %5288 = vmatpush1.msra.mxu0 %v5287
  %5289 = vmatprep.subr.mxu0 0.0
  %v5290 = vand.u32 %v1028, 4294901760
  %5291 = vmatpush1.msra.mxu0 %v5290
  %5292 = vmatprep.subr.mxu0 0.0
  %v5293 = vand.u32 %v1027, 4294901760
  %5294 = vmatpush1.msra.mxu0 %v5293
  %5295 = vmatprep.subr.mxu0 0.0
  %v5296 = vand.u32 %v1026, 4294901760
  %5297 = vmatpush1.msra.mxu0 %v5296
  %5298 = vmatprep.subr.mxu0 0.0
  %v5299 = vand.u32 %v1025, 4294901760
  %5300 = vmatpush1.msra.mxu0 %v5299
  %5301 = vmatprep.subr.mxu0 0.0
  %v5302 = vand.u32 %v1024, 4294901760
  %5303 = vmatpush1.msra.mxu0 %v5302
  %5304 = vmatprep.subr.mxu0 0.0
  %v5305 = vand.u32 %v1023, 4294901760
  %5306 = vmatpush1.msra.mxu0 %v5305
  %5307 = vmatprep.subr.mxu0 0.0
  %v5308 = vand.u32 %v1022, 4294901760
  %5309 = vmatpush1.msra.mxu0 %v5308
  %5310 = vmatprep.subr.mxu0 0.0
  %v5311 = vand.u32 %v1021, 4294901760
  %5312 = vmatpush1.msra.mxu0 %v5311
  %5313 = vmatprep.subr.mxu0 0.0
  %v5314 = vand.u32 %v1020, 4294901760
  %5315 = vmatpush1.msra.mxu0 %v5314
  %5316 = vmatprep.subr.mxu0 0.0
  %v5317 = vand.u32 %v1019, 4294901760
  %5318 = vmatpush1.msra.mxu0 %v5317
  %5319 = vmatprep.subr.mxu0 0.0
  %5320 = vmatpush2.msra.mxu0 0.0
  %5321 = vmatprep.subr.mxu0 0.0
  %5322 = vmatpush2.msra.mxu0 0.0
  %5323 = vmatprep.subr.mxu0 0.0
  %5324 = vmatpush2.msra.mxu0 0.0
  %5325 = vmatprep.subr.mxu0 0.0
  %5326 = vmatpush2.msra.mxu0 0.0
  %5327 = vmatprep.subr.mxu0 0.0
  %5328 = vmatpush2.msra.mxu0 0.0
  %5329 = vmatprep.subr.mxu0 0.0
  %5330 = vmatpush2.msra.mxu0 0.0
  %5331 = vmatprep.subr.mxu0 0.0
  %5332 = vmatpush2.msra.mxu0 0.0
  %5333 = vmatprep.subr.mxu0 0.0
  %5334 = vmatpush2.msra.mxu0 0.0
  %5335 = vmatprep.subr.mxu0 0.0
  %5336 = vmatpush2.msra.mxu0 0.0
  %5337 = vmatprep.subr.mxu0 0.0
  %5338 = vmatpush2.msra.mxu0 0.0
  %5339 = vmatprep.subr.mxu0 0.0
  %5340 = vmatpush2.msra.mxu0 0.0
  %5341 = vmatprep.subr.mxu0 0.0
  %5342 = vmatpush2.msra.mxu0 0.0
  %5343 = vmatprep.subr.mxu0 0.0
  %5344 = vmatpush2.msra.mxu0 0.0
  %5345 = vmatprep.subr.mxu0 0.0
  %5346 = vmatpush2.msra.mxu0 0.0
  %5347 = vmatprep.subr.mxu0 0.0
  %5348 = vmatpush2.msra.mxu0 0.0
  %5349 = vmatprep.subr.mxu0 0.0
  %5350 = vmatpush2.msra.mxu0 0.0
  %5351 = vmatprep.mubr.f32.mxu0 0.0
  %v5352 = vand.u32 %v4922, 4294901760
  %v5353 = vsub.f32 %v4922, %v5352
  %v5354 = vand.u32 %v5353, 4294901760
  %5355 = vmatmul.mubr.f32.gmra.mxu0 %v5354
  %v5356 = vpop.f32.mrf.mxu0
  %v5357 = vadd.f32 %v5268, %v5356
  %v5358 = vpop.f32.mrf.mxu0
  %5359 = vdwg.mxu0
  %5360 = vmatprep.subr.mxu0 0.0
  %v5361 = vand.u32 %v1034, 4294901760
  %v5362 = vsub.f32 %v1034, %v5361
  %v5363 = vand.u32 %v5362, 4294901760
  %5364 = vmatpush1.msra.mxu0 %v5363
  %5365 = vmatprep.subr.mxu0 0.0
  %v5366 = vand.u32 %v1033, 4294901760
  %v5367 = vsub.f32 %v1033, %v5366
  %v5368 = vand.u32 %v5367, 4294901760
  %5369 = vmatpush1.msra.mxu0 %v5368
  %5370 = vmatprep.subr.mxu0 0.0
  %v5371 = vand.u32 %v1032, 4294901760
  %v5372 = vsub.f32 %v1032, %v5371
  %v5373 = vand.u32 %v5372, 4294901760
  %5374 = vmatpush1.msra.mxu0 %v5373
  %5375 = vmatprep.subr.mxu0 0.0
  %v5376 = vand.u32 %v1031, 4294901760
  %v5377 = vsub.f32 %v1031, %v5376
  %v5378 = vand.u32 %v5377, 4294901760
  %5379 = vmatpush1.msra.mxu0 %v5378
  %5380 = vmatprep.subr.mxu0 0.0
  %v5381 = vand.u32 %v1030, 4294901760
  %v5382 = vsub.f32 %v1030, %v5381
  %v5383 = vand.u32 %v5382, 4294901760
  %5384 = vmatpush1.msra.mxu0 %v5383
  %5385 = vmatprep.subr.mxu0 0.0
  %v5386 = vand.u32 %v1029, 4294901760
  %v5387 = vsub.f32 %v1029, %v5386
  %v5388 = vand.u32 %v5387, 4294901760
  %5389 = vmatpush1.msra.mxu0 %v5388
  %5390 = vmatprep.subr.mxu0 0.0
  %v5391 = vand.u32 %v1028, 4294901760
  %v5392 = vsub.f32 %v1028, %v5391
  %v5393 = vand.u32 %v5392, 4294901760
  %5394 = vmatpush1.msra.mxu0 %v5393
  %5395 = vmatprep.subr.mxu0 0.0
  %v5396 = vand.u32 %v1027, 4294901760
  %v5397 = vsub.f32 %v1027, %v5396
  %v5398 = vand.u32 %v5397, 4294901760
  %5399 = vmatpush1.msra.mxu0 %v5398
  %5400 = vmatprep.subr.mxu0 0.0
  %v5401 = vand.u32 %v1026, 4294901760
  %v5402 = vsub.f32 %v1026, %v5401
  %v5403 = vand.u32 %v5402, 4294901760
  %5404 = vmatpush1.msra.mxu0 %v5403
  %5405 = vmatprep.subr.mxu0 0.0
  %v5406 = vand.u32 %v1025, 4294901760
  %v5407 = vsub.f32 %v1025, %v5406
  %v5408 = vand.u32 %v5407, 4294901760
  %5409 = vmatpush1.msra.mxu0 %v5408
  %5410 = vmatprep.subr.mxu0 0.0
  %v5411 = vand.u32 %v1024, 4294901760
  %v5412 = vsub.f32 %v1024, %v5411
  %v5413 = vand.u32 %v5412, 4294901760
  %5414 = vmatpush1.msra.mxu0 %v5413
  %5415 = vmatprep.subr.mxu0 0.0
  %v5416 = vand.u32 %v1023, 4294901760
  %v5417 = vsub.f32 %v1023, %v5416
  %v5418 = vand.u32 %v5417, 4294901760
  %5419 = vmatpush1.msra.mxu0 %v5418
  %5420 = vmatprep.subr.mxu0 0.0
  %v5421 = vand.u32 %v1022, 4294901760
  %v5422 = vsub.f32 %v1022, %v5421
  %v5423 = vand.u32 %v5422, 4294901760
  %5424 = vmatpush1.msra.mxu0 %v5423
  %5425 = vmatprep.subr.mxu0 0.0
  %v5426 = vand.u32 %v1021, 4294901760
  %v5427 = vsub.f32 %v1021, %v5426
  %v5428 = vand.u32 %v5427, 4294901760
  %5429 = vmatpush1.msra.mxu0 %v5428
  %5430 = vmatprep.subr.mxu0 0.0
  %v5431 = vand.u32 %v1020, 4294901760
  %v5432 = vsub.f32 %v1020, %v5431
  %v5433 = vand.u32 %v5432, 4294901760
  %5434 = vmatpush1.msra.mxu0 %v5433
  %5435 = vmatprep.subr.mxu0 0.0
  %v5436 = vand.u32 %v1019, 4294901760
  %v5437 = vsub.f32 %v1019, %v5436
  %v5438 = vand.u32 %v5437, 4294901760
  %5439 = vmatpush1.msra.mxu0 %v5438
  %5440 = vmatprep.subr.mxu0 0.0
  %5441 = vmatpush2.msra.mxu0 0.0
  %5442 = vmatprep.subr.mxu0 0.0
  %5443 = vmatpush2.msra.mxu0 0.0
  %5444 = vmatprep.subr.mxu0 0.0
  %5445 = vmatpush2.msra.mxu0 0.0
  %5446 = vmatprep.subr.mxu0 0.0
  %5447 = vmatpush2.msra.mxu0 0.0
  %5448 = vmatprep.subr.mxu0 0.0
  %5449 = vmatpush2.msra.mxu0 0.0
  %5450 = vmatprep.subr.mxu0 0.0
  %5451 = vmatpush2.msra.mxu0 0.0
  %5452 = vmatprep.subr.mxu0 0.0
  %5453 = vmatpush2.msra.mxu0 0.0
  %5454 = vmatprep.subr.mxu0 0.0
  %5455 = vmatpush2.msra.mxu0 0.0
  %5456 = vmatprep.subr.mxu0 0.0
  %5457 = vmatpush2.msra.mxu0 0.0
  %5458 = vmatprep.subr.mxu0 0.0
  %5459 = vmatpush2.msra.mxu0 0.0
  %5460 = vmatprep.subr.mxu0 0.0
  %5461 = vmatpush2.msra.mxu0 0.0
  %5462 = vmatprep.subr.mxu0 0.0
  %5463 = vmatpush2.msra.mxu0 0.0
  %5464 = vmatprep.subr.mxu0 0.0
  %5465 = vmatpush2.msra.mxu0 0.0
  %5466 = vmatprep.subr.mxu0 0.0
  %5467 = vmatpush2.msra.mxu0 0.0
  %5468 = vmatprep.subr.mxu0 0.0
  %5469 = vmatpush2.msra.mxu0 0.0
  %5470 = vmatprep.subr.mxu0 0.0
  %5471 = vmatpush2.msra.mxu0 0.0
  %5472 = vmatprep.mubr.f32.mxu0 0.0
  %v5473 = vand.u32 %v4922, 4294901760
  %5474 = vmatmul.mubr.f32.gmra.mxu0 %v5473
  %v5475 = vpop.f32.mrf.mxu0
  %v5476 = vadd.f32 %v5357, %v5475
  %v5477 = vpop.f32.mrf.mxu0
  %5478 = vdwg.mxu0
  %5479 = vmatprep.subr.mxu0 0.0
  %v5480 = vand.u32 %v1034, 4294901760
  %5481 = vmatpush1.msra.mxu0 %v5480
  %5482 = vmatprep.subr.mxu0 0.0
  %v5483 = vand.u32 %v1033, 4294901760
  %5484 = vmatpush1.msra.mxu0 %v5483
  %5485 = vmatprep.subr.mxu0 0.0
  %v5486 = vand.u32 %v1032, 4294901760
  %5487 = vmatpush1.msra.mxu0 %v5486
  %5488 = vmatprep.subr.mxu0 0.0
  %v5489 = vand.u32 %v1031, 4294901760
  %5490 = vmatpush1.msra.mxu0 %v5489
  %5491 = vmatprep.subr.mxu0 0.0
  %v5492 = vand.u32 %v1030, 4294901760
  %5493 = vmatpush1.msra.mxu0 %v5492
  %5494 = vmatprep.subr.mxu0 0.0
  %v5495 = vand.u32 %v1029, 4294901760
  %5496 = vmatpush1.msra.mxu0 %v5495
  %5497 = vmatprep.subr.mxu0 0.0
  %v5498 = vand.u32 %v1028, 4294901760
  %5499 = vmatpush1.msra.mxu0 %v5498
  %5500 = vmatprep.subr.mxu0 0.0
  %v5501 = vand.u32 %v1027, 4294901760
  %5502 = vmatpush1.msra.mxu0 %v5501
  %5503 = vmatprep.subr.mxu0 0.0
  %v5504 = vand.u32 %v1026, 4294901760
  %5505 = vmatpush1.msra.mxu0 %v5504
  %5506 = vmatprep.subr.mxu0 0.0
  %v5507 = vand.u32 %v1025, 4294901760
  %5508 = vmatpush1.msra.mxu0 %v5507
  %5509 = vmatprep.subr.mxu0 0.0
  %v5510 = vand.u32 %v1024, 4294901760
  %5511 = vmatpush1.msra.mxu0 %v5510
  %5512 = vmatprep.subr.mxu0 0.0
  %v5513 = vand.u32 %v1023, 4294901760
  %5514 = vmatpush1.msra.mxu0 %v5513
  %5515 = vmatprep.subr.mxu0 0.0
  %v5516 = vand.u32 %v1022, 4294901760
  %5517 = vmatpush1.msra.mxu0 %v5516
  %5518 = vmatprep.subr.mxu0 0.0
  %v5519 = vand.u32 %v1021, 4294901760
  %5520 = vmatpush1.msra.mxu0 %v5519
  %5521 = vmatprep.subr.mxu0 0.0
  %v5522 = vand.u32 %v1020, 4294901760
  %5523 = vmatpush1.msra.mxu0 %v5522
  %5524 = vmatprep.subr.mxu0 0.0
  %v5525 = vand.u32 %v1019, 4294901760
  %5526 = vmatpush1.msra.mxu0 %v5525
  %5527 = vmatprep.subr.mxu0 0.0
  %5528 = vmatpush2.msra.mxu0 0.0
  %5529 = vmatprep.subr.mxu0 0.0
  %5530 = vmatpush2.msra.mxu0 0.0
  %5531 = vmatprep.subr.mxu0 0.0
  %5532 = vmatpush2.msra.mxu0 0.0
  %5533 = vmatprep.subr.mxu0 0.0
  %5534 = vmatpush2.msra.mxu0 0.0
  %5535 = vmatprep.subr.mxu0 0.0
  %5536 = vmatpush2.msra.mxu0 0.0
  %5537 = vmatprep.subr.mxu0 0.0
  %5538 = vmatpush2.msra.mxu0 0.0
  %5539 = vmatprep.subr.mxu0 0.0
  %5540 = vmatpush2.msra.mxu0 0.0
  %5541 = vmatprep.subr.mxu0 0.0
  %5542 = vmatpush2.msra.mxu0 0.0
  %5543 = vmatprep.subr.mxu0 0.0
  %5544 = vmatpush2.msra.mxu0 0.0
  %5545 = vmatprep.subr.mxu0 0.0
  %5546 = vmatpush2.msra.mxu0 0.0
  %5547 = vmatprep.subr.mxu0 0.0
  %5548 = vmatpush2.msra.mxu0 0.0
  %5549 = vmatprep.subr.mxu0 0.0
  %5550 = vmatpush2.msra.mxu0 0.0
  %5551 = vmatprep.subr.mxu0 0.0
  %5552 = vmatpush2.msra.mxu0 0.0
  %5553 = vmatprep.subr.mxu0 0.0
  %5554 = vmatpush2.msra.mxu0 0.0
  %5555 = vmatprep.subr.mxu0 0.0
  %5556 = vmatpush2.msra.mxu0 0.0
  %5557 = vmatprep.subr.mxu0 0.0
  %5558 = vmatpush2.msra.mxu0 0.0
  %5559 = vmatprep.mubr.f32.mxu0 0.0
  %v5560 = vand.u32 %v4922, 4294901760
  %5561 = vmatmul.mubr.f32.gmra.mxu0 %v5560
  %v5562 = vpop.f32.mrf.mxu0
  %v5563 = vadd.f32 %v5476, %v5562
  %v5564 = vpop.f32.mrf.mxu0
  %5565 = vdwg.mxu0
  %v5566 = vadd.f32 %v4924, %v5563
  %v5567 = vtanh.pop %v5566
  %5568 = vst [vmem:[%s4923] sm:$0xff] %v5567
  %5569 = vst [vmem:[#allocation2] sm:$0xff] %v5567
  %v5570 = vld [vmem:[#allocation2] sm:$0xff]
  %s5571 = scalar_lea.vmem [#allocation3], 56
  %v5572 = vld [vmem:[%s5571] sm:$0xff]
  %5573 = vmatprep.subr.mxu0 0.0
  %v5574 = vand.u32 %v1034, 4294901760
  %5575 = vmatpush1.msra.mxu0 %v5574
  %5576 = vmatprep.subr.mxu0 0.0
  %v5577 = vand.u32 %v1033, 4294901760
  %5578 = vmatpush1.msra.mxu0 %v5577
  %5579 = vmatprep.subr.mxu0 0.0
  %v5580 = vand.u32 %v1032, 4294901760
  %5581 = vmatpush1.msra.mxu0 %v5580
  %5582 = vmatprep.subr.mxu0 0.0
  %v5583 = vand.u32 %v1031, 4294901760
  %5584 = vmatpush1.msra.mxu0 %v5583
  %5585 = vmatprep.subr.mxu0 0.0
  %v5586 = vand.u32 %v1030, 4294901760
  %5587 = vmatpush1.msra.mxu0 %v5586
  %5588 = vmatprep.subr.mxu0 0.0
  %v5589 = vand.u32 %v1029, 4294901760
  %5590 = vmatpush1.msra.mxu0 %v5589
  %5591 = vmatprep.subr.mxu0 0.0
  %v5592 = vand.u32 %v1028, 4294901760
  %5593 = vmatpush1.msra.mxu0 %v5592
  %5594 = vmatprep.subr.mxu0 0.0
  %v5595 = vand.u32 %v1027, 4294901760
  %5596 = vmatpush1.msra.mxu0 %v5595
  %5597 = vmatprep.subr.mxu0 0.0
  %v5598 = vand.u32 %v1026, 4294901760
  %5599 = vmatpush1.msra.mxu0 %v5598
  %5600 = vmatprep.subr.mxu0 0.0
  %v5601 = vand.u32 %v1025, 4294901760
  %5602 = vmatpush1.msra.mxu0 %v5601
  %5603 = vmatprep.subr.mxu0 0.0
  %v5604 = vand.u32 %v1024, 4294901760
  %5605 = vmatpush1.msra.mxu0 %v5604
  %5606 = vmatprep.subr.mxu0 0.0
  %v5607 = vand.u32 %v1023, 4294901760
  %5608 = vmatpush1.msra.mxu0 %v5607
  %5609 = vmatprep.subr.mxu0 0.0
  %v5610 = vand.u32 %v1022, 4294901760
  %5611 = vmatpush1.msra.mxu0 %v5610
  %5612 = vmatprep.subr.mxu0 0.0
  %v5613 = vand.u32 %v1021, 4294901760
  %5614 = vmatpush1.msra.mxu0 %v5613
  %5615 = vmatprep.subr.mxu0 0.0
  %v5616 = vand.u32 %v1020, 4294901760
  %5617 = vmatpush1.msra.mxu0 %v5616
  %5618 = vmatprep.subr.mxu0 0.0
  %v5619 = vand.u32 %v1019, 4294901760
  %5620 = vmatpush1.msra.mxu0 %v5619
  %5621 = vmatprep.subr.mxu0 0.0
  %5622 = vmatpush2.msra.mxu0 0.0
  %5623 = vmatprep.subr.mxu0 0.0
  %5624 = vmatpush2.msra.mxu0 0.0
  %5625 = vmatprep.subr.mxu0 0.0
  %5626 = vmatpush2.msra.mxu0 0.0
  %5627 = vmatprep.subr.mxu0 0.0
  %5628 = vmatpush2.msra.mxu0 0.0
  %5629 = vmatprep.subr.mxu0 0.0
  %5630 = vmatpush2.msra.mxu0 0.0
  %5631 = vmatprep.subr.mxu0 0.0
  %5632 = vmatpush2.msra.mxu0 0.0
  %5633 = vmatprep.subr.mxu0 0.0
  %5634 = vmatpush2.msra.mxu0 0.0
  %5635 = vmatprep.subr.mxu0 0.0
  %5636 = vmatpush2.msra.mxu0 0.0
  %5637 = vmatprep.subr.mxu0 0.0
  %5638 = vmatpush2.msra.mxu0 0.0
  %5639 = vmatprep.subr.mxu0 0.0
  %5640 = vmatpush2.msra.mxu0 0.0
  %5641 = vmatprep.subr.mxu0 0.0
  %5642 = vmatpush2.msra.mxu0 0.0
  %5643 = vmatprep.subr.mxu0 0.0
  %5644 = vmatpush2.msra.mxu0 0.0
  %5645 = vmatprep.subr.mxu0 0.0
  %5646 = vmatpush2.msra.mxu0 0.0
  %5647 = vmatprep.subr.mxu0 0.0
  %5648 = vmatpush2.msra.mxu0 0.0
  %5649 = vmatprep.subr.mxu0 0.0
  %5650 = vmatpush2.msra.mxu0 0.0
  %5651 = vmatprep.subr.mxu0 0.0
  %5652 = vmatpush2.msra.mxu0 0.0
  %5653 = vmatprep.mubr.f32.mxu0 0.0
  %v5654 = vand.u32 %v5570, 4294901760
  %v5655 = vsub.f32 %v5570, %v5654
  %v5656 = vand.u32 %v5655, 4294901760
  %v5657 = vsub.f32 %v5655, %v5656
  %v5658 = vand.u32 %v5657, 4294901760
  %5659 = vmatmul.mubr.f32.gmra.mxu0 %v5658
  %v5660 = vpop.f32.mrf.mxu0
  %v5661 = vadd.f32 0.0, %v5660
  %v5662 = vpop.f32.mrf.mxu0
  %5663 = vdwg.mxu0
  %5664 = vmatprep.subr.mxu0 0.0
  %v5665 = vand.u32 %v1034, 4294901760
  %v5666 = vsub.f32 %v1034, %v5665
  %v5667 = vand.u32 %v5666, 4294901760
  %v5668 = vsub.f32 %v5666, %v5667
  %v5669 = vand.u32 %v5668, 4294901760
  %5670 = vmatpush1.msra.mxu0 %v5669
  %5671 = vmatprep.subr.mxu0 0.0
  %v5672 = vand.u32 %v1033, 4294901760
  %v5673 = vsub.f32 %v1033, %v5672
  %v5674 = vand.u32 %v5673, 4294901760
  %v5675 = vsub.f32 %v5673, %v5674
  %v5676 = vand.u32 %v5675, 4294901760
  %5677 = vmatpush1.msra.mxu0 %v5676
  %5678 = vmatprep.subr.mxu0 0.0
  %v5679 = vand.u32 %v1032, 4294901760
  %v5680 = vsub.f32 %v1032, %v5679
  %v5681 = vand.u32 %v5680, 4294901760
  %v5682 = vsub.f32 %v5680, %v5681
  %v5683 = vand.u32 %v5682, 4294901760
  %5684 = vmatpush1.msra.mxu0 %v5683
  %5685 = vmatprep.subr.mxu0 0.0
  %v5686 = vand.u32 %v1031, 4294901760
  %v5687 = vsub.f32 %v1031, %v5686
  %v5688 = vand.u32 %v5687, 4294901760
  %v5689 = vsub.f32 %v5687, %v5688
  %v5690 = vand.u32 %v5689, 4294901760
  %5691 = vmatpush1.msra.mxu0 %v5690
  %5692 = vmatprep.subr.mxu0 0.0
  %v5693 = vand.u32 %v1030, 4294901760
  %v5694 = vsub.f32 %v1030, %v5693
  %v5695 = vand.u32 %v5694, 4294901760
  %v5696 = vsub.f32 %v5694, %v5695
  %v5697 = vand.u32 %v5696, 4294901760
  %5698 = vmatpush1.msra.mxu0 %v5697
  %5699 = vmatprep.subr.mxu0 0.0
  %v5700 = vand.u32 %v1029, 4294901760
  %v5701 = vsub.f32 %v1029, %v5700
  %v5702 = vand.u32 %v5701, 4294901760
  %v5703 = vsub.f32 %v5701, %v5702
  %v5704 = vand.u32 %v5703, 4294901760
  %5705 = vmatpush1.msra.mxu0 %v5704
  %5706 = vmatprep.subr.mxu0 0.0
  %v5707 = vand.u32 %v1028, 4294901760
  %v5708 = vsub.f32 %v1028, %v5707
  %v5709 = vand.u32 %v5708, 4294901760
  %v5710 = vsub.f32 %v5708, %v5709
  %v5711 = vand.u32 %v5710, 4294901760
  %5712 = vmatpush1.msra.mxu0 %v5711
  %5713 = vmatprep.subr.mxu0 0.0
  %v5714 = vand.u32 %v1027, 4294901760
  %v5715 = vsub.f32 %v1027, %v5714
  %v5716 = vand.u32 %v5715, 4294901760
  %v5717 = vsub.f32 %v5715, %v5716
  %v5718 = vand.u32 %v5717, 4294901760
  %5719 = vmatpush1.msra.mxu0 %v5718
  %5720 = vmatprep.subr.mxu0 0.0
  %v5721 = vand.u32 %v1026, 4294901760
  %v5722 = vsub.f32 %v1026, %v5721
  %v5723 = vand.u32 %v5722, 4294901760
  %v5724 = vsub.f32 %v5722, %v5723
  %v5725 = vand.u32 %v5724, 4294901760
  %5726 = vmatpush1.msra.mxu0 %v5725
  %5727 = vmatprep.subr.mxu0 0.0
  %v5728 = vand.u32 %v1025, 4294901760
  %v5729 = vsub.f32 %v1025, %v5728
  %v5730 = vand.u32 %v5729, 4294901760
  %v5731 = vsub.f32 %v5729, %v5730
  %v5732 = vand.u32 %v5731, 4294901760
  %5733 = vmatpush1.msra.mxu0 %v5732
  %5734 = vmatprep.subr.mxu0 0.0
  %v5735 = vand.u32 %v1024, 4294901760
  %v5736 = vsub.f32 %v1024, %v5735
  %v5737 = vand.u32 %v5736, 4294901760
  %v5738 = vsub.f32 %v5736, %v5737
  %v5739 = vand.u32 %v5738, 4294901760
  %5740 = vmatpush1.msra.mxu0 %v5739
  %5741 = vmatprep.subr.mxu0 0.0
  %v5742 = vand.u32 %v1023, 4294901760
  %v5743 = vsub.f32 %v1023, %v5742
  %v5744 = vand.u32 %v5743, 4294901760
  %v5745 = vsub.f32 %v5743, %v5744
  %v5746 = vand.u32 %v5745, 4294901760
  %5747 = vmatpush1.msra.mxu0 %v5746
  %5748 = vmatprep.subr.mxu0 0.0
  %v5749 = vand.u32 %v1022, 4294901760
  %v5750 = vsub.f32 %v1022, %v5749
  %v5751 = vand.u32 %v5750, 4294901760
  %v5752 = vsub.f32 %v5750, %v5751
  %v5753 = vand.u32 %v5752, 4294901760
  %5754 = vmatpush1.msra.mxu0 %v5753
  %5755 = vmatprep.subr.mxu0 0.0
  %v5756 = vand.u32 %v1021, 4294901760
  %v5757 = vsub.f32 %v1021, %v5756
  %v5758 = vand.u32 %v5757, 4294901760
  %v5759 = vsub.f32 %v5757, %v5758
  %v5760 = vand.u32 %v5759, 4294901760
  %5761 = vmatpush1.msra.mxu0 %v5760
  %5762 = vmatprep.subr.mxu0 0.0
  %v5763 = vand.u32 %v1020, 4294901760
  %v5764 = vsub.f32 %v1020, %v5763
  %v5765 = vand.u32 %v5764, 4294901760
  %v5766 = vsub.f32 %v5764, %v5765
  %v5767 = vand.u32 %v5766, 4294901760
  %5768 = vmatpush1.msra.mxu0 %v5767
  %5769 = vmatprep.subr.mxu0 0.0
  %v5770 = vand.u32 %v1019, 4294901760
  %v5771 = vsub.f32 %v1019, %v5770
  %v5772 = vand.u32 %v5771, 4294901760
  %v5773 = vsub.f32 %v5771, %v5772
  %v5774 = vand.u32 %v5773, 4294901760
  %5775 = vmatpush1.msra.mxu0 %v5774
  %5776 = vmatprep.subr.mxu0 0.0
  %5777 = vmatpush2.msra.mxu0 0.0
  %5778 = vmatprep.subr.mxu0 0.0
  %5779 = vmatpush2.msra.mxu0 0.0
  %5780 = vmatprep.subr.mxu0 0.0
  %5781 = vmatpush2.msra.mxu0 0.0
  %5782 = vmatprep.subr.mxu0 0.0
  %5783 = vmatpush2.msra.mxu0 0.0
  %5784 = vmatprep.subr.mxu0 0.0
  %5785 = vmatpush2.msra.mxu0 0.0
  %5786 = vmatprep.subr.mxu0 0.0
  %5787 = vmatpush2.msra.mxu0 0.0
  %5788 = vmatprep.subr.mxu0 0.0
  %5789 = vmatpush2.msra.mxu0 0.0
  %5790 = vmatprep.subr.mxu0 0.0
  %5791 = vmatpush2.msra.mxu0 0.0
  %5792 = vmatprep.subr.mxu0 0.0
  %5793 = vmatpush2.msra.mxu0 0.0
  %5794 = vmatprep.subr.mxu0 0.0
  %5795 = vmatpush2.msra.mxu0 0.0
  %5796 = vmatprep.subr.mxu0 0.0
  %5797 = vmatpush2.msra.mxu0 0.0
  %5798 = vmatprep.subr.mxu0 0.0
  %5799 = vmatpush2.msra.mxu0 0.0
  %5800 = vmatprep.subr.mxu0 0.0
  %5801 = vmatpush2.msra.mxu0 0.0
  %5802 = vmatprep.subr.mxu0 0.0
  %5803 = vmatpush2.msra.mxu0 0.0
  %5804 = vmatprep.subr.mxu0 0.0
  %5805 = vmatpush2.msra.mxu0 0.0
  %5806 = vmatprep.subr.mxu0 0.0
  %5807 = vmatpush2.msra.mxu0 0.0
  %5808 = vmatprep.mubr.f32.mxu0 0.0
  %v5809 = vand.u32 %v5570, 4294901760
  %5810 = vmatmul.mubr.f32.gmra.mxu0 %v5809
  %v5811 = vpop.f32.mrf.mxu0
  %v5812 = vadd.f32 %v5661, %v5811
  %v5813 = vpop.f32.mrf.mxu0
  %5814 = vdwg.mxu0
  %5815 = vmatprep.subr.mxu0 0.0
  %v5816 = vand.u32 %v1034, 4294901760
  %v5817 = vsub.f32 %v1034, %v5816
  %5818 = vmatpush1.msra.mxu0 %v5817
  %5819 = vmatprep.subr.mxu0 0.0
  %v5820 = vand.u32 %v1033, 4294901760
  %v5821 = vsub.f32 %v1033, %v5820
  %5822 = vmatpush1.msra.mxu0 %v5821
  %5823 = vmatprep.subr.mxu0 0.0
  %v5824 = vand.u32 %v1032, 4294901760
  %v5825 = vsub.f32 %v1032, %v5824
  %5826 = vmatpush1.msra.mxu0 %v5825
  %5827 = vmatprep.subr.mxu0 0.0
  %v5828 = vand.u32 %v1031, 4294901760
  %v5829 = vsub.f32 %v1031, %v5828
  %5830 = vmatpush1.msra.mxu0 %v5829
  %5831 = vmatprep.subr.mxu0 0.0
  %v5832 = vand.u32 %v1030, 4294901760
  %v5833 = vsub.f32 %v1030, %v5832
  %5834 = vmatpush1.msra.mxu0 %v5833
  %5835 = vmatprep.subr.mxu0 0.0
  %v5836 = vand.u32 %v1029, 4294901760
  %v5837 = vsub.f32 %v1029, %v5836
  %5838 = vmatpush1.msra.mxu0 %v5837
  %5839 = vmatprep.subr.mxu0 0.0
  %v5840 = vand.u32 %v1028, 4294901760
  %v5841 = vsub.f32 %v1028, %v5840
  %5842 = vmatpush1.msra.mxu0 %v5841
  %5843 = vmatprep.subr.mxu0 0.0
  %v5844 = vand.u32 %v1027, 4294901760
  %v5845 = vsub.f32 %v1027, %v5844
  %5846 = vmatpush1.msra.mxu0 %v5845
  %5847 = vmatprep.subr.mxu0 0.0
  %v5848 = vand.u32 %v1026, 4294901760
  %v5849 = vsub.f32 %v1026, %v5848
  %5850 = vmatpush1.msra.mxu0 %v5849
  %5851 = vmatprep.subr.mxu0 0.0
  %v5852 = vand.u32 %v1025, 4294901760
  %v5853 = vsub.f32 %v1025, %v5852
  %5854 = vmatpush1.msra.mxu0 %v5853
  %5855 = vmatprep.subr.mxu0 0.0
  %v5856 = vand.u32 %v1024, 4294901760
  %v5857 = vsub.f32 %v1024, %v5856
  %5858 = vmatpush1.msra.mxu0 %v5857
  %5859 = vmatprep.subr.mxu0 0.0
  %v5860 = vand.u32 %v1023, 4294901760
  %v5861 = vsub.f32 %v1023, %v5860
  %5862 = vmatpush1.msra.mxu0 %v5861
  %5863 = vmatprep.subr.mxu0 0.0
  %v5864 = vand.u32 %v1022, 4294901760
  %v5865 = vsub.f32 %v1022, %v5864
  %5866 = vmatpush1.msra.mxu0 %v5865
  %5867 = vmatprep.subr.mxu0 0.0
  %v5868 = vand.u32 %v1021, 4294901760
  %v5869 = vsub.f32 %v1021, %v5868
  %5870 = vmatpush1.msra.mxu0 %v5869
  %5871 = vmatprep.subr.mxu0 0.0
  %v5872 = vand.u32 %v1020, 4294901760
  %v5873 = vsub.f32 %v1020, %v5872
  %5874 = vmatpush1.msra.mxu0 %v5873
  %5875 = vmatprep.subr.mxu0 0.0
  %v5876 = vand.u32 %v1019, 4294901760
  %v5877 = vsub.f32 %v1019, %v5876
  %5878 = vmatpush1.msra.mxu0 %v5877
  %5879 = vmatprep.subr.mxu0 0.0
  %5880 = vmatpush2.msra.mxu0 0.0
  %5881 = vmatprep.subr.mxu0 0.0
  %5882 = vmatpush2.msra.mxu0 0.0
  %5883 = vmatprep.subr.mxu0 0.0
  %5884 = vmatpush2.msra.mxu0 0.0
  %5885 = vmatprep.subr.mxu0 0.0
  %5886 = vmatpush2.msra.mxu0 0.0
  %5887 = vmatprep.subr.mxu0 0.0
  %5888 = vmatpush2.msra.mxu0 0.0
  %5889 = vmatprep.subr.mxu0 0.0
  %5890 = vmatpush2.msra.mxu0 0.0
  %5891 = vmatprep.subr.mxu0 0.0
  %5892 = vmatpush2.msra.mxu0 0.0
  %5893 = vmatprep.subr.mxu0 0.0
  %5894 = vmatpush2.msra.mxu0 0.0
  %5895 = vmatprep.subr.mxu0 0.0
  %5896 = vmatpush2.msra.mxu0 0.0
  %5897 = vmatprep.subr.mxu0 0.0
  %5898 = vmatpush2.msra.mxu0 0.0
  %5899 = vmatprep.subr.mxu0 0.0
  %5900 = vmatpush2.msra.mxu0 0.0
  %5901 = vmatprep.subr.mxu0 0.0
  %5902 = vmatpush2.msra.mxu0 0.0
  %5903 = vmatprep.subr.mxu0 0.0
  %5904 = vmatpush2.msra.mxu0 0.0
  %5905 = vmatprep.subr.mxu0 0.0
  %5906 = vmatpush2.msra.mxu0 0.0
  %5907 = vmatprep.subr.mxu0 0.0
  %5908 = vmatpush2.msra.mxu0 0.0
  %5909 = vmatprep.subr.mxu0 0.0
  %5910 = vmatpush2.msra.mxu0 0.0
  %5911 = vmatprep.mubr.f32.mxu0 0.0
  %v5912 = vand.u32 %v5570, 4294901760
  %v5913 = vsub.f32 %v5570, %v5912
  %5914 = vmatmul.mubr.f32.gmra.mxu0 %v5913
  %v5915 = vpop.f32.mrf.mxu0
  %v5916 = vadd.f32 %v5812, %v5915
  %v5917 = vpop.f32.mrf.mxu0
  %5918 = vdwg.mxu0
  %5919 = vmatprep.subr.mxu0 0.0
  %v5920 = vand.u32 %v1034, 4294901760
  %5921 = vmatpush1.msra.mxu0 %v5920
  %5922 = vmatprep.subr.mxu0 0.0
  %v5923 = vand.u32 %v1033, 4294901760
  %5924 = vmatpush1.msra.mxu0 %v5923
  %5925 = vmatprep.subr.mxu0 0.0
  %v5926 = vand.u32 %v1032, 4294901760
  %5927 = vmatpush1.msra.mxu0 %v5926
  %5928 = vmatprep.subr.mxu0 0.0
  %v5929 = vand.u32 %v1031, 4294901760
  %5930 = vmatpush1.msra.mxu0 %v5929
  %5931 = vmatprep.subr.mxu0 0.0
  %v5932 = vand.u32 %v1030, 4294901760
  %5933 = vmatpush1.msra.mxu0 %v5932
  %5934 = vmatprep.subr.mxu0 0.0
  %v5935 = vand.u32 %v1029, 4294901760
  %5936 = vmatpush1.msra.mxu0 %v5935
  %5937 = vmatprep.subr.mxu0 0.0
  %v5938 = vand.u32 %v1028, 4294901760
  %5939 = vmatpush1.msra.mxu0 %v5938
  %5940 = vmatprep.subr.mxu0 0.0
  %v5941 = vand.u32 %v1027, 4294901760
  %5942 = vmatpush1.msra.mxu0 %v5941
  %5943 = vmatprep.subr.mxu0 0.0
  %v5944 = vand.u32 %v1026, 4294901760
  %5945 = vmatpush1.msra.mxu0 %v5944
  %5946 = vmatprep.subr.mxu0 0.0
  %v5947 = vand.u32 %v1025, 4294901760
  %5948 = vmatpush1.msra.mxu0 %v5947
  %5949 = vmatprep.subr.mxu0 0.0
  %v5950 = vand.u32 %v1024, 4294901760
  %5951 = vmatpush1.msra.mxu0 %v5950
  %5952 = vmatprep.subr.mxu0 0.0
  %v5953 = vand.u32 %v1023, 4294901760
  %5954 = vmatpush1.msra.mxu0 %v5953
  %5955 = vmatprep.subr.mxu0 0.0
  %v5956 = vand.u32 %v1022, 4294901760
  %5957 = vmatpush1.msra.mxu0 %v5956
  %5958 = vmatprep.subr.mxu0 0.0
  %v5959 = vand.u32 %v1021, 4294901760
  %5960 = vmatpush1.msra.mxu0 %v5959
  %5961 = vmatprep.subr.mxu0 0.0
  %v5962 = vand.u32 %v1020, 4294901760
  %5963 = vmatpush1.msra.mxu0 %v5962
  %5964 = vmatprep.subr.mxu0 0.0
  %v5965 = vand.u32 %v1019, 4294901760
  %5966 = vmatpush1.msra.mxu0 %v5965
  %5967 = vmatprep.subr.mxu0 0.0
  %5968 = vmatpush2.msra.mxu0 0.0
  %5969 = vmatprep.subr.mxu0 0.0
  %5970 = vmatpush2.msra.mxu0 0.0
  %5971 = vmatprep.subr.mxu0 0.0
  %5972 = vmatpush2.msra.mxu0 0.0
  %5973 = vmatprep.subr.mxu0 0.0
  %5974 = vmatpush2.msra.mxu0 0.0
  %5975 = vmatprep.subr.mxu0 0.0
  %5976 = vmatpush2.msra.mxu0 0.0
  %5977 = vmatprep.subr.mxu0 0.0
  %5978 = vmatpush2.msra.mxu0 0.0
  %5979 = vmatprep.subr.mxu0 0.0
  %5980 = vmatpush2.msra.mxu0 0.0
  %5981 = vmatprep.subr.mxu0 0.0
  %5982 = vmatpush2.msra.mxu0 0.0
  %5983 = vmatprep.subr.mxu0 0.0
  %5984 = vmatpush2.msra.mxu0 0.0
  %5985 = vmatprep.subr.mxu0 0.0
  %5986 = vmatpush2.msra.mxu0 0.0
  %5987 = vmatprep.subr.mxu0 0.0
  %5988 = vmatpush2.msra.mxu0 0.0
  %5989 = vmatprep.subr.mxu0 0.0
  %5990 = vmatpush2.msra.mxu0 0.0
  %5991 = vmatprep.subr.mxu0 0.0
  %5992 = vmatpush2.msra.mxu0 0.0
  %5993 = vmatprep.subr.mxu0 0.0
  %5994 = vmatpush2.msra.mxu0 0.0
  %5995 = vmatprep.subr.mxu0 0.0
  %5996 = vmatpush2.msra.mxu0 0.0
  %5997 = vmatprep.subr.mxu0 0.0
  %5998 = vmatpush2.msra.mxu0 0.0
  %5999 = vmatprep.mubr.f32.mxu0 0.0
  %v6000 = vand.u32 %v5570, 4294901760
  %v6001 = vsub.f32 %v5570, %v6000
  %v6002 = vand.u32 %v6001, 4294901760
  %6003 = vmatmul.mubr.f32.gmra.mxu0 %v6002
  %v6004 = vpop.f32.mrf.mxu0
  %v6005 = vadd.f32 %v5916, %v6004
  %v6006 = vpop.f32.mrf.mxu0
  %6007 = vdwg.mxu0
  %6008 = vmatprep.subr.mxu0 0.0
  %v6009 = vand.u32 %v1034, 4294901760
  %v6010 = vsub.f32 %v1034, %v6009
  %v6011 = vand.u32 %v6010, 4294901760
  %6012 = vmatpush1.msra.mxu0 %v6011
  %6013 = vmatprep.subr.mxu0 0.0
  %v6014 = vand.u32 %v1033, 4294901760
  %v6015 = vsub.f32 %v1033, %v6014
  %v6016 = vand.u32 %v6015, 4294901760
  %6017 = vmatpush1.msra.mxu0 %v6016
  %6018 = vmatprep.subr.mxu0 0.0
  %v6019 = vand.u32 %v1032, 4294901760
  %v6020 = vsub.f32 %v1032, %v6019
  %v6021 = vand.u32 %v6020, 4294901760
  %6022 = vmatpush1.msra.mxu0 %v6021
  %6023 = vmatprep.subr.mxu0 0.0
  %v6024 = vand.u32 %v1031, 4294901760
  %v6025 = vsub.f32 %v1031, %v6024
  %v6026 = vand.u32 %v6025, 4294901760
  %6027 = vmatpush1.msra.mxu0 %v6026
  %6028 = vmatprep.subr.mxu0 0.0
  %v6029 = vand.u32 %v1030, 4294901760
  %v6030 = vsub.f32 %v1030, %v6029
  %v6031 = vand.u32 %v6030, 4294901760
  %6032 = vmatpush1.msra.mxu0 %v6031
  %6033 = vmatprep.subr.mxu0 0.0
  %v6034 = vand.u32 %v1029, 4294901760
  %v6035 = vsub.f32 %v1029, %v6034
  %v6036 = vand.u32 %v6035, 4294901760
  %6037 = vmatpush1.msra.mxu0 %v6036
  %6038 = vmatprep.subr.mxu0 0.0
  %v6039 = vand.u32 %v1028, 4294901760
  %v6040 = vsub.f32 %v1028, %v6039
  %v6041 = vand.u32 %v6040, 4294901760
  %6042 = vmatpush1.msra.mxu0 %v6041
  %6043 = vmatprep.subr.mxu0 0.0
  %v6044 = vand.u32 %v1027, 4294901760
  %v6045 = vsub.f32 %v1027, %v6044
  %v6046 = vand.u32 %v6045, 4294901760
  %6047 = vmatpush1.msra.mxu0 %v6046
  %6048 = vmatprep.subr.mxu0 0.0
  %v6049 = vand.u32 %v1026, 4294901760
  %v6050 = vsub.f32 %v1026, %v6049
  %v6051 = vand.u32 %v6050, 4294901760
  %6052 = vmatpush1.msra.mxu0 %v6051
  %6053 = vmatprep.subr.mxu0 0.0
  %v6054 = vand.u32 %v1025, 4294901760
  %v6055 = vsub.f32 %v1025, %v6054
  %v6056 = vand.u32 %v6055, 4294901760
  %6057 = vmatpush1.msra.mxu0 %v6056
  %6058 = vmatprep.subr.mxu0 0.0
  %v6059 = vand.u32 %v1024, 4294901760
  %v6060 = vsub.f32 %v1024, %v6059
  %v6061 = vand.u32 %v6060, 4294901760
  %6062 = vmatpush1.msra.mxu0 %v6061
  %6063 = vmatprep.subr.mxu0 0.0
  %v6064 = vand.u32 %v1023, 4294901760
  %v6065 = vsub.f32 %v1023, %v6064
  %v6066 = vand.u32 %v6065, 4294901760
  %6067 = vmatpush1.msra.mxu0 %v6066
  %6068 = vmatprep.subr.mxu0 0.0
  %v6069 = vand.u32 %v1022, 4294901760
  %v6070 = vsub.f32 %v1022, %v6069
  %v6071 = vand.u32 %v6070, 4294901760
  %6072 = vmatpush1.msra.mxu0 %v6071
  %6073 = vmatprep.subr.mxu0 0.0
  %v6074 = vand.u32 %v1021, 4294901760
  %v6075 = vsub.f32 %v1021, %v6074
  %v6076 = vand.u32 %v6075, 4294901760
  %6077 = vmatpush1.msra.mxu0 %v6076
  %6078 = vmatprep.subr.mxu0 0.0
  %v6079 = vand.u32 %v1020, 4294901760
  %v6080 = vsub.f32 %v1020, %v6079
  %v6081 = vand.u32 %v6080, 4294901760
  %6082 = vmatpush1.msra.mxu0 %v6081
  %6083 = vmatprep.subr.mxu0 0.0
  %v6084 = vand.u32 %v1019, 4294901760
  %v6085 = vsub.f32 %v1019, %v6084
  %v6086 = vand.u32 %v6085, 4294901760
  %6087 = vmatpush1.msra.mxu0 %v6086
  %6088 = vmatprep.subr.mxu0 0.0
  %6089 = vmatpush2.msra.mxu0 0.0
  %6090 = vmatprep.subr.mxu0 0.0
  %6091 = vmatpush2.msra.mxu0 0.0
  %6092 = vmatprep.subr.mxu0 0.0
  %6093 = vmatpush2.msra.mxu0 0.0
  %6094 = vmatprep.subr.mxu0 0.0
  %6095 = vmatpush2.msra.mxu0 0.0
  %6096 = vmatprep.subr.mxu0 0.0
  %6097 = vmatpush2.msra.mxu0 0.0
  %6098 = vmatprep.subr.mxu0 0.0
  %6099 = vmatpush2.msra.mxu0 0.0
  %6100 = vmatprep.subr.mxu0 0.0
  %6101 = vmatpush2.msra.mxu0 0.0
  %6102 = vmatprep.subr.mxu0 0.0
  %6103 = vmatpush2.msra.mxu0 0.0
  %6104 = vmatprep.subr.mxu0 0.0
  %6105 = vmatpush2.msra.mxu0 0.0
  %6106 = vmatprep.subr.mxu0 0.0
  %6107 = vmatpush2.msra.mxu0 0.0
  %6108 = vmatprep.subr.mxu0 0.0
  %6109 = vmatpush2.msra.mxu0 0.0
  %6110 = vmatprep.subr.mxu0 0.0
  %6111 = vmatpush2.msra.mxu0 0.0
  %6112 = vmatprep.subr.mxu0 0.0
  %6113 = vmatpush2.msra.mxu0 0.0
  %6114 = vmatprep.subr.mxu0 0.0
  %6115 = vmatpush2.msra.mxu0 0.0
  %6116 = vmatprep.subr.mxu0 0.0
  %6117 = vmatpush2.msra.mxu0 0.0
  %6118 = vmatprep.subr.mxu0 0.0
  %6119 = vmatpush2.msra.mxu0 0.0
  %6120 = vmatprep.mubr.f32.mxu0 0.0
  %v6121 = vand.u32 %v5570, 4294901760
  %6122 = vmatmul.mubr.f32.gmra.mxu0 %v6121
  %v6123 = vpop.f32.mrf.mxu0
  %v6124 = vadd.f32 %v6005, %v6123
  %v6125 = vpop.f32.mrf.mxu0
  %6126 = vdwg.mxu0
  %6127 = vmatprep.subr.mxu0 0.0
  %v6128 = vand.u32 %v1034, 4294901760
  %6129 = vmatpush1.msra.mxu0 %v6128
  %6130 = vmatprep.subr.mxu0 0.0
  %v6131 = vand.u32 %v1033, 4294901760
  %6132 = vmatpush1.msra.mxu0 %v6131
  %6133 = vmatprep.subr.mxu0 0.0
  %v6134 = vand.u32 %v1032, 4294901760
  %6135 = vmatpush1.msra.mxu0 %v6134
  %6136 = vmatprep.subr.mxu0 0.0
  %v6137 = vand.u32 %v1031, 4294901760
  %6138 = vmatpush1.msra.mxu0 %v6137
  %6139 = vmatprep.subr.mxu0 0.0
  %v6140 = vand.u32 %v1030, 4294901760
  %6141 = vmatpush1.msra.mxu0 %v6140
  %6142 = vmatprep.subr.mxu0 0.0
  %v6143 = vand.u32 %v1029, 4294901760
  %6144 = vmatpush1.msra.mxu0 %v6143
  %6145 = vmatprep.subr.mxu0 0.0
  %v6146 = vand.u32 %v1028, 4294901760
  %6147 = vmatpush1.msra.mxu0 %v6146
  %6148 = vmatprep.subr.mxu0 0.0
  %v6149 = vand.u32 %v1027, 4294901760
  %6150 = vmatpush1.msra.mxu0 %v6149
  %6151 = vmatprep.subr.mxu0 0.0
  %v6152 = vand.u32 %v1026, 4294901760
  %6153 = vmatpush1.msra.mxu0 %v6152
  %6154 = vmatprep.subr.mxu0 0.0
  %v6155 = vand.u32 %v1025, 4294901760
  %6156 = vmatpush1.msra.mxu0 %v6155
  %6157 = vmatprep.subr.mxu0 0.0
  %v6158 = vand.u32 %v1024, 4294901760
  %6159 = vmatpush1.msra.mxu0 %v6158
  %6160 = vmatprep.subr.mxu0 0.0
  %v6161 = vand.u32 %v1023, 4294901760
  %6162 = vmatpush1.msra.mxu0 %v6161
  %6163 = vmatprep.subr.mxu0 0.0
  %v6164 = vand.u32 %v1022, 4294901760
  %6165 = vmatpush1.msra.mxu0 %v6164
  %6166 = vmatprep.subr.mxu0 0.0
  %v6167 = vand.u32 %v1021, 4294901760
  %6168 = vmatpush1.msra.mxu0 %v6167
  %6169 = vmatprep.subr.mxu0 0.0
  %v6170 = vand.u32 %v1020, 4294901760
  %6171 = vmatpush1.msra.mxu0 %v6170
  %6172 = vmatprep.subr.mxu0 0.0
  %v6173 = vand.u32 %v1019, 4294901760
  %6174 = vmatpush1.msra.mxu0 %v6173
  %6175 = vmatprep.subr.mxu0 0.0
  %6176 = vmatpush2.msra.mxu0 0.0
  %6177 = vmatprep.subr.mxu0 0.0
  %6178 = vmatpush2.msra.mxu0 0.0
  %6179 = vmatprep.subr.mxu0 0.0
  %6180 = vmatpush2.msra.mxu0 0.0
  %6181 = vmatprep.subr.mxu0 0.0
  %6182 = vmatpush2.msra.mxu0 0.0
  %6183 = vmatprep.subr.mxu0 0.0
  %6184 = vmatpush2.msra.mxu0 0.0
  %6185 = vmatprep.subr.mxu0 0.0
  %6186 = vmatpush2.msra.mxu0 0.0
  %6187 = vmatprep.subr.mxu0 0.0
  %6188 = vmatpush2.msra.mxu0 0.0
  %6189 = vmatprep.subr.mxu0 0.0
  %6190 = vmatpush2.msra.mxu0 0.0
  %6191 = vmatprep.subr.mxu0 0.0
  %6192 = vmatpush2.msra.mxu0 0.0
  %6193 = vmatprep.subr.mxu0 0.0
  %6194 = vmatpush2.msra.mxu0 0.0
  %6195 = vmatprep.subr.mxu0 0.0
  %6196 = vmatpush2.msra.mxu0 0.0
  %6197 = vmatprep.subr.mxu0 0.0
  %6198 = vmatpush2.msra.mxu0 0.0
  %6199 = vmatprep.subr.mxu0 0.0
  %6200 = vmatpush2.msra.mxu0 0.0
  %6201 = vmatprep.subr.mxu0 0.0
  %6202 = vmatpush2.msra.mxu0 0.0
  %6203 = vmatprep.subr.mxu0 0.0
  %6204 = vmatpush2.msra.mxu0 0.0
  %6205 = vmatprep.subr.mxu0 0.0
  %6206 = vmatpush2.msra.mxu0 0.0
  %6207 = vmatprep.mubr.f32.mxu0 0.0
  %v6208 = vand.u32 %v5570, 4294901760
  %6209 = vmatmul.mubr.f32.gmra.mxu0 %v6208
  %v6210 = vpop.f32.mrf.mxu0
  %v6211 = vadd.f32 %v6124, %v6210
  %v6212 = vpop.f32.mrf.mxu0
  %6213 = vdwg.mxu0
  %v6214 = vadd.f32 %v5572, %v6211
  %v6215 = vtanh.pop %v6214
  %6216 = vst [vmem:[%s5571] sm:$0xff] %v6215
  %6217 = vst [vmem:[#allocation2] sm:$0xff] %v6215
  %v6218 = vld [vmem:[#allocation3] sm:$0xff]
  %v6219 = vld [vmem:[#allocation3 + $0x8] sm:$0xff]
  %v6220 = vld [vmem:[#allocation3 + $0x10] sm:$0xff]
  %v6221 = vld [vmem:[#allocation3 + $0x18] sm:$0xff]
  %v6222 = vld [vmem:[#allocation3 + $0x20] sm:$0xff]
  %v6223 = vld [vmem:[#allocation3 + $0x28] sm:$0xff]
  %v6224 = vld [vmem:[#allocation3 + $0x30] sm:$0xff]
  %v6225 = vld [vmem:[#allocation3 + $0x38] sm:$0xff]
  %v6226 = vld [vmem:[%s4] sm:$0xff]
  %v6227 = vld [vmem:[%s4 + $0x8] sm:$0xff]
  %v6228 = vld [vmem:[%s4 + $0x10] sm:$0xff]
  %v6229 = vld [vmem:[%s4 + $0x18] sm:$0xff]
  %v6230 = vld [vmem:[%s4 + $0x20] sm:$0xff]
  %v6231 = vld [vmem:[%s4 + $0x28] sm:$0xff]
  %v6232 = vld [vmem:[%s4 + $0x30] sm:$0xff]
  %v6233 = vld [vmem:[%s4 + $0x38] sm:$0xff]
  %v6234 = vld [vmem:[%s4 + $0x40] sm:$0xff]
  %v6235 = vld [vmem:[%s4 + $0x48] sm:$0xff]
  %v6236 = vld [vmem:[%s4 + $0x50] sm:$0xff]
  %v6237 = vld [vmem:[%s4 + $0x58] sm:$0xff]
  %v6238 = vld [vmem:[%s4 + $0x60] sm:$0xff]
  %v6239 = vld [vmem:[%s4 + $0x68] sm:$0xff]
  %v6240 = vld [vmem:[%s4 + $0x70] sm:$0xff]
  %v6241 = vld [vmem:[%s4 + $0x78] sm:$0xff]
  %6242 = vmatprep.subr.mxu0 0.0
  %v6243 = vand.u32 %v6241, 4294901760
  %6244 = vmatpush1.msra.mxu0 %v6243
  %6245 = vmatprep.subr.mxu0 0.0
  %v6246 = vand.u32 %v6240, 4294901760
  %6247 = vmatpush1.msra.mxu0 %v6246
  %6248 = vmatprep.subr.mxu0 0.0
  %v6249 = vand.u32 %v6239, 4294901760
  %6250 = vmatpush1.msra.mxu0 %v6249
  %6251 = vmatprep.subr.mxu0 0.0
  %v6252 = vand.u32 %v6238, 4294901760
  %6253 = vmatpush1.msra.mxu0 %v6252
  %6254 = vmatprep.subr.mxu0 0.0
  %v6255 = vand.u32 %v6237, 4294901760
  %6256 = vmatpush1.msra.mxu0 %v6255
  %6257 = vmatprep.subr.mxu0 0.0
  %v6258 = vand.u32 %v6236, 4294901760
  %6259 = vmatpush1.msra.mxu0 %v6258
  %6260 = vmatprep.subr.mxu0 0.0
  %v6261 = vand.u32 %v6235, 4294901760
  %6262 = vmatpush1.msra.mxu0 %v6261
  %6263 = vmatprep.subr.mxu0 0.0
  %v6264 = vand.u32 %v6234, 4294901760
  %6265 = vmatpush1.msra.mxu0 %v6264
  %6266 = vmatprep.subr.mxu0 0.0
  %v6267 = vand.u32 %v6233, 4294901760
  %6268 = vmatpush1.msra.mxu0 %v6267
  %6269 = vmatprep.subr.mxu0 0.0
  %v6270 = vand.u32 %v6232, 4294901760
  %6271 = vmatpush1.msra.mxu0 %v6270
  %6272 = vmatprep.subr.mxu0 0.0
  %v6273 = vand.u32 %v6231, 4294901760
  %6274 = vmatpush1.msra.mxu0 %v6273
  %6275 = vmatprep.subr.mxu0 0.0
  %v6276 = vand.u32 %v6230, 4294901760
  %6277 = vmatpush1.msra.mxu0 %v6276
  %6278 = vmatprep.subr.mxu0 0.0
  %v6279 = vand.u32 %v6229, 4294901760
  %6280 = vmatpush1.msra.mxu0 %v6279
  %6281 = vmatprep.subr.mxu0 0.0
  %v6282 = vand.u32 %v6228, 4294901760
  %6283 = vmatpush1.msra.mxu0 %v6282
  %6284 = vmatprep.subr.mxu0 0.0
  %v6285 = vand.u32 %v6227, 4294901760
  %6286 = vmatpush1.msra.mxu0 %v6285
  %6287 = vmatprep.subr.mxu0 0.0
  %v6288 = vand.u32 %v6226, 4294901760
  %6289 = vmatpush1.msra.mxu0 %v6288
  %6290 = vmatprep.subr.mxu0 0.0
  %6291 = vmatpush2.msra.mxu0 0.0
  %6292 = vmatprep.subr.mxu0 0.0
  %6293 = vmatpush2.msra.mxu0 0.0
  %6294 = vmatprep.subr.mxu0 0.0
  %6295 = vmatpush2.msra.mxu0 0.0
  %6296 = vmatprep.subr.mxu0 0.0
  %6297 = vmatpush2.msra.mxu0 0.0
  %6298 = vmatprep.subr.mxu0 0.0
  %6299 = vmatpush2.msra.mxu0 0.0
  %6300 = vmatprep.subr.mxu0 0.0
  %6301 = vmatpush2.msra.mxu0 0.0
  %6302 = vmatprep.subr.mxu0 0.0
  %6303 = vmatpush2.msra.mxu0 0.0
  %6304 = vmatprep.subr.mxu0 0.0
  %6305 = vmatpush2.msra.mxu0 0.0
  %6306 = vmatprep.subr.mxu0 0.0
  %6307 = vmatpush2.msra.mxu0 0.0
  %6308 = vmatprep.subr.mxu0 0.0
  %6309 = vmatpush2.msra.mxu0 0.0
  %6310 = vmatprep.subr.mxu0 0.0
  %6311 = vmatpush2.msra.mxu0 0.0
  %6312 = vmatprep.subr.mxu0 0.0
  %6313 = vmatpush2.msra.mxu0 0.0
  %6314 = vmatprep.subr.mxu0 0.0
  %6315 = vmatpush2.msra.mxu0 0.0
  %6316 = vmatprep.subr.mxu0 0.0
  %6317 = vmatpush2.msra.mxu0 0.0
  %6318 = vmatprep.subr.mxu0 0.0
  %6319 = vmatpush2.msra.mxu0 0.0
  %6320 = vmatprep.subr.mxu0 0.0
  %6321 = vmatpush2.msra.mxu0 0.0
  %6322 = vmatprep.mubr.f32.mxu0 0.0
  %v6323 = vand.u32 %v6218, 4294901760
  %v6324 = vsub.f32 %v6218, %v6323
  %v6325 = vand.u32 %v6324, 4294901760
  %v6326 = vsub.f32 %v6324, %v6325
  %v6327 = vand.u32 %v6326, 4294901760
  %6328 = vmatmul.mubr.f32.gmra.mxu0 %v6327
  %v6329 = vpop.f32.mrf.mxu0
  %v6330 = vadd.f32 0.0, %v6329
  %v6331 = vpop.f32.mrf.mxu0
  %6332 = vmatprep.mubr.f32.mxu0 0.0
  %v6333 = vand.u32 %v6219, 4294901760
  %v6334 = vsub.f32 %v6219, %v6333
  %v6335 = vand.u32 %v6334, 4294901760
  %v6336 = vsub.f32 %v6334, %v6335
  %v6337 = vand.u32 %v6336, 4294901760
  %6338 = vmatmul.mubr.f32.gmra.mxu0 %v6337
  %v6339 = vpop.f32.mrf.mxu0
  %v6340 = vadd.f32 0.0, %v6339
  %v6341 = vpop.f32.mrf.mxu0
  %6342 = vmatprep.mubr.f32.mxu0 0.0
  %v6343 = vand.u32 %v6220, 4294901760
  %v6344 = vsub.f32 %v6220, %v6343
  %v6345 = vand.u32 %v6344, 4294901760
  %v6346 = vsub.f32 %v6344, %v6345
  %v6347 = vand.u32 %v6346, 4294901760
  %6348 = vmatmul.mubr.f32.gmra.mxu0 %v6347
  %v6349 = vpop.f32.mrf.mxu0
  %v6350 = vadd.f32 0.0, %v6349
  %v6351 = vpop.f32.mrf.mxu0
  %6352 = vmatprep.mubr.f32.mxu0 0.0
  %v6353 = vand.u32 %v6221, 4294901760
  %v6354 = vsub.f32 %v6221, %v6353
  %v6355 = vand.u32 %v6354, 4294901760
  %v6356 = vsub.f32 %v6354, %v6355
  %v6357 = vand.u32 %v6356, 4294901760
  %6358 = vmatmul.mubr.f32.gmra.mxu0 %v6357
  %v6359 = vpop.f32.mrf.mxu0
  %v6360 = vadd.f32 0.0, %v6359
  %v6361 = vpop.f32.mrf.mxu0
  %6362 = vmatprep.mubr.f32.mxu0 0.0
  %v6363 = vand.u32 %v6222, 4294901760
  %v6364 = vsub.f32 %v6222, %v6363
  %v6365 = vand.u32 %v6364, 4294901760
  %v6366 = vsub.f32 %v6364, %v6365
  %v6367 = vand.u32 %v6366, 4294901760
  %6368 = vmatmul.mubr.f32.gmra.mxu0 %v6367
  %v6369 = vpop.f32.mrf.mxu0
  %v6370 = vadd.f32 0.0, %v6369
  %v6371 = vpop.f32.mrf.mxu0
  %6372 = vmatprep.mubr.f32.mxu0 0.0
  %v6373 = vand.u32 %v6223, 4294901760
  %v6374 = vsub.f32 %v6223, %v6373
  %v6375 = vand.u32 %v6374, 4294901760
  %v6376 = vsub.f32 %v6374, %v6375
  %v6377 = vand.u32 %v6376, 4294901760
  %6378 = vmatmul.mubr.f32.gmra.mxu0 %v6377
  %v6379 = vpop.f32.mrf.mxu0
  %v6380 = vadd.f32 0.0, %v6379
  %v6381 = vpop.f32.mrf.mxu0
  %6382 = vmatprep.mubr.f32.mxu0 0.0
  %v6383 = vand.u32 %v6224, 4294901760
  %v6384 = vsub.f32 %v6224, %v6383
  %v6385 = vand.u32 %v6384, 4294901760
  %v6386 = vsub.f32 %v6384, %v6385
  %v6387 = vand.u32 %v6386, 4294901760
  %6388 = vmatmul.mubr.f32.gmra.mxu0 %v6387
  %v6389 = vpop.f32.mrf.mxu0
  %v6390 = vadd.f32 0.0, %v6389
  %v6391 = vpop.f32.mrf.mxu0
  %6392 = vmatprep.mubr.f32.mxu0 0.0
  %v6393 = vand.u32 %v6225, 4294901760
  %v6394 = vsub.f32 %v6225, %v6393
  %v6395 = vand.u32 %v6394, 4294901760
  %v6396 = vsub.f32 %v6394, %v6395
  %v6397 = vand.u32 %v6396, 4294901760
  %6398 = vmatmul.mubr.f32.gmra.mxu0 %v6397
  %v6399 = vpop.f32.mrf.mxu0
  %v6400 = vadd.f32 0.0, %v6399
  %v6401 = vpop.f32.mrf.mxu0
  %6402 = vdwg.mxu0
  %6403 = vmatprep.subr.mxu0 0.0
  %v6404 = vand.u32 %v6241, 4294901760
  %v6405 = vsub.f32 %v6241, %v6404
  %v6406 = vand.u32 %v6405, 4294901760
  %v6407 = vsub.f32 %v6405, %v6406
  %v6408 = vand.u32 %v6407, 4294901760
  %6409 = vmatpush1.msra.mxu0 %v6408
  %6410 = vmatprep.subr.mxu0 0.0
  %v6411 = vand.u32 %v6240, 4294901760
  %v6412 = vsub.f32 %v6240, %v6411
  %v6413 = vand.u32 %v6412, 4294901760
  %v6414 = vsub.f32 %v6412, %v6413
  %v6415 = vand.u32 %v6414, 4294901760
  %6416 = vmatpush1.msra.mxu0 %v6415
  %6417 = vmatprep.subr.mxu0 0.0
  %v6418 = vand.u32 %v6239, 4294901760
  %v6419 = vsub.f32 %v6239, %v6418
  %v6420 = vand.u32 %v6419, 4294901760
  %v6421 = vsub.f32 %v6419, %v6420
  %v6422 = vand.u32 %v6421, 4294901760
  %6423 = vmatpush1.msra.mxu0 %v6422
  %6424 = vmatprep.subr.mxu0 0.0
  %v6425 = vand.u32 %v6238, 4294901760
  %v6426 = vsub.f32 %v6238, %v6425
  %v6427 = vand.u32 %v6426, 4294901760
  %v6428 = vsub.f32 %v6426, %v6427
  %v6429 = vand.u32 %v6428, 4294901760
  %6430 = vmatpush1.msra.mxu0 %v6429
  %6431 = vmatprep.subr.mxu0 0.0
  %v6432 = vand.u32 %v6237, 4294901760
  %v6433 = vsub.f32 %v6237, %v6432
  %v6434 = vand.u32 %v6433, 4294901760
  %v6435 = vsub.f32 %v6433, %v6434
  %v6436 = vand.u32 %v6435, 4294901760
  %6437 = vmatpush1.msra.mxu0 %v6436
  %6438 = vmatprep.subr.mxu0 0.0
  %v6439 = vand.u32 %v6236, 4294901760
  %v6440 = vsub.f32 %v6236, %v6439
  %v6441 = vand.u32 %v6440, 4294901760
  %v6442 = vsub.f32 %v6440, %v6441
  %v6443 = vand.u32 %v6442, 4294901760
  %6444 = vmatpush1.msra.mxu0 %v6443
  %6445 = vmatprep.subr.mxu0 0.0
  %v6446 = vand.u32 %v6235, 4294901760
  %v6447 = vsub.f32 %v6235, %v6446
  %v6448 = vand.u32 %v6447, 4294901760
  %v6449 = vsub.f32 %v6447, %v6448
  %v6450 = vand.u32 %v6449, 4294901760
  %6451 = vmatpush1.msra.mxu0 %v6450
  %6452 = vmatprep.subr.mxu0 0.0
  %v6453 = vand.u32 %v6234, 4294901760
  %v6454 = vsub.f32 %v6234, %v6453
  %v6455 = vand.u32 %v6454, 4294901760
  %v6456 = vsub.f32 %v6454, %v6455
  %v6457 = vand.u32 %v6456, 4294901760
  %6458 = vmatpush1.msra.mxu0 %v6457
  %6459 = vmatprep.subr.mxu0 0.0
  %v6460 = vand.u32 %v6233, 4294901760
  %v6461 = vsub.f32 %v6233, %v6460
  %v6462 = vand.u32 %v6461, 4294901760
  %v6463 = vsub.f32 %v6461, %v6462
  %v6464 = vand.u32 %v6463, 4294901760
  %6465 = vmatpush1.msra.mxu0 %v6464
  %6466 = vmatprep.subr.mxu0 0.0
  %v6467 = vand.u32 %v6232, 4294901760
  %v6468 = vsub.f32 %v6232, %v6467
  %v6469 = vand.u32 %v6468, 4294901760
  %v6470 = vsub.f32 %v6468, %v6469
  %v6471 = vand.u32 %v6470, 4294901760
  %6472 = vmatpush1.msra.mxu0 %v6471
  %6473 = vmatprep.subr.mxu0 0.0
  %v6474 = vand.u32 %v6231, 4294901760
  %v6475 = vsub.f32 %v6231, %v6474
  %v6476 = vand.u32 %v6475, 4294901760
  %v6477 = vsub.f32 %v6475, %v6476
  %v6478 = vand.u32 %v6477, 4294901760
  %6479 = vmatpush1.msra.mxu0 %v6478
  %6480 = vmatprep.subr.mxu0 0.0
  %v6481 = vand.u32 %v6230, 4294901760
  %v6482 = vsub.f32 %v6230, %v6481
  %v6483 = vand.u32 %v6482, 4294901760
  %v6484 = vsub.f32 %v6482, %v6483
  %v6485 = vand.u32 %v6484, 4294901760
  %6486 = vmatpush1.msra.mxu0 %v6485
  %6487 = vmatprep.subr.mxu0 0.0
  %v6488 = vand.u32 %v6229, 4294901760
  %v6489 = vsub.f32 %v6229, %v6488
  %v6490 = vand.u32 %v6489, 4294901760
  %v6491 = vsub.f32 %v6489, %v6490
  %v6492 = vand.u32 %v6491, 4294901760
  %6493 = vmatpush1.msra.mxu0 %v6492
  %6494 = vmatprep.subr.mxu0 0.0
  %v6495 = vand.u32 %v6228, 4294901760
  %v6496 = vsub.f32 %v6228, %v6495
  %v6497 = vand.u32 %v6496, 4294901760
  %v6498 = vsub.f32 %v6496, %v6497
  %v6499 = vand.u32 %v6498, 4294901760
  %6500 = vmatpush1.msra.mxu0 %v6499
  %6501 = vmatprep.subr.mxu0 0.0
  %v6502 = vand.u32 %v6227, 4294901760
  %v6503 = vsub.f32 %v6227, %v6502
  %v6504 = vand.u32 %v6503, 4294901760
  %v6505 = vsub.f32 %v6503, %v6504
  %v6506 = vand.u32 %v6505, 4294901760
  %6507 = vmatpush1.msra.mxu0 %v6506
  %6508 = vmatprep.subr.mxu0 0.0
  %v6509 = vand.u32 %v6226, 4294901760
  %v6510 = vsub.f32 %v6226, %v6509
  %v6511 = vand.u32 %v6510, 4294901760
  %v6512 = vsub.f32 %v6510, %v6511
  %v6513 = vand.u32 %v6512, 4294901760
  %6514 = vmatpush1.msra.mxu0 %v6513
  %6515 = vmatprep.subr.mxu0 0.0
  %6516 = vmatpush2.msra.mxu0 0.0
  %6517 = vmatprep.subr.mxu0 0.0
  %6518 = vmatpush2.msra.mxu0 0.0
  %6519 = vmatprep.subr.mxu0 0.0
  %6520 = vmatpush2.msra.mxu0 0.0
  %6521 = vmatprep.subr.mxu0 0.0
  %6522 = vmatpush2.msra.mxu0 0.0
  %6523 = vmatprep.subr.mxu0 0.0
  %6524 = vmatpush2.msra.mxu0 0.0
  %6525 = vmatprep.subr.mxu0 0.0
  %6526 = vmatpush2.msra.mxu0 0.0
  %6527 = vmatprep.subr.mxu0 0.0
  %6528 = vmatpush2.msra.mxu0 0.0
  %6529 = vmatprep.subr.mxu0 0.0
  %6530 = vmatpush2.msra.mxu0 0.0
  %6531 = vmatprep.subr.mxu0 0.0
  %6532 = vmatpush2.msra.mxu0 0.0
  %6533 = vmatprep.subr.mxu0 0.0
  %6534 = vmatpush2.msra.mxu0 0.0
  %6535 = vmatprep.subr.mxu0 0.0
  %6536 = vmatpush2.msra.mxu0 0.0
  %6537 = vmatprep.subr.mxu0 0.0
  %6538 = vmatpush2.msra.mxu0 0.0
  %6539 = vmatprep.subr.mxu0 0.0
  %6540 = vmatpush2.msra.mxu0 0.0
  %6541 = vmatprep.subr.mxu0 0.0
  %6542 = vmatpush2.msra.mxu0 0.0
  %6543 = vmatprep.subr.mxu0 0.0
  %6544 = vmatpush2.msra.mxu0 0.0
  %6545 = vmatprep.subr.mxu0 0.0
  %6546 = vmatpush2.msra.mxu0 0.0
  %6547 = vmatprep.mubr.f32.mxu0 0.0
  %v6548 = vand.u32 %v6218, 4294901760
  %6549 = vmatmul.mubr.f32.gmra.mxu0 %v6548
  %v6550 = vpop.f32.mrf.mxu0
  %v6551 = vadd.f32 %v6330, %v6550
  %v6552 = vpop.f32.mrf.mxu0
  %6553 = vmatprep.mubr.f32.mxu0 0.0
  %v6554 = vand.u32 %v6219, 4294901760
  %6555 = vmatmul.mubr.f32.gmra.mxu0 %v6554
  %v6556 = vpop.f32.mrf.mxu0
  %v6557 = vadd.f32 %v6340, %v6556
  %v6558 = vpop.f32.mrf.mxu0
  %6559 = vmatprep.mubr.f32.mxu0 0.0
  %v6560 = vand.u32 %v6220, 4294901760
  %6561 = vmatmul.mubr.f32.gmra.mxu0 %v6560
  %v6562 = vpop.f32.mrf.mxu0
  %v6563 = vadd.f32 %v6350, %v6562
  %v6564 = vpop.f32.mrf.mxu0
  %6565 = vmatprep.mubr.f32.mxu0 0.0
  %v6566 = vand.u32 %v6221, 4294901760
  %6567 = vmatmul.mubr.f32.gmra.mxu0 %v6566
  %v6568 = vpop.f32.mrf.mxu0
  %v6569 = vadd.f32 %v6360, %v6568
  %v6570 = vpop.f32.mrf.mxu0
  %6571 = vmatprep.mubr.f32.mxu0 0.0
  %v6572 = vand.u32 %v6222, 4294901760
  %6573 = vmatmul.mubr.f32.gmra.mxu0 %v6572
  %v6574 = vpop.f32.mrf.mxu0
  %v6575 = vadd.f32 %v6370, %v6574
  %v6576 = vpop.f32.mrf.mxu0
  %6577 = vmatprep.mubr.f32.mxu0 0.0
  %v6578 = vand.u32 %v6223, 4294901760
  %6579 = vmatmul.mubr.f32.gmra.mxu0 %v6578
  %v6580 = vpop.f32.mrf.mxu0
  %v6581 = vadd.f32 %v6380, %v6580
  %v6582 = vpop.f32.mrf.mxu0
  %6583 = vmatprep.mubr.f32.mxu0 0.0
  %v6584 = vand.u32 %v6224, 4294901760
  %6585 = vmatmul.mubr.f32.gmra.mxu0 %v6584
  %v6586 = vpop.f32.mrf.mxu0
  %v6587 = vadd.f32 %v6390, %v6586
  %v6588 = vpop.f32.mrf.mxu0
  %6589 = vmatprep.mubr.f32.mxu0 0.0
  %v6590 = vand.u32 %v6225, 4294901760
  %6591 = vmatmul.mubr.f32.gmra.mxu0 %v6590
  %v6592 = vpop.f32.mrf.mxu0
  %v6593 = vadd.f32 %v6400, %v6592
  %v6594 = vpop.f32.mrf.mxu0
  %6595 = vdwg.mxu0
  %6596 = vmatprep.subr.mxu0 0.0
  %v6597 = vand.u32 %v6241, 4294901760
  %v6598 = vsub.f32 %v6241, %v6597
  %6599 = vmatpush1.msra.mxu0 %v6598
  %6600 = vmatprep.subr.mxu0 0.0
  %v6601 = vand.u32 %v6240, 4294901760
  %v6602 = vsub.f32 %v6240, %v6601
  %6603 = vmatpush1.msra.mxu0 %v6602
  %6604 = vmatprep.subr.mxu0 0.0
  %v6605 = vand.u32 %v6239, 4294901760
  %v6606 = vsub.f32 %v6239, %v6605
  %6607 = vmatpush1.msra.mxu0 %v6606
  %6608 = vmatprep.subr.mxu0 0.0
  %v6609 = vand.u32 %v6238, 4294901760
  %v6610 = vsub.f32 %v6238, %v6609
  %6611 = vmatpush1.msra.mxu0 %v6610
  %6612 = vmatprep.subr.mxu0 0.0
  %v6613 = vand.u32 %v6237, 4294901760
  %v6614 = vsub.f32 %v6237, %v6613
  %6615 = vmatpush1.msra.mxu0 %v6614
  %6616 = vmatprep.subr.mxu0 0.0
  %v6617 = vand.u32 %v6236, 4294901760
  %v6618 = vsub.f32 %v6236, %v6617
  %6619 = vmatpush1.msra.mxu0 %v6618
  %6620 = vmatprep.subr.mxu0 0.0
  %v6621 = vand.u32 %v6235, 4294901760
  %v6622 = vsub.f32 %v6235, %v6621
  %6623 = vmatpush1.msra.mxu0 %v6622
  %6624 = vmatprep.subr.mxu0 0.0
  %v6625 = vand.u32 %v6234, 4294901760
  %v6626 = vsub.f32 %v6234, %v6625
  %6627 = vmatpush1.msra.mxu0 %v6626
  %6628 = vmatprep.subr.mxu0 0.0
  %v6629 = vand.u32 %v6233, 4294901760
  %v6630 = vsub.f32 %v6233, %v6629
  %6631 = vmatpush1.msra.mxu0 %v6630
  %6632 = vmatprep.subr.mxu0 0.0
  %v6633 = vand.u32 %v6232, 4294901760
  %v6634 = vsub.f32 %v6232, %v6633
  %6635 = vmatpush1.msra.mxu0 %v6634
  %6636 = vmatprep.subr.mxu0 0.0
  %v6637 = vand.u32 %v6231, 4294901760
  %v6638 = vsub.f32 %v6231, %v6637
  %6639 = vmatpush1.msra.mxu0 %v6638
  %6640 = vmatprep.subr.mxu0 0.0
  %v6641 = vand.u32 %v6230, 4294901760
  %v6642 = vsub.f32 %v6230, %v6641
  %6643 = vmatpush1.msra.mxu0 %v6642
  %6644 = vmatprep.subr.mxu0 0.0
  %v6645 = vand.u32 %v6229, 4294901760
  %v6646 = vsub.f32 %v6229, %v6645
  %6647 = vmatpush1.msra.mxu0 %v6646
  %6648 = vmatprep.subr.mxu0 0.0
  %v6649 = vand.u32 %v6228, 4294901760
  %v6650 = vsub.f32 %v6228, %v6649
  %6651 = vmatpush1.msra.mxu0 %v6650
  %6652 = vmatprep.subr.mxu0 0.0
  %v6653 = vand.u32 %v6227, 4294901760
  %v6654 = vsub.f32 %v6227, %v6653
  %6655 = vmatpush1.msra.mxu0 %v6654
  %6656 = vmatprep.subr.mxu0 0.0
  %v6657 = vand.u32 %v6226, 4294901760
  %v6658 = vsub.f32 %v6226, %v6657
  %6659 = vmatpush1.msra.mxu0 %v6658
  %6660 = vmatprep.subr.mxu0 0.0
  %6661 = vmatpush2.msra.mxu0 0.0
  %6662 = vmatprep.subr.mxu0 0.0
  %6663 = vmatpush2.msra.mxu0 0.0
  %6664 = vmatprep.subr.mxu0 0.0
  %6665 = vmatpush2.msra.mxu0 0.0
  %6666 = vmatprep.subr.mxu0 0.0
  %6667 = vmatpush2.msra.mxu0 0.0
  %6668 = vmatprep.subr.mxu0 0.0
  %6669 = vmatpush2.msra.mxu0 0.0
  %6670 = vmatprep.subr.mxu0 0.0
  %6671 = vmatpush2.msra.mxu0 0.0
  %6672 = vmatprep.subr.mxu0 0.0
  %6673 = vmatpush2.msra.mxu0 0.0
  %6674 = vmatprep.subr.mxu0 0.0
  %6675 = vmatpush2.msra.mxu0 0.0
  %6676 = vmatprep.subr.mxu0 0.0
  %6677 = vmatpush2.msra.mxu0 0.0
  %6678 = vmatprep.subr.mxu0 0.0
  %6679 = vmatpush2.msra.mxu0 0.0
  %6680 = vmatprep.subr.mxu0 0.0
  %6681 = vmatpush2.msra.mxu0 0.0
  %6682 = vmatprep.subr.mxu0 0.0
  %6683 = vmatpush2.msra.mxu0 0.0
  %6684 = vmatprep.subr.mxu0 0.0
  %6685 = vmatpush2.msra.mxu0 0.0
  %6686 = vmatprep.subr.mxu0 0.0
  %6687 = vmatpush2.msra.mxu0 0.0
  %6688 = vmatprep.subr.mxu0 0.0
  %6689 = vmatpush2.msra.mxu0 0.0
  %6690 = vmatprep.subr.mxu0 0.0
  %6691 = vmatpush2.msra.mxu0 0.0
  %6692 = vmatprep.mubr.f32.mxu0 0.0
  %v6693 = vand.u32 %v6218, 4294901760
  %v6694 = vsub.f32 %v6218, %v6693
  %6695 = vmatmul.mubr.f32.gmra.mxu0 %v6694
  %v6696 = vpop.f32.mrf.mxu0
  %v6697 = vadd.f32 %v6551, %v6696
  %v6698 = vpop.f32.mrf.mxu0
  %6699 = vmatprep.mubr.f32.mxu0 0.0
  %v6700 = vand.u32 %v6219, 4294901760
  %v6701 = vsub.f32 %v6219, %v6700
  %6702 = vmatmul.mubr.f32.gmra.mxu0 %v6701
  %v6703 = vpop.f32.mrf.mxu0
  %v6704 = vadd.f32 %v6557, %v6703
  %v6705 = vpop.f32.mrf.mxu0
  %6706 = vmatprep.mubr.f32.mxu0 0.0
  %v6707 = vand.u32 %v6220, 4294901760
  %v6708 = vsub.f32 %v6220, %v6707
  %6709 = vmatmul.mubr.f32.gmra.mxu0 %v6708
  %v6710 = vpop.f32.mrf.mxu0
  %v6711 = vadd.f32 %v6563, %v6710
  %v6712 = vpop.f32.mrf.mxu0
  %6713 = vmatprep.mubr.f32.mxu0 0.0
  %v6714 = vand.u32 %v6221, 4294901760
  %v6715 = vsub.f32 %v6221, %v6714
  %6716 = vmatmul.mubr.f32.gmra.mxu0 %v6715
  %v6717 = vpop.f32.mrf.mxu0
  %v6718 = vadd.f32 %v6569, %v6717
  %v6719 = vpop.f32.mrf.mxu0
  %6720 = vmatprep.mubr.f32.mxu0 0.0
  %v6721 = vand.u32 %v6222, 4294901760
  %v6722 = vsub.f32 %v6222, %v6721
  %6723 = vmatmul.mubr.f32.gmra.mxu0 %v6722
  %v6724 = vpop.f32.mrf.mxu0
  %v6725 = vadd.f32 %v6575, %v6724
  %v6726 = vpop.f32.mrf.mxu0
  %6727 = vmatprep.mubr.f32.mxu0 0.0
  %v6728 = vand.u32 %v6223, 4294901760
  %v6729 = vsub.f32 %v6223, %v6728
  %6730 = vmatmul.mubr.f32.gmra.mxu0 %v6729
  %v6731 = vpop.f32.mrf.mxu0
  %v6732 = vadd.f32 %v6581, %v6731
  %v6733 = vpop.f32.mrf.mxu0
  %6734 = vmatprep.mubr.f32.mxu0 0.0
  %v6735 = vand.u32 %v6224, 4294901760
  %v6736 = vsub.f32 %v6224, %v6735
  %6737 = vmatmul.mubr.f32.gmra.mxu0 %v6736
  %v6738 = vpop.f32.mrf.mxu0
  %v6739 = vadd.f32 %v6587, %v6738
  %v6740 = vpop.f32.mrf.mxu0
  %6741 = vmatprep.mubr.f32.mxu0 0.0
  %v6742 = vand.u32 %v6225, 4294901760
  %v6743 = vsub.f32 %v6225, %v6742
  %6744 = vmatmul.mubr.f32.gmra.mxu0 %v6743
  %v6745 = vpop.f32.mrf.mxu0
  %v6746 = vadd.f32 %v6593, %v6745
  %v6747 = vpop.f32.mrf.mxu0
  %6748 = vdwg.mxu0
  %6749 = vmatprep.subr.mxu0 0.0
  %v6750 = vand.u32 %v6241, 4294901760
  %6751 = vmatpush1.msra.mxu0 %v6750
  %6752 = vmatprep.subr.mxu0 0.0
  %v6753 = vand.u32 %v6240, 4294901760
  %6754 = vmatpush1.msra.mxu0 %v6753
  %6755 = vmatprep.subr.mxu0 0.0
  %v6756 = vand.u32 %v6239, 4294901760
  %6757 = vmatpush1.msra.mxu0 %v6756
  %6758 = vmatprep.subr.mxu0 0.0
  %v6759 = vand.u32 %v6238, 4294901760
  %6760 = vmatpush1.msra.mxu0 %v6759
  %6761 = vmatprep.subr.mxu0 0.0
  %v6762 = vand.u32 %v6237, 4294901760
  %6763 = vmatpush1.msra.mxu0 %v6762
  %6764 = vmatprep.subr.mxu0 0.0
  %v6765 = vand.u32 %v6236, 4294901760
  %6766 = vmatpush1.msra.mxu0 %v6765
  %6767 = vmatprep.subr.mxu0 0.0
  %v6768 = vand.u32 %v6235, 4294901760
  %6769 = vmatpush1.msra.mxu0 %v6768
  %6770 = vmatprep.subr.mxu0 0.0
  %v6771 = vand.u32 %v6234, 4294901760
  %6772 = vmatpush1.msra.mxu0 %v6771
  %6773 = vmatprep.subr.mxu0 0.0
  %v6774 = vand.u32 %v6233, 4294901760
  %6775 = vmatpush1.msra.mxu0 %v6774
  %6776 = vmatprep.subr.mxu0 0.0
  %v6777 = vand.u32 %v6232, 4294901760
  %6778 = vmatpush1.msra.mxu0 %v6777
  %6779 = vmatprep.subr.mxu0 0.0
  %v6780 = vand.u32 %v6231, 4294901760
  %6781 = vmatpush1.msra.mxu0 %v6780
  %6782 = vmatprep.subr.mxu0 0.0
  %v6783 = vand.u32 %v6230, 4294901760
  %6784 = vmatpush1.msra.mxu0 %v6783
  %6785 = vmatprep.subr.mxu0 0.0
  %v6786 = vand.u32 %v6229, 4294901760
  %6787 = vmatpush1.msra.mxu0 %v6786
  %6788 = vmatprep.subr.mxu0 0.0
  %v6789 = vand.u32 %v6228, 4294901760
  %6790 = vmatpush1.msra.mxu0 %v6789
  %6791 = vmatprep.subr.mxu0 0.0
  %v6792 = vand.u32 %v6227, 4294901760
  %6793 = vmatpush1.msra.mxu0 %v6792
  %6794 = vmatprep.subr.mxu0 0.0
  %v6795 = vand.u32 %v6226, 4294901760
  %6796 = vmatpush1.msra.mxu0 %v6795
  %6797 = vmatprep.subr.mxu0 0.0
  %6798 = vmatpush2.msra.mxu0 0.0
  %6799 = vmatprep.subr.mxu0 0.0
  %6800 = vmatpush2.msra.mxu0 0.0
  %6801 = vmatprep.subr.mxu0 0.0
  %6802 = vmatpush2.msra.mxu0 0.0
  %6803 = vmatprep.subr.mxu0 0.0
  %6804 = vmatpush2.msra.mxu0 0.0
  %6805 = vmatprep.subr.mxu0 0.0
  %6806 = vmatpush2.msra.mxu0 0.0
  %6807 = vmatprep.subr.mxu0 0.0
  %6808 = vmatpush2.msra.mxu0 0.0
  %6809 = vmatprep.subr.mxu0 0.0
  %6810 = vmatpush2.msra.mxu0 0.0
  %6811 = vmatprep.subr.mxu0 0.0
  %6812 = vmatpush2.msra.mxu0 0.0
  %6813 = vmatprep.subr.mxu0 0.0
  %6814 = vmatpush2.msra.mxu0 0.0
  %6815 = vmatprep.subr.mxu0 0.0
  %6816 = vmatpush2.msra.mxu0 0.0
  %6817 = vmatprep.subr.mxu0 0.0
  %6818 = vmatpush2.msra.mxu0 0.0
  %6819 = vmatprep.subr.mxu0 0.0
  %6820 = vmatpush2.msra.mxu0 0.0
  %6821 = vmatprep.subr.mxu0 0.0
  %6822 = vmatpush2.msra.mxu0 0.0
  %6823 = vmatprep.subr.mxu0 0.0
  %6824 = vmatpush2.msra.mxu0 0.0
  %6825 = vmatprep.subr.mxu0 0.0
  %6826 = vmatpush2.msra.mxu0 0.0
  %6827 = vmatprep.subr.mxu0 0.0
  %6828 = vmatpush2.msra.mxu0 0.0
  %6829 = vmatprep.mubr.f32.mxu0 0.0
  %v6830 = vand.u32 %v6218, 4294901760
  %v6831 = vsub.f32 %v6218, %v6830
  %v6832 = vand.u32 %v6831, 4294901760
  %6833 = vmatmul.mubr.f32.gmra.mxu0 %v6832
  %v6834 = vpop.f32.mrf.mxu0
  %v6835 = vadd.f32 %v6697, %v6834
  %v6836 = vpop.f32.mrf.mxu0
  %6837 = vmatprep.mubr.f32.mxu0 0.0
  %v6838 = vand.u32 %v6219, 4294901760
  %v6839 = vsub.f32 %v6219, %v6838
  %v6840 = vand.u32 %v6839, 4294901760
  %6841 = vmatmul.mubr.f32.gmra.mxu0 %v6840
  %v6842 = vpop.f32.mrf.mxu0
  %v6843 = vadd.f32 %v6704, %v6842
  %v6844 = vpop.f32.mrf.mxu0
  %6845 = vmatprep.mubr.f32.mxu0 0.0
  %v6846 = vand.u32 %v6220, 4294901760
  %v6847 = vsub.f32 %v6220, %v6846
  %v6848 = vand.u32 %v6847, 4294901760
  %6849 = vmatmul.mubr.f32.gmra.mxu0 %v6848
  %v6850 = vpop.f32.mrf.mxu0
  %v6851 = vadd.f32 %v6711, %v6850
  %v6852 = vpop.f32.mrf.mxu0
  %6853 = vmatprep.mubr.f32.mxu0 0.0
  %v6854 = vand.u32 %v6221, 4294901760
  %v6855 = vsub.f32 %v6221, %v6854
  %v6856 = vand.u32 %v6855, 4294901760
  %6857 = vmatmul.mubr.f32.gmra.mxu0 %v6856
  %v6858 = vpop.f32.mrf.mxu0
  %v6859 = vadd.f32 %v6718, %v6858
  %v6860 = vpop.f32.mrf.mxu0
  %6861 = vmatprep.mubr.f32.mxu0 0.0
  %v6862 = vand.u32 %v6222, 4294901760
  %v6863 = vsub.f32 %v6222, %v6862
  %v6864 = vand.u32 %v6863, 4294901760
  %6865 = vmatmul.mubr.f32.gmra.mxu0 %v6864
  %v6866 = vpop.f32.mrf.mxu0
  %v6867 = vadd.f32 %v6725, %v6866
  %v6868 = vpop.f32.mrf.mxu0
  %6869 = vmatprep.mubr.f32.mxu0 0.0
  %v6870 = vand.u32 %v6223, 4294901760
  %v6871 = vsub.f32 %v6223, %v6870
  %v6872 = vand.u32 %v6871, 4294901760
  %6873 = vmatmul.mubr.f32.gmra.mxu0 %v6872
  %v6874 = vpop.f32.mrf.mxu0
  %v6875 = vadd.f32 %v6732, %v6874
  %v6876 = vpop.f32.mrf.mxu0
  %6877 = vmatprep.mubr.f32.mxu0 0.0
  %v6878 = vand.u32 %v6224, 4294901760
  %v6879 = vsub.f32 %v6224, %v6878
  %v6880 = vand.u32 %v6879, 4294901760
  %6881 = vmatmul.mubr.f32.gmra.mxu0 %v6880
  %v6882 = vpop.f32.mrf.mxu0
  %v6883 = vadd.f32 %v6739, %v6882
  %v6884 = vpop.f32.mrf.mxu0
  %6885 = vmatprep.mubr.f32.mxu0 0.0
  %v6886 = vand.u32 %v6225, 4294901760
  %v6887 = vsub.f32 %v6225, %v6886
  %v6888 = vand.u32 %v6887, 4294901760
  %6889 = vmatmul.mubr.f32.gmra.mxu0 %v6888
  %v6890 = vpop.f32.mrf.mxu0
  %v6891 = vadd.f32 %v6746, %v6890
  %v6892 = vpop.f32.mrf.mxu0
  %6893 = vdwg.mxu0
  %6894 = vmatprep.subr.mxu0 0.0
  %v6895 = vand.u32 %v6241, 4294901760
  %v6896 = vsub.f32 %v6241, %v6895
  %v6897 = vand.u32 %v6896, 4294901760
  %6898 = vmatpush1.msra.mxu0 %v6897
  %6899 = vmatprep.subr.mxu0 0.0
  %v6900 = vand.u32 %v6240, 4294901760
  %v6901 = vsub.f32 %v6240, %v6900
  %v6902 = vand.u32 %v6901, 4294901760
  %6903 = vmatpush1.msra.mxu0 %v6902
  %6904 = vmatprep.subr.mxu0 0.0
  %v6905 = vand.u32 %v6239, 4294901760
  %v6906 = vsub.f32 %v6239, %v6905
  %v6907 = vand.u32 %v6906, 4294901760
  %6908 = vmatpush1.msra.mxu0 %v6907
  %6909 = vmatprep.subr.mxu0 0.0
  %v6910 = vand.u32 %v6238, 4294901760
  %v6911 = vsub.f32 %v6238, %v6910
  %v6912 = vand.u32 %v6911, 4294901760
  %6913 = vmatpush1.msra.mxu0 %v6912
  %6914 = vmatprep.subr.mxu0 0.0
  %v6915 = vand.u32 %v6237, 4294901760
  %v6916 = vsub.f32 %v6237, %v6915
  %v6917 = vand.u32 %v6916, 4294901760
  %6918 = vmatpush1.msra.mxu0 %v6917
  %6919 = vmatprep.subr.mxu0 0.0
  %v6920 = vand.u32 %v6236, 4294901760
  %v6921 = vsub.f32 %v6236, %v6920
  %v6922 = vand.u32 %v6921, 4294901760
  %6923 = vmatpush1.msra.mxu0 %v6922
  %6924 = vmatprep.subr.mxu0 0.0
  %v6925 = vand.u32 %v6235, 4294901760
  %v6926 = vsub.f32 %v6235, %v6925
  %v6927 = vand.u32 %v6926, 4294901760
  %6928 = vmatpush1.msra.mxu0 %v6927
  %6929 = vmatprep.subr.mxu0 0.0
  %v6930 = vand.u32 %v6234, 4294901760
  %v6931 = vsub.f32 %v6234, %v6930
  %v6932 = vand.u32 %v6931, 4294901760
  %6933 = vmatpush1.msra.mxu0 %v6932
  %6934 = vmatprep.subr.mxu0 0.0
  %v6935 = vand.u32 %v6233, 4294901760
  %v6936 = vsub.f32 %v6233, %v6935
  %v6937 = vand.u32 %v6936, 4294901760
  %6938 = vmatpush1.msra.mxu0 %v6937
  %6939 = vmatprep.subr.mxu0 0.0
  %v6940 = vand.u32 %v6232, 4294901760
  %v6941 = vsub.f32 %v6232, %v6940
  %v6942 = vand.u32 %v6941, 4294901760
  %6943 = vmatpush1.msra.mxu0 %v6942
  %6944 = vmatprep.subr.mxu0 0.0
  %v6945 = vand.u32 %v6231, 4294901760
  %v6946 = vsub.f32 %v6231, %v6945
  %v6947 = vand.u32 %v6946, 4294901760
  %6948 = vmatpush1.msra.mxu0 %v6947
  %6949 = vmatprep.subr.mxu0 0.0
  %v6950 = vand.u32 %v6230, 4294901760
  %v6951 = vsub.f32 %v6230, %v6950
  %v6952 = vand.u32 %v6951, 4294901760
  %6953 = vmatpush1.msra.mxu0 %v6952
  %6954 = vmatprep.subr.mxu0 0.0
  %v6955 = vand.u32 %v6229, 4294901760
  %v6956 = vsub.f32 %v6229, %v6955
  %v6957 = vand.u32 %v6956, 4294901760
  %6958 = vmatpush1.msra.mxu0 %v6957
  %6959 = vmatprep.subr.mxu0 0.0
  %v6960 = vand.u32 %v6228, 4294901760
  %v6961 = vsub.f32 %v6228, %v6960
  %v6962 = vand.u32 %v6961, 4294901760
  %6963 = vmatpush1.msra.mxu0 %v6962
  %6964 = vmatprep.subr.mxu0 0.0
  %v6965 = vand.u32 %v6227, 4294901760
  %v6966 = vsub.f32 %v6227, %v6965
  %v6967 = vand.u32 %v6966, 4294901760
  %6968 = vmatpush1.msra.mxu0 %v6967
  %6969 = vmatprep.subr.mxu0 0.0
  %v6970 = vand.u32 %v6226, 4294901760
  %v6971 = vsub.f32 %v6226, %v6970
  %v6972 = vand.u32 %v6971, 4294901760
  %6973 = vmatpush1.msra.mxu0 %v6972
  %6974 = vmatprep.subr.mxu0 0.0
  %6975 = vmatpush2.msra.mxu0 0.0
  %6976 = vmatprep.subr.mxu0 0.0
  %6977 = vmatpush2.msra.mxu0 0.0
  %6978 = vmatprep.subr.mxu0 0.0
  %6979 = vmatpush2.msra.mxu0 0.0
  %6980 = vmatprep.subr.mxu0 0.0
  %6981 = vmatpush2.msra.mxu0 0.0
  %6982 = vmatprep.subr.mxu0 0.0
  %6983 = vmatpush2.msra.mxu0 0.0
  %6984 = vmatprep.subr.mxu0 0.0
  %6985 = vmatpush2.msra.mxu0 0.0
  %6986 = vmatprep.subr.mxu0 0.0
  %6987 = vmatpush2.msra.mxu0 0.0
  %6988 = vmatprep.subr.mxu0 0.0
  %6989 = vmatpush2.msra.mxu0 0.0
  %6990 = vmatprep.subr.mxu0 0.0
  %6991 = vmatpush2.msra.mxu0 0.0
  %6992 = vmatprep.subr.mxu0 0.0
  %6993 = vmatpush2.msra.mxu0 0.0
  %6994 = vmatprep.subr.mxu0 0.0
  %6995 = vmatpush2.msra.mxu0 0.0
  %6996 = vmatprep.subr.mxu0 0.0
  %6997 = vmatpush2.msra.mxu0 0.0
  %6998 = vmatprep.subr.mxu0 0.0
  %6999 = vmatpush2.msra.mxu0 0.0
  %7000 = vmatprep.subr.mxu0 0.0
  %7001 = vmatpush2.msra.mxu0 0.0
  %7002 = vmatprep.subr.mxu0 0.0
  %7003 = vmatpush2.msra.mxu0 0.0
  %7004 = vmatprep.subr.mxu0 0.0
  %7005 = vmatpush2.msra.mxu0 0.0
  %7006 = vmatprep.mubr.f32.mxu0 0.0
  %v7007 = vand.u32 %v6218, 4294901760
  %7008 = vmatmul.mubr.f32.gmra.mxu0 %v7007
  %v7009 = vpop.f32.mrf.mxu0
  %v7010 = vadd.f32 %v6835, %v7009
  %v7011 = vpop.f32.mrf.mxu0
  %7012 = vmatprep.mubr.f32.mxu0 0.0
  %v7013 = vand.u32 %v6219, 4294901760
  %7014 = vmatmul.mubr.f32.gmra.mxu0 %v7013
  %v7015 = vpop.f32.mrf.mxu0
  %v7016 = vadd.f32 %v6843, %v7015
  %v7017 = vpop.f32.mrf.mxu0
  %7018 = vmatprep.mubr.f32.mxu0 0.0
  %v7019 = vand.u32 %v6220, 4294901760
  %7020 = vmatmul.mubr.f32.gmra.mxu0 %v7019
  %v7021 = vpop.f32.mrf.mxu0
  %v7022 = vadd.f32 %v6851, %v7021
  %v7023 = vpop.f32.mrf.mxu0
  %7024 = vmatprep.mubr.f32.mxu0 0.0
  %v7025 = vand.u32 %v6221, 4294901760
  %7026 = vmatmul.mubr.f32.gmra.mxu0 %v7025
  %v7027 = vpop.f32.mrf.mxu0
  %v7028 = vadd.f32 %v6859, %v7027
  %v7029 = vpop.f32.mrf.mxu0
  %7030 = vmatprep.mubr.f32.mxu0 0.0
  %v7031 = vand.u32 %v6222, 4294901760
  %7032 = vmatmul.mubr.f32.gmra.mxu0 %v7031
  %v7033 = vpop.f32.mrf.mxu0
  %v7034 = vadd.f32 %v6867, %v7033
  %v7035 = vpop.f32.mrf.mxu0
  %7036 = vmatprep.mubr.f32.mxu0 0.0
  %v7037 = vand.u32 %v6223, 4294901760
  %7038 = vmatmul.mubr.f32.gmra.mxu0 %v7037
  %v7039 = vpop.f32.mrf.mxu0
  %v7040 = vadd.f32 %v6875, %v7039
  %v7041 = vpop.f32.mrf.mxu0
  %7042 = vmatprep.mubr.f32.mxu0 0.0
  %v7043 = vand.u32 %v6224, 4294901760
  %7044 = vmatmul.mubr.f32.gmra.mxu0 %v7043
  %v7045 = vpop.f32.mrf.mxu0
  %v7046 = vadd.f32 %v6883, %v7045
  %v7047 = vpop.f32.mrf.mxu0
  %7048 = vmatprep.mubr.f32.mxu0 0.0
  %v7049 = vand.u32 %v6225, 4294901760
  %7050 = vmatmul.mubr.f32.gmra.mxu0 %v7049
  %v7051 = vpop.f32.mrf.mxu0
  %v7052 = vadd.f32 %v6891, %v7051
  %v7053 = vpop.f32.mrf.mxu0
  %7054 = vdwg.mxu0
  %7055 = vmatprep.subr.mxu0 0.0
  %v7056 = vand.u32 %v6241, 4294901760
  %7057 = vmatpush1.msra.mxu0 %v7056
  %7058 = vmatprep.subr.mxu0 0.0
  %v7059 = vand.u32 %v6240, 4294901760
  %7060 = vmatpush1.msra.mxu0 %v7059
  %7061 = vmatprep.subr.mxu0 0.0
  %v7062 = vand.u32 %v6239, 4294901760
  %7063 = vmatpush1.msra.mxu0 %v7062
  %7064 = vmatprep.subr.mxu0 0.0
  %v7065 = vand.u32 %v6238, 4294901760
  %7066 = vmatpush1.msra.mxu0 %v7065
  %7067 = vmatprep.subr.mxu0 0.0
  %v7068 = vand.u32 %v6237, 4294901760
  %7069 = vmatpush1.msra.mxu0 %v7068
  %7070 = vmatprep.subr.mxu0 0.0
  %v7071 = vand.u32 %v6236, 4294901760
  %7072 = vmatpush1.msra.mxu0 %v7071
  %7073 = vmatprep.subr.mxu0 0.0
  %v7074 = vand.u32 %v6235, 4294901760
  %7075 = vmatpush1.msra.mxu0 %v7074
  %7076 = vmatprep.subr.mxu0 0.0
  %v7077 = vand.u32 %v6234, 4294901760
  %7078 = vmatpush1.msra.mxu0 %v7077
  %7079 = vmatprep.subr.mxu0 0.0
  %v7080 = vand.u32 %v6233, 4294901760
  %7081 = vmatpush1.msra.mxu0 %v7080
  %7082 = vmatprep.subr.mxu0 0.0
  %v7083 = vand.u32 %v6232, 4294901760
  %7084 = vmatpush1.msra.mxu0 %v7083
  %7085 = vmatprep.subr.mxu0 0.0
  %v7086 = vand.u32 %v6231, 4294901760
  %7087 = vmatpush1.msra.mxu0 %v7086
  %7088 = vmatprep.subr.mxu0 0.0
  %v7089 = vand.u32 %v6230, 4294901760
  %7090 = vmatpush1.msra.mxu0 %v7089
  %7091 = vmatprep.subr.mxu0 0.0
  %v7092 = vand.u32 %v6229, 4294901760
  %7093 = vmatpush1.msra.mxu0 %v7092
  %7094 = vmatprep.subr.mxu0 0.0
  %v7095 = vand.u32 %v6228, 4294901760
  %7096 = vmatpush1.msra.mxu0 %v7095
  %7097 = vmatprep.subr.mxu0 0.0
  %v7098 = vand.u32 %v6227, 4294901760
  %7099 = vmatpush1.msra.mxu0 %v7098
  %7100 = vmatprep.subr.mxu0 0.0
  %v7101 = vand.u32 %v6226, 4294901760
  %7102 = vmatpush1.msra.mxu0 %v7101
  %7103 = vmatprep.subr.mxu0 0.0
  %7104 = vmatpush2.msra.mxu0 0.0
  %7105 = vmatprep.subr.mxu0 0.0
  %7106 = vmatpush2.msra.mxu0 0.0
  %7107 = vmatprep.subr.mxu0 0.0
  %7108 = vmatpush2.msra.mxu0 0.0
  %7109 = vmatprep.subr.mxu0 0.0
  %7110 = vmatpush2.msra.mxu0 0.0
  %7111 = vmatprep.subr.mxu0 0.0
  %7112 = vmatpush2.msra.mxu0 0.0
  %7113 = vmatprep.subr.mxu0 0.0
  %7114 = vmatpush2.msra.mxu0 0.0
  %7115 = vmatprep.subr.mxu0 0.0
  %7116 = vmatpush2.msra.mxu0 0.0
  %7117 = vmatprep.subr.mxu0 0.0
  %7118 = vmatpush2.msra.mxu0 0.0
  %7119 = vmatprep.subr.mxu0 0.0
  %7120 = vmatpush2.msra.mxu0 0.0
  %7121 = vmatprep.subr.mxu0 0.0
  %7122 = vmatpush2.msra.mxu0 0.0
  %7123 = vmatprep.subr.mxu0 0.0
  %7124 = vmatpush2.msra.mxu0 0.0
  %7125 = vmatprep.subr.mxu0 0.0
  %7126 = vmatpush2.msra.mxu0 0.0
  %7127 = vmatprep.subr.mxu0 0.0
  %7128 = vmatpush2.msra.mxu0 0.0
  %7129 = vmatprep.subr.mxu0 0.0
  %7130 = vmatpush2.msra.mxu0 0.0
  %7131 = vmatprep.subr.mxu0 0.0
  %7132 = vmatpush2.msra.mxu0 0.0
  %7133 = vmatprep.subr.mxu0 0.0
  %7134 = vmatpush2.msra.mxu0 0.0
  %7135 = vmatprep.mubr.f32.mxu0 0.0
  %v7136 = vand.u32 %v6218, 4294901760
  %7137 = vmatmul.mubr.f32.gmra.mxu0 %v7136
  %v7138 = vpop.f32.mrf.mxu0
  %v7139 = vadd.f32 %v7010, %v7138
  %v7140 = vpop.f32.mrf.mxu0
  %7141 = vmatprep.mubr.f32.mxu0 0.0
  %v7142 = vand.u32 %v6219, 4294901760
  %7143 = vmatmul.mubr.f32.gmra.mxu0 %v7142
  %v7144 = vpop.f32.mrf.mxu0
  %v7145 = vadd.f32 %v7016, %v7144
  %v7146 = vpop.f32.mrf.mxu0
  %7147 = vmatprep.mubr.f32.mxu0 0.0
  %v7148 = vand.u32 %v6220, 4294901760
  %7149 = vmatmul.mubr.f32.gmra.mxu0 %v7148
  %v7150 = vpop.f32.mrf.mxu0
  %v7151 = vadd.f32 %v7022, %v7150
  %v7152 = vpop.f32.mrf.mxu0
  %7153 = vmatprep.mubr.f32.mxu0 0.0
  %v7154 = vand.u32 %v6221, 4294901760
  %7155 = vmatmul.mubr.f32.gmra.mxu0 %v7154
  %v7156 = vpop.f32.mrf.mxu0
  %v7157 = vadd.f32 %v7028, %v7156
  %v7158 = vpop.f32.mrf.mxu0
  %7159 = vmatprep.mubr.f32.mxu0 0.0
  %v7160 = vand.u32 %v6222, 4294901760
  %7161 = vmatmul.mubr.f32.gmra.mxu0 %v7160
  %v7162 = vpop.f32.mrf.mxu0
  %v7163 = vadd.f32 %v7034, %v7162
  %v7164 = vpop.f32.mrf.mxu0
  %7165 = vmatprep.mubr.f32.mxu0 0.0
  %v7166 = vand.u32 %v6223, 4294901760
  %7167 = vmatmul.mubr.f32.gmra.mxu0 %v7166
  %v7168 = vpop.f32.mrf.mxu0
  %v7169 = vadd.f32 %v7040, %v7168
  %v7170 = vpop.f32.mrf.mxu0
  %7171 = vmatprep.mubr.f32.mxu0 0.0
  %v7172 = vand.u32 %v6224, 4294901760
  %7173 = vmatmul.mubr.f32.gmra.mxu0 %v7172
  %v7174 = vpop.f32.mrf.mxu0
  %v7175 = vadd.f32 %v7046, %v7174
  %v7176 = vpop.f32.mrf.mxu0
  %7177 = vmatprep.mubr.f32.mxu0 0.0
  %v7178 = vand.u32 %v6225, 4294901760
  %7179 = vmatmul.mubr.f32.gmra.mxu0 %v7178
  %v7180 = vpop.f32.mrf.mxu0
  %v7181 = vadd.f32 %v7052, %v7180
  %v7182 = vpop.f32.mrf.mxu0
  %7183 = vdwg.mxu0
  %v7184 = vld [vmem:[%s5] sm:$0x1]
  %v7186 = vlaneseq
  %v7187 = vshrl.u32 %v7186, 7
  %v7188 = vsub.s32 0, %v7187
  %v7189 = vrot.slane %v7184, %v7188
  %v7191 = vadd.f32 %v7139, %v7189
  %v7192 = vadd.f32 %v7145, %v7189
  %v7193 = vadd.f32 %v7151, %v7189
  %v7194 = vadd.f32 %v7157, %v7189
  %v7195 = vadd.f32 %v7163, %v7189
  %v7196 = vadd.f32 %v7169, %v7189
  %v7197 = vadd.f32 %v7175, %v7189
  %v7198 = vadd.f32 %v7181, %v7189
  %7199 = vst [vmem:[%s6] sm:$0xff] %v7191
  %7200 = vst [vmem:[%s6 + $0x8] sm:$0xff] %v7192
  %7201 = vst [vmem:[%s6 + $0x10] sm:$0xff] %v7193
  %7202 = vst [vmem:[%s6 + $0x18] sm:$0xff] %v7194
  %7203 = vst [vmem:[%s6 + $0x20] sm:$0xff] %v7195
  %7204 = vst [vmem:[%s6 + $0x28] sm:$0xff] %v7196
  %7205 = vst [vmem:[%s6 + $0x30] sm:$0xff] %v7197
  %7206 = vst [vmem:[%s6 + $0x38] sm:$0xff] %v7198
  // Predicated region
  $region30: #{vrnn_forward.1} parent=0 // pred_check
    %p7207 = pneg %p25
  $region31: #{vrnn_forward.1} parent=0 // pred_check_branch
    %7209 = sbr.rel (%p7207) target = $region33
  $region32: #{vrnn_forward.1} parent=0 // pred_region
    %v7210 = vld [vmem:[#allocation2] sm:$0xff]
    %7211 = vst [vmem:[%s7] sm:$0xff] %v7210
  $region33: #{vrnn_forward.1} parent=0 // pred_fallthru
    _
  // Predicated region
  $region34: #{vrnn_forward.1} parent=0 // pred_check
    _
  $region35: #{vrnn_forward.1} parent=0 // pred_check_branch
    %7213 = sbr.rel (0) target = $region37
  $region36: #{vrnn_forward.1} parent=0 // pred_region
    _
  $region37: #{vrnn_forward.1} parent=0 // pred_fallthru
    _
  // Predicated region
  $region38: #{vrnn_forward.1} parent=0 // pred_check
    _
  $region39: #{vrnn_forward.1} parent=0 // pred_check_branch
    %7215 = sbr.rel (0) target = $region41
  $region40: #{vrnn_forward.1} parent=0 // pred_region
    _
  $region41: #{vrnn_forward.1} parent=0 // pred_fallthru
    _
  // Predicated region
  $region42: #{vrnn_forward.1} parent=0 // pred_check
    _
  $region43: #{vrnn_forward.1} parent=0 // pred_check_branch
    %7217 = sbr.rel (0) target = $region45
  $region44: #{vrnn_forward.1} parent=0 // pred_region
    _
  $region45: #{vrnn_forward.1} parent=0 // pred_fallthru
    _
  // Predicated region
  $region46: #{vrnn_forward.1} parent=0 // pred_check
    _
  $region47: #{vrnn_forward.1} parent=0 // pred_check_branch
    %7219 = sbr.rel (0) target = $region49
  $region48: #{vrnn_forward.1} parent=0 // pred_region
    _
  $region49: #{vrnn_forward.1} parent=0 // pred_fallthru
    _

</llo_original>
